<compile_context>
chip_gen: v5e
topology: v5e:2x2
jax: 0.10.0
libtpu: 0.0.40
codegen_flags: <defaults>
</compile_context>

<pallas_src>
import functools

import jax
import jax.numpy as jnp
import numpy as np
from jax.experimental import pallas as pl
from jax.experimental.pallas import tpu as pltpu


def _round_up(x, m):
    return (x + m - 1) // m * m


def _fused_conv_kernel(cfg, xpf_ref, w1_ref, b1_ref, w2_ref, b2_ref, m_ref,
                       o_ref, rhs1_ref, v3p_ref, rhs2_ref):
    """Fused conv1 -> (-0.5, relu) -> conv2 -> (-0.6, relu), all in VMEM.

    xpf_ref : (Cin1p, LX)          padded conv1 input, rows flattened (stride wp1)
    w1_ref  : (C1p, K*K*Cin1p)     conv1 weights, tap-major contraction layout
    b1_ref  : (C1p, 1)             conv1 bias - 0.5
    w2_ref  : (C2p, K*K*C1p)       conv2 weights, tap-major contraction layout
    b2_ref  : (C2p, 1)             conv2 bias - 0.6
    m_ref   : (1, L1)              0/1 mask of valid conv1 output lanes
    o_ref   : (C2p, L2)            conv2 output, rows flattened (stride wp1)
    rhs1_ref: (K*K*Cin1p, L1)      scratch: stacked shifted conv1 RHS
    v3p_ref : (C1p, LV)            scratch: v3 zero-padded for conv2 (stride wp1)
    rhs2_ref: (K*K*C1p, L2)        scratch: stacked shifted conv2 RHS
    """
    k, wp1, l1, l2, cin1p, c1p, lv = cfg
    kk = k * k

    # ---- stack conv1's K*K taps along the contraction dimension -------------
    for t in range(kk):
        off = (t // k) * wp1 + (t % k)
        rhs1_ref[pl.ds(t * cin1p, cin1p), :] = xpf_ref[:, pl.ds(off, l1)]

    # ---- conv1 = ONE deep matmul; fused (bias-0.5) + relu + wrap-column mask
    acc1 = jnp.dot(w1_ref[...], rhs1_ref[...],
                   preferred_element_type=jnp.float32)          # (C1p, L1)
    v3 = jnp.maximum(acc1 + b1_ref[...], 0.0) * m_ref[...]

    # ---- bulk shifted store into conv2's zero-padded layout (same stride) ---
    zeros = jnp.zeros((c1p, 128), jnp.float32)
    v3p_ref[:, :128] = zeros                     # top ring + row-1 left pad
    v3p_ref[:, pl.ds(lv - 128, 128)] = zeros     # tail hygiene (never-valid lanes)
    v3p_ref[:, pl.ds(wp1 + 1, l1)] = v3          # single bulk store

    # ---- stack conv2's K*K taps along the contraction dimension -------------
    for t in range(kk):
        off = (t // k) * wp1 + (t % k)
        rhs2_ref[pl.ds(t * c1p, c1p), :] = v3p_ref[:, pl.ds(off, l2)]

    # ---- conv2 = ONE deep matmul; fused (bias-0.6) + relu -------------------
    acc2 = jnp.dot(w2_ref[...], rhs2_ref[...],
                   preferred_element_type=jnp.float32)          # (C2p, L2)
    o_ref[...] = jnp.maximum(acc2 + b2_ref[...], 0.0)


def prepare_params(w1, b1, w2, b2):
    """One-time weight/bias prep (constant w.r.t. x; never re-run per call)."""
    cout1, cin, k, _ = w1.shape
    cout2 = w2.shape[0]
    cin1p = _round_up(cin, 8)
    c1p = _round_up(cout1, 8)
    c2p = _round_up(cout2, 8)

    # dense 2-D weights: column = (kh*K + kw)*Cin_pad + c  (matches stacked RHS)
    w1d = jnp.transpose(w1, (0, 2, 3, 1))                       # (o, kh, kw, c)
    w1d = jnp.pad(w1d, ((0, c1p - cout1), (0, 0), (0, 0), (0, cin1p - cin)))
    w1d = w1d.reshape(c1p, k * k * cin1p)
    w2d = jnp.transpose(w2, (0, 2, 3, 1))
    w2d = jnp.pad(w2d, ((0, c2p - cout2), (0, 0), (0, 0), (0, c1p - cout1)))
    w2d = w2d.reshape(c2p, k * k * c1p)

    # fold the "- 0.5" / "- 0.6" constants into the biases
    b1c = jnp.pad(b1 - 0.5, (0, c1p - cout1)).reshape(c1p, 1)
    b2c = jnp.pad(b2 - 0.6, (0, c2p - cout2)).reshape(c2p, 1)
    return w1d, b1c, w2d, b2c


def model_forward(x, w1d, b1c, w2d, b2c, *, cout2=10, k=6, pad=1):
    n, cin, h, w = x.shape
    cin1p = _round_up(cin, 8)
    c1p = b1c.shape[0]
    c2p = b2c.shape[0]
    kk = k * k

    # conv geometry (stride 1); conv2 reuses conv1's row stride wp1.
    wp1 = w + 2 * pad                       # 34  (shared row stride)
    hp1 = h + 2 * pad                       # 34
    ho1, wo1 = hp1 - k + 1, wp1 - k + 1     # 29, 29
    ho2 = ho1 + 2 * pad - k + 1             # 26
    wo2 = wo1 + 2 * pad - k + 1             # 26

    l1 = _round_up(ho1 * wp1, 128)          # 1024 conv1 accumulator lanes
    l2 = _round_up(ho2 * wp1, 128)          # 896  conv2 accumulator lanes
    max_off = (k - 1) * wp1 + (k - 1)       # 175  largest tap offset
    rows_in = -(-(max_off + l1) // wp1)     # rows so every tap slice is in-bounds
    lx = rows_in * wp1                      # 1224 flattened input lanes
    lv = _round_up(max(max_off + l2, wp1 + 1 + l1), 128)   # 1152 padded-v3 lanes

    # single pad (channels + spatial ring + extra bottom rows), then flatten rows
    xpf = jnp.pad(x, ((0, 0), (0, cin1p - cin),
                      (pad, rows_in - h - pad), (pad, pad)))
    xpf = xpf.reshape(n, cin1p, lx)

    # compile-time constant: valid conv1 output lanes (kills row-wrap garbage
    # BEFORE it can land in conv2's zero-padding columns)
    q = np.arange(l1)
    mask = (((q % wp1) < wo1) & (q < ho1 * wp1)).astype(np.float32)
    mask = jnp.asarray(mask).reshape(1, l1)

    cfg = (k, wp1, l1, l2, cin1p, c1p, lv)
    out_full = pl.pallas_call(
        functools.partial(_fused_conv_kernel, cfg),
        grid=(n,),
        in_specs=[
            pl.BlockSpec((None, cin1p, lx), lambda b: (b, 0, 0)),   # per-sample
            pl.BlockSpec((c1p, kk * cin1p), lambda b: (0, 0)),      # resident
            pl.BlockSpec((c1p, 1), lambda b: (0, 0)),
            pl.BlockSpec((c2p, kk * c1p), lambda b: (0, 0)),
            pl.BlockSpec((c2p, 1), lambda b: (0, 0)),
            pl.BlockSpec((1, l1), lambda b: (0, 0)),
        ],
        out_specs=pl.BlockSpec((None, c2p, l2), lambda b: (b, 0, 0)),
        out_shape=jax.ShapeDtypeStruct((n, c2p, l2), jnp.float32),
        scratch_shapes=[
            pltpu.VMEM((kk * cin1p, l1), jnp.float32),   # stacked conv1 RHS
            pltpu.VMEM((c1p, lv), jnp.float32),          # padded v3
            pltpu.VMEM((kk * c1p, l2), jnp.float32),     # stacked conv2 RHS
        ],
        compiler_params=pltpu.CompilerParams(
            dimension_semantics=("parallel",)),           # megacore over batch
    )(xpf, w1d, b1c, w2d, b2c, mask)

    # crop the lane-dense output (stride wp1, padded channels) to (N, C2, 26, 26)
    out = out_full[:, :cout2, :ho2 * wp1].reshape(n, cout2, ho2, wp1)
    return out[..., :wo2]


# ---- pure-JAX reference for a correctness check -----------------------------
def _ref_conv(x, w, b, pad):
    out = jax.lax.conv_general_dilated(
        x, w, window_strides=(1, 1), padding=[(pad, pad), (pad, pad)],
        dimension_numbers=("NCHW", "OIHW", "NCHW"))
    return out + b[None, :, None, None]


def _ref_forward(x, w1, b1, w2, b2):
    v3 = jnp.maximum(_ref_conv(x, w1, b1, 1) - 0.5, 0.0)
    return jnp.maximum(_ref_conv(v3, w2, b2, 1) - 0.6, 0.0)


if __name__ == "__main__":
    key = jax.random.PRNGKey(0)
    kx, k1, k2, k3, k4 = jax.random.split(key, 5)

    # input consistent with the module: x1 = torch.randn(1, 3, 32, 32)
    x = jax.random.normal(kx, (1, 3, 32, 32), dtype=jnp.float32)

    # deterministic parameter init (shapes from the module's __init__)
    w1 = jax.random.normal(k1, (16, 3, 6, 6), dtype=jnp.float32) * 0.1
    b1 = jax.random.normal(k2, (16,), dtype=jnp.float32) * 0.1
    w2 = jax.random.normal(k3, (10, 16, 6, 6), dtype=jnp.float32) * 0.1
    b2 = jax.random.normal(k4, (10,), dtype=jnp.float32) * 0.1

    # one-time weight prep (constant w.r.t. x), then the jitted fused forward
    params = prepare_params(w1, b1, w2, b2)
    fwd = jax.jit(model_forward)
    out = fwd(x, *params)
    jax.block_until_ready(out)

    ref = _ref_forward(x, w1, b1, w2, b2)
    assert out.shape == (1, 10, 26, 26), out.shape
    # relaxed tolerance: summation order inside the fused kernel differs from
    # XLA's conv decomposition (f32 accumulation throughout).
    np.testing.assert_allclose(np.asarray(out), np.asarray(ref),
                               rtol=2e-3, atol=2e-3)
    print("KERNEL_OK")
</pallas_src>

<mosaic_0001>
module attributes {stable_mosaic.version = 11 : i64} {
  func.func @_fused_conv_kernel(%arg0: i32, %arg1: memref<1x8x1224xf32, #tpu.memory_space<vmem>>, %arg2: memref<16x288xf32, #tpu.memory_space<vmem>>, %arg3: memref<16x1xf32, #tpu.memory_space<vmem>>, %arg4: memref<16x576xf32, #tpu.memory_space<vmem>>, %arg5: memref<16x1xf32, #tpu.memory_space<vmem>>, %arg6: memref<1x1024xf32, #tpu.memory_space<vmem>>, %arg7: memref<1x16x896xf32, #tpu.memory_space<vmem>>, %arg8: memref<288x1024xf32, #tpu.memory_space<vmem>>, %arg9: memref<16x1152xf32, #tpu.memory_space<vmem>>, %arg10: memref<576x896xf32, #tpu.memory_space<vmem>>) attributes {dimension_semantics = [#tpu.dimension_semantics<parallel>], iteration_bounds = array<i64: 1>, scalar_prefetch = 0 : i64, scratch_operands = 3 : i64, tpu.core_type = #tpu.core_type<tc>, window_params = [{transform_indices = @transform_0, window_bounds = array<i64: 1, 8, 1224>}, {pipeline_mode = #tpu.pipeline_mode<synchronous>, transform_indices = @transform_1, window_bounds = array<i64: 16, 288>}, {pipeline_mode = #tpu.pipeline_mode<synchronous>, transform_indices = @transform_2, window_bounds = array<i64: 16, 1>}, {pipeline_mode = #tpu.pipeline_mode<synchronous>, transform_indices = @transform_3, window_bounds = array<i64: 16, 576>}, {pipeline_mode = #tpu.pipeline_mode<synchronous>, transform_indices = @transform_4, window_bounds = array<i64: 16, 1>}, {pipeline_mode = #tpu.pipeline_mode<synchronous>, transform_indices = @transform_5, window_bounds = array<i64: 1, 1024>}, {transform_indices = @transform_6, window_bounds = array<i64: 1, 16, 896>}]} {
    %c0 = arith.constant 0 : index
    %c0_0 = arith.constant 0 : index
    %c0_1 = arith.constant 0 : index
    %0 = vector.load %arg1[%c0, %c0_0, %c0_1] : memref<1x8x1224xf32, #tpu.memory_space<vmem>>, vector<1x8x1024xf32>
    %1 = vector.shape_cast %0 : vector<1x8x1024xf32> to vector<8x1024xf32>
    %c0_2 = arith.constant 0 : index
    %c0_3 = arith.constant 0 : index
    %2 = vector.load %arg8[%c0_2, %c0_3] : memref<288x1024xf32, #tpu.memory_space<vmem>>, vector<8x1024xf32>
    tpu.vector_store %arg8[%c0_2, %c0_3], %1 {strides = array<i32>} : memref<288x1024xf32, #tpu.memory_space<vmem>>, vector<8x1024xf32>,
    %c0_4 = arith.constant 0 : index
    %c0_5 = arith.constant 0 : index
    %c1 = arith.constant 1 : index
    %3 = vector.load %arg1[%c0_4, %c0_5, %c1] : memref<1x8x1224xf32, #tpu.memory_space<vmem>>, vector<1x8x1024xf32>
    %4 = vector.shape_cast %3 : vector<1x8x1024xf32> to vector<8x1024xf32>
    %c8 = arith.constant 8 : index
    %c0_6 = arith.constant 0 : index
    %5 = vector.load %arg8[%c8, %c0_6] : memref<288x1024xf32, #tpu.memory_space<vmem>>, vector<8x1024xf32>
    tpu.vector_store %arg8[%c8, %c0_6], %4 {strides = array<i32>} : memref<288x1024xf32, #tpu.memory_space<vmem>>, vector<8x1024xf32>,
    %c0_7 = arith.constant 0 : index
    %c0_8 = arith.constant 0 : index
    %c2 = arith.constant 2 : index
    %6 = vector.load %arg1[%c0_7, %c0_8, %c2] : memref<1x8x1224xf32, #tpu.memory_space<vmem>>, vector<1x8x1024xf32>
    %7 = vector.shape_cast %6 : vector<1x8x1024xf32> to vector<8x1024xf32>
    %c16 = arith.constant 16 : index
    %c0_9 = arith.constant 0 : index
    %8 = vector.load %arg8[%c16, %c0_9] : memref<288x1024xf32, #tpu.memory_space<vmem>>, vector<8x1024xf32>
    tpu.vector_store %arg8[%c16, %c0_9], %7 {strides = array<i32>} : memref<288x1024xf32, #tpu.memory_space<vmem>>, vector<8x1024xf32>,
    %c0_10 = arith.constant 0 : index
    %c0_11 = arith.constant 0 : index
    %c3 = arith.constant 3 : index
    %9 = vector.load %arg1[%c0_10, %c0_11, %c3] : memref<1x8x1224xf32, #tpu.memory_space<vmem>>, vector<1x8x1024xf32>
    %10 = vector.shape_cast %9 : vector<1x8x1024xf32> to vector<8x1024xf32>
    %c24 = arith.constant 24 : index
    %c0_12 = arith.constant 0 : index
    %11 = vector.load %arg8[%c24, %c0_12] : memref<288x1024xf32, #tpu.memory_space<vmem>>, vector<8x1024xf32>
    tpu.vector_store %arg8[%c24, %c0_12], %10 {strides = array<i32>} : memref<288x1024xf32, #tpu.memory_space<vmem>>, vector<8x1024xf32>,
    %c0_13 = arith.constant 0 : index
    %c0_14 = arith.constant 0 : index
    %c4 = arith.constant 4 : index
    %12 = vector.load %arg1[%c0_13, %c0_14, %c4] : memref<1x8x1224xf32, #tpu.memory_space<vmem>>, vector<1x8x1024xf32>
    %13 = vector.shape_cast %12 : vector<1x8x1024xf32> to vector<8x1024xf32>
    %c32 = arith.constant 32 : index
    %c0_15 = arith.constant 0 : index
    %14 = vector.load %arg8[%c32, %c0_15] : memref<288x1024xf32, #tpu.memory_space<vmem>>, vector<8x1024xf32>
    tpu.vector_store %arg8[%c32, %c0_15], %13 {strides = array<i32>} : memref<288x1024xf32, #tpu.memory_space<vmem>>, vector<8x1024xf32>,
    %c0_16 = arith.constant 0 : index
    %c0_17 = arith.constant 0 : index
    %c5 = arith.constant 5 : index
    %15 = vector.load %arg1[%c0_16, %c0_17, %c5] : memref<1x8x1224xf32, #tpu.memory_space<vmem>>, vector<1x8x1024xf32>
    %16 = vector.shape_cast %15 : vector<1x8x1024xf32> to vector<8x1024xf32>
    %c40 = arith.constant 40 : index
    %c0_18 = arith.constant 0 : index
    %17 = vector.load %arg8[%c40, %c0_18] : memref<288x1024xf32, #tpu.memory_space<vmem>>, vector<8x1024xf32>
    tpu.vector_store %arg8[%c40, %c0_18], %16 {strides = array<i32>} : memref<288x1024xf32, #tpu.memory_space<vmem>>, vector<8x1024xf32>,
    %c0_19 = arith.constant 0 : index
    %c0_20 = arith.constant 0 : index
    %c34 = arith.constant 34 : index
    %18 = vector.load %arg1[%c0_19, %c0_20, %c34] : memref<1x8x1224xf32, #tpu.memory_space<vmem>>, vector<1x8x1024xf32>
    %19 = vector.shape_cast %18 : vector<1x8x1024xf32> to vector<8x1024xf32>
    %c48 = arith.constant 48 : index
    %c0_21 = arith.constant 0 : index
    %20 = vector.load %arg8[%c48, %c0_21] : memref<288x1024xf32, #tpu.memory_space<vmem>>, vector<8x1024xf32>
    tpu.vector_store %arg8[%c48, %c0_21], %19 {strides = array<i32>} : memref<288x1024xf32, #tpu.memory_space<vmem>>, vector<8x1024xf32>,
    %c0_22 = arith.constant 0 : index
    %c0_23 = arith.constant 0 : index
    %c35 = arith.constant 35 : index
    %21 = vector.load %arg1[%c0_22, %c0_23, %c35] : memref<1x8x1224xf32, #tpu.memory_space<vmem>>, vector<1x8x1024xf32>
    %22 = vector.shape_cast %21 : vector<1x8x1024xf32> to vector<8x1024xf32>
    %c56 = arith.constant 56 : index
    %c0_24 = arith.constant 0 : index
    %23 = vector.load %arg8[%c56, %c0_24] : memref<288x1024xf32, #tpu.memory_space<vmem>>, vector<8x1024xf32>
    tpu.vector_store %arg8[%c56, %c0_24], %22 {strides = array<i32>} : memref<288x1024xf32, #tpu.memory_space<vmem>>, vector<8x1024xf32>,
    %c0_25 = arith.constant 0 : index
    %c0_26 = arith.constant 0 : index
    %c36 = arith.constant 36 : index
    %24 = vector.load %arg1[%c0_25, %c0_26, %c36] : memref<1x8x1224xf32, #tpu.memory_space<vmem>>, vector<1x8x1024xf32>
    %25 = vector.shape_cast %24 : vector<1x8x1024xf32> to vector<8x1024xf32>
    %c64 = arith.constant 64 : index
    %c0_27 = arith.constant 0 : index
    %26 = vector.load %arg8[%c64, %c0_27] : memref<288x1024xf32, #tpu.memory_space<vmem>>, vector<8x1024xf32>
    tpu.vector_store %arg8[%c64, %c0_27], %25 {strides = array<i32>} : memref<288x1024xf32, #tpu.memory_space<vmem>>, vector<8x1024xf32>,
    %c0_28 = arith.constant 0 : index
    %c0_29 = arith.constant 0 : index
    %c37 = arith.constant 37 : index
    %27 = vector.load %arg1[%c0_28, %c0_29, %c37] : memref<1x8x1224xf32, #tpu.memory_space<vmem>>, vector<1x8x1024xf32>
    %28 = vector.shape_cast %27 : vector<1x8x1024xf32> to vector<8x1024xf32>
    %c72 = arith.constant 72 : index
    %c0_30 = arith.constant 0 : index
    %29 = vector.load %arg8[%c72, %c0_30] : memref<288x1024xf32, #tpu.memory_space<vmem>>, vector<8x1024xf32>
    tpu.vector_store %arg8[%c72, %c0_30], %28 {strides = array<i32>} : memref<288x1024xf32, #tpu.memory_space<vmem>>, vector<8x1024xf32>,
    %c0_31 = arith.constant 0 : index
    %c0_32 = arith.constant 0 : index
    %c38 = arith.constant 38 : index
    %30 = vector.load %arg1[%c0_31, %c0_32, %c38] : memref<1x8x1224xf32, #tpu.memory_space<vmem>>, vector<1x8x1024xf32>
    %31 = vector.shape_cast %30 : vector<1x8x1024xf32> to vector<8x1024xf32>
    %c80 = arith.constant 80 : index
    %c0_33 = arith.constant 0 : index
    %32 = vector.load %arg8[%c80, %c0_33] : memref<288x1024xf32, #tpu.memory_space<vmem>>, vector<8x1024xf32>
    tpu.vector_store %arg8[%c80, %c0_33], %31 {strides = array<i32>} : memref<288x1024xf32, #tpu.memory_space<vmem>>, vector<8x1024xf32>,
    %c0_34 = arith.constant 0 : index
    %c0_35 = arith.constant 0 : index
    %c39 = arith.constant 39 : index
    %33 = vector.load %arg1[%c0_34, %c0_35, %c39] : memref<1x8x1224xf32, #tpu.memory_space<vmem>>, vector<1x8x1024xf32>
    %34 = vector.shape_cast %33 : vector<1x8x1024xf32> to vector<8x1024xf32>
    %c88 = arith.constant 88 : index
    %c0_36 = arith.constant 0 : index
    %35 = vector.load %arg8[%c88, %c0_36] : memref<288x1024xf32, #tpu.memory_space<vmem>>, vector<8x1024xf32>
    tpu.vector_store %arg8[%c88, %c0_36], %34 {strides = array<i32>} : memref<288x1024xf32, #tpu.memory_space<vmem>>, vector<8x1024xf32>,
    %c0_37 = arith.constant 0 : index
    %c0_38 = arith.constant 0 : index
    %c68 = arith.constant 68 : index
    %36 = vector.load %arg1[%c0_37, %c0_38, %c68] : memref<1x8x1224xf32, #tpu.memory_space<vmem>>, vector<1x8x1024xf32>
    %37 = vector.shape_cast %36 : vector<1x8x1024xf32> to vector<8x1024xf32>
    %c96 = arith.constant 96 : index
    %c0_39 = arith.constant 0 : index
    %38 = vector.load %arg8[%c96, %c0_39] : memref<288x1024xf32, #tpu.memory_space<vmem>>, vector<8x1024xf32>
    tpu.vector_store %arg8[%c96, %c0_39], %37 {strides = array<i32>} : memref<288x1024xf32, #tpu.memory_space<vmem>>, vector<8x1024xf32>,
    %c0_40 = arith.constant 0 : index
    %c0_41 = arith.constant 0 : index
    %c69 = arith.constant 69 : index
    %39 = vector.load %arg1[%c0_40, %c0_41, %c69] : memref<1x8x1224xf32, #tpu.memory_space<vmem>>, vector<1x8x1024xf32>
    %40 = vector.shape_cast %39 : vector<1x8x1024xf32> to vector<8x1024xf32>
    %c104 = arith.constant 104 : index
    %c0_42 = arith.constant 0 : index
    %41 = vector.load %arg8[%c104, %c0_42] : memref<288x1024xf32, #tpu.memory_space<vmem>>, vector<8x1024xf32>
    tpu.vector_store %arg8[%c104, %c0_42], %40 {strides = array<i32>} : memref<288x1024xf32, #tpu.memory_space<vmem>>, vector<8x1024xf32>,
    %c0_43 = arith.constant 0 : index
    %c0_44 = arith.constant 0 : index
    %c70 = arith.constant 70 : index
    %42 = vector.load %arg1[%c0_43, %c0_44, %c70] : memref<1x8x1224xf32, #tpu.memory_space<vmem>>, vector<1x8x1024xf32>
    %43 = vector.shape_cast %42 : vector<1x8x1024xf32> to vector<8x1024xf32>
    %c112 = arith.constant 112 : index
    %c0_45 = arith.constant 0 : index
    %44 = vector.load %arg8[%c112, %c0_45] : memref<288x1024xf32, #tpu.memory_space<vmem>>, vector<8x1024xf32>
    tpu.vector_store %arg8[%c112, %c0_45], %43 {strides = array<i32>} : memref<288x1024xf32, #tpu.memory_space<vmem>>, vector<8x1024xf32>,
    %c0_46 = arith.constant 0 : index
    %c0_47 = arith.constant 0 : index
    %c71 = arith.constant 71 : index
    %45 = vector.load %arg1[%c0_46, %c0_47, %c71] : memref<1x8x1224xf32, #tpu.memory_space<vmem>>, vector<1x8x1024xf32>
    %46 = vector.shape_cast %45 : vector<1x8x1024xf32> to vector<8x1024xf32>
    %c120 = arith.constant 120 : index
    %c0_48 = arith.constant 0 : index
    %47 = vector.load %arg8[%c120, %c0_48] : memref<288x1024xf32, #tpu.memory_space<vmem>>, vector<8x1024xf32>
    tpu.vector_store %arg8[%c120, %c0_48], %46 {strides = array<i32>} : memref<288x1024xf32, #tpu.memory_space<vmem>>, vector<8x1024xf32>,
    %c0_49 = arith.constant 0 : index
    %c0_50 = arith.constant 0 : index
    %c72_51 = arith.constant 72 : index
    %48 = vector.load %arg1[%c0_49, %c0_50, %c72_51] : memref<1x8x1224xf32, #tpu.memory_space<vmem>>, vector<1x8x1024xf32>
    %49 = vector.shape_cast %48 : vector<1x8x1024xf32> to vector<8x1024xf32>
    %c128 = arith.constant 128 : index
    %c0_52 = arith.constant 0 : index
    %50 = vector.load %arg8[%c128, %c0_52] : memref<288x1024xf32, #tpu.memory_space<vmem>>, vector<8x1024xf32>
    tpu.vector_store %arg8[%c128, %c0_52], %49 {strides = array<i32>} : memref<288x1024xf32, #tpu.memory_space<vmem>>, vector<8x1024xf32>,
    %c0_53 = arith.constant 0 : index
    %c0_54 = arith.constant 0 : index
    %c73 = arith.constant 73 : index
    %51 = vector.load %arg1[%c0_53, %c0_54, %c73] : memref<1x8x1224xf32, #tpu.memory_space<vmem>>, vector<1x8x1024xf32>
    %52 = vector.shape_cast %51 : vector<1x8x1024xf32> to vector<8x1024xf32>
    %c136 = arith.constant 136 : index
    %c0_55 = arith.constant 0 : index
    %53 = vector.load %arg8[%c136, %c0_55] : memref<288x1024xf32, #tpu.memory_space<vmem>>, vector<8x1024xf32>
    tpu.vector_store %arg8[%c136, %c0_55], %52 {strides = array<i32>} : memref<288x1024xf32, #tpu.memory_space<vmem>>, vector<8x1024xf32>,
    %c0_56 = arith.constant 0 : index
    %c0_57 = arith.constant 0 : index
    %c102 = arith.constant 102 : index
    %54 = vector.load %arg1[%c0_56, %c0_57, %c102] : memref<1x8x1224xf32, #tpu.memory_space<vmem>>, vector<1x8x1024xf32>
    %55 = vector.shape_cast %54 : vector<1x8x1024xf32> to vector<8x1024xf32>
    %c144 = arith.constant 144 : index
    %c0_58 = arith.constant 0 : index
    %56 = vector.load %arg8[%c144, %c0_58] : memref<288x1024xf32, #tpu.memory_space<vmem>>, vector<8x1024xf32>
    tpu.vector_store %arg8[%c144, %c0_58], %55 {strides = array<i32>} : memref<288x1024xf32, #tpu.memory_space<vmem>>, vector<8x1024xf32>,
    %c0_59 = arith.constant 0 : index
    %c0_60 = arith.constant 0 : index
    %c103 = arith.constant 103 : index
    %57 = vector.load %arg1[%c0_59, %c0_60, %c103] : memref<1x8x1224xf32, #tpu.memory_space<vmem>>, vector<1x8x1024xf32>
    %58 = vector.shape_cast %57 : vector<1x8x1024xf32> to vector<8x1024xf32>
    %c152 = arith.constant 152 : index
    %c0_61 = arith.constant 0 : index
    %59 = vector.load %arg8[%c152, %c0_61] : memref<288x1024xf32, #tpu.memory_space<vmem>>, vector<8x1024xf32>
    tpu.vector_store %arg8[%c152, %c0_61], %58 {strides = array<i32>} : memref<288x1024xf32, #tpu.memory_space<vmem>>, vector<8x1024xf32>,
    %c0_62 = arith.constant 0 : index
    %c0_63 = arith.constant 0 : index
    %c104_64 = arith.constant 104 : index
    %60 = vector.load %arg1[%c0_62, %c0_63, %c104_64] : memref<1x8x1224xf32, #tpu.memory_space<vmem>>, vector<1x8x1024xf32>
    %61 = vector.shape_cast %60 : vector<1x8x1024xf32> to vector<8x1024xf32>
    %c160 = arith.constant 160 : index
    %c0_65 = arith.constant 0 : index
    %62 = vector.load %arg8[%c160, %c0_65] : memref<288x1024xf32, #tpu.memory_space<vmem>>, vector<8x1024xf32>
    tpu.vector_store %arg8[%c160, %c0_65], %61 {strides = array<i32>} : memref<288x1024xf32, #tpu.memory_space<vmem>>, vector<8x1024xf32>,
    %c0_66 = arith.constant 0 : index
    %c0_67 = arith.constant 0 : index
    %c105 = arith.constant 105 : index
    %63 = vector.load %arg1[%c0_66, %c0_67, %c105] : memref<1x8x1224xf32, #tpu.memory_space<vmem>>, vector<1x8x1024xf32>
    %64 = vector.shape_cast %63 : vector<1x8x1024xf32> to vector<8x1024xf32>
    %c168 = arith.constant 168 : index
    %c0_68 = arith.constant 0 : index
    %65 = vector.load %arg8[%c168, %c0_68] : memref<288x1024xf32, #tpu.memory_space<vmem>>, vector<8x1024xf32>
    tpu.vector_store %arg8[%c168, %c0_68], %64 {strides = array<i32>} : memref<288x1024xf32, #tpu.memory_space<vmem>>, vector<8x1024xf32>,
    %c0_69 = arith.constant 0 : index
    %c0_70 = arith.constant 0 : index
    %c106 = arith.constant 106 : index
    %66 = vector.load %arg1[%c0_69, %c0_70, %c106] : memref<1x8x1224xf32, #tpu.memory_space<vmem>>, vector<1x8x1024xf32>
    %67 = vector.shape_cast %66 : vector<1x8x1024xf32> to vector<8x1024xf32>
    %c176 = arith.constant 176 : index
    %c0_71 = arith.constant 0 : index
    %68 = vector.load %arg8[%c176, %c0_71] : memref<288x1024xf32, #tpu.memory_space<vmem>>, vector<8x1024xf32>
    tpu.vector_store %arg8[%c176, %c0_71], %67 {strides = array<i32>} : memref<288x1024xf32, #tpu.memory_space<vmem>>, vector<8x1024xf32>,
    %c0_72 = arith.constant 0 : index
    %c0_73 = arith.constant 0 : index
    %c107 = arith.constant 107 : index
    %69 = vector.load %arg1[%c0_72, %c0_73, %c107] : memref<1x8x1224xf32, #tpu.memory_space<vmem>>, vector<1x8x1024xf32>
    %70 = vector.shape_cast %69 : vector<1x8x1024xf32> to vector<8x1024xf32>
    %c184 = arith.constant 184 : index
    %c0_74 = arith.constant 0 : index
    %71 = vector.load %arg8[%c184, %c0_74] : memref<288x1024xf32, #tpu.memory_space<vmem>>, vector<8x1024xf32>
    tpu.vector_store %arg8[%c184, %c0_74], %70 {strides = array<i32>} : memref<288x1024xf32, #tpu.memory_space<vmem>>, vector<8x1024xf32>,
    %c0_75 = arith.constant 0 : index
    %c0_76 = arith.constant 0 : index
    %c136_77 = arith.constant 136 : index
    %72 = vector.load %arg1[%c0_75, %c0_76, %c136_77] : memref<1x8x1224xf32, #tpu.memory_space<vmem>>, vector<1x8x1024xf32>
    %73 = vector.shape_cast %72 : vector<1x8x1024xf32> to vector<8x1024xf32>
    %c192 = arith.constant 192 : index
    %c0_78 = arith.constant 0 : index
    %74 = vector.load %arg8[%c192, %c0_78] : memref<288x1024xf32, #tpu.memory_space<vmem>>, vector<8x1024xf32>
    tpu.vector_store %arg8[%c192, %c0_78], %73 {strides = array<i32>} : memref<288x1024xf32, #tpu.memory_space<vmem>>, vector<8x1024xf32>,
    %c0_79 = arith.constant 0 : index
    %c0_80 = arith.constant 0 : index
    %c137 = arith.constant 137 : index
    %75 = vector.load %arg1[%c0_79, %c0_80, %c137] : memref<1x8x1224xf32, #tpu.memory_space<vmem>>, vector<1x8x1024xf32>
    %76 = vector.shape_cast %75 : vector<1x8x1024xf32> to vector<8x1024xf32>
    %c200 = arith.constant 200 : index
    %c0_81 = arith.constant 0 : index
    %77 = vector.load %arg8[%c200, %c0_81] : memref<288x1024xf32, #tpu.memory_space<vmem>>, vector<8x1024xf32>
    tpu.vector_store %arg8[%c200, %c0_81], %76 {strides = array<i32>} : memref<288x1024xf32, #tpu.memory_space<vmem>>, vector<8x1024xf32>,
    %c0_82 = arith.constant 0 : index
    %c0_83 = arith.constant 0 : index
    %c138 = arith.constant 138 : index
    %78 = vector.load %arg1[%c0_82, %c0_83, %c138] : memref<1x8x1224xf32, #tpu.memory_space<vmem>>, vector<1x8x1024xf32>
    %79 = vector.shape_cast %78 : vector<1x8x1024xf32> to vector<8x1024xf32>
    %c208 = arith.constant 208 : index
    %c0_84 = arith.constant 0 : index
    %80 = vector.load %arg8[%c208, %c0_84] : memref<288x1024xf32, #tpu.memory_space<vmem>>, vector<8x1024xf32>
    tpu.vector_store %arg8[%c208, %c0_84], %79 {strides = array<i32>} : memref<288x1024xf32, #tpu.memory_space<vmem>>, vector<8x1024xf32>,
    %c0_85 = arith.constant 0 : index
    %c0_86 = arith.constant 0 : index
    %c139 = arith.constant 139 : index
    %81 = vector.load %arg1[%c0_85, %c0_86, %c139] : memref<1x8x1224xf32, #tpu.memory_space<vmem>>, vector<1x8x1024xf32>
    %82 = vector.shape_cast %81 : vector<1x8x1024xf32> to vector<8x1024xf32>
    %c216 = arith.constant 216 : index
    %c0_87 = arith.constant 0 : index
    %83 = vector.load %arg8[%c216, %c0_87] : memref<288x1024xf32, #tpu.memory_space<vmem>>, vector<8x1024xf32>
    tpu.vector_store %arg8[%c216, %c0_87], %82 {strides = array<i32>} : memref<288x1024xf32, #tpu.memory_space<vmem>>, vector<8x1024xf32>,
    %c0_88 = arith.constant 0 : index
    %c0_89 = arith.constant 0 : index
    %c140 = arith.constant 140 : index
    %84 = vector.load %arg1[%c0_88, %c0_89, %c140] : memref<1x8x1224xf32, #tpu.memory_space<vmem>>, vector<1x8x1024xf32>
    %85 = vector.shape_cast %84 : vector<1x8x1024xf32> to vector<8x1024xf32>
    %c224 = arith.constant 224 : index
    %c0_90 = arith.constant 0 : index
    %86 = vector.load %arg8[%c224, %c0_90] : memref<288x1024xf32, #tpu.memory_space<vmem>>, vector<8x1024xf32>
    tpu.vector_store %arg8[%c224, %c0_90], %85 {strides = array<i32>} : memref<288x1024xf32, #tpu.memory_space<vmem>>, vector<8x1024xf32>,
    %c0_91 = arith.constant 0 : index
    %c0_92 = arith.constant 0 : index
    %c141 = arith.constant 141 : index
    %87 = vector.load %arg1[%c0_91, %c0_92, %c141] : memref<1x8x1224xf32, #tpu.memory_space<vmem>>, vector<1x8x1024xf32>
    %88 = vector.shape_cast %87 : vector<1x8x1024xf32> to vector<8x1024xf32>
    %c232 = arith.constant 232 : index
    %c0_93 = arith.constant 0 : index
    %89 = vector.load %arg8[%c232, %c0_93] : memref<288x1024xf32, #tpu.memory_space<vmem>>, vector<8x1024xf32>
    tpu.vector_store %arg8[%c232, %c0_93], %88 {strides = array<i32>} : memref<288x1024xf32, #tpu.memory_space<vmem>>, vector<8x1024xf32>,
    %c0_94 = arith.constant 0 : index
    %c0_95 = arith.constant 0 : index
    %c170 = arith.constant 170 : index
    %90 = vector.load %arg1[%c0_94, %c0_95, %c170] : memref<1x8x1224xf32, #tpu.memory_space<vmem>>, vector<1x8x1024xf32>
    %91 = vector.shape_cast %90 : vector<1x8x1024xf32> to vector<8x1024xf32>
    %c240 = arith.constant 240 : index
    %c0_96 = arith.constant 0 : index
    %92 = vector.load %arg8[%c240, %c0_96] : memref<288x1024xf32, #tpu.memory_space<vmem>>, vector<8x1024xf32>
    tpu.vector_store %arg8[%c240, %c0_96], %91 {strides = array<i32>} : memref<288x1024xf32, #tpu.memory_space<vmem>>, vector<8x1024xf32>,
    %c0_97 = arith.constant 0 : index
    %c0_98 = arith.constant 0 : index
    %c171 = arith.constant 171 : index
    %93 = vector.load %arg1[%c0_97, %c0_98, %c171] : memref<1x8x1224xf32, #tpu.memory_space<vmem>>, vector<1x8x1024xf32>
    %94 = vector.shape_cast %93 : vector<1x8x1024xf32> to vector<8x1024xf32>
    %c248 = arith.constant 248 : index
    %c0_99 = arith.constant 0 : index
    %95 = vector.load %arg8[%c248, %c0_99] : memref<288x1024xf32, #tpu.memory_space<vmem>>, vector<8x1024xf32>
    tpu.vector_store %arg8[%c248, %c0_99], %94 {strides = array<i32>} : memref<288x1024xf32, #tpu.memory_space<vmem>>, vector<8x1024xf32>,
    %c0_100 = arith.constant 0 : index
    %c0_101 = arith.constant 0 : index
    %c172 = arith.constant 172 : index
    %96 = vector.load %arg1[%c0_100, %c0_101, %c172] : memref<1x8x1224xf32, #tpu.memory_space<vmem>>, vector<1x8x1024xf32>
    %97 = vector.shape_cast %96 : vector<1x8x1024xf32> to vector<8x1024xf32>
    %c256 = arith.constant 256 : index
    %c0_102 = arith.constant 0 : index
    %98 = vector.load %arg8[%c256, %c0_102] : memref<288x1024xf32, #tpu.memory_space<vmem>>, vector<8x1024xf32>
    tpu.vector_store %arg8[%c256, %c0_102], %97 {strides = array<i32>} : memref<288x1024xf32, #tpu.memory_space<vmem>>, vector<8x1024xf32>,
    %c0_103 = arith.constant 0 : index
    %c0_104 = arith.constant 0 : index
    %c173 = arith.constant 173 : index
    %99 = vector.load %arg1[%c0_103, %c0_104, %c173] : memref<1x8x1224xf32, #tpu.memory_space<vmem>>, vector<1x8x1024xf32>
    %100 = vector.shape_cast %99 : vector<1x8x1024xf32> to vector<8x1024xf32>
    %c264 = arith.constant 264 : index
    %c0_105 = arith.constant 0 : index
    %101 = vector.load %arg8[%c264, %c0_105] : memref<288x1024xf32, #tpu.memory_space<vmem>>, vector<8x1024xf32>
    tpu.vector_store %arg8[%c264, %c0_105], %100 {strides = array<i32>} : memref<288x1024xf32, #tpu.memory_space<vmem>>, vector<8x1024xf32>,
    %c0_106 = arith.constant 0 : index
    %c0_107 = arith.constant 0 : index
    %c174 = arith.constant 174 : index
    %102 = vector.load %arg1[%c0_106, %c0_107, %c174] : memref<1x8x1224xf32, #tpu.memory_space<vmem>>, vector<1x8x1024xf32>
    %103 = vector.shape_cast %102 : vector<1x8x1024xf32> to vector<8x1024xf32>
    %c272 = arith.constant 272 : index
    %c0_108 = arith.constant 0 : index
    %104 = vector.load %arg8[%c272, %c0_108] : memref<288x1024xf32, #tpu.memory_space<vmem>>, vector<8x1024xf32>
    tpu.vector_store %arg8[%c272, %c0_108], %103 {strides = array<i32>} : memref<288x1024xf32, #tpu.memory_space<vmem>>, vector<8x1024xf32>,
    %c0_109 = arith.constant 0 : index
    %c0_110 = arith.constant 0 : index
    %c175 = arith.constant 175 : index
    %105 = vector.load %arg1[%c0_109, %c0_110, %c175] : memref<1x8x1224xf32, #tpu.memory_space<vmem>>, vector<1x8x1024xf32>
    %106 = vector.shape_cast %105 : vector<1x8x1024xf32> to vector<8x1024xf32>
    %c280 = arith.constant 280 : index
    %c0_111 = arith.constant 0 : index
    %107 = vector.load %arg8[%c280, %c0_111] : memref<288x1024xf32, #tpu.memory_space<vmem>>, vector<8x1024xf32>
    tpu.vector_store %arg8[%c280, %c0_111], %106 {strides = array<i32>} : memref<288x1024xf32, #tpu.memory_space<vmem>>, vector<8x1024xf32>,
    %c0_112 = arith.constant 0 : index
    %c0_113 = arith.constant 0 : index
    %108 = vector.load %arg2[%c0_112, %c0_113] : memref<16x288xf32, #tpu.memory_space<vmem>>, vector<16x288xf32>
    %c0_114 = arith.constant 0 : index
    %c0_115 = arith.constant 0 : index
    %109 = vector.load %arg8[%c0_114, %c0_115] : memref<288x1024xf32, #tpu.memory_space<vmem>>, vector<288x1024xf32>
    %cst = arith.constant dense<0.000000e+00> : vector<16x1024xf32>
    %110 = tpu.matmul %108, %109, %cst {dimension_numbers = #tpu.dot_dimension_numbers<[1], [0], [0], [1], [0, 0, 1, 1], [], []>} : vector<16x288xf32>, vector<288x1024xf32>, vector<16x1024xf32> -> vector<16x1024xf32>
    %c0_116 = arith.constant 0 : index
    %c0_117 = arith.constant 0 : index
    %111 = vector.load %arg3[%c0_116, %c0_117] : memref<16x1xf32, #tpu.memory_space<vmem>>, vector<16x1xf32>
    %112 = vector.broadcast %111 : vector<16x1xf32> to vector<16x1024xf32>
    %113 = arith.addf %110, %112 : vector<16x1024xf32>
    %cst_118 = arith.constant 0.000000e+00 : f32
    %114 = vector.broadcast %cst_118 : f32 to vector<16x1024xf32>
    %115 = arith.maximumf %113, %114 : vector<16x1024xf32>
    %c0_119 = arith.constant 0 : index
    %c0_120 = arith.constant 0 : index
    %116 = vector.load %arg6[%c0_119, %c0_120] : memref<1x1024xf32, #tpu.memory_space<vmem>>, vector<1x1024xf32>
    %117 = vector.broadcast %116 : vector<1x1024xf32> to vector<16x1024xf32>
    %118 = arith.mulf %115, %117 : vector<16x1024xf32>
    %cst_121 = arith.constant 0.000000e+00 : f32
    %119 = vector.broadcast %cst_121 : f32 to vector<16x128xf32>
    %c0_122 = arith.constant 0 : index
    %c0_123 = arith.constant 0 : index
    %120 = vector.load %arg9[%c0_122, %c0_123] : memref<16x1152xf32, #tpu.memory_space<vmem>>, vector<16x128xf32>
    tpu.vector_store %arg9[%c0_122, %c0_123], %119 {strides = array<i32>} : memref<16x1152xf32, #tpu.memory_space<vmem>>, vector<16x128xf32>,
    %c0_124 = arith.constant 0 : index
    %c1024 = arith.constant 1024 : index
    %121 = vector.load %arg9[%c0_124, %c1024] : memref<16x1152xf32, #tpu.memory_space<vmem>>, vector<16x128xf32>
    tpu.vector_store %arg9[%c0_124, %c1024], %119 {strides = array<i32>} : memref<16x1152xf32, #tpu.memory_space<vmem>>, vector<16x128xf32>,
    %c0_125 = arith.constant 0 : index
    %c35_126 = arith.constant 35 : index
    %122 = vector.load %arg9[%c0_125, %c35_126] : memref<16x1152xf32, #tpu.memory_space<vmem>>, vector<16x1024xf32>
    tpu.vector_store %arg9[%c0_125, %c35_126], %118 {strides = array<i32>} : memref<16x1152xf32, #tpu.memory_space<vmem>>, vector<16x1024xf32>,
    %c0_127 = arith.constant 0 : index
    %c0_128 = arith.constant 0 : index
    %123 = vector.load %arg9[%c0_127, %c0_128] : memref<16x1152xf32, #tpu.memory_space<vmem>>, vector<16x896xf32>
    %c0_129 = arith.constant 0 : index
    %c0_130 = arith.constant 0 : index
    %124 = vector.load %arg10[%c0_129, %c0_130] : memref<576x896xf32, #tpu.memory_space<vmem>>, vector<16x896xf32>
    tpu.vector_store %arg10[%c0_129, %c0_130], %123 {strides = array<i32>} : memref<576x896xf32, #tpu.memory_space<vmem>>, vector<16x896xf32>,
    %c0_131 = arith.constant 0 : index
    %c1_132 = arith.constant 1 : index
    %125 = vector.load %arg9[%c0_131, %c1_132] : memref<16x1152xf32, #tpu.memory_space<vmem>>, vector<16x896xf32>
    %c16_133 = arith.constant 16 : index
    %c0_134 = arith.constant 0 : index
    %126 = vector.load %arg10[%c16_133, %c0_134] : memref<576x896xf32, #tpu.memory_space<vmem>>, vector<16x896xf32>
    tpu.vector_store %arg10[%c16_133, %c0_134], %125 {strides = array<i32>} : memref<576x896xf32, #tpu.memory_space<vmem>>, vector<16x896xf32>,
    %c0_135 = arith.constant 0 : index
    %c2_136 = arith.constant 2 : index
    %127 = vector.load %arg9[%c0_135, %c2_136] : memref<16x1152xf32, #tpu.memory_space<vmem>>, vector<16x896xf32>
    %c32_137 = arith.constant 32 : index
    %c0_138 = arith.constant 0 : index
    %128 = vector.load %arg10[%c32_137, %c0_138] : memref<576x896xf32, #tpu.memory_space<vmem>>, vector<16x896xf32>
    tpu.vector_store %arg10[%c32_137, %c0_138], %127 {strides = array<i32>} : memref<576x896xf32, #tpu.memory_space<vmem>>, vector<16x896xf32>,
    %c0_139 = arith.constant 0 : index
    %c3_140 = arith.constant 3 : index
    %129 = vector.load %arg9[%c0_139, %c3_140] : memref<16x1152xf32, #tpu.memory_space<vmem>>, vector<16x896xf32>
    %c48_141 = arith.constant 48 : index
    %c0_142 = arith.constant 0 : index
    %130 = vector.load %arg10[%c48_141, %c0_142] : memref<576x896xf32, #tpu.memory_space<vmem>>, vector<16x896xf32>
    tpu.vector_store %arg10[%c48_141, %c0_142], %129 {strides = array<i32>} : memref<576x896xf32, #tpu.memory_space<vmem>>, vector<16x896xf32>,
    %c0_143 = arith.constant 0 : index
    %c4_144 = arith.constant 4 : index
    %131 = vector.load %arg9[%c0_143, %c4_144] : memref<16x1152xf32, #tpu.memory_space<vmem>>, vector<16x896xf32>
    %c64_145 = arith.constant 64 : index
    %c0_146 = arith.constant 0 : index
    %132 = vector.load %arg10[%c64_145, %c0_146] : memref<576x896xf32, #tpu.memory_space<vmem>>, vector<16x896xf32>
    tpu.vector_store %arg10[%c64_145, %c0_146], %131 {strides = array<i32>} : memref<576x896xf32, #tpu.memory_space<vmem>>, vector<16x896xf32>,
    %c0_147 = arith.constant 0 : index
    %c5_148 = arith.constant 5 : index
    %133 = vector.load %arg9[%c0_147, %c5_148] : memref<16x1152xf32, #tpu.memory_space<vmem>>, vector<16x896xf32>
    %c80_149 = arith.constant 80 : index
    %c0_150 = arith.constant 0 : index
    %134 = vector.load %arg10[%c80_149, %c0_150] : memref<576x896xf32, #tpu.memory_space<vmem>>, vector<16x896xf32>
    tpu.vector_store %arg10[%c80_149, %c0_150], %133 {strides = array<i32>} : memref<576x896xf32, #tpu.memory_space<vmem>>, vector<16x896xf32>,
    %c0_151 = arith.constant 0 : index
    %c34_152 = arith.constant 34 : index
    %135 = vector.load %arg9[%c0_151, %c34_152] : memref<16x1152xf32, #tpu.memory_space<vmem>>, vector<16x896xf32>
    %c96_153 = arith.constant 96 : index
    %c0_154 = arith.constant 0 : index
    %136 = vector.load %arg10[%c96_153, %c0_154] : memref<576x896xf32, #tpu.memory_space<vmem>>, vector<16x896xf32>
    tpu.vector_store %arg10[%c96_153, %c0_154], %135 {strides = array<i32>} : memref<576x896xf32, #tpu.memory_space<vmem>>, vector<16x896xf32>,
    %c0_155 = arith.constant 0 : index
    %c35_156 = arith.constant 35 : index
    %137 = vector.load %arg9[%c0_155, %c35_156] : memref<16x1152xf32, #tpu.memory_space<vmem>>, vector<16x896xf32>
    %c112_157 = arith.constant 112 : index
    %c0_158 = arith.constant 0 : index
    %138 = vector.load %arg10[%c112_157, %c0_158] : memref<576x896xf32, #tpu.memory_space<vmem>>, vector<16x896xf32>
    tpu.vector_store %arg10[%c112_157, %c0_158], %137 {strides = array<i32>} : memref<576x896xf32, #tpu.memory_space<vmem>>, vector<16x896xf32>,
    %c0_159 = arith.constant 0 : index
    %c36_160 = arith.constant 36 : index
    %139 = vector.load %arg9[%c0_159, %c36_160] : memref<16x1152xf32, #tpu.memory_space<vmem>>, vector<16x896xf32>
    %c128_161 = arith.constant 128 : index
    %c0_162 = arith.constant 0 : index
    %140 = vector.load %arg10[%c128_161, %c0_162] : memref<576x896xf32, #tpu.memory_space<vmem>>, vector<16x896xf32>
    tpu.vector_store %arg10[%c128_161, %c0_162], %139 {strides = array<i32>} : memref<576x896xf32, #tpu.memory_space<vmem>>, vector<16x896xf32>,
    %c0_163 = arith.constant 0 : index
    %c37_164 = arith.constant 37 : index
    %141 = vector.load %arg9[%c0_163, %c37_164] : memref<16x1152xf32, #tpu.memory_space<vmem>>, vector<16x896xf32>
    %c144_165 = arith.constant 144 : index
    %c0_166 = arith.constant 0 : index
    %142 = vector.load %arg10[%c144_165, %c0_166] : memref<576x896xf32, #tpu.memory_space<vmem>>, vector<16x896xf32>
    tpu.vector_store %arg10[%c144_165, %c0_166], %141 {strides = array<i32>} : memref<576x896xf32, #tpu.memory_space<vmem>>, vector<16x896xf32>,
    %c0_167 = arith.constant 0 : index
    %c38_168 = arith.constant 38 : index
    %143 = vector.load %arg9[%c0_167, %c38_168] : memref<16x1152xf32, #tpu.memory_space<vmem>>, vector<16x896xf32>
    %c160_169 = arith.constant 160 : index
    %c0_170 = arith.constant 0 : index
    %144 = vector.load %arg10[%c160_169, %c0_170] : memref<576x896xf32, #tpu.memory_space<vmem>>, vector<16x896xf32>
    tpu.vector_store %arg10[%c160_169, %c0_170], %143 {strides = array<i32>} : memref<576x896xf32, #tpu.memory_space<vmem>>, vector<16x896xf32>,
    %c0_171 = arith.constant 0 : index
    %c39_172 = arith.constant 39 : index
    %145 = vector.load %arg9[%c0_171, %c39_172] : memref<16x1152xf32, #tpu.memory_space<vmem>>, vector<16x896xf32>
    %c176_173 = arith.constant 176 : index
    %c0_174 = arith.constant 0 : index
    %146 = vector.load %arg10[%c176_173, %c0_174] : memref<576x896xf32, #tpu.memory_space<vmem>>, vector<16x896xf32>
    tpu.vector_store %arg10[%c176_173, %c0_174], %145 {strides = array<i32>} : memref<576x896xf32, #tpu.memory_space<vmem>>, vector<16x896xf32>,
    %c0_175 = arith.constant 0 : index
    %c68_176 = arith.constant 68 : index
    %147 = vector.load %arg9[%c0_175, %c68_176] : memref<16x1152xf32, #tpu.memory_space<vmem>>, vector<16x896xf32>
    %c192_177 = arith.constant 192 : index
    %c0_178 = arith.constant 0 : index
    %148 = vector.load %arg10[%c192_177, %c0_178] : memref<576x896xf32, #tpu.memory_space<vmem>>, vector<16x896xf32>
    tpu.vector_store %arg10[%c192_177, %c0_178], %147 {strides = array<i32>} : memref<576x896xf32, #tpu.memory_space<vmem>>, vector<16x896xf32>,
    %c0_179 = arith.constant 0 : index
    %c69_180 = arith.constant 69 : index
    %149 = vector.load %arg9[%c0_179, %c69_180] : memref<16x1152xf32, #tpu.memory_space<vmem>>, vector<16x896xf32>
    %c208_181 = arith.constant 208 : index
    %c0_182 = arith.constant 0 : index
    %150 = vector.load %arg10[%c208_181, %c0_182] : memref<576x896xf32, #tpu.memory_space<vmem>>, vector<16x896xf32>
    tpu.vector_store %arg10[%c208_181, %c0_182], %149 {strides = array<i32>} : memref<576x896xf32, #tpu.memory_space<vmem>>, vector<16x896xf32>,
    %c0_183 = arith.constant 0 : index
    %c70_184 = arith.constant 70 : index
    %151 = vector.load %arg9[%c0_183, %c70_184] : memref<16x1152xf32, #tpu.memory_space<vmem>>, vector<16x896xf32>
    %c224_185 = arith.constant 224 : index
    %c0_186 = arith.constant 0 : index
    %152 = vector.load %arg10[%c224_185, %c0_186] : memref<576x896xf32, #tpu.memory_space<vmem>>, vector<16x896xf32>
    tpu.vector_store %arg10[%c224_185, %c0_186], %151 {strides = array<i32>} : memref<576x896xf32, #tpu.memory_space<vmem>>, vector<16x896xf32>,
    %c0_187 = arith.constant 0 : index
    %c71_188 = arith.constant 71 : index
    %153 = vector.load %arg9[%c0_187, %c71_188] : memref<16x1152xf32, #tpu.memory_space<vmem>>, vector<16x896xf32>
    %c240_189 = arith.constant 240 : index
    %c0_190 = arith.constant 0 : index
    %154 = vector.load %arg10[%c240_189, %c0_190] : memref<576x896xf32, #tpu.memory_space<vmem>>, vector<16x896xf32>
    tpu.vector_store %arg10[%c240_189, %c0_190], %153 {strides = array<i32>} : memref<576x896xf32, #tpu.memory_space<vmem>>, vector<16x896xf32>,
    %c0_191 = arith.constant 0 : index
    %c72_192 = arith.constant 72 : index
    %155 = vector.load %arg9[%c0_191, %c72_192] : memref<16x1152xf32, #tpu.memory_space<vmem>>, vector<16x896xf32>
    %c256_193 = arith.constant 256 : index
    %c0_194 = arith.constant 0 : index
    %156 = vector.load %arg10[%c256_193, %c0_194] : memref<576x896xf32, #tpu.memory_space<vmem>>, vector<16x896xf32>
    tpu.vector_store %arg10[%c256_193, %c0_194], %155 {strides = array<i32>} : memref<576x896xf32, #tpu.memory_space<vmem>>, vector<16x896xf32>,
    %c0_195 = arith.constant 0 : index
    %c73_196 = arith.constant 73 : index
    %157 = vector.load %arg9[%c0_195, %c73_196] : memref<16x1152xf32, #tpu.memory_space<vmem>>, vector<16x896xf32>
    %c272_197 = arith.constant 272 : index
    %c0_198 = arith.constant 0 : index
    %158 = vector.load %arg10[%c272_197, %c0_198] : memref<576x896xf32, #tpu.memory_space<vmem>>, vector<16x896xf32>
    tpu.vector_store %arg10[%c272_197, %c0_198], %157 {strides = array<i32>} : memref<576x896xf32, #tpu.memory_space<vmem>>, vector<16x896xf32>,
    %c0_199 = arith.constant 0 : index
    %c102_200 = arith.constant 102 : index
    %159 = vector.load %arg9[%c0_199, %c102_200] : memref<16x1152xf32, #tpu.memory_space<vmem>>, vector<16x896xf32>
    %c288 = arith.constant 288 : index
    %c0_201 = arith.constant 0 : index
    %160 = vector.load %arg10[%c288, %c0_201] : memref<576x896xf32, #tpu.memory_space<vmem>>, vector<16x896xf32>
    tpu.vector_store %arg10[%c288, %c0_201], %159 {strides = array<i32>} : memref<576x896xf32, #tpu.memory_space<vmem>>, vector<16x896xf32>,
    %c0_202 = arith.constant 0 : index
    %c103_203 = arith.constant 103 : index
    %161 = vector.load %arg9[%c0_202, %c103_203] : memref<16x1152xf32, #tpu.memory_space<vmem>>, vector<16x896xf32>
    %c304 = arith.constant 304 : index
    %c0_204 = arith.constant 0 : index
    %162 = vector.load %arg10[%c304, %c0_204] : memref<576x896xf32, #tpu.memory_space<vmem>>, vector<16x896xf32>
    tpu.vector_store %arg10[%c304, %c0_204], %161 {strides = array<i32>} : memref<576x896xf32, #tpu.memory_space<vmem>>, vector<16x896xf32>,
    %c0_205 = arith.constant 0 : index
    %c104_206 = arith.constant 104 : index
    %163 = vector.load %arg9[%c0_205, %c104_206] : memref<16x1152xf32, #tpu.memory_space<vmem>>, vector<16x896xf32>
    %c320 = arith.constant 320 : index
    %c0_207 = arith.constant 0 : index
    %164 = vector.load %arg10[%c320, %c0_207] : memref<576x896xf32, #tpu.memory_space<vmem>>, vector<16x896xf32>
    tpu.vector_store %arg10[%c320, %c0_207], %163 {strides = array<i32>} : memref<576x896xf32, #tpu.memory_space<vmem>>, vector<16x896xf32>,
    %c0_208 = arith.constant 0 : index
    %c105_209 = arith.constant 105 : index
    %165 = vector.load %arg9[%c0_208, %c105_209] : memref<16x1152xf32, #tpu.memory_space<vmem>>, vector<16x896xf32>
    %c336 = arith.constant 336 : index
    %c0_210 = arith.constant 0 : index
    %166 = vector.load %arg10[%c336, %c0_210] : memref<576x896xf32, #tpu.memory_space<vmem>>, vector<16x896xf32>
    tpu.vector_store %arg10[%c336, %c0_210], %165 {strides = array<i32>} : memref<576x896xf32, #tpu.memory_space<vmem>>, vector<16x896xf32>,
    %c0_211 = arith.constant 0 : index
    %c106_212 = arith.constant 106 : index
    %167 = vector.load %arg9[%c0_211, %c106_212] : memref<16x1152xf32, #tpu.memory_space<vmem>>, vector<16x896xf32>
    %c352 = arith.constant 352 : index
    %c0_213 = arith.constant 0 : index
    %168 = vector.load %arg10[%c352, %c0_213] : memref<576x896xf32, #tpu.memory_space<vmem>>, vector<16x896xf32>
    tpu.vector_store %arg10[%c352, %c0_213], %167 {strides = array<i32>} : memref<576x896xf32, #tpu.memory_space<vmem>>, vector<16x896xf32>,
    %c0_214 = arith.constant 0 : index
    %c107_215 = arith.constant 107 : index
    %169 = vector.load %arg9[%c0_214, %c107_215] : memref<16x1152xf32, #tpu.memory_space<vmem>>, vector<16x896xf32>
    %c368 = arith.constant 368 : index
    %c0_216 = arith.constant 0 : index
    %170 = vector.load %arg10[%c368, %c0_216] : memref<576x896xf32, #tpu.memory_space<vmem>>, vector<16x896xf32>
    tpu.vector_store %arg10[%c368, %c0_216], %169 {strides = array<i32>} : memref<576x896xf32, #tpu.memory_space<vmem>>, vector<16x896xf32>,
    %c0_217 = arith.constant 0 : index
    %c136_218 = arith.constant 136 : index
    %171 = vector.load %arg9[%c0_217, %c136_218] : memref<16x1152xf32, #tpu.memory_space<vmem>>, vector<16x896xf32>
    %c384 = arith.constant 384 : index
    %c0_219 = arith.constant 0 : index
    %172 = vector.load %arg10[%c384, %c0_219] : memref<576x896xf32, #tpu.memory_space<vmem>>, vector<16x896xf32>
    tpu.vector_store %arg10[%c384, %c0_219], %171 {strides = array<i32>} : memref<576x896xf32, #tpu.memory_space<vmem>>, vector<16x896xf32>,
    %c0_220 = arith.constant 0 : index
    %c137_221 = arith.constant 137 : index
    %173 = vector.load %arg9[%c0_220, %c137_221] : memref<16x1152xf32, #tpu.memory_space<vmem>>, vector<16x896xf32>
    %c400 = arith.constant 400 : index
    %c0_222 = arith.constant 0 : index
    %174 = vector.load %arg10[%c400, %c0_222] : memref<576x896xf32, #tpu.memory_space<vmem>>, vector<16x896xf32>
    tpu.vector_store %arg10[%c400, %c0_222], %173 {strides = array<i32>} : memref<576x896xf32, #tpu.memory_space<vmem>>, vector<16x896xf32>,
    %c0_223 = arith.constant 0 : index
    %c138_224 = arith.constant 138 : index
    %175 = vector.load %arg9[%c0_223, %c138_224] : memref<16x1152xf32, #tpu.memory_space<vmem>>, vector<16x896xf32>
    %c416 = arith.constant 416 : index
    %c0_225 = arith.constant 0 : index
    %176 = vector.load %arg10[%c416, %c0_225] : memref<576x896xf32, #tpu.memory_space<vmem>>, vector<16x896xf32>
    tpu.vector_store %arg10[%c416, %c0_225], %175 {strides = array<i32>} : memref<576x896xf32, #tpu.memory_space<vmem>>, vector<16x896xf32>,
    %c0_226 = arith.constant 0 : index
    %c139_227 = arith.constant 139 : index
    %177 = vector.load %arg9[%c0_226, %c139_227] : memref<16x1152xf32, #tpu.memory_space<vmem>>, vector<16x896xf32>
    %c432 = arith.constant 432 : index
    %c0_228 = arith.constant 0 : index
    %178 = vector.load %arg10[%c432, %c0_228] : memref<576x896xf32, #tpu.memory_space<vmem>>, vector<16x896xf32>
    tpu.vector_store %arg10[%c432, %c0_228], %177 {strides = array<i32>} : memref<576x896xf32, #tpu.memory_space<vmem>>, vector<16x896xf32>,
    %c0_229 = arith.constant 0 : index
    %c140_230 = arith.constant 140 : index
    %179 = vector.load %arg9[%c0_229, %c140_230] : memref<16x1152xf32, #tpu.memory_space<vmem>>, vector<16x896xf32>
    %c448 = arith.constant 448 : index
    %c0_231 = arith.constant 0 : index
    %180 = vector.load %arg10[%c448, %c0_231] : memref<576x896xf32, #tpu.memory_space<vmem>>, vector<16x896xf32>
    tpu.vector_store %arg10[%c448, %c0_231], %179 {strides = array<i32>} : memref<576x896xf32, #tpu.memory_space<vmem>>, vector<16x896xf32>,
    %c0_232 = arith.constant 0 : index
    %c141_233 = arith.constant 141 : index
    %181 = vector.load %arg9[%c0_232, %c141_233] : memref<16x1152xf32, #tpu.memory_space<vmem>>, vector<16x896xf32>
    %c464 = arith.constant 464 : index
    %c0_234 = arith.constant 0 : index
    %182 = vector.load %arg10[%c464, %c0_234] : memref<576x896xf32, #tpu.memory_space<vmem>>, vector<16x896xf32>
    tpu.vector_store %arg10[%c464, %c0_234], %181 {strides = array<i32>} : memref<576x896xf32, #tpu.memory_space<vmem>>, vector<16x896xf32>,
    %c0_235 = arith.constant 0 : index
    %c170_236 = arith.constant 170 : index
    %183 = vector.load %arg9[%c0_235, %c170_236] : memref<16x1152xf32, #tpu.memory_space<vmem>>, vector<16x896xf32>
    %c480 = arith.constant 480 : index
    %c0_237 = arith.constant 0 : index
    %184 = vector.load %arg10[%c480, %c0_237] : memref<576x896xf32, #tpu.memory_space<vmem>>, vector<16x896xf32>
    tpu.vector_store %arg10[%c480, %c0_237], %183 {strides = array<i32>} : memref<576x896xf32, #tpu.memory_space<vmem>>, vector<16x896xf32>,
    %c0_238 = arith.constant 0 : index
    %c171_239 = arith.constant 171 : index
    %185 = vector.load %arg9[%c0_238, %c171_239] : memref<16x1152xf32, #tpu.memory_space<vmem>>, vector<16x896xf32>
    %c496 = arith.constant 496 : index
    %c0_240 = arith.constant 0 : index
    %186 = vector.load %arg10[%c496, %c0_240] : memref<576x896xf32, #tpu.memory_space<vmem>>, vector<16x896xf32>
    tpu.vector_store %arg10[%c496, %c0_240], %185 {strides = array<i32>} : memref<576x896xf32, #tpu.memory_space<vmem>>, vector<16x896xf32>,
    %c0_241 = arith.constant 0 : index
    %c172_242 = arith.constant 172 : index
    %187 = vector.load %arg9[%c0_241, %c172_242] : memref<16x1152xf32, #tpu.memory_space<vmem>>, vector<16x896xf32>
    %c512 = arith.constant 512 : index
    %c0_243 = arith.constant 0 : index
    %188 = vector.load %arg10[%c512, %c0_243] : memref<576x896xf32, #tpu.memory_space<vmem>>, vector<16x896xf32>
    tpu.vector_store %arg10[%c512, %c0_243], %187 {strides = array<i32>} : memref<576x896xf32, #tpu.memory_space<vmem>>, vector<16x896xf32>,
    %c0_244 = arith.constant 0 : index
    %c173_245 = arith.constant 173 : index
    %189 = vector.load %arg9[%c0_244, %c173_245] : memref<16x1152xf32, #tpu.memory_space<vmem>>, vector<16x896xf32>
    %c528 = arith.constant 528 : index
    %c0_246 = arith.constant 0 : index
    %190 = vector.load %arg10[%c528, %c0_246] : memref<576x896xf32, #tpu.memory_space<vmem>>, vector<16x896xf32>
    tpu.vector_store %arg10[%c528, %c0_246], %189 {strides = array<i32>} : memref<576x896xf32, #tpu.memory_space<vmem>>, vector<16x896xf32>,
    %c0_247 = arith.constant 0 : index
    %c174_248 = arith.constant 174 : index
    %191 = vector.load %arg9[%c0_247, %c174_248] : memref<16x1152xf32, #tpu.memory_space<vmem>>, vector<16x896xf32>
    %c544 = arith.constant 544 : index
    %c0_249 = arith.constant 0 : index
    %192 = vector.load %arg10[%c544, %c0_249] : memref<576x896xf32, #tpu.memory_space<vmem>>, vector<16x896xf32>
    tpu.vector_store %arg10[%c544, %c0_249], %191 {strides = array<i32>} : memref<576x896xf32, #tpu.memory_space<vmem>>, vector<16x896xf32>,
    %c0_250 = arith.constant 0 : index
    %c175_251 = arith.constant 175 : index
    %193 = vector.load %arg9[%c0_250, %c175_251] : memref<16x1152xf32, #tpu.memory_space<vmem>>, vector<16x896xf32>
    %c560 = arith.constant 560 : index
    %c0_252 = arith.constant 0 : index
    %194 = vector.load %arg10[%c560, %c0_252] : memref<576x896xf32, #tpu.memory_space<vmem>>, vector<16x896xf32>
    tpu.vector_store %arg10[%c560, %c0_252], %193 {strides = array<i32>} : memref<576x896xf32, #tpu.memory_space<vmem>>, vector<16x896xf32>,
    %c0_253 = arith.constant 0 : index
    %c0_254 = arith.constant 0 : index
    %195 = vector.load %arg4[%c0_253, %c0_254] : memref<16x576xf32, #tpu.memory_space<vmem>>, vector<16x576xf32>
    %c0_255 = arith.constant 0 : index
    %c0_256 = arith.constant 0 : index
    %196 = vector.load %arg10[%c0_255, %c0_256] : memref<576x896xf32, #tpu.memory_space<vmem>>, vector<576x896xf32>
    %cst_257 = arith.constant dense<0.000000e+00> : vector<16x896xf32>
    %197 = tpu.matmul %195, %196, %cst_257 {dimension_numbers = #tpu.dot_dimension_numbers<[1], [0], [0], [1], [0, 0, 1, 1], [], []>} : vector<16x576xf32>, vector<576x896xf32>, vector<16x896xf32> -> vector<16x896xf32>
    %c0_258 = arith.constant 0 : index
    %c0_259 = arith.constant 0 : index
    %198 = vector.load %arg5[%c0_258, %c0_259] : memref<16x1xf32, #tpu.memory_space<vmem>>, vector<16x1xf32>
    %199 = vector.broadcast %198 : vector<16x1xf32> to vector<16x896xf32>
    %200 = arith.addf %197, %199 : vector<16x896xf32>
    %cst_260 = arith.constant 0.000000e+00 : f32
    %201 = vector.broadcast %cst_260 : f32 to vector<16x896xf32>
    %202 = arith.maximumf %200, %201 : vector<16x896xf32>
    %c0_261 = arith.constant 0 : index
    %c0_262 = arith.constant 0 : index
    %c0_263 = arith.constant 0 : index
    %203 = vector.load %arg7[%c0_261, %c0_262, %c0_263] : memref<1x16x896xf32, #tpu.memory_space<vmem>>, vector<1x16x896xf32>
    %204 = vector.shape_cast %203 : vector<1x16x896xf32> to vector<16x896xf32>
    %205 = vector.shape_cast %202 : vector<16x896xf32> to vector<1x16x896xf32>
    tpu.vector_store %arg7[%c0_261, %c0_262, %c0_263], %205 {strides = array<i32>} : memref<1x16x896xf32, #tpu.memory_space<vmem>>, vector<1x16x896xf32>,
    return
  }
  func.func @transform_0(%arg0: i32) -> (i32, i32, i32) {
    %c0_i32 = arith.constant 0 : i32
    %c0_i32_0 = arith.constant 0 : i32
    %c0_i32_1 = arith.constant 0 : i32
    return %arg0, %c0_i32, %c0_i32_0 : i32, i32, i32
  }
  func.func @transform_1(%arg0: i32) -> (i32, i32) {
    %c0_i32 = arith.constant 0 : i32
    %c0_i32_0 = arith.constant 0 : i32
    %c0_i32_1 = arith.constant 0 : i32
    return %c0_i32, %c0_i32_0 : i32, i32
  }
  func.func @transform_2(%arg0: i32) -> (i32, i32) {
    %c0_i32 = arith.constant 0 : i32
    %c0_i32_0 = arith.constant 0 : i32
    %c0_i32_1 = arith.constant 0 : i32
    return %c0_i32, %c0_i32_0 : i32, i32
  }
  func.func @transform_3(%arg0: i32) -> (i32, i32) {
    %c0_i32 = arith.constant 0 : i32
    %c0_i32_0 = arith.constant 0 : i32
    %c0_i32_1 = arith.constant 0 : i32
    return %c0_i32, %c0_i32_0 : i32, i32
  }
  func.func @transform_4(%arg0: i32) -> (i32, i32) {
    %c0_i32 = arith.constant 0 : i32
    %c0_i32_0 = arith.constant 0 : i32
    %c0_i32_1 = arith.constant 0 : i32
    return %c0_i32, %c0_i32_0 : i32, i32
  }
  func.func @transform_5(%arg0: i32) -> (i32, i32) {
    %c0_i32 = arith.constant 0 : i32
    %c0_i32_0 = arith.constant 0 : i32
    %c0_i32_1 = arith.constant 0 : i32
    return %c0_i32, %c0_i32_0 : i32, i32
  }
  func.func @transform_6(%arg0: i32) -> (i32, i32, i32) {
    %c0_i32 = arith.constant 0 : i32
    %c0_i32_0 = arith.constant 0 : i32
    %c0_i32_1 = arith.constant 0 : i32
    return %arg0, %c0_i32, %c0_i32_0 : i32, i32, i32
  }
}

</mosaic_0001>

<llo_original>
// kernel: model_forward.1
$region0: #{model_forward.1}
  #allocation0 [shape = 'u32[]', space=smem, size = 0x4, offset = 0x4, fixed_abs, tag = 'smem constant byte address 0x4 - core index']
  #allocation1 [shape = 'u32[72,128]{1,0:T(1,128)}', space=vmem, size = 0x9000, scoped, tag = 'internal scratch']
  #allocation2 [shape = 'f32[288,1024]{1,0:T(8,128)}', space=vmem, size = 0x120000, scoped, tag = 'scratch operand']
  #allocation3 [shape = 'f32[16,1152]{1,0:T(8,128)}', space=vmem, size = 0x12000, scoped, tag = 'scratch operand']
  #allocation4 [shape = 'f32[576,896]{1,0:T(8,128)}', space=vmem, size = 0x1f8000, scoped, tag = 'scratch operand']
  %s0 = inlined_call_operand.vmem [shape: f32[1,8,1224], index: 0, kind: input, shape index: {}]
  %s1 = inlined_call_operand.vmem [shape: f32[16,288], index: 1, kind: input, shape index: {}]
  %s2 = inlined_call_operand.vmem [shape: f32[16,1], index: 2, kind: input, shape index: {}]
  %s3 = inlined_call_operand.vmem [shape: f32[16,576], index: 3, kind: input, shape index: {}]
  %s4 = inlined_call_operand.vmem [shape: f32[16,1], index: 4, kind: input, shape index: {}]
  %s5 = inlined_call_operand.vmem [shape: f32[1,1024], index: 5, kind: input, shape index: {}]
  %s6 = inlined_call_operand.vmem [shape: f32[1,16,896], index: 6, kind: output, shape index: {}]
  %s7 = sld [smem:[#allocation0]]
  $region34: #{model_forward.1} parent=0
    _
  %s9 = ssub.s32 1, %s7
  %s10 = scalar_select 0, %s9, %s7
  // Predicated region
  $region2: #{model_forward.1} parent=0 // pred_check
    _
  $region3: #{model_forward.1} parent=0 // pred_check_branch
    %12 = sbr.rel (0) target = $region5
  $region4: #{model_forward.1} parent=0 // pred_region
    _
  $region5: #{model_forward.1} parent=0 // pred_fallthru
    _
  // Predicated region
  $region6: #{model_forward.1} parent=0 // pred_check
    _
  $region7: #{model_forward.1} parent=0 // pred_check_branch
    %14 = sbr.rel (0) target = $region9
  $region8: #{model_forward.1} parent=0 // pred_region
    _
  $region9: #{model_forward.1} parent=0 // pred_fallthru
    _
  // Predicated region
  $region10: #{model_forward.1} parent=0 // pred_check
    _
  $region11: #{model_forward.1} parent=0 // pred_check_branch
    %16 = sbr.rel (0) target = $region13
  $region12: #{model_forward.1} parent=0 // pred_region
    _
  $region13: #{model_forward.1} parent=0 // pred_fallthru
    _
  // Predicated region
  $region14: #{model_forward.1} parent=0 // pred_check
    _
  $region15: #{model_forward.1} parent=0 // pred_check_branch
    %18 = sbr.rel (0) target = $region17
  $region16: #{model_forward.1} parent=0 // pred_region
    _
  $region17: #{model_forward.1} parent=0 // pred_fallthru
    _
  // Predicated region
  $region18: #{model_forward.1} parent=0 // pred_check
    _
  $region19: #{model_forward.1} parent=0 // pred_check_branch
    %20 = sbr.rel (0) target = $region21
  $region20: #{model_forward.1} parent=0 // pred_region
    _
  $region21: #{model_forward.1} parent=0 // pred_fallthru
    _
  // Predicated region
  $region22: #{model_forward.1} parent=0 // pred_check
    _
  $region23: #{model_forward.1} parent=0 // pred_check_branch
    %22 = sbr.rel (0) target = $region25
  $region24: #{model_forward.1} parent=0 // pred_region
    _
  $region25: #{model_forward.1} parent=0 // pred_fallthru
    _
  %v23 = vld [vmem:[%s0] sm:$0xff]
  %v24 = vld [vmem:[%s0 + $0x8] sm:$0xff]
  %v25 = vld [vmem:[%s0 + $0x10] sm:$0xff]
  %v26 = vld [vmem:[%s0 + $0x18] sm:$0xff]
  %v27 = vld [vmem:[%s0 + $0x20] sm:$0xff]
  %v28 = vld [vmem:[%s0 + $0x28] sm:$0xff]
  %v29 = vld [vmem:[%s0 + $0x30] sm:$0xff]
  %v30 = vld [vmem:[%s0 + $0x38] sm:$0xff]
  %31 = vst [vmem:[#allocation2] sm:$0xff] %v23
  %32 = vst [vmem:[#allocation2 + $0x8] sm:$0xff] %v24
  %33 = vst [vmem:[#allocation2 + $0x10] sm:$0xff] %v25
  %34 = vst [vmem:[#allocation2 + $0x18] sm:$0xff] %v26
  %35 = vst [vmem:[#allocation2 + $0x20] sm:$0xff] %v27
  %36 = vst [vmem:[#allocation2 + $0x28] sm:$0xff] %v28
  %37 = vst [vmem:[#allocation2 + $0x30] sm:$0xff] %v29
  %38 = vst [vmem:[#allocation2 + $0x38] sm:$0xff] %v30
  %v39 = vld [vmem:[%s0] sm:$0xff]
  %v40 = vld [vmem:[%s0 + $0x8] sm:$0xff]
  %v41 = vld [vmem:[%s0 + $0x10] sm:$0xff]
  %v42 = vld [vmem:[%s0 + $0x18] sm:$0xff]
  %v43 = vld [vmem:[%s0 + $0x20] sm:$0xff]
  %v44 = vld [vmem:[%s0 + $0x28] sm:$0xff]
  %v45 = vld [vmem:[%s0 + $0x30] sm:$0xff]
  %v46 = vld [vmem:[%s0 + $0x38] sm:$0xff]
  %v47 = vld [vmem:[%s0 + $0x40] sm:$0xff]
  %57 = vrot.lane.b32.xlu0 %v39, 127
  %v58 = vpop.permute.xlu0 %57
  %59 = vrot.lane.b32.xlu0 %v40, 127
  %v60 = vpop.permute.xlu0 %59
  %61 = vrot.lane.b32.xlu0 %v41, 127
  %v62 = vpop.permute.xlu0 %61
  %63 = vrot.lane.b32.xlu0 %v42, 127
  %v64 = vpop.permute.xlu0 %63
  %65 = vrot.lane.b32.xlu0 %v43, 127
  %v66 = vpop.permute.xlu0 %65
  %67 = vrot.lane.b32.xlu0 %v44, 127
  %v68 = vpop.permute.xlu0 %67
  %69 = vrot.lane.b32.xlu0 %v45, 127
  %v70 = vpop.permute.xlu0 %69
  %71 = vrot.lane.b32.xlu0 %v46, 127
  %v72 = vpop.permute.xlu0 %71
  %73 = vrot.lane.b32.xlu0 %v47, 127
  %v74 = vpop.permute.xlu0 %73
  %vm75 = vcmask 1039360
  %v76 = vsel %vm75, %v58, %v60
  %v77 = vsel %vm75, %v60, %v62
  %v78 = vsel %vm75, %v62, %v64
  %v79 = vsel %vm75, %v64, %v66
  %v80 = vsel %vm75, %v66, %v68
  %v81 = vsel %vm75, %v68, %v70
  %v82 = vsel %vm75, %v70, %v72
  %v83 = vsel %vm75, %v72, %v74
  %92 = vst [vmem:[#allocation2 + $0x40] sm:$0xff] %v76
  %93 = vst [vmem:[#allocation2 + $0x48] sm:$0xff] %v77
  %94 = vst [vmem:[#allocation2 + $0x50] sm:$0xff] %v78
  %95 = vst [vmem:[#allocation2 + $0x58] sm:$0xff] %v79
  %96 = vst [vmem:[#allocation2 + $0x60] sm:$0xff] %v80
  %97 = vst [vmem:[#allocation2 + $0x68] sm:$0xff] %v81
  %98 = vst [vmem:[#allocation2 + $0x70] sm:$0xff] %v82
  %99 = vst [vmem:[#allocation2 + $0x78] sm:$0xff] %v83
  %v100 = vld [vmem:[%s0] sm:$0xff]
  %v101 = vld [vmem:[%s0 + $0x8] sm:$0xff]
  %v102 = vld [vmem:[%s0 + $0x10] sm:$0xff]
  %v103 = vld [vmem:[%s0 + $0x18] sm:$0xff]
  %v104 = vld [vmem:[%s0 + $0x20] sm:$0xff]
  %v105 = vld [vmem:[%s0 + $0x28] sm:$0xff]
  %v106 = vld [vmem:[%s0 + $0x30] sm:$0xff]
  %v107 = vld [vmem:[%s0 + $0x38] sm:$0xff]
  %v108 = vld [vmem:[%s0 + $0x40] sm:$0xff]
  %118 = vrot.lane.b32.xlu0 %v100, 126
  %v119 = vpop.permute.xlu0 %118
  %120 = vrot.lane.b32.xlu0 %v101, 126
  %v121 = vpop.permute.xlu0 %120
  %122 = vrot.lane.b32.xlu0 %v102, 126
  %v123 = vpop.permute.xlu0 %122
  %124 = vrot.lane.b32.xlu0 %v103, 126
  %v125 = vpop.permute.xlu0 %124
  %126 = vrot.lane.b32.xlu0 %v104, 126
  %v127 = vpop.permute.xlu0 %126
  %128 = vrot.lane.b32.xlu0 %v105, 126
  %v129 = vpop.permute.xlu0 %128
  %130 = vrot.lane.b32.xlu0 %v106, 126
  %v131 = vpop.permute.xlu0 %130
  %132 = vrot.lane.b32.xlu0 %v107, 126
  %v133 = vpop.permute.xlu0 %132
  %134 = vrot.lane.b32.xlu0 %v108, 126
  %v135 = vpop.permute.xlu0 %134
  %vm136 = vcmask 1031168
  %v137 = vsel %vm136, %v119, %v121
  %v138 = vsel %vm136, %v121, %v123
  %v139 = vsel %vm136, %v123, %v125
  %v140 = vsel %vm136, %v125, %v127
  %v141 = vsel %vm136, %v127, %v129
  %v142 = vsel %vm136, %v129, %v131
  %v143 = vsel %vm136, %v131, %v133
  %v144 = vsel %vm136, %v133, %v135
  %153 = vst [vmem:[#allocation2 + $0x80] sm:$0xff] %v137
  %154 = vst [vmem:[#allocation2 + $0x88] sm:$0xff] %v138
  %155 = vst [vmem:[#allocation2 + $0x90] sm:$0xff] %v139
  %156 = vst [vmem:[#allocation2 + $0x98] sm:$0xff] %v140
  %157 = vst [vmem:[#allocation2 + $0xa0] sm:$0xff] %v141
  %158 = vst [vmem:[#allocation2 + $0xa8] sm:$0xff] %v142
  %159 = vst [vmem:[#allocation2 + $0xb0] sm:$0xff] %v143
  %160 = vst [vmem:[#allocation2 + $0xb8] sm:$0xff] %v144
  %v161 = vld [vmem:[%s0] sm:$0xff]
  %v162 = vld [vmem:[%s0 + $0x8] sm:$0xff]
  %v163 = vld [vmem:[%s0 + $0x10] sm:$0xff]
  %v164 = vld [vmem:[%s0 + $0x18] sm:$0xff]
  %v165 = vld [vmem:[%s0 + $0x20] sm:$0xff]
  %v166 = vld [vmem:[%s0 + $0x28] sm:$0xff]
  %v167 = vld [vmem:[%s0 + $0x30] sm:$0xff]
  %v168 = vld [vmem:[%s0 + $0x38] sm:$0xff]
  %v169 = vld [vmem:[%s0 + $0x40] sm:$0xff]
  %179 = vrot.lane.b32.xlu0 %v161, 125
  %v180 = vpop.permute.xlu0 %179
  %181 = vrot.lane.b32.xlu0 %v162, 125
  %v182 = vpop.permute.xlu0 %181
  %183 = vrot.lane.b32.xlu0 %v163, 125
  %v184 = vpop.permute.xlu0 %183
  %185 = vrot.lane.b32.xlu0 %v164, 125
  %v186 = vpop.permute.xlu0 %185
  %187 = vrot.lane.b32.xlu0 %v165, 125
  %v188 = vpop.permute.xlu0 %187
  %189 = vrot.lane.b32.xlu0 %v166, 125
  %v190 = vpop.permute.xlu0 %189
  %191 = vrot.lane.b32.xlu0 %v167, 125
  %v192 = vpop.permute.xlu0 %191
  %193 = vrot.lane.b32.xlu0 %v168, 125
  %v194 = vpop.permute.xlu0 %193
  %195 = vrot.lane.b32.xlu0 %v169, 125
  %v196 = vpop.permute.xlu0 %195
  %vm197 = vcmask 1022976
  %v198 = vsel %vm197, %v180, %v182
  %v199 = vsel %vm197, %v182, %v184
  %v200 = vsel %vm197, %v184, %v186
  %v201 = vsel %vm197, %v186, %v188
  %v202 = vsel %vm197, %v188, %v190
  %v203 = vsel %vm197, %v190, %v192
  %v204 = vsel %vm197, %v192, %v194
  %v205 = vsel %vm197, %v194, %v196
  %214 = vst [vmem:[#allocation2 + $0xc0] sm:$0xff] %v198
  %215 = vst [vmem:[#allocation2 + $0xc8] sm:$0xff] %v199
  %216 = vst [vmem:[#allocation2 + $0xd0] sm:$0xff] %v200
  %217 = vst [vmem:[#allocation2 + $0xd8] sm:$0xff] %v201
  %218 = vst [vmem:[#allocation2 + $0xe0] sm:$0xff] %v202
  %219 = vst [vmem:[#allocation2 + $0xe8] sm:$0xff] %v203
  %220 = vst [vmem:[#allocation2 + $0xf0] sm:$0xff] %v204
  %221 = vst [vmem:[#allocation2 + $0xf8] sm:$0xff] %v205
  %v222 = vld [vmem:[%s0] sm:$0xff]
  %v223 = vld [vmem:[%s0 + $0x8] sm:$0xff]
  %v224 = vld [vmem:[%s0 + $0x10] sm:$0xff]
  %v225 = vld [vmem:[%s0 + $0x18] sm:$0xff]
  %v226 = vld [vmem:[%s0 + $0x20] sm:$0xff]
  %v227 = vld [vmem:[%s0 + $0x28] sm:$0xff]
  %v228 = vld [vmem:[%s0 + $0x30] sm:$0xff]
  %v229 = vld [vmem:[%s0 + $0x38] sm:$0xff]
  %v230 = vld [vmem:[%s0 + $0x40] sm:$0xff]
  %240 = vrot.lane.b32.xlu0 %v222, 124
  %v241 = vpop.permute.xlu0 %240
  %242 = vrot.lane.b32.xlu0 %v223, 124
  %v243 = vpop.permute.xlu0 %242
  %244 = vrot.lane.b32.xlu0 %v224, 124
  %v245 = vpop.permute.xlu0 %244
  %246 = vrot.lane.b32.xlu0 %v225, 124
  %v247 = vpop.permute.xlu0 %246
  %248 = vrot.lane.b32.xlu0 %v226, 124
  %v249 = vpop.permute.xlu0 %248
  %250 = vrot.lane.b32.xlu0 %v227, 124
  %v251 = vpop.permute.xlu0 %250
  %252 = vrot.lane.b32.xlu0 %v228, 124
  %v253 = vpop.permute.xlu0 %252
  %254 = vrot.lane.b32.xlu0 %v229, 124
  %v255 = vpop.permute.xlu0 %254
  %256 = vrot.lane.b32.xlu0 %v230, 124
  %v257 = vpop.permute.xlu0 %256
  %vm258 = vcmask 1014784
  %v259 = vsel %vm258, %v241, %v243
  %v260 = vsel %vm258, %v243, %v245
  %v261 = vsel %vm258, %v245, %v247
  %v262 = vsel %vm258, %v247, %v249
  %v263 = vsel %vm258, %v249, %v251
  %v264 = vsel %vm258, %v251, %v253
  %v265 = vsel %vm258, %v253, %v255
  %v266 = vsel %vm258, %v255, %v257
  %275 = vst [vmem:[#allocation2 + $0x100] sm:$0xff] %v259
  %276 = vst [vmem:[#allocation2 + $0x108] sm:$0xff] %v260
  %277 = vst [vmem:[#allocation2 + $0x110] sm:$0xff] %v261
  %278 = vst [vmem:[#allocation2 + $0x118] sm:$0xff] %v262
  %279 = vst [vmem:[#allocation2 + $0x120] sm:$0xff] %v263
  %280 = vst [vmem:[#allocation2 + $0x128] sm:$0xff] %v264
  %281 = vst [vmem:[#allocation2 + $0x130] sm:$0xff] %v265
  %282 = vst [vmem:[#allocation2 + $0x138] sm:$0xff] %v266
  %v283 = vld [vmem:[%s0] sm:$0xff]
  %v284 = vld [vmem:[%s0 + $0x8] sm:$0xff]
  %v285 = vld [vmem:[%s0 + $0x10] sm:$0xff]
  %v286 = vld [vmem:[%s0 + $0x18] sm:$0xff]
  %v287 = vld [vmem:[%s0 + $0x20] sm:$0xff]
  %v288 = vld [vmem:[%s0 + $0x28] sm:$0xff]
  %v289 = vld [vmem:[%s0 + $0x30] sm:$0xff]
  %v290 = vld [vmem:[%s0 + $0x38] sm:$0xff]
  %v291 = vld [vmem:[%s0 + $0x40] sm:$0xff]
  %301 = vrot.lane.b32.xlu0 %v283, 123
  %v302 = vpop.permute.xlu0 %301
  %303 = vrot.lane.b32.xlu0 %v284, 123
  %v304 = vpop.permute.xlu0 %303
  %305 = vrot.lane.b32.xlu0 %v285, 123
  %v306 = vpop.permute.xlu0 %305
  %307 = vrot.lane.b32.xlu0 %v286, 123
  %v308 = vpop.permute.xlu0 %307
  %309 = vrot.lane.b32.xlu0 %v287, 123
  %v310 = vpop.permute.xlu0 %309
  %311 = vrot.lane.b32.xlu0 %v288, 123
  %v312 = vpop.permute.xlu0 %311
  %313 = vrot.lane.b32.xlu0 %v289, 123
  %v314 = vpop.permute.xlu0 %313
  %315 = vrot.lane.b32.xlu0 %v290, 123
  %v316 = vpop.permute.xlu0 %315
  %317 = vrot.lane.b32.xlu0 %v291, 123
  %v318 = vpop.permute.xlu0 %317
  %vm319 = vcmask 1006592
  %v320 = vsel %vm319, %v302, %v304
  %v321 = vsel %vm319, %v304, %v306
  %v322 = vsel %vm319, %v306, %v308
  %v323 = vsel %vm319, %v308, %v310
  %v324 = vsel %vm319, %v310, %v312
  %v325 = vsel %vm319, %v312, %v314
  %v326 = vsel %vm319, %v314, %v316
  %v327 = vsel %vm319, %v316, %v318
  %336 = vst [vmem:[#allocation2 + $0x140] sm:$0xff] %v320
  %337 = vst [vmem:[#allocation2 + $0x148] sm:$0xff] %v321
  %338 = vst [vmem:[#allocation2 + $0x150] sm:$0xff] %v322
  %339 = vst [vmem:[#allocation2 + $0x158] sm:$0xff] %v323
  %340 = vst [vmem:[#allocation2 + $0x160] sm:$0xff] %v324
  %341 = vst [vmem:[#allocation2 + $0x168] sm:$0xff] %v325
  %342 = vst [vmem:[#allocation2 + $0x170] sm:$0xff] %v326
  %343 = vst [vmem:[#allocation2 + $0x178] sm:$0xff] %v327
  %v344 = vld [vmem:[%s0] sm:$0xff]
  %v345 = vld [vmem:[%s0 + $0x8] sm:$0xff]
  %v346 = vld [vmem:[%s0 + $0x10] sm:$0xff]
  %v347 = vld [vmem:[%s0 + $0x18] sm:$0xff]
  %v348 = vld [vmem:[%s0 + $0x20] sm:$0xff]
  %v349 = vld [vmem:[%s0 + $0x28] sm:$0xff]
  %v350 = vld [vmem:[%s0 + $0x30] sm:$0xff]
  %v351 = vld [vmem:[%s0 + $0x38] sm:$0xff]
  %v352 = vld [vmem:[%s0 + $0x40] sm:$0xff]
  %362 = vrot.lane.b32.xlu0 %v344, 94
  %v363 = vpop.permute.xlu0 %362
  %364 = vrot.lane.b32.xlu0 %v345, 94
  %v365 = vpop.permute.xlu0 %364
  %366 = vrot.lane.b32.xlu0 %v346, 94
  %v367 = vpop.permute.xlu0 %366
  %368 = vrot.lane.b32.xlu0 %v347, 94
  %v369 = vpop.permute.xlu0 %368
  %370 = vrot.lane.b32.xlu0 %v348, 94
  %v371 = vpop.permute.xlu0 %370
  %372 = vrot.lane.b32.xlu0 %v349, 94
  %v373 = vpop.permute.xlu0 %372
  %374 = vrot.lane.b32.xlu0 %v350, 94
  %v375 = vpop.permute.xlu0 %374
  %376 = vrot.lane.b32.xlu0 %v351, 94
  %v377 = vpop.permute.xlu0 %376
  %378 = vrot.lane.b32.xlu0 %v352, 94
  %v379 = vpop.permute.xlu0 %378
  %vm380 = vcmask 769024
  %v381 = vsel %vm380, %v363, %v365
  %v382 = vsel %vm380, %v365, %v367
  %v383 = vsel %vm380, %v367, %v369
  %v384 = vsel %vm380, %v369, %v371
  %v385 = vsel %vm380, %v371, %v373
  %v386 = vsel %vm380, %v373, %v375
  %v387 = vsel %vm380, %v375, %v377
  %v388 = vsel %vm380, %v377, %v379
  %397 = vst [vmem:[#allocation2 + $0x180] sm:$0xff] %v381
  %398 = vst [vmem:[#allocation2 + $0x188] sm:$0xff] %v382
  %399 = vst [vmem:[#allocation2 + $0x190] sm:$0xff] %v383
  %400 = vst [vmem:[#allocation2 + $0x198] sm:$0xff] %v384
  %401 = vst [vmem:[#allocation2 + $0x1a0] sm:$0xff] %v385
  %402 = vst [vmem:[#allocation2 + $0x1a8] sm:$0xff] %v386
  %403 = vst [vmem:[#allocation2 + $0x1b0] sm:$0xff] %v387
  %404 = vst [vmem:[#allocation2 + $0x1b8] sm:$0xff] %v388
  %v405 = vld [vmem:[%s0] sm:$0xff]
  %v406 = vld [vmem:[%s0 + $0x8] sm:$0xff]
  %v407 = vld [vmem:[%s0 + $0x10] sm:$0xff]
  %v408 = vld [vmem:[%s0 + $0x18] sm:$0xff]
  %v409 = vld [vmem:[%s0 + $0x20] sm:$0xff]
  %v410 = vld [vmem:[%s0 + $0x28] sm:$0xff]
  %v411 = vld [vmem:[%s0 + $0x30] sm:$0xff]
  %v412 = vld [vmem:[%s0 + $0x38] sm:$0xff]
  %v413 = vld [vmem:[%s0 + $0x40] sm:$0xff]
  %423 = vrot.lane.b32.xlu0 %v405, 93
  %v424 = vpop.permute.xlu0 %423
  %425 = vrot.lane.b32.xlu0 %v406, 93
  %v426 = vpop.permute.xlu0 %425
  %427 = vrot.lane.b32.xlu0 %v407, 93
  %v428 = vpop.permute.xlu0 %427
  %429 = vrot.lane.b32.xlu0 %v408, 93
  %v430 = vpop.permute.xlu0 %429
  %431 = vrot.lane.b32.xlu0 %v409, 93
  %v432 = vpop.permute.xlu0 %431
  %433 = vrot.lane.b32.xlu0 %v410, 93
  %v434 = vpop.permute.xlu0 %433
  %435 = vrot.lane.b32.xlu0 %v411, 93
  %v436 = vpop.permute.xlu0 %435
  %437 = vrot.lane.b32.xlu0 %v412, 93
  %v438 = vpop.permute.xlu0 %437
  %439 = vrot.lane.b32.xlu0 %v413, 93
  %v440 = vpop.permute.xlu0 %439
  %vm441 = vcmask 760832
  %v442 = vsel %vm441, %v424, %v426
  %v443 = vsel %vm441, %v426, %v428
  %v444 = vsel %vm441, %v428, %v430
  %v445 = vsel %vm441, %v430, %v432
  %v446 = vsel %vm441, %v432, %v434
  %v447 = vsel %vm441, %v434, %v436
  %v448 = vsel %vm441, %v436, %v438
  %v449 = vsel %vm441, %v438, %v440
  %458 = vst [vmem:[#allocation2 + $0x1c0] sm:$0xff] %v442
  %459 = vst [vmem:[#allocation2 + $0x1c8] sm:$0xff] %v443
  %460 = vst [vmem:[#allocation2 + $0x1d0] sm:$0xff] %v444
  %461 = vst [vmem:[#allocation2 + $0x1d8] sm:$0xff] %v445
  %462 = vst [vmem:[#allocation2 + $0x1e0] sm:$0xff] %v446
  %463 = vst [vmem:[#allocation2 + $0x1e8] sm:$0xff] %v447
  %464 = vst [vmem:[#allocation2 + $0x1f0] sm:$0xff] %v448
  %465 = vst [vmem:[#allocation2 + $0x1f8] sm:$0xff] %v449
  %v466 = vld [vmem:[%s0] sm:$0xff]
  %v467 = vld [vmem:[%s0 + $0x8] sm:$0xff]
  %v468 = vld [vmem:[%s0 + $0x10] sm:$0xff]
  %v469 = vld [vmem:[%s0 + $0x18] sm:$0xff]
  %v470 = vld [vmem:[%s0 + $0x20] sm:$0xff]
  %v471 = vld [vmem:[%s0 + $0x28] sm:$0xff]
  %v472 = vld [vmem:[%s0 + $0x30] sm:$0xff]
  %v473 = vld [vmem:[%s0 + $0x38] sm:$0xff]
  %v474 = vld [vmem:[%s0 + $0x40] sm:$0xff]
  %484 = vrot.lane.b32.xlu0 %v466, 92
  %v485 = vpop.permute.xlu0 %484
  %486 = vrot.lane.b32.xlu0 %v467, 92
  %v487 = vpop.permute.xlu0 %486
  %488 = vrot.lane.b32.xlu0 %v468, 92
  %v489 = vpop.permute.xlu0 %488
  %490 = vrot.lane.b32.xlu0 %v469, 92
  %v491 = vpop.permute.xlu0 %490
  %492 = vrot.lane.b32.xlu0 %v470, 92
  %v493 = vpop.permute.xlu0 %492
  %494 = vrot.lane.b32.xlu0 %v471, 92
  %v495 = vpop.permute.xlu0 %494
  %496 = vrot.lane.b32.xlu0 %v472, 92
  %v497 = vpop.permute.xlu0 %496
  %498 = vrot.lane.b32.xlu0 %v473, 92
  %v499 = vpop.permute.xlu0 %498
  %500 = vrot.lane.b32.xlu0 %v474, 92
  %v501 = vpop.permute.xlu0 %500
  %vm502 = vcmask 752640
  %v503 = vsel %vm502, %v485, %v487
  %v504 = vsel %vm502, %v487, %v489
  %v505 = vsel %vm502, %v489, %v491
  %v506 = vsel %vm502, %v491, %v493
  %v507 = vsel %vm502, %v493, %v495
  %v508 = vsel %vm502, %v495, %v497
  %v509 = vsel %vm502, %v497, %v499
  %v510 = vsel %vm502, %v499, %v501
  %519 = vst [vmem:[#allocation2 + $0x200] sm:$0xff] %v503
  %520 = vst [vmem:[#allocation2 + $0x208] sm:$0xff] %v504
  %521 = vst [vmem:[#allocation2 + $0x210] sm:$0xff] %v505
  %522 = vst [vmem:[#allocation2 + $0x218] sm:$0xff] %v506
  %523 = vst [vmem:[#allocation2 + $0x220] sm:$0xff] %v507
  %524 = vst [vmem:[#allocation2 + $0x228] sm:$0xff] %v508
  %525 = vst [vmem:[#allocation2 + $0x230] sm:$0xff] %v509
  %526 = vst [vmem:[#allocation2 + $0x238] sm:$0xff] %v510
  %v527 = vld [vmem:[%s0] sm:$0xff]
  %v528 = vld [vmem:[%s0 + $0x8] sm:$0xff]
  %v529 = vld [vmem:[%s0 + $0x10] sm:$0xff]
  %v530 = vld [vmem:[%s0 + $0x18] sm:$0xff]
  %v531 = vld [vmem:[%s0 + $0x20] sm:$0xff]
  %v532 = vld [vmem:[%s0 + $0x28] sm:$0xff]
  %v533 = vld [vmem:[%s0 + $0x30] sm:$0xff]
  %v534 = vld [vmem:[%s0 + $0x38] sm:$0xff]
  %v535 = vld [vmem:[%s0 + $0x40] sm:$0xff]
  %545 = vrot.lane.b32.xlu0 %v527, 91
  %v546 = vpop.permute.xlu0 %545
  %547 = vrot.lane.b32.xlu0 %v528, 91
  %v548 = vpop.permute.xlu0 %547
  %549 = vrot.lane.b32.xlu0 %v529, 91
  %v550 = vpop.permute.xlu0 %549
  %551 = vrot.lane.b32.xlu0 %v530, 91
  %v552 = vpop.permute.xlu0 %551
  %553 = vrot.lane.b32.xlu0 %v531, 91
  %v554 = vpop.permute.xlu0 %553
  %555 = vrot.lane.b32.xlu0 %v532, 91
  %v556 = vpop.permute.xlu0 %555
  %557 = vrot.lane.b32.xlu0 %v533, 91
  %v558 = vpop.permute.xlu0 %557
  %559 = vrot.lane.b32.xlu0 %v534, 91
  %v560 = vpop.permute.xlu0 %559
  %561 = vrot.lane.b32.xlu0 %v535, 91
  %v562 = vpop.permute.xlu0 %561
  %vm563 = vcmask 744448
  %v564 = vsel %vm563, %v546, %v548
  %v565 = vsel %vm563, %v548, %v550
  %v566 = vsel %vm563, %v550, %v552
  %v567 = vsel %vm563, %v552, %v554
  %v568 = vsel %vm563, %v554, %v556
  %v569 = vsel %vm563, %v556, %v558
  %v570 = vsel %vm563, %v558, %v560
  %v571 = vsel %vm563, %v560, %v562
  %580 = vst [vmem:[#allocation2 + $0x240] sm:$0xff] %v564
  %581 = vst [vmem:[#allocation2 + $0x248] sm:$0xff] %v565
  %582 = vst [vmem:[#allocation2 + $0x250] sm:$0xff] %v566
  %583 = vst [vmem:[#allocation2 + $0x258] sm:$0xff] %v567
  %584 = vst [vmem:[#allocation2 + $0x260] sm:$0xff] %v568
  %585 = vst [vmem:[#allocation2 + $0x268] sm:$0xff] %v569
  %586 = vst [vmem:[#allocation2 + $0x270] sm:$0xff] %v570
  %587 = vst [vmem:[#allocation2 + $0x278] sm:$0xff] %v571
  %v588 = vld [vmem:[%s0] sm:$0xff]
  %v589 = vld [vmem:[%s0 + $0x8] sm:$0xff]
  %v590 = vld [vmem:[%s0 + $0x10] sm:$0xff]
  %v591 = vld [vmem:[%s0 + $0x18] sm:$0xff]
  %v592 = vld [vmem:[%s0 + $0x20] sm:$0xff]
  %v593 = vld [vmem:[%s0 + $0x28] sm:$0xff]
  %v594 = vld [vmem:[%s0 + $0x30] sm:$0xff]
  %v595 = vld [vmem:[%s0 + $0x38] sm:$0xff]
  %v596 = vld [vmem:[%s0 + $0x40] sm:$0xff]
  %606 = vrot.lane.b32.xlu0 %v588, 90
  %v607 = vpop.permute.xlu0 %606
  %608 = vrot.lane.b32.xlu0 %v589, 90
  %v609 = vpop.permute.xlu0 %608
  %610 = vrot.lane.b32.xlu0 %v590, 90
  %v611 = vpop.permute.xlu0 %610
  %612 = vrot.lane.b32.xlu0 %v591, 90
  %v613 = vpop.permute.xlu0 %612
  %614 = vrot.lane.b32.xlu0 %v592, 90
  %v615 = vpop.permute.xlu0 %614
  %616 = vrot.lane.b32.xlu0 %v593, 90
  %v617 = vpop.permute.xlu0 %616
  %618 = vrot.lane.b32.xlu0 %v594, 90
  %v619 = vpop.permute.xlu0 %618
  %620 = vrot.lane.b32.xlu0 %v595, 90
  %v621 = vpop.permute.xlu0 %620
  %622 = vrot.lane.b32.xlu0 %v596, 90
  %v623 = vpop.permute.xlu0 %622
  %vm624 = vcmask 736256
  %v625 = vsel %vm624, %v607, %v609
  %v626 = vsel %vm624, %v609, %v611
  %v627 = vsel %vm624, %v611, %v613
  %v628 = vsel %vm624, %v613, %v615
  %v629 = vsel %vm624, %v615, %v617
  %v630 = vsel %vm624, %v617, %v619
  %v631 = vsel %vm624, %v619, %v621
  %v632 = vsel %vm624, %v621, %v623
  %641 = vst [vmem:[#allocation2 + $0x280] sm:$0xff] %v625
  %642 = vst [vmem:[#allocation2 + $0x288] sm:$0xff] %v626
  %643 = vst [vmem:[#allocation2 + $0x290] sm:$0xff] %v627
  %644 = vst [vmem:[#allocation2 + $0x298] sm:$0xff] %v628
  %645 = vst [vmem:[#allocation2 + $0x2a0] sm:$0xff] %v629
  %646 = vst [vmem:[#allocation2 + $0x2a8] sm:$0xff] %v630
  %647 = vst [vmem:[#allocation2 + $0x2b0] sm:$0xff] %v631
  %648 = vst [vmem:[#allocation2 + $0x2b8] sm:$0xff] %v632
  %v649 = vld [vmem:[%s0] sm:$0xff]
  %v650 = vld [vmem:[%s0 + $0x8] sm:$0xff]
  %v651 = vld [vmem:[%s0 + $0x10] sm:$0xff]
  %v652 = vld [vmem:[%s0 + $0x18] sm:$0xff]
  %v653 = vld [vmem:[%s0 + $0x20] sm:$0xff]
  %v654 = vld [vmem:[%s0 + $0x28] sm:$0xff]
  %v655 = vld [vmem:[%s0 + $0x30] sm:$0xff]
  %v656 = vld [vmem:[%s0 + $0x38] sm:$0xff]
  %v657 = vld [vmem:[%s0 + $0x40] sm:$0xff]
  %667 = vrot.lane.b32.xlu0 %v649, 89
  %v668 = vpop.permute.xlu0 %667
  %669 = vrot.lane.b32.xlu0 %v650, 89
  %v670 = vpop.permute.xlu0 %669
  %671 = vrot.lane.b32.xlu0 %v651, 89
  %v672 = vpop.permute.xlu0 %671
  %673 = vrot.lane.b32.xlu0 %v652, 89
  %v674 = vpop.permute.xlu0 %673
  %675 = vrot.lane.b32.xlu0 %v653, 89
  %v676 = vpop.permute.xlu0 %675
  %677 = vrot.lane.b32.xlu0 %v654, 89
  %v678 = vpop.permute.xlu0 %677
  %679 = vrot.lane.b32.xlu0 %v655, 89
  %v680 = vpop.permute.xlu0 %679
  %681 = vrot.lane.b32.xlu0 %v656, 89
  %v682 = vpop.permute.xlu0 %681
  %683 = vrot.lane.b32.xlu0 %v657, 89
  %v684 = vpop.permute.xlu0 %683
  %vm685 = vcmask 728064
  %v686 = vsel %vm685, %v668, %v670
  %v687 = vsel %vm685, %v670, %v672
  %v688 = vsel %vm685, %v672, %v674
  %v689 = vsel %vm685, %v674, %v676
  %v690 = vsel %vm685, %v676, %v678
  %v691 = vsel %vm685, %v678, %v680
  %v692 = vsel %vm685, %v680, %v682
  %v693 = vsel %vm685, %v682, %v684
  %702 = vst [vmem:[#allocation2 + $0x2c0] sm:$0xff] %v686
  %703 = vst [vmem:[#allocation2 + $0x2c8] sm:$0xff] %v687
  %704 = vst [vmem:[#allocation2 + $0x2d0] sm:$0xff] %v688
  %705 = vst [vmem:[#allocation2 + $0x2d8] sm:$0xff] %v689
  %706 = vst [vmem:[#allocation2 + $0x2e0] sm:$0xff] %v690
  %707 = vst [vmem:[#allocation2 + $0x2e8] sm:$0xff] %v691
  %708 = vst [vmem:[#allocation2 + $0x2f0] sm:$0xff] %v692
  %709 = vst [vmem:[#allocation2 + $0x2f8] sm:$0xff] %v693
  %v710 = vld [vmem:[%s0] sm:$0xff]
  %v711 = vld [vmem:[%s0 + $0x8] sm:$0xff]
  %v712 = vld [vmem:[%s0 + $0x10] sm:$0xff]
  %v713 = vld [vmem:[%s0 + $0x18] sm:$0xff]
  %v714 = vld [vmem:[%s0 + $0x20] sm:$0xff]
  %v715 = vld [vmem:[%s0 + $0x28] sm:$0xff]
  %v716 = vld [vmem:[%s0 + $0x30] sm:$0xff]
  %v717 = vld [vmem:[%s0 + $0x38] sm:$0xff]
  %v718 = vld [vmem:[%s0 + $0x40] sm:$0xff]
  %728 = vrot.lane.b32.xlu0 %v710, 60
  %v729 = vpop.permute.xlu0 %728
  %730 = vrot.lane.b32.xlu0 %v711, 60
  %v731 = vpop.permute.xlu0 %730
  %732 = vrot.lane.b32.xlu0 %v712, 60
  %v733 = vpop.permute.xlu0 %732
  %734 = vrot.lane.b32.xlu0 %v713, 60
  %v735 = vpop.permute.xlu0 %734
  %736 = vrot.lane.b32.xlu0 %v714, 60
  %v737 = vpop.permute.xlu0 %736
  %738 = vrot.lane.b32.xlu0 %v715, 60
  %v739 = vpop.permute.xlu0 %738
  %740 = vrot.lane.b32.xlu0 %v716, 60
  %v741 = vpop.permute.xlu0 %740
  %742 = vrot.lane.b32.xlu0 %v717, 60
  %v743 = vpop.permute.xlu0 %742
  %744 = vrot.lane.b32.xlu0 %v718, 60
  %v745 = vpop.permute.xlu0 %744
  %vm746 = vcmask 490496
  %v747 = vsel %vm746, %v729, %v731
  %v748 = vsel %vm746, %v731, %v733
  %v749 = vsel %vm746, %v733, %v735
  %v750 = vsel %vm746, %v735, %v737
  %v751 = vsel %vm746, %v737, %v739
  %v752 = vsel %vm746, %v739, %v741
  %v753 = vsel %vm746, %v741, %v743
  %v754 = vsel %vm746, %v743, %v745
  %763 = vst [vmem:[#allocation2 + $0x300] sm:$0xff] %v747
  %764 = vst [vmem:[#allocation2 + $0x308] sm:$0xff] %v748
  %765 = vst [vmem:[#allocation2 + $0x310] sm:$0xff] %v749
  %766 = vst [vmem:[#allocation2 + $0x318] sm:$0xff] %v750
  %767 = vst [vmem:[#allocation2 + $0x320] sm:$0xff] %v751
  %768 = vst [vmem:[#allocation2 + $0x328] sm:$0xff] %v752
  %769 = vst [vmem:[#allocation2 + $0x330] sm:$0xff] %v753
  %770 = vst [vmem:[#allocation2 + $0x338] sm:$0xff] %v754
  %v771 = vld [vmem:[%s0] sm:$0xff]
  %v772 = vld [vmem:[%s0 + $0x8] sm:$0xff]
  %v773 = vld [vmem:[%s0 + $0x10] sm:$0xff]
  %v774 = vld [vmem:[%s0 + $0x18] sm:$0xff]
  %v775 = vld [vmem:[%s0 + $0x20] sm:$0xff]
  %v776 = vld [vmem:[%s0 + $0x28] sm:$0xff]
  %v777 = vld [vmem:[%s0 + $0x30] sm:$0xff]
  %v778 = vld [vmem:[%s0 + $0x38] sm:$0xff]
  %v779 = vld [vmem:[%s0 + $0x40] sm:$0xff]
  %789 = vrot.lane.b32.xlu0 %v771, 59
  %v790 = vpop.permute.xlu0 %789
  %791 = vrot.lane.b32.xlu0 %v772, 59
  %v792 = vpop.permute.xlu0 %791
  %793 = vrot.lane.b32.xlu0 %v773, 59
  %v794 = vpop.permute.xlu0 %793
  %795 = vrot.lane.b32.xlu0 %v774, 59
  %v796 = vpop.permute.xlu0 %795
  %797 = vrot.lane.b32.xlu0 %v775, 59
  %v798 = vpop.permute.xlu0 %797
  %799 = vrot.lane.b32.xlu0 %v776, 59
  %v800 = vpop.permute.xlu0 %799
  %801 = vrot.lane.b32.xlu0 %v777, 59
  %v802 = vpop.permute.xlu0 %801
  %803 = vrot.lane.b32.xlu0 %v778, 59
  %v804 = vpop.permute.xlu0 %803
  %805 = vrot.lane.b32.xlu0 %v779, 59
  %v806 = vpop.permute.xlu0 %805
  %vm807 = vcmask 482304
  %v808 = vsel %vm807, %v790, %v792
  %v809 = vsel %vm807, %v792, %v794
  %v810 = vsel %vm807, %v794, %v796
  %v811 = vsel %vm807, %v796, %v798
  %v812 = vsel %vm807, %v798, %v800
  %v813 = vsel %vm807, %v800, %v802
  %v814 = vsel %vm807, %v802, %v804
  %v815 = vsel %vm807, %v804, %v806
  %824 = vst [vmem:[#allocation2 + $0x340] sm:$0xff] %v808
  %825 = vst [vmem:[#allocation2 + $0x348] sm:$0xff] %v809
  %826 = vst [vmem:[#allocation2 + $0x350] sm:$0xff] %v810
  %827 = vst [vmem:[#allocation2 + $0x358] sm:$0xff] %v811
  %828 = vst [vmem:[#allocation2 + $0x360] sm:$0xff] %v812
  %829 = vst [vmem:[#allocation2 + $0x368] sm:$0xff] %v813
  %830 = vst [vmem:[#allocation2 + $0x370] sm:$0xff] %v814
  %831 = vst [vmem:[#allocation2 + $0x378] sm:$0xff] %v815
  %v832 = vld [vmem:[%s0] sm:$0xff]
  %v833 = vld [vmem:[%s0 + $0x8] sm:$0xff]
  %v834 = vld [vmem:[%s0 + $0x10] sm:$0xff]
  %v835 = vld [vmem:[%s0 + $0x18] sm:$0xff]
  %v836 = vld [vmem:[%s0 + $0x20] sm:$0xff]
  %v837 = vld [vmem:[%s0 + $0x28] sm:$0xff]
  %v838 = vld [vmem:[%s0 + $0x30] sm:$0xff]
  %v839 = vld [vmem:[%s0 + $0x38] sm:$0xff]
  %v840 = vld [vmem:[%s0 + $0x40] sm:$0xff]
  %850 = vrot.lane.b32.xlu0 %v832, 58
  %v851 = vpop.permute.xlu0 %850
  %852 = vrot.lane.b32.xlu0 %v833, 58
  %v853 = vpop.permute.xlu0 %852
  %854 = vrot.lane.b32.xlu0 %v834, 58
  %v855 = vpop.permute.xlu0 %854
  %856 = vrot.lane.b32.xlu0 %v835, 58
  %v857 = vpop.permute.xlu0 %856
  %858 = vrot.lane.b32.xlu0 %v836, 58
  %v859 = vpop.permute.xlu0 %858
  %860 = vrot.lane.b32.xlu0 %v837, 58
  %v861 = vpop.permute.xlu0 %860
  %862 = vrot.lane.b32.xlu0 %v838, 58
  %v863 = vpop.permute.xlu0 %862
  %864 = vrot.lane.b32.xlu0 %v839, 58
  %v865 = vpop.permute.xlu0 %864
  %866 = vrot.lane.b32.xlu0 %v840, 58
  %v867 = vpop.permute.xlu0 %866
  %vm868 = vcmask 474112
  %v869 = vsel %vm868, %v851, %v853
  %v870 = vsel %vm868, %v853, %v855
  %v871 = vsel %vm868, %v855, %v857
  %v872 = vsel %vm868, %v857, %v859
  %v873 = vsel %vm868, %v859, %v861
  %v874 = vsel %vm868, %v861, %v863
  %v875 = vsel %vm868, %v863, %v865
  %v876 = vsel %vm868, %v865, %v867
  %885 = vst [vmem:[#allocation2 + $0x380] sm:$0xff] %v869
  %886 = vst [vmem:[#allocation2 + $0x388] sm:$0xff] %v870
  %887 = vst [vmem:[#allocation2 + $0x390] sm:$0xff] %v871
  %888 = vst [vmem:[#allocation2 + $0x398] sm:$0xff] %v872
  %889 = vst [vmem:[#allocation2 + $0x3a0] sm:$0xff] %v873
  %890 = vst [vmem:[#allocation2 + $0x3a8] sm:$0xff] %v874
  %891 = vst [vmem:[#allocation2 + $0x3b0] sm:$0xff] %v875
  %892 = vst [vmem:[#allocation2 + $0x3b8] sm:$0xff] %v876
  %v893 = vld [vmem:[%s0] sm:$0xff]
  %v894 = vld [vmem:[%s0 + $0x8] sm:$0xff]
  %v895 = vld [vmem:[%s0 + $0x10] sm:$0xff]
  %v896 = vld [vmem:[%s0 + $0x18] sm:$0xff]
  %v897 = vld [vmem:[%s0 + $0x20] sm:$0xff]
  %v898 = vld [vmem:[%s0 + $0x28] sm:$0xff]
  %v899 = vld [vmem:[%s0 + $0x30] sm:$0xff]
  %v900 = vld [vmem:[%s0 + $0x38] sm:$0xff]
  %v901 = vld [vmem:[%s0 + $0x40] sm:$0xff]
  %911 = vrot.lane.b32.xlu0 %v893, 57
  %v912 = vpop.permute.xlu0 %911
  %913 = vrot.lane.b32.xlu0 %v894, 57
  %v914 = vpop.permute.xlu0 %913
  %915 = vrot.lane.b32.xlu0 %v895, 57
  %v916 = vpop.permute.xlu0 %915
  %917 = vrot.lane.b32.xlu0 %v896, 57
  %v918 = vpop.permute.xlu0 %917
  %919 = vrot.lane.b32.xlu0 %v897, 57
  %v920 = vpop.permute.xlu0 %919
  %921 = vrot.lane.b32.xlu0 %v898, 57
  %v922 = vpop.permute.xlu0 %921
  %923 = vrot.lane.b32.xlu0 %v899, 57
  %v924 = vpop.permute.xlu0 %923
  %925 = vrot.lane.b32.xlu0 %v900, 57
  %v926 = vpop.permute.xlu0 %925
  %927 = vrot.lane.b32.xlu0 %v901, 57
  %v928 = vpop.permute.xlu0 %927
  %vm929 = vcmask 465920
  %v930 = vsel %vm929, %v912, %v914
  %v931 = vsel %vm929, %v914, %v916
  %v932 = vsel %vm929, %v916, %v918
  %v933 = vsel %vm929, %v918, %v920
  %v934 = vsel %vm929, %v920, %v922
  %v935 = vsel %vm929, %v922, %v924
  %v936 = vsel %vm929, %v924, %v926
  %v937 = vsel %vm929, %v926, %v928
  %946 = vst [vmem:[#allocation2 + $0x3c0] sm:$0xff] %v930
  %947 = vst [vmem:[#allocation2 + $0x3c8] sm:$0xff] %v931
  %948 = vst [vmem:[#allocation2 + $0x3d0] sm:$0xff] %v932
  %949 = vst [vmem:[#allocation2 + $0x3d8] sm:$0xff] %v933
  %950 = vst [vmem:[#allocation2 + $0x3e0] sm:$0xff] %v934
  %951 = vst [vmem:[#allocation2 + $0x3e8] sm:$0xff] %v935
  %952 = vst [vmem:[#allocation2 + $0x3f0] sm:$0xff] %v936
  %953 = vst [vmem:[#allocation2 + $0x3f8] sm:$0xff] %v937
  %v954 = vld [vmem:[%s0] sm:$0xff]
  %v955 = vld [vmem:[%s0 + $0x8] sm:$0xff]
  %v956 = vld [vmem:[%s0 + $0x10] sm:$0xff]
  %v957 = vld [vmem:[%s0 + $0x18] sm:$0xff]
  %v958 = vld [vmem:[%s0 + $0x20] sm:$0xff]
  %v959 = vld [vmem:[%s0 + $0x28] sm:$0xff]
  %v960 = vld [vmem:[%s0 + $0x30] sm:$0xff]
  %v961 = vld [vmem:[%s0 + $0x38] sm:$0xff]
  %v962 = vld [vmem:[%s0 + $0x40] sm:$0xff]
  %972 = vrot.lane.b32.xlu0 %v954, 56
  %v973 = vpop.permute.xlu0 %972
  %974 = vrot.lane.b32.xlu0 %v955, 56
  %v975 = vpop.permute.xlu0 %974
  %976 = vrot.lane.b32.xlu0 %v956, 56
  %v977 = vpop.permute.xlu0 %976
  %978 = vrot.lane.b32.xlu0 %v957, 56
  %v979 = vpop.permute.xlu0 %978
  %980 = vrot.lane.b32.xlu0 %v958, 56
  %v981 = vpop.permute.xlu0 %980
  %982 = vrot.lane.b32.xlu0 %v959, 56
  %v983 = vpop.permute.xlu0 %982
  %984 = vrot.lane.b32.xlu0 %v960, 56
  %v985 = vpop.permute.xlu0 %984
  %986 = vrot.lane.b32.xlu0 %v961, 56
  %v987 = vpop.permute.xlu0 %986
  %988 = vrot.lane.b32.xlu0 %v962, 56
  %v989 = vpop.permute.xlu0 %988
  %vm990 = vcmask 457728
  %v991 = vsel %vm990, %v973, %v975
  %v992 = vsel %vm990, %v975, %v977
  %v993 = vsel %vm990, %v977, %v979
  %v994 = vsel %vm990, %v979, %v981
  %v995 = vsel %vm990, %v981, %v983
  %v996 = vsel %vm990, %v983, %v985
  %v997 = vsel %vm990, %v985, %v987
  %v998 = vsel %vm990, %v987, %v989
  %1007 = vst [vmem:[#allocation2 + $0x400] sm:$0xff] %v991
  %1008 = vst [vmem:[#allocation2 + $0x408] sm:$0xff] %v992
  %1009 = vst [vmem:[#allocation2 + $0x410] sm:$0xff] %v993
  %1010 = vst [vmem:[#allocation2 + $0x418] sm:$0xff] %v994
  %1011 = vst [vmem:[#allocation2 + $0x420] sm:$0xff] %v995
  %1012 = vst [vmem:[#allocation2 + $0x428] sm:$0xff] %v996
  %1013 = vst [vmem:[#allocation2 + $0x430] sm:$0xff] %v997
  %1014 = vst [vmem:[#allocation2 + $0x438] sm:$0xff] %v998
  %v1015 = vld [vmem:[%s0] sm:$0xff]
  %v1016 = vld [vmem:[%s0 + $0x8] sm:$0xff]
  %v1017 = vld [vmem:[%s0 + $0x10] sm:$0xff]
  %v1018 = vld [vmem:[%s0 + $0x18] sm:$0xff]
  %v1019 = vld [vmem:[%s0 + $0x20] sm:$0xff]
  %v1020 = vld [vmem:[%s0 + $0x28] sm:$0xff]
  %v1021 = vld [vmem:[%s0 + $0x30] sm:$0xff]
  %v1022 = vld [vmem:[%s0 + $0x38] sm:$0xff]
  %v1023 = vld [vmem:[%s0 + $0x40] sm:$0xff]
  %1033 = vrot.lane.b32.xlu0 %v1015, 55
  %v1034 = vpop.permute.xlu0 %1033
  %1035 = vrot.lane.b32.xlu0 %v1016, 55
  %v1036 = vpop.permute.xlu0 %1035
  %1037 = vrot.lane.b32.xlu0 %v1017, 55
  %v1038 = vpop.permute.xlu0 %1037
  %1039 = vrot.lane.b32.xlu0 %v1018, 55
  %v1040 = vpop.permute.xlu0 %1039
  %1041 = vrot.lane.b32.xlu0 %v1019, 55
  %v1042 = vpop.permute.xlu0 %1041
  %1043 = vrot.lane.b32.xlu0 %v1020, 55
  %v1044 = vpop.permute.xlu0 %1043
  %1045 = vrot.lane.b32.xlu0 %v1021, 55
  %v1046 = vpop.permute.xlu0 %1045
  %1047 = vrot.lane.b32.xlu0 %v1022, 55
  %v1048 = vpop.permute.xlu0 %1047
  %1049 = vrot.lane.b32.xlu0 %v1023, 55
  %v1050 = vpop.permute.xlu0 %1049
  %vm1051 = vcmask 449536
  %v1052 = vsel %vm1051, %v1034, %v1036
  %v1053 = vsel %vm1051, %v1036, %v1038
  %v1054 = vsel %vm1051, %v1038, %v1040
  %v1055 = vsel %vm1051, %v1040, %v1042
  %v1056 = vsel %vm1051, %v1042, %v1044
  %v1057 = vsel %vm1051, %v1044, %v1046
  %v1058 = vsel %vm1051, %v1046, %v1048
  %v1059 = vsel %vm1051, %v1048, %v1050
  %1068 = vst [vmem:[#allocation2 + $0x440] sm:$0xff] %v1052
  %1069 = vst [vmem:[#allocation2 + $0x448] sm:$0xff] %v1053
  %1070 = vst [vmem:[#allocation2 + $0x450] sm:$0xff] %v1054
  %1071 = vst [vmem:[#allocation2 + $0x458] sm:$0xff] %v1055
  %1072 = vst [vmem:[#allocation2 + $0x460] sm:$0xff] %v1056
  %1073 = vst [vmem:[#allocation2 + $0x468] sm:$0xff] %v1057
  %1074 = vst [vmem:[#allocation2 + $0x470] sm:$0xff] %v1058
  %1075 = vst [vmem:[#allocation2 + $0x478] sm:$0xff] %v1059
  %v1076 = vld [vmem:[%s0] sm:$0xff]
  %v1077 = vld [vmem:[%s0 + $0x8] sm:$0xff]
  %v1078 = vld [vmem:[%s0 + $0x10] sm:$0xff]
  %v1079 = vld [vmem:[%s0 + $0x18] sm:$0xff]
  %v1080 = vld [vmem:[%s0 + $0x20] sm:$0xff]
  %v1081 = vld [vmem:[%s0 + $0x28] sm:$0xff]
  %v1082 = vld [vmem:[%s0 + $0x30] sm:$0xff]
  %v1083 = vld [vmem:[%s0 + $0x38] sm:$0xff]
  %v1084 = vld [vmem:[%s0 + $0x40] sm:$0xff]
  %1094 = vrot.lane.b32.xlu0 %v1076, 26
  %v1095 = vpop.permute.xlu0 %1094
  %1096 = vrot.lane.b32.xlu0 %v1077, 26
  %v1097 = vpop.permute.xlu0 %1096
  %1098 = vrot.lane.b32.xlu0 %v1078, 26
  %v1099 = vpop.permute.xlu0 %1098
  %1100 = vrot.lane.b32.xlu0 %v1079, 26
  %v1101 = vpop.permute.xlu0 %1100
  %1102 = vrot.lane.b32.xlu0 %v1080, 26
  %v1103 = vpop.permute.xlu0 %1102
  %1104 = vrot.lane.b32.xlu0 %v1081, 26
  %v1105 = vpop.permute.xlu0 %1104
  %1106 = vrot.lane.b32.xlu0 %v1082, 26
  %v1107 = vpop.permute.xlu0 %1106
  %1108 = vrot.lane.b32.xlu0 %v1083, 26
  %v1109 = vpop.permute.xlu0 %1108
  %1110 = vrot.lane.b32.xlu0 %v1084, 26
  %v1111 = vpop.permute.xlu0 %1110
  %vm1112 = vcmask 211968
  %v1113 = vsel %vm1112, %v1095, %v1097
  %v1114 = vsel %vm1112, %v1097, %v1099
  %v1115 = vsel %vm1112, %v1099, %v1101
  %v1116 = vsel %vm1112, %v1101, %v1103
  %v1117 = vsel %vm1112, %v1103, %v1105
  %v1118 = vsel %vm1112, %v1105, %v1107
  %v1119 = vsel %vm1112, %v1107, %v1109
  %v1120 = vsel %vm1112, %v1109, %v1111
  %1129 = vst [vmem:[#allocation2 + $0x480] sm:$0xff] %v1113
  %1130 = vst [vmem:[#allocation2 + $0x488] sm:$0xff] %v1114
  %1131 = vst [vmem:[#allocation2 + $0x490] sm:$0xff] %v1115
  %1132 = vst [vmem:[#allocation2 + $0x498] sm:$0xff] %v1116
  %1133 = vst [vmem:[#allocation2 + $0x4a0] sm:$0xff] %v1117
  %1134 = vst [vmem:[#allocation2 + $0x4a8] sm:$0xff] %v1118
  %1135 = vst [vmem:[#allocation2 + $0x4b0] sm:$0xff] %v1119
  %1136 = vst [vmem:[#allocation2 + $0x4b8] sm:$0xff] %v1120
  %v1137 = vld [vmem:[%s0] sm:$0xff]
  %v1138 = vld [vmem:[%s0 + $0x8] sm:$0xff]
  %v1139 = vld [vmem:[%s0 + $0x10] sm:$0xff]
  %v1140 = vld [vmem:[%s0 + $0x18] sm:$0xff]
  %v1141 = vld [vmem:[%s0 + $0x20] sm:$0xff]
  %v1142 = vld [vmem:[%s0 + $0x28] sm:$0xff]
  %v1143 = vld [vmem:[%s0 + $0x30] sm:$0xff]
  %v1144 = vld [vmem:[%s0 + $0x38] sm:$0xff]
  %v1145 = vld [vmem:[%s0 + $0x40] sm:$0xff]
  %1155 = vrot.lane.b32.xlu0 %v1137, 25
  %v1156 = vpop.permute.xlu0 %1155
  %1157 = vrot.lane.b32.xlu0 %v1138, 25
  %v1158 = vpop.permute.xlu0 %1157
  %1159 = vrot.lane.b32.xlu0 %v1139, 25
  %v1160 = vpop.permute.xlu0 %1159
  %1161 = vrot.lane.b32.xlu0 %v1140, 25
  %v1162 = vpop.permute.xlu0 %1161
  %1163 = vrot.lane.b32.xlu0 %v1141, 25
  %v1164 = vpop.permute.xlu0 %1163
  %1165 = vrot.lane.b32.xlu0 %v1142, 25
  %v1166 = vpop.permute.xlu0 %1165
  %1167 = vrot.lane.b32.xlu0 %v1143, 25
  %v1168 = vpop.permute.xlu0 %1167
  %1169 = vrot.lane.b32.xlu0 %v1144, 25
  %v1170 = vpop.permute.xlu0 %1169
  %1171 = vrot.lane.b32.xlu0 %v1145, 25
  %v1172 = vpop.permute.xlu0 %1171
  %vm1173 = vcmask 203776
  %v1174 = vsel %vm1173, %v1156, %v1158
  %v1175 = vsel %vm1173, %v1158, %v1160
  %v1176 = vsel %vm1173, %v1160, %v1162
  %v1177 = vsel %vm1173, %v1162, %v1164
  %v1178 = vsel %vm1173, %v1164, %v1166
  %v1179 = vsel %vm1173, %v1166, %v1168
  %v1180 = vsel %vm1173, %v1168, %v1170
  %v1181 = vsel %vm1173, %v1170, %v1172
  %1190 = vst [vmem:[#allocation2 + $0x4c0] sm:$0xff] %v1174
  %1191 = vst [vmem:[#allocation2 + $0x4c8] sm:$0xff] %v1175
  %1192 = vst [vmem:[#allocation2 + $0x4d0] sm:$0xff] %v1176
  %1193 = vst [vmem:[#allocation2 + $0x4d8] sm:$0xff] %v1177
  %1194 = vst [vmem:[#allocation2 + $0x4e0] sm:$0xff] %v1178
  %1195 = vst [vmem:[#allocation2 + $0x4e8] sm:$0xff] %v1179
  %1196 = vst [vmem:[#allocation2 + $0x4f0] sm:$0xff] %v1180
  %1197 = vst [vmem:[#allocation2 + $0x4f8] sm:$0xff] %v1181
  %v1198 = vld [vmem:[%s0] sm:$0xff]
  %v1199 = vld [vmem:[%s0 + $0x8] sm:$0xff]
  %v1200 = vld [vmem:[%s0 + $0x10] sm:$0xff]
  %v1201 = vld [vmem:[%s0 + $0x18] sm:$0xff]
  %v1202 = vld [vmem:[%s0 + $0x20] sm:$0xff]
  %v1203 = vld [vmem:[%s0 + $0x28] sm:$0xff]
  %v1204 = vld [vmem:[%s0 + $0x30] sm:$0xff]
  %v1205 = vld [vmem:[%s0 + $0x38] sm:$0xff]
  %v1206 = vld [vmem:[%s0 + $0x40] sm:$0xff]
  %1216 = vrot.lane.b32.xlu0 %v1198, 24
  %v1217 = vpop.permute.xlu0 %1216
  %1218 = vrot.lane.b32.xlu0 %v1199, 24
  %v1219 = vpop.permute.xlu0 %1218
  %1220 = vrot.lane.b32.xlu0 %v1200, 24
  %v1221 = vpop.permute.xlu0 %1220
  %1222 = vrot.lane.b32.xlu0 %v1201, 24
  %v1223 = vpop.permute.xlu0 %1222
  %1224 = vrot.lane.b32.xlu0 %v1202, 24
  %v1225 = vpop.permute.xlu0 %1224
  %1226 = vrot.lane.b32.xlu0 %v1203, 24
  %v1227 = vpop.permute.xlu0 %1226
  %1228 = vrot.lane.b32.xlu0 %v1204, 24
  %v1229 = vpop.permute.xlu0 %1228
  %1230 = vrot.lane.b32.xlu0 %v1205, 24
  %v1231 = vpop.permute.xlu0 %1230
  %1232 = vrot.lane.b32.xlu0 %v1206, 24
  %v1233 = vpop.permute.xlu0 %1232
  %vm1234 = vcmask 195584
  %v1235 = vsel %vm1234, %v1217, %v1219
  %v1236 = vsel %vm1234, %v1219, %v1221
  %v1237 = vsel %vm1234, %v1221, %v1223
  %v1238 = vsel %vm1234, %v1223, %v1225
  %v1239 = vsel %vm1234, %v1225, %v1227
  %v1240 = vsel %vm1234, %v1227, %v1229
  %v1241 = vsel %vm1234, %v1229, %v1231
  %v1242 = vsel %vm1234, %v1231, %v1233
  %1251 = vst [vmem:[#allocation2 + $0x500] sm:$0xff] %v1235
  %1252 = vst [vmem:[#allocation2 + $0x508] sm:$0xff] %v1236
  %1253 = vst [vmem:[#allocation2 + $0x510] sm:$0xff] %v1237
  %1254 = vst [vmem:[#allocation2 + $0x518] sm:$0xff] %v1238
  %1255 = vst [vmem:[#allocation2 + $0x520] sm:$0xff] %v1239
  %1256 = vst [vmem:[#allocation2 + $0x528] sm:$0xff] %v1240
  %1257 = vst [vmem:[#allocation2 + $0x530] sm:$0xff] %v1241
  %1258 = vst [vmem:[#allocation2 + $0x538] sm:$0xff] %v1242
  %v1259 = vld [vmem:[%s0] sm:$0xff]
  %v1260 = vld [vmem:[%s0 + $0x8] sm:$0xff]
  %v1261 = vld [vmem:[%s0 + $0x10] sm:$0xff]
  %v1262 = vld [vmem:[%s0 + $0x18] sm:$0xff]
  %v1263 = vld [vmem:[%s0 + $0x20] sm:$0xff]
  %v1264 = vld [vmem:[%s0 + $0x28] sm:$0xff]
  %v1265 = vld [vmem:[%s0 + $0x30] sm:$0xff]
  %v1266 = vld [vmem:[%s0 + $0x38] sm:$0xff]
  %v1267 = vld [vmem:[%s0 + $0x40] sm:$0xff]
  %1277 = vrot.lane.b32.xlu0 %v1259, 23
  %v1278 = vpop.permute.xlu0 %1277
  %1279 = vrot.lane.b32.xlu0 %v1260, 23
  %v1280 = vpop.permute.xlu0 %1279
  %1281 = vrot.lane.b32.xlu0 %v1261, 23
  %v1282 = vpop.permute.xlu0 %1281
  %1283 = vrot.lane.b32.xlu0 %v1262, 23
  %v1284 = vpop.permute.xlu0 %1283
  %1285 = vrot.lane.b32.xlu0 %v1263, 23
  %v1286 = vpop.permute.xlu0 %1285
  %1287 = vrot.lane.b32.xlu0 %v1264, 23
  %v1288 = vpop.permute.xlu0 %1287
  %1289 = vrot.lane.b32.xlu0 %v1265, 23
  %v1290 = vpop.permute.xlu0 %1289
  %1291 = vrot.lane.b32.xlu0 %v1266, 23
  %v1292 = vpop.permute.xlu0 %1291
  %1293 = vrot.lane.b32.xlu0 %v1267, 23
  %v1294 = vpop.permute.xlu0 %1293
  %vm1295 = vcmask 187392
  %v1296 = vsel %vm1295, %v1278, %v1280
  %v1297 = vsel %vm1295, %v1280, %v1282
  %v1298 = vsel %vm1295, %v1282, %v1284
  %v1299 = vsel %vm1295, %v1284, %v1286
  %v1300 = vsel %vm1295, %v1286, %v1288
  %v1301 = vsel %vm1295, %v1288, %v1290
  %v1302 = vsel %vm1295, %v1290, %v1292
  %v1303 = vsel %vm1295, %v1292, %v1294
  %1312 = vst [vmem:[#allocation2 + $0x540] sm:$0xff] %v1296
  %1313 = vst [vmem:[#allocation2 + $0x548] sm:$0xff] %v1297
  %1314 = vst [vmem:[#allocation2 + $0x550] sm:$0xff] %v1298
  %1315 = vst [vmem:[#allocation2 + $0x558] sm:$0xff] %v1299
  %1316 = vst [vmem:[#allocation2 + $0x560] sm:$0xff] %v1300
  %1317 = vst [vmem:[#allocation2 + $0x568] sm:$0xff] %v1301
  %1318 = vst [vmem:[#allocation2 + $0x570] sm:$0xff] %v1302
  %1319 = vst [vmem:[#allocation2 + $0x578] sm:$0xff] %v1303
  %v1320 = vld [vmem:[%s0] sm:$0xff]
  %v1321 = vld [vmem:[%s0 + $0x8] sm:$0xff]
  %v1322 = vld [vmem:[%s0 + $0x10] sm:$0xff]
  %v1323 = vld [vmem:[%s0 + $0x18] sm:$0xff]
  %v1324 = vld [vmem:[%s0 + $0x20] sm:$0xff]
  %v1325 = vld [vmem:[%s0 + $0x28] sm:$0xff]
  %v1326 = vld [vmem:[%s0 + $0x30] sm:$0xff]
  %v1327 = vld [vmem:[%s0 + $0x38] sm:$0xff]
  %v1328 = vld [vmem:[%s0 + $0x40] sm:$0xff]
  %1338 = vrot.lane.b32.xlu0 %v1320, 22
  %v1339 = vpop.permute.xlu0 %1338
  %1340 = vrot.lane.b32.xlu0 %v1321, 22
  %v1341 = vpop.permute.xlu0 %1340
  %1342 = vrot.lane.b32.xlu0 %v1322, 22
  %v1343 = vpop.permute.xlu0 %1342
  %1344 = vrot.lane.b32.xlu0 %v1323, 22
  %v1345 = vpop.permute.xlu0 %1344
  %1346 = vrot.lane.b32.xlu0 %v1324, 22
  %v1347 = vpop.permute.xlu0 %1346
  %1348 = vrot.lane.b32.xlu0 %v1325, 22
  %v1349 = vpop.permute.xlu0 %1348
  %1350 = vrot.lane.b32.xlu0 %v1326, 22
  %v1351 = vpop.permute.xlu0 %1350
  %1352 = vrot.lane.b32.xlu0 %v1327, 22
  %v1353 = vpop.permute.xlu0 %1352
  %1354 = vrot.lane.b32.xlu0 %v1328, 22
  %v1355 = vpop.permute.xlu0 %1354
  %vm1356 = vcmask 179200
  %v1357 = vsel %vm1356, %v1339, %v1341
  %v1358 = vsel %vm1356, %v1341, %v1343
  %v1359 = vsel %vm1356, %v1343, %v1345
  %v1360 = vsel %vm1356, %v1345, %v1347
  %v1361 = vsel %vm1356, %v1347, %v1349
  %v1362 = vsel %vm1356, %v1349, %v1351
  %v1363 = vsel %vm1356, %v1351, %v1353
  %v1364 = vsel %vm1356, %v1353, %v1355
  %1373 = vst [vmem:[#allocation2 + $0x580] sm:$0xff] %v1357
  %1374 = vst [vmem:[#allocation2 + $0x588] sm:$0xff] %v1358
  %1375 = vst [vmem:[#allocation2 + $0x590] sm:$0xff] %v1359
  %1376 = vst [vmem:[#allocation2 + $0x598] sm:$0xff] %v1360
  %1377 = vst [vmem:[#allocation2 + $0x5a0] sm:$0xff] %v1361
  %1378 = vst [vmem:[#allocation2 + $0x5a8] sm:$0xff] %v1362
  %1379 = vst [vmem:[#allocation2 + $0x5b0] sm:$0xff] %v1363
  %1380 = vst [vmem:[#allocation2 + $0x5b8] sm:$0xff] %v1364
  %v1381 = vld [vmem:[%s0] sm:$0xff]
  %v1382 = vld [vmem:[%s0 + $0x8] sm:$0xff]
  %v1383 = vld [vmem:[%s0 + $0x10] sm:$0xff]
  %v1384 = vld [vmem:[%s0 + $0x18] sm:$0xff]
  %v1385 = vld [vmem:[%s0 + $0x20] sm:$0xff]
  %v1386 = vld [vmem:[%s0 + $0x28] sm:$0xff]
  %v1387 = vld [vmem:[%s0 + $0x30] sm:$0xff]
  %v1388 = vld [vmem:[%s0 + $0x38] sm:$0xff]
  %v1389 = vld [vmem:[%s0 + $0x40] sm:$0xff]
  %1399 = vrot.lane.b32.xlu0 %v1381, 21
  %v1400 = vpop.permute.xlu0 %1399
  %1401 = vrot.lane.b32.xlu0 %v1382, 21
  %v1402 = vpop.permute.xlu0 %1401
  %1403 = vrot.lane.b32.xlu0 %v1383, 21
  %v1404 = vpop.permute.xlu0 %1403
  %1405 = vrot.lane.b32.xlu0 %v1384, 21
  %v1406 = vpop.permute.xlu0 %1405
  %1407 = vrot.lane.b32.xlu0 %v1385, 21
  %v1408 = vpop.permute.xlu0 %1407
  %1409 = vrot.lane.b32.xlu0 %v1386, 21
  %v1410 = vpop.permute.xlu0 %1409
  %1411 = vrot.lane.b32.xlu0 %v1387, 21
  %v1412 = vpop.permute.xlu0 %1411
  %1413 = vrot.lane.b32.xlu0 %v1388, 21
  %v1414 = vpop.permute.xlu0 %1413
  %1415 = vrot.lane.b32.xlu0 %v1389, 21
  %v1416 = vpop.permute.xlu0 %1415
  %vm1417 = vcmask 171008
  %v1418 = vsel %vm1417, %v1400, %v1402
  %v1419 = vsel %vm1417, %v1402, %v1404
  %v1420 = vsel %vm1417, %v1404, %v1406
  %v1421 = vsel %vm1417, %v1406, %v1408
  %v1422 = vsel %vm1417, %v1408, %v1410
  %v1423 = vsel %vm1417, %v1410, %v1412
  %v1424 = vsel %vm1417, %v1412, %v1414
  %v1425 = vsel %vm1417, %v1414, %v1416
  %1434 = vst [vmem:[#allocation2 + $0x5c0] sm:$0xff] %v1418
  %1435 = vst [vmem:[#allocation2 + $0x5c8] sm:$0xff] %v1419
  %1436 = vst [vmem:[#allocation2 + $0x5d0] sm:$0xff] %v1420
  %1437 = vst [vmem:[#allocation2 + $0x5d8] sm:$0xff] %v1421
  %1438 = vst [vmem:[#allocation2 + $0x5e0] sm:$0xff] %v1422
  %1439 = vst [vmem:[#allocation2 + $0x5e8] sm:$0xff] %v1423
  %1440 = vst [vmem:[#allocation2 + $0x5f0] sm:$0xff] %v1424
  %1441 = vst [vmem:[#allocation2 + $0x5f8] sm:$0xff] %v1425
  %v1442 = vld [vmem:[%s0 + $0x8] sm:$0xff]
  %v1443 = vld [vmem:[%s0 + $0x10] sm:$0xff]
  %v1444 = vld [vmem:[%s0 + $0x18] sm:$0xff]
  %v1445 = vld [vmem:[%s0 + $0x20] sm:$0xff]
  %v1446 = vld [vmem:[%s0 + $0x28] sm:$0xff]
  %v1447 = vld [vmem:[%s0 + $0x30] sm:$0xff]
  %v1448 = vld [vmem:[%s0 + $0x38] sm:$0xff]
  %v1449 = vld [vmem:[%s0 + $0x40] sm:$0xff]
  %v1450 = vld [vmem:[%s0 + $0x48] sm:$0xff]
  %1460 = vrot.lane.b32.xlu0 %v1442, 120
  %v1461 = vpop.permute.xlu0 %1460
  %1462 = vrot.lane.b32.xlu0 %v1443, 120
  %v1463 = vpop.permute.xlu0 %1462
  %1464 = vrot.lane.b32.xlu0 %v1444, 120
  %v1465 = vpop.permute.xlu0 %1464
  %1466 = vrot.lane.b32.xlu0 %v1445, 120
  %v1467 = vpop.permute.xlu0 %1466
  %1468 = vrot.lane.b32.xlu0 %v1446, 120
  %v1469 = vpop.permute.xlu0 %1468
  %1470 = vrot.lane.b32.xlu0 %v1447, 120
  %v1471 = vpop.permute.xlu0 %1470
  %1472 = vrot.lane.b32.xlu0 %v1448, 120
  %v1473 = vpop.permute.xlu0 %1472
  %1474 = vrot.lane.b32.xlu0 %v1449, 120
  %v1475 = vpop.permute.xlu0 %1474
  %1476 = vrot.lane.b32.xlu0 %v1450, 120
  %v1477 = vpop.permute.xlu0 %1476
  %vm1478 = vcmask 982016
  %v1479 = vsel %vm1478, %v1461, %v1463
  %v1480 = vsel %vm1478, %v1463, %v1465
  %v1481 = vsel %vm1478, %v1465, %v1467
  %v1482 = vsel %vm1478, %v1467, %v1469
  %v1483 = vsel %vm1478, %v1469, %v1471
  %v1484 = vsel %vm1478, %v1471, %v1473
  %v1485 = vsel %vm1478, %v1473, %v1475
  %v1486 = vsel %vm1478, %v1475, %v1477
  %1495 = vst [vmem:[#allocation2 + $0x600] sm:$0xff] %v1479
  %1496 = vst [vmem:[#allocation2 + $0x608] sm:$0xff] %v1480
  %1497 = vst [vmem:[#allocation2 + $0x610] sm:$0xff] %v1481
  %1498 = vst [vmem:[#allocation2 + $0x618] sm:$0xff] %v1482
  %1499 = vst [vmem:[#allocation2 + $0x620] sm:$0xff] %v1483
  %1500 = vst [vmem:[#allocation2 + $0x628] sm:$0xff] %v1484
  %1501 = vst [vmem:[#allocation2 + $0x630] sm:$0xff] %v1485
  %1502 = vst [vmem:[#allocation2 + $0x638] sm:$0xff] %v1486
  %v1503 = vld [vmem:[%s0 + $0x8] sm:$0xff]
  %v1504 = vld [vmem:[%s0 + $0x10] sm:$0xff]
  %v1505 = vld [vmem:[%s0 + $0x18] sm:$0xff]
  %v1506 = vld [vmem:[%s0 + $0x20] sm:$0xff]
  %v1507 = vld [vmem:[%s0 + $0x28] sm:$0xff]
  %v1508 = vld [vmem:[%s0 + $0x30] sm:$0xff]
  %v1509 = vld [vmem:[%s0 + $0x38] sm:$0xff]
  %v1510 = vld [vmem:[%s0 + $0x40] sm:$0xff]
  %v1511 = vld [vmem:[%s0 + $0x48] sm:$0xff]
  %1521 = vrot.lane.b32.xlu0 %v1503, 119
  %v1522 = vpop.permute.xlu0 %1521
  %1523 = vrot.lane.b32.xlu0 %v1504, 119
  %v1524 = vpop.permute.xlu0 %1523
  %1525 = vrot.lane.b32.xlu0 %v1505, 119
  %v1526 = vpop.permute.xlu0 %1525
  %1527 = vrot.lane.b32.xlu0 %v1506, 119
  %v1528 = vpop.permute.xlu0 %1527
  %1529 = vrot.lane.b32.xlu0 %v1507, 119
  %v1530 = vpop.permute.xlu0 %1529
  %1531 = vrot.lane.b32.xlu0 %v1508, 119
  %v1532 = vpop.permute.xlu0 %1531
  %1533 = vrot.lane.b32.xlu0 %v1509, 119
  %v1534 = vpop.permute.xlu0 %1533
  %1535 = vrot.lane.b32.xlu0 %v1510, 119
  %v1536 = vpop.permute.xlu0 %1535
  %1537 = vrot.lane.b32.xlu0 %v1511, 119
  %v1538 = vpop.permute.xlu0 %1537
  %vm1539 = vcmask 973824
  %v1540 = vsel %vm1539, %v1522, %v1524
  %v1541 = vsel %vm1539, %v1524, %v1526
  %v1542 = vsel %vm1539, %v1526, %v1528
  %v1543 = vsel %vm1539, %v1528, %v1530
  %v1544 = vsel %vm1539, %v1530, %v1532
  %v1545 = vsel %vm1539, %v1532, %v1534
  %v1546 = vsel %vm1539, %v1534, %v1536
  %v1547 = vsel %vm1539, %v1536, %v1538
  %1556 = vst [vmem:[#allocation2 + $0x640] sm:$0xff] %v1540
  %1557 = vst [vmem:[#allocation2 + $0x648] sm:$0xff] %v1541
  %1558 = vst [vmem:[#allocation2 + $0x650] sm:$0xff] %v1542
  %1559 = vst [vmem:[#allocation2 + $0x658] sm:$0xff] %v1543
  %1560 = vst [vmem:[#allocation2 + $0x660] sm:$0xff] %v1544
  %1561 = vst [vmem:[#allocation2 + $0x668] sm:$0xff] %v1545
  %1562 = vst [vmem:[#allocation2 + $0x670] sm:$0xff] %v1546
  %1563 = vst [vmem:[#allocation2 + $0x678] sm:$0xff] %v1547
  %v1564 = vld [vmem:[%s0 + $0x8] sm:$0xff]
  %v1565 = vld [vmem:[%s0 + $0x10] sm:$0xff]
  %v1566 = vld [vmem:[%s0 + $0x18] sm:$0xff]
  %v1567 = vld [vmem:[%s0 + $0x20] sm:$0xff]
  %v1568 = vld [vmem:[%s0 + $0x28] sm:$0xff]
  %v1569 = vld [vmem:[%s0 + $0x30] sm:$0xff]
  %v1570 = vld [vmem:[%s0 + $0x38] sm:$0xff]
  %v1571 = vld [vmem:[%s0 + $0x40] sm:$0xff]
  %v1572 = vld [vmem:[%s0 + $0x48] sm:$0xff]
  %1582 = vrot.lane.b32.xlu0 %v1564, 118
  %v1583 = vpop.permute.xlu0 %1582
  %1584 = vrot.lane.b32.xlu0 %v1565, 118
  %v1585 = vpop.permute.xlu0 %1584
  %1586 = vrot.lane.b32.xlu0 %v1566, 118
  %v1587 = vpop.permute.xlu0 %1586
  %1588 = vrot.lane.b32.xlu0 %v1567, 118
  %v1589 = vpop.permute.xlu0 %1588
  %1590 = vrot.lane.b32.xlu0 %v1568, 118
  %v1591 = vpop.permute.xlu0 %1590
  %1592 = vrot.lane.b32.xlu0 %v1569, 118
  %v1593 = vpop.permute.xlu0 %1592
  %1594 = vrot.lane.b32.xlu0 %v1570, 118
  %v1595 = vpop.permute.xlu0 %1594
  %1596 = vrot.lane.b32.xlu0 %v1571, 118
  %v1597 = vpop.permute.xlu0 %1596
  %1598 = vrot.lane.b32.xlu0 %v1572, 118
  %v1599 = vpop.permute.xlu0 %1598
  %vm1600 = vcmask 965632
  %v1601 = vsel %vm1600, %v1583, %v1585
  %v1602 = vsel %vm1600, %v1585, %v1587
  %v1603 = vsel %vm1600, %v1587, %v1589
  %v1604 = vsel %vm1600, %v1589, %v1591
  %v1605 = vsel %vm1600, %v1591, %v1593
  %v1606 = vsel %vm1600, %v1593, %v1595
  %v1607 = vsel %vm1600, %v1595, %v1597
  %v1608 = vsel %vm1600, %v1597, %v1599
  %1617 = vst [vmem:[#allocation2 + $0x680] sm:$0xff] %v1601
  %1618 = vst [vmem:[#allocation2 + $0x688] sm:$0xff] %v1602
  %1619 = vst [vmem:[#allocation2 + $0x690] sm:$0xff] %v1603
  %1620 = vst [vmem:[#allocation2 + $0x698] sm:$0xff] %v1604
  %1621 = vst [vmem:[#allocation2 + $0x6a0] sm:$0xff] %v1605
  %1622 = vst [vmem:[#allocation2 + $0x6a8] sm:$0xff] %v1606
  %1623 = vst [vmem:[#allocation2 + $0x6b0] sm:$0xff] %v1607
  %1624 = vst [vmem:[#allocation2 + $0x6b8] sm:$0xff] %v1608
  %v1625 = vld [vmem:[%s0 + $0x8] sm:$0xff]
  %v1626 = vld [vmem:[%s0 + $0x10] sm:$0xff]
  %v1627 = vld [vmem:[%s0 + $0x18] sm:$0xff]
  %v1628 = vld [vmem:[%s0 + $0x20] sm:$0xff]
  %v1629 = vld [vmem:[%s0 + $0x28] sm:$0xff]
  %v1630 = vld [vmem:[%s0 + $0x30] sm:$0xff]
  %v1631 = vld [vmem:[%s0 + $0x38] sm:$0xff]
  %v1632 = vld [vmem:[%s0 + $0x40] sm:$0xff]
  %v1633 = vld [vmem:[%s0 + $0x48] sm:$0xff]
  %1643 = vrot.lane.b32.xlu0 %v1625, 117
  %v1644 = vpop.permute.xlu0 %1643
  %1645 = vrot.lane.b32.xlu0 %v1626, 117
  %v1646 = vpop.permute.xlu0 %1645
  %1647 = vrot.lane.b32.xlu0 %v1627, 117
  %v1648 = vpop.permute.xlu0 %1647
  %1649 = vrot.lane.b32.xlu0 %v1628, 117
  %v1650 = vpop.permute.xlu0 %1649
  %1651 = vrot.lane.b32.xlu0 %v1629, 117
  %v1652 = vpop.permute.xlu0 %1651
  %1653 = vrot.lane.b32.xlu0 %v1630, 117
  %v1654 = vpop.permute.xlu0 %1653
  %1655 = vrot.lane.b32.xlu0 %v1631, 117
  %v1656 = vpop.permute.xlu0 %1655
  %1657 = vrot.lane.b32.xlu0 %v1632, 117
  %v1658 = vpop.permute.xlu0 %1657
  %1659 = vrot.lane.b32.xlu0 %v1633, 117
  %v1660 = vpop.permute.xlu0 %1659
  %vm1661 = vcmask 957440
  %v1662 = vsel %vm1661, %v1644, %v1646
  %v1663 = vsel %vm1661, %v1646, %v1648
  %v1664 = vsel %vm1661, %v1648, %v1650
  %v1665 = vsel %vm1661, %v1650, %v1652
  %v1666 = vsel %vm1661, %v1652, %v1654
  %v1667 = vsel %vm1661, %v1654, %v1656
  %v1668 = vsel %vm1661, %v1656, %v1658
  %v1669 = vsel %vm1661, %v1658, %v1660
  %1678 = vst [vmem:[#allocation2 + $0x6c0] sm:$0xff] %v1662
  %1679 = vst [vmem:[#allocation2 + $0x6c8] sm:$0xff] %v1663
  %1680 = vst [vmem:[#allocation2 + $0x6d0] sm:$0xff] %v1664
  %1681 = vst [vmem:[#allocation2 + $0x6d8] sm:$0xff] %v1665
  %1682 = vst [vmem:[#allocation2 + $0x6e0] sm:$0xff] %v1666
  %1683 = vst [vmem:[#allocation2 + $0x6e8] sm:$0xff] %v1667
  %1684 = vst [vmem:[#allocation2 + $0x6f0] sm:$0xff] %v1668
  %1685 = vst [vmem:[#allocation2 + $0x6f8] sm:$0xff] %v1669
  %v1686 = vld [vmem:[%s0 + $0x8] sm:$0xff]
  %v1687 = vld [vmem:[%s0 + $0x10] sm:$0xff]
  %v1688 = vld [vmem:[%s0 + $0x18] sm:$0xff]
  %v1689 = vld [vmem:[%s0 + $0x20] sm:$0xff]
  %v1690 = vld [vmem:[%s0 + $0x28] sm:$0xff]
  %v1691 = vld [vmem:[%s0 + $0x30] sm:$0xff]
  %v1692 = vld [vmem:[%s0 + $0x38] sm:$0xff]
  %v1693 = vld [vmem:[%s0 + $0x40] sm:$0xff]
  %v1694 = vld [vmem:[%s0 + $0x48] sm:$0xff]
  %1704 = vrot.lane.b32.xlu0 %v1686, 116
  %v1705 = vpop.permute.xlu0 %1704
  %1706 = vrot.lane.b32.xlu0 %v1687, 116
  %v1707 = vpop.permute.xlu0 %1706
  %1708 = vrot.lane.b32.xlu0 %v1688, 116
  %v1709 = vpop.permute.xlu0 %1708
  %1710 = vrot.lane.b32.xlu0 %v1689, 116
  %v1711 = vpop.permute.xlu0 %1710
  %1712 = vrot.lane.b32.xlu0 %v1690, 116
  %v1713 = vpop.permute.xlu0 %1712
  %1714 = vrot.lane.b32.xlu0 %v1691, 116
  %v1715 = vpop.permute.xlu0 %1714
  %1716 = vrot.lane.b32.xlu0 %v1692, 116
  %v1717 = vpop.permute.xlu0 %1716
  %1718 = vrot.lane.b32.xlu0 %v1693, 116
  %v1719 = vpop.permute.xlu0 %1718
  %1720 = vrot.lane.b32.xlu0 %v1694, 116
  %v1721 = vpop.permute.xlu0 %1720
  %vm1722 = vcmask 949248
  %v1723 = vsel %vm1722, %v1705, %v1707
  %v1724 = vsel %vm1722, %v1707, %v1709
  %v1725 = vsel %vm1722, %v1709, %v1711
  %v1726 = vsel %vm1722, %v1711, %v1713
  %v1727 = vsel %vm1722, %v1713, %v1715
  %v1728 = vsel %vm1722, %v1715, %v1717
  %v1729 = vsel %vm1722, %v1717, %v1719
  %v1730 = vsel %vm1722, %v1719, %v1721
  %1739 = vst [vmem:[#allocation2 + $0x700] sm:$0xff] %v1723
  %1740 = vst [vmem:[#allocation2 + $0x708] sm:$0xff] %v1724
  %1741 = vst [vmem:[#allocation2 + $0x710] sm:$0xff] %v1725
  %1742 = vst [vmem:[#allocation2 + $0x718] sm:$0xff] %v1726
  %1743 = vst [vmem:[#allocation2 + $0x720] sm:$0xff] %v1727
  %1744 = vst [vmem:[#allocation2 + $0x728] sm:$0xff] %v1728
  %1745 = vst [vmem:[#allocation2 + $0x730] sm:$0xff] %v1729
  %1746 = vst [vmem:[#allocation2 + $0x738] sm:$0xff] %v1730
  %v1747 = vld [vmem:[%s0 + $0x8] sm:$0xff]
  %v1748 = vld [vmem:[%s0 + $0x10] sm:$0xff]
  %v1749 = vld [vmem:[%s0 + $0x18] sm:$0xff]
  %v1750 = vld [vmem:[%s0 + $0x20] sm:$0xff]
  %v1751 = vld [vmem:[%s0 + $0x28] sm:$0xff]
  %v1752 = vld [vmem:[%s0 + $0x30] sm:$0xff]
  %v1753 = vld [vmem:[%s0 + $0x38] sm:$0xff]
  %v1754 = vld [vmem:[%s0 + $0x40] sm:$0xff]
  %v1755 = vld [vmem:[%s0 + $0x48] sm:$0xff]
  %1765 = vrot.lane.b32.xlu0 %v1747, 115
  %v1766 = vpop.permute.xlu0 %1765
  %1767 = vrot.lane.b32.xlu0 %v1748, 115
  %v1768 = vpop.permute.xlu0 %1767
  %1769 = vrot.lane.b32.xlu0 %v1749, 115
  %v1770 = vpop.permute.xlu0 %1769
  %1771 = vrot.lane.b32.xlu0 %v1750, 115
  %v1772 = vpop.permute.xlu0 %1771
  %1773 = vrot.lane.b32.xlu0 %v1751, 115
  %v1774 = vpop.permute.xlu0 %1773
  %1775 = vrot.lane.b32.xlu0 %v1752, 115
  %v1776 = vpop.permute.xlu0 %1775
  %1777 = vrot.lane.b32.xlu0 %v1753, 115
  %v1778 = vpop.permute.xlu0 %1777
  %1779 = vrot.lane.b32.xlu0 %v1754, 115
  %v1780 = vpop.permute.xlu0 %1779
  %1781 = vrot.lane.b32.xlu0 %v1755, 115
  %v1782 = vpop.permute.xlu0 %1781
  %vm1783 = vcmask 941056
  %v1784 = vsel %vm1783, %v1766, %v1768
  %v1785 = vsel %vm1783, %v1768, %v1770
  %v1786 = vsel %vm1783, %v1770, %v1772
  %v1787 = vsel %vm1783, %v1772, %v1774
  %v1788 = vsel %vm1783, %v1774, %v1776
  %v1789 = vsel %vm1783, %v1776, %v1778
  %v1790 = vsel %vm1783, %v1778, %v1780
  %v1791 = vsel %vm1783, %v1780, %v1782
  %1800 = vst [vmem:[#allocation2 + $0x740] sm:$0xff] %v1784
  %1801 = vst [vmem:[#allocation2 + $0x748] sm:$0xff] %v1785
  %1802 = vst [vmem:[#allocation2 + $0x750] sm:$0xff] %v1786
  %1803 = vst [vmem:[#allocation2 + $0x758] sm:$0xff] %v1787
  %1804 = vst [vmem:[#allocation2 + $0x760] sm:$0xff] %v1788
  %1805 = vst [vmem:[#allocation2 + $0x768] sm:$0xff] %v1789
  %1806 = vst [vmem:[#allocation2 + $0x770] sm:$0xff] %v1790
  %1807 = vst [vmem:[#allocation2 + $0x778] sm:$0xff] %v1791
  %v1808 = vld [vmem:[%s0 + $0x8] sm:$0xff]
  %v1809 = vld [vmem:[%s0 + $0x10] sm:$0xff]
  %v1810 = vld [vmem:[%s0 + $0x18] sm:$0xff]
  %v1811 = vld [vmem:[%s0 + $0x20] sm:$0xff]
  %v1812 = vld [vmem:[%s0 + $0x28] sm:$0xff]
  %v1813 = vld [vmem:[%s0 + $0x30] sm:$0xff]
  %v1814 = vld [vmem:[%s0 + $0x38] sm:$0xff]
  %v1815 = vld [vmem:[%s0 + $0x40] sm:$0xff]
  %v1816 = vld [vmem:[%s0 + $0x48] sm:$0xff]
  %1826 = vrot.lane.b32.xlu0 %v1808, 86
  %v1827 = vpop.permute.xlu0 %1826
  %1828 = vrot.lane.b32.xlu0 %v1809, 86
  %v1829 = vpop.permute.xlu0 %1828
  %1830 = vrot.lane.b32.xlu0 %v1810, 86
  %v1831 = vpop.permute.xlu0 %1830
  %1832 = vrot.lane.b32.xlu0 %v1811, 86
  %v1833 = vpop.permute.xlu0 %1832
  %1834 = vrot.lane.b32.xlu0 %v1812, 86
  %v1835 = vpop.permute.xlu0 %1834
  %1836 = vrot.lane.b32.xlu0 %v1813, 86
  %v1837 = vpop.permute.xlu0 %1836
  %1838 = vrot.lane.b32.xlu0 %v1814, 86
  %v1839 = vpop.permute.xlu0 %1838
  %1840 = vrot.lane.b32.xlu0 %v1815, 86
  %v1841 = vpop.permute.xlu0 %1840
  %1842 = vrot.lane.b32.xlu0 %v1816, 86
  %v1843 = vpop.permute.xlu0 %1842
  %vm1844 = vcmask 703488
  %v1845 = vsel %vm1844, %v1827, %v1829
  %v1846 = vsel %vm1844, %v1829, %v1831
  %v1847 = vsel %vm1844, %v1831, %v1833
  %v1848 = vsel %vm1844, %v1833, %v1835
  %v1849 = vsel %vm1844, %v1835, %v1837
  %v1850 = vsel %vm1844, %v1837, %v1839
  %v1851 = vsel %vm1844, %v1839, %v1841
  %v1852 = vsel %vm1844, %v1841, %v1843
  %1861 = vst [vmem:[#allocation2 + $0x780] sm:$0xff] %v1845
  %1862 = vst [vmem:[#allocation2 + $0x788] sm:$0xff] %v1846
  %1863 = vst [vmem:[#allocation2 + $0x790] sm:$0xff] %v1847
  %1864 = vst [vmem:[#allocation2 + $0x798] sm:$0xff] %v1848
  %1865 = vst [vmem:[#allocation2 + $0x7a0] sm:$0xff] %v1849
  %1866 = vst [vmem:[#allocation2 + $0x7a8] sm:$0xff] %v1850
  %1867 = vst [vmem:[#allocation2 + $0x7b0] sm:$0xff] %v1851
  %1868 = vst [vmem:[#allocation2 + $0x7b8] sm:$0xff] %v1852
  %v1869 = vld [vmem:[%s0 + $0x8] sm:$0xff]
  %v1870 = vld [vmem:[%s0 + $0x10] sm:$0xff]
  %v1871 = vld [vmem:[%s0 + $0x18] sm:$0xff]
  %v1872 = vld [vmem:[%s0 + $0x20] sm:$0xff]
  %v1873 = vld [vmem:[%s0 + $0x28] sm:$0xff]
  %v1874 = vld [vmem:[%s0 + $0x30] sm:$0xff]
  %v1875 = vld [vmem:[%s0 + $0x38] sm:$0xff]
  %v1876 = vld [vmem:[%s0 + $0x40] sm:$0xff]
  %v1877 = vld [vmem:[%s0 + $0x48] sm:$0xff]
  %1887 = vrot.lane.b32.xlu0 %v1869, 85
  %v1888 = vpop.permute.xlu0 %1887
  %1889 = vrot.lane.b32.xlu0 %v1870, 85
  %v1890 = vpop.permute.xlu0 %1889
  %1891 = vrot.lane.b32.xlu0 %v1871, 85
  %v1892 = vpop.permute.xlu0 %1891
  %1893 = vrot.lane.b32.xlu0 %v1872, 85
  %v1894 = vpop.permute.xlu0 %1893
  %1895 = vrot.lane.b32.xlu0 %v1873, 85
  %v1896 = vpop.permute.xlu0 %1895
  %1897 = vrot.lane.b32.xlu0 %v1874, 85
  %v1898 = vpop.permute.xlu0 %1897
  %1899 = vrot.lane.b32.xlu0 %v1875, 85
  %v1900 = vpop.permute.xlu0 %1899
  %1901 = vrot.lane.b32.xlu0 %v1876, 85
  %v1902 = vpop.permute.xlu0 %1901
  %1903 = vrot.lane.b32.xlu0 %v1877, 85
  %v1904 = vpop.permute.xlu0 %1903
  %vm1905 = vcmask 695296
  %v1906 = vsel %vm1905, %v1888, %v1890
  %v1907 = vsel %vm1905, %v1890, %v1892
  %v1908 = vsel %vm1905, %v1892, %v1894
  %v1909 = vsel %vm1905, %v1894, %v1896
  %v1910 = vsel %vm1905, %v1896, %v1898
  %v1911 = vsel %vm1905, %v1898, %v1900
  %v1912 = vsel %vm1905, %v1900, %v1902
  %v1913 = vsel %vm1905, %v1902, %v1904
  %1922 = vst [vmem:[#allocation2 + $0x7c0] sm:$0xff] %v1906
  %1923 = vst [vmem:[#allocation2 + $0x7c8] sm:$0xff] %v1907
  %1924 = vst [vmem:[#allocation2 + $0x7d0] sm:$0xff] %v1908
  %1925 = vst [vmem:[#allocation2 + $0x7d8] sm:$0xff] %v1909
  %1926 = vst [vmem:[#allocation2 + $0x7e0] sm:$0xff] %v1910
  %1927 = vst [vmem:[#allocation2 + $0x7e8] sm:$0xff] %v1911
  %1928 = vst [vmem:[#allocation2 + $0x7f0] sm:$0xff] %v1912
  %1929 = vst [vmem:[#allocation2 + $0x7f8] sm:$0xff] %v1913
  %v1930 = vld [vmem:[%s0 + $0x8] sm:$0xff]
  %v1931 = vld [vmem:[%s0 + $0x10] sm:$0xff]
  %v1932 = vld [vmem:[%s0 + $0x18] sm:$0xff]
  %v1933 = vld [vmem:[%s0 + $0x20] sm:$0xff]
  %v1934 = vld [vmem:[%s0 + $0x28] sm:$0xff]
  %v1935 = vld [vmem:[%s0 + $0x30] sm:$0xff]
  %v1936 = vld [vmem:[%s0 + $0x38] sm:$0xff]
  %v1937 = vld [vmem:[%s0 + $0x40] sm:$0xff]
  %v1938 = vld [vmem:[%s0 + $0x48] sm:$0xff]
  %1948 = vrot.lane.b32.xlu0 %v1930, 84
  %v1949 = vpop.permute.xlu0 %1948
  %1950 = vrot.lane.b32.xlu0 %v1931, 84
  %v1951 = vpop.permute.xlu0 %1950
  %1952 = vrot.lane.b32.xlu0 %v1932, 84
  %v1953 = vpop.permute.xlu0 %1952
  %1954 = vrot.lane.b32.xlu0 %v1933, 84
  %v1955 = vpop.permute.xlu0 %1954
  %1956 = vrot.lane.b32.xlu0 %v1934, 84
  %v1957 = vpop.permute.xlu0 %1956
  %1958 = vrot.lane.b32.xlu0 %v1935, 84
  %v1959 = vpop.permute.xlu0 %1958
  %1960 = vrot.lane.b32.xlu0 %v1936, 84
  %v1961 = vpop.permute.xlu0 %1960
  %1962 = vrot.lane.b32.xlu0 %v1937, 84
  %v1963 = vpop.permute.xlu0 %1962
  %1964 = vrot.lane.b32.xlu0 %v1938, 84
  %v1965 = vpop.permute.xlu0 %1964
  %vm1966 = vcmask 687104
  %v1967 = vsel %vm1966, %v1949, %v1951
  %v1968 = vsel %vm1966, %v1951, %v1953
  %v1969 = vsel %vm1966, %v1953, %v1955
  %v1970 = vsel %vm1966, %v1955, %v1957
  %v1971 = vsel %vm1966, %v1957, %v1959
  %v1972 = vsel %vm1966, %v1959, %v1961
  %v1973 = vsel %vm1966, %v1961, %v1963
  %v1974 = vsel %vm1966, %v1963, %v1965
  %1983 = vst [vmem:[#allocation2 + $0x800] sm:$0xff] %v1967
  %1984 = vst [vmem:[#allocation2 + $0x808] sm:$0xff] %v1968
  %1985 = vst [vmem:[#allocation2 + $0x810] sm:$0xff] %v1969
  %1986 = vst [vmem:[#allocation2 + $0x818] sm:$0xff] %v1970
  %1987 = vst [vmem:[#allocation2 + $0x820] sm:$0xff] %v1971
  %1988 = vst [vmem:[#allocation2 + $0x828] sm:$0xff] %v1972
  %1989 = vst [vmem:[#allocation2 + $0x830] sm:$0xff] %v1973
  %1990 = vst [vmem:[#allocation2 + $0x838] sm:$0xff] %v1974
  %v1991 = vld [vmem:[%s0 + $0x8] sm:$0xff]
  %v1992 = vld [vmem:[%s0 + $0x10] sm:$0xff]
  %v1993 = vld [vmem:[%s0 + $0x18] sm:$0xff]
  %v1994 = vld [vmem:[%s0 + $0x20] sm:$0xff]
  %v1995 = vld [vmem:[%s0 + $0x28] sm:$0xff]
  %v1996 = vld [vmem:[%s0 + $0x30] sm:$0xff]
  %v1997 = vld [vmem:[%s0 + $0x38] sm:$0xff]
  %v1998 = vld [vmem:[%s0 + $0x40] sm:$0xff]
  %v1999 = vld [vmem:[%s0 + $0x48] sm:$0xff]
  %2009 = vrot.lane.b32.xlu0 %v1991, 83
  %v2010 = vpop.permute.xlu0 %2009
  %2011 = vrot.lane.b32.xlu0 %v1992, 83
  %v2012 = vpop.permute.xlu0 %2011
  %2013 = vrot.lane.b32.xlu0 %v1993, 83
  %v2014 = vpop.permute.xlu0 %2013
  %2015 = vrot.lane.b32.xlu0 %v1994, 83
  %v2016 = vpop.permute.xlu0 %2015
  %2017 = vrot.lane.b32.xlu0 %v1995, 83
  %v2018 = vpop.permute.xlu0 %2017
  %2019 = vrot.lane.b32.xlu0 %v1996, 83
  %v2020 = vpop.permute.xlu0 %2019
  %2021 = vrot.lane.b32.xlu0 %v1997, 83
  %v2022 = vpop.permute.xlu0 %2021
  %2023 = vrot.lane.b32.xlu0 %v1998, 83
  %v2024 = vpop.permute.xlu0 %2023
  %2025 = vrot.lane.b32.xlu0 %v1999, 83
  %v2026 = vpop.permute.xlu0 %2025
  %vm2027 = vcmask 678912
  %v2028 = vsel %vm2027, %v2010, %v2012
  %v2029 = vsel %vm2027, %v2012, %v2014
  %v2030 = vsel %vm2027, %v2014, %v2016
  %v2031 = vsel %vm2027, %v2016, %v2018
  %v2032 = vsel %vm2027, %v2018, %v2020
  %v2033 = vsel %vm2027, %v2020, %v2022
  %v2034 = vsel %vm2027, %v2022, %v2024
  %v2035 = vsel %vm2027, %v2024, %v2026
  %2044 = vst [vmem:[#allocation2 + $0x840] sm:$0xff] %v2028
  %2045 = vst [vmem:[#allocation2 + $0x848] sm:$0xff] %v2029
  %2046 = vst [vmem:[#allocation2 + $0x850] sm:$0xff] %v2030
  %2047 = vst [vmem:[#allocation2 + $0x858] sm:$0xff] %v2031
  %2048 = vst [vmem:[#allocation2 + $0x860] sm:$0xff] %v2032
  %2049 = vst [vmem:[#allocation2 + $0x868] sm:$0xff] %v2033
  %2050 = vst [vmem:[#allocation2 + $0x870] sm:$0xff] %v2034
  %2051 = vst [vmem:[#allocation2 + $0x878] sm:$0xff] %v2035
  %v2052 = vld [vmem:[%s0 + $0x8] sm:$0xff]
  %v2053 = vld [vmem:[%s0 + $0x10] sm:$0xff]
  %v2054 = vld [vmem:[%s0 + $0x18] sm:$0xff]
  %v2055 = vld [vmem:[%s0 + $0x20] sm:$0xff]
  %v2056 = vld [vmem:[%s0 + $0x28] sm:$0xff]
  %v2057 = vld [vmem:[%s0 + $0x30] sm:$0xff]
  %v2058 = vld [vmem:[%s0 + $0x38] sm:$0xff]
  %v2059 = vld [vmem:[%s0 + $0x40] sm:$0xff]
  %v2060 = vld [vmem:[%s0 + $0x48] sm:$0xff]
  %2070 = vrot.lane.b32.xlu0 %v2052, 82
  %v2071 = vpop.permute.xlu0 %2070
  %2072 = vrot.lane.b32.xlu0 %v2053, 82
  %v2073 = vpop.permute.xlu0 %2072
  %2074 = vrot.lane.b32.xlu0 %v2054, 82
  %v2075 = vpop.permute.xlu0 %2074
  %2076 = vrot.lane.b32.xlu0 %v2055, 82
  %v2077 = vpop.permute.xlu0 %2076
  %2078 = vrot.lane.b32.xlu0 %v2056, 82
  %v2079 = vpop.permute.xlu0 %2078
  %2080 = vrot.lane.b32.xlu0 %v2057, 82
  %v2081 = vpop.permute.xlu0 %2080
  %2082 = vrot.lane.b32.xlu0 %v2058, 82
  %v2083 = vpop.permute.xlu0 %2082
  %2084 = vrot.lane.b32.xlu0 %v2059, 82
  %v2085 = vpop.permute.xlu0 %2084
  %2086 = vrot.lane.b32.xlu0 %v2060, 82
  %v2087 = vpop.permute.xlu0 %2086
  %vm2088 = vcmask 670720
  %v2089 = vsel %vm2088, %v2071, %v2073
  %v2090 = vsel %vm2088, %v2073, %v2075
  %v2091 = vsel %vm2088, %v2075, %v2077
  %v2092 = vsel %vm2088, %v2077, %v2079
  %v2093 = vsel %vm2088, %v2079, %v2081
  %v2094 = vsel %vm2088, %v2081, %v2083
  %v2095 = vsel %vm2088, %v2083, %v2085
  %v2096 = vsel %vm2088, %v2085, %v2087
  %2105 = vst [vmem:[#allocation2 + $0x880] sm:$0xff] %v2089
  %2106 = vst [vmem:[#allocation2 + $0x888] sm:$0xff] %v2090
  %2107 = vst [vmem:[#allocation2 + $0x890] sm:$0xff] %v2091
  %2108 = vst [vmem:[#allocation2 + $0x898] sm:$0xff] %v2092
  %2109 = vst [vmem:[#allocation2 + $0x8a0] sm:$0xff] %v2093
  %2110 = vst [vmem:[#allocation2 + $0x8a8] sm:$0xff] %v2094
  %2111 = vst [vmem:[#allocation2 + $0x8b0] sm:$0xff] %v2095
  %2112 = vst [vmem:[#allocation2 + $0x8b8] sm:$0xff] %v2096
  %v2113 = vld [vmem:[%s0 + $0x8] sm:$0xff]
  %v2114 = vld [vmem:[%s0 + $0x10] sm:$0xff]
  %v2115 = vld [vmem:[%s0 + $0x18] sm:$0xff]
  %v2116 = vld [vmem:[%s0 + $0x20] sm:$0xff]
  %v2117 = vld [vmem:[%s0 + $0x28] sm:$0xff]
  %v2118 = vld [vmem:[%s0 + $0x30] sm:$0xff]
  %v2119 = vld [vmem:[%s0 + $0x38] sm:$0xff]
  %v2120 = vld [vmem:[%s0 + $0x40] sm:$0xff]
  %v2121 = vld [vmem:[%s0 + $0x48] sm:$0xff]
  %2131 = vrot.lane.b32.xlu0 %v2113, 81
  %v2132 = vpop.permute.xlu0 %2131
  %2133 = vrot.lane.b32.xlu0 %v2114, 81
  %v2134 = vpop.permute.xlu0 %2133
  %2135 = vrot.lane.b32.xlu0 %v2115, 81
  %v2136 = vpop.permute.xlu0 %2135
  %2137 = vrot.lane.b32.xlu0 %v2116, 81
  %v2138 = vpop.permute.xlu0 %2137
  %2139 = vrot.lane.b32.xlu0 %v2117, 81
  %v2140 = vpop.permute.xlu0 %2139
  %2141 = vrot.lane.b32.xlu0 %v2118, 81
  %v2142 = vpop.permute.xlu0 %2141
  %2143 = vrot.lane.b32.xlu0 %v2119, 81
  %v2144 = vpop.permute.xlu0 %2143
  %2145 = vrot.lane.b32.xlu0 %v2120, 81
  %v2146 = vpop.permute.xlu0 %2145
  %2147 = vrot.lane.b32.xlu0 %v2121, 81
  %v2148 = vpop.permute.xlu0 %2147
  %vm2149 = vcmask 662528
  %v2150 = vsel %vm2149, %v2132, %v2134
  %v2151 = vsel %vm2149, %v2134, %v2136
  %v2152 = vsel %vm2149, %v2136, %v2138
  %v2153 = vsel %vm2149, %v2138, %v2140
  %v2154 = vsel %vm2149, %v2140, %v2142
  %v2155 = vsel %vm2149, %v2142, %v2144
  %v2156 = vsel %vm2149, %v2144, %v2146
  %v2157 = vsel %vm2149, %v2146, %v2148
  %2166 = vst [vmem:[#allocation2 + $0x8c0] sm:$0xff] %v2150
  %2167 = vst [vmem:[#allocation2 + $0x8c8] sm:$0xff] %v2151
  %2168 = vst [vmem:[#allocation2 + $0x8d0] sm:$0xff] %v2152
  %2169 = vst [vmem:[#allocation2 + $0x8d8] sm:$0xff] %v2153
  %2170 = vst [vmem:[#allocation2 + $0x8e0] sm:$0xff] %v2154
  %2171 = vst [vmem:[#allocation2 + $0x8e8] sm:$0xff] %v2155
  %2172 = vst [vmem:[#allocation2 + $0x8f0] sm:$0xff] %v2156
  %2173 = vst [vmem:[#allocation2 + $0x8f8] sm:$0xff] %v2157
  %v2174 = vld [vmem:[%s1] sm:$0xff]
  %v2175 = vld [vmem:[%s1 + $0x8] sm:$0xff]
  %v2176 = vld [vmem:[%s1 + $0x10] sm:$0xff]
  %v2177 = vld [vmem:[%s1 + $0x18] sm:$0xff]
  %v2178 = vld [vmem:[%s1 + $0x20] sm:$0xff]
  %v2179 = vld [vmem:[%s1 + $0x28] sm:$0xff]
  %v2180 = vld [vmem:[#allocation2] sm:$0xff]
  %v2181 = vld [vmem:[#allocation2 + $0x8] sm:$0xff]
  %v2182 = vld [vmem:[#allocation2 + $0x10] sm:$0xff]
  %v2183 = vld [vmem:[#allocation2 + $0x18] sm:$0xff]
  %v2184 = vld [vmem:[#allocation2 + $0x20] sm:$0xff]
  %v2185 = vld [vmem:[#allocation2 + $0x28] sm:$0xff]
  %v2186 = vld [vmem:[#allocation2 + $0x30] sm:$0xff]
  %v2187 = vld [vmem:[#allocation2 + $0x38] sm:$0xff]
  %v2188 = vld [vmem:[#allocation2 + $0x40] sm:$0xff]
  %v2189 = vld [vmem:[#allocation2 + $0x48] sm:$0xff]
  %v2190 = vld [vmem:[#allocation2 + $0x50] sm:$0xff]
  %v2191 = vld [vmem:[#allocation2 + $0x58] sm:$0xff]
  %v2192 = vld [vmem:[#allocation2 + $0x60] sm:$0xff]
  %v2193 = vld [vmem:[#allocation2 + $0x68] sm:$0xff]
  %v2194 = vld [vmem:[#allocation2 + $0x70] sm:$0xff]
  %v2195 = vld [vmem:[#allocation2 + $0x78] sm:$0xff]
  %v2196 = vld [vmem:[#allocation2 + $0x80] sm:$0xff]
  %v2197 = vld [vmem:[#allocation2 + $0x88] sm:$0xff]
  %v2198 = vld [vmem:[#allocation2 + $0x90] sm:$0xff]
  %v2199 = vld [vmem:[#allocation2 + $0x98] sm:$0xff]
  %v2200 = vld [vmem:[#allocation2 + $0xa0] sm:$0xff]
  %v2201 = vld [vmem:[#allocation2 + $0xa8] sm:$0xff]
  %v2202 = vld [vmem:[#allocation2 + $0xb0] sm:$0xff]
  %v2203 = vld [vmem:[#allocation2 + $0xb8] sm:$0xff]
  %v2204 = vld [vmem:[#allocation2 + $0xc0] sm:$0xff]
  %v2205 = vld [vmem:[#allocation2 + $0xc8] sm:$0xff]
  %v2206 = vld [vmem:[#allocation2 + $0xd0] sm:$0xff]
  %v2207 = vld [vmem:[#allocation2 + $0xd8] sm:$0xff]
  %v2208 = vld [vmem:[#allocation2 + $0xe0] sm:$0xff]
  %v2209 = vld [vmem:[#allocation2 + $0xe8] sm:$0xff]
  %v2210 = vld [vmem:[#allocation2 + $0xf0] sm:$0xff]
  %v2211 = vld [vmem:[#allocation2 + $0xf8] sm:$0xff]
  %v2212 = vld [vmem:[#allocation2 + $0x100] sm:$0xff]
  %v2213 = vld [vmem:[#allocation2 + $0x108] sm:$0xff]
  %v2214 = vld [vmem:[#allocation2 + $0x110] sm:$0xff]
  %v2215 = vld [vmem:[#allocation2 + $0x118] sm:$0xff]
  %v2216 = vld [vmem:[#allocation2 + $0x120] sm:$0xff]
  %v2217 = vld [vmem:[#allocation2 + $0x128] sm:$0xff]
  %v2218 = vld [vmem:[#allocation2 + $0x130] sm:$0xff]
  %v2219 = vld [vmem:[#allocation2 + $0x138] sm:$0xff]
  %v2220 = vld [vmem:[#allocation2 + $0x140] sm:$0xff]
  %v2221 = vld [vmem:[#allocation2 + $0x148] sm:$0xff]
  %v2222 = vld [vmem:[#allocation2 + $0x150] sm:$0xff]
  %v2223 = vld [vmem:[#allocation2 + $0x158] sm:$0xff]
  %v2224 = vld [vmem:[#allocation2 + $0x160] sm:$0xff]
  %v2225 = vld [vmem:[#allocation2 + $0x168] sm:$0xff]
  %v2226 = vld [vmem:[#allocation2 + $0x170] sm:$0xff]
  %v2227 = vld [vmem:[#allocation2 + $0x178] sm:$0xff]
  %v2228 = vld [vmem:[#allocation2 + $0x180] sm:$0xff]
  %v2229 = vld [vmem:[#allocation2 + $0x188] sm:$0xff]
  %v2230 = vld [vmem:[#allocation2 + $0x190] sm:$0xff]
  %v2231 = vld [vmem:[#allocation2 + $0x198] sm:$0xff]
  %v2232 = vld [vmem:[#allocation2 + $0x1a0] sm:$0xff]
  %v2233 = vld [vmem:[#allocation2 + $0x1a8] sm:$0xff]
  %v2234 = vld [vmem:[#allocation2 + $0x1b0] sm:$0xff]
  %v2235 = vld [vmem:[#allocation2 + $0x1b8] sm:$0xff]
  %v2236 = vld [vmem:[#allocation2 + $0x1c0] sm:$0xff]
  %v2237 = vld [vmem:[#allocation2 + $0x1c8] sm:$0xff]
  %v2238 = vld [vmem:[#allocation2 + $0x1d0] sm:$0xff]
  %v2239 = vld [vmem:[#allocation2 + $0x1d8] sm:$0xff]
  %v2240 = vld [vmem:[#allocation2 + $0x1e0] sm:$0xff]
  %v2241 = vld [vmem:[#allocation2 + $0x1e8] sm:$0xff]
  %v2242 = vld [vmem:[#allocation2 + $0x1f0] sm:$0xff]
  %v2243 = vld [vmem:[#allocation2 + $0x1f8] sm:$0xff]
  %v2244 = vld [vmem:[#allocation2 + $0x200] sm:$0xff]
  %v2245 = vld [vmem:[#allocation2 + $0x208] sm:$0xff]
  %v2246 = vld [vmem:[#allocation2 + $0x210] sm:$0xff]
  %v2247 = vld [vmem:[#allocation2 + $0x218] sm:$0xff]
  %v2248 = vld [vmem:[#allocation2 + $0x220] sm:$0xff]
  %v2249 = vld [vmem:[#allocation2 + $0x228] sm:$0xff]
  %v2250 = vld [vmem:[#allocation2 + $0x230] sm:$0xff]
  %v2251 = vld [vmem:[#allocation2 + $0x238] sm:$0xff]
  %v2252 = vld [vmem:[#allocation2 + $0x240] sm:$0xff]
  %v2253 = vld [vmem:[#allocation2 + $0x248] sm:$0xff]
  %v2254 = vld [vmem:[#allocation2 + $0x250] sm:$0xff]
  %v2255 = vld [vmem:[#allocation2 + $0x258] sm:$0xff]
  %v2256 = vld [vmem:[#allocation2 + $0x260] sm:$0xff]
  %v2257 = vld [vmem:[#allocation2 + $0x268] sm:$0xff]
  %v2258 = vld [vmem:[#allocation2 + $0x270] sm:$0xff]
  %v2259 = vld [vmem:[#allocation2 + $0x278] sm:$0xff]
  %v2260 = vld [vmem:[#allocation2 + $0x280] sm:$0xff]
  %v2261 = vld [vmem:[#allocation2 + $0x288] sm:$0xff]
  %v2262 = vld [vmem:[#allocation2 + $0x290] sm:$0xff]
  %v2263 = vld [vmem:[#allocation2 + $0x298] sm:$0xff]
  %v2264 = vld [vmem:[#allocation2 + $0x2a0] sm:$0xff]
  %v2265 = vld [vmem:[#allocation2 + $0x2a8] sm:$0xff]
  %v2266 = vld [vmem:[#allocation2 + $0x2b0] sm:$0xff]
  %v2267 = vld [vmem:[#allocation2 + $0x2b8] sm:$0xff]
  %v2268 = vld [vmem:[#allocation2 + $0x2c0] sm:$0xff]
  %v2269 = vld [vmem:[#allocation2 + $0x2c8] sm:$0xff]
  %v2270 = vld [vmem:[#allocation2 + $0x2d0] sm:$0xff]
  %v2271 = vld [vmem:[#allocation2 + $0x2d8] sm:$0xff]
  %v2272 = vld [vmem:[#allocation2 + $0x2e0] sm:$0xff]
  %v2273 = vld [vmem:[#allocation2 + $0x2e8] sm:$0xff]
  %v2274 = vld [vmem:[#allocation2 + $0x2f0] sm:$0xff]
  %v2275 = vld [vmem:[#allocation2 + $0x2f8] sm:$0xff]
  %v2276 = vld [vmem:[#allocation2 + $0x300] sm:$0xff]
  %v2277 = vld [vmem:[#allocation2 + $0x308] sm:$0xff]
  %v2278 = vld [vmem:[#allocation2 + $0x310] sm:$0xff]
  %v2279 = vld [vmem:[#allocation2 + $0x318] sm:$0xff]
  %v2280 = vld [vmem:[#allocation2 + $0x320] sm:$0xff]
  %v2281 = vld [vmem:[#allocation2 + $0x328] sm:$0xff]
  %v2282 = vld [vmem:[#allocation2 + $0x330] sm:$0xff]
  %v2283 = vld [vmem:[#allocation2 + $0x338] sm:$0xff]
  %v2284 = vld [vmem:[#allocation2 + $0x340] sm:$0xff]
  %v2285 = vld [vmem:[#allocation2 + $0x348] sm:$0xff]
  %v2286 = vld [vmem:[#allocation2 + $0x350] sm:$0xff]
  %v2287 = vld [vmem:[#allocation2 + $0x358] sm:$0xff]
  %v2288 = vld [vmem:[#allocation2 + $0x360] sm:$0xff]
  %v2289 = vld [vmem:[#allocation2 + $0x368] sm:$0xff]
  %v2290 = vld [vmem:[#allocation2 + $0x370] sm:$0xff]
  %v2291 = vld [vmem:[#allocation2 + $0x378] sm:$0xff]
  %v2292 = vld [vmem:[#allocation2 + $0x380] sm:$0xff]
  %v2293 = vld [vmem:[#allocation2 + $0x388] sm:$0xff]
  %v2294 = vld [vmem:[#allocation2 + $0x390] sm:$0xff]
  %v2295 = vld [vmem:[#allocation2 + $0x398] sm:$0xff]
  %v2296 = vld [vmem:[#allocation2 + $0x3a0] sm:$0xff]
  %v2297 = vld [vmem:[#allocation2 + $0x3a8] sm:$0xff]
  %v2298 = vld [vmem:[#allocation2 + $0x3b0] sm:$0xff]
  %v2299 = vld [vmem:[#allocation2 + $0x3b8] sm:$0xff]
  %v2300 = vld [vmem:[#allocation2 + $0x3c0] sm:$0xff]
  %v2301 = vld [vmem:[#allocation2 + $0x3c8] sm:$0xff]
  %v2302 = vld [vmem:[#allocation2 + $0x3d0] sm:$0xff]
  %v2303 = vld [vmem:[#allocation2 + $0x3d8] sm:$0xff]
  %v2304 = vld [vmem:[#allocation2 + $0x3e0] sm:$0xff]
  %v2305 = vld [vmem:[#allocation2 + $0x3e8] sm:$0xff]
  %v2306 = vld [vmem:[#allocation2 + $0x3f0] sm:$0xff]
  %v2307 = vld [vmem:[#allocation2 + $0x3f8] sm:$0xff]
  %v2308 = vld [vmem:[#allocation2 + $0x400] sm:$0xff]
  %v2309 = vld [vmem:[#allocation2 + $0x408] sm:$0xff]
  %v2310 = vld [vmem:[#allocation2 + $0x410] sm:$0xff]
  %v2311 = vld [vmem:[#allocation2 + $0x418] sm:$0xff]
  %v2312 = vld [vmem:[#allocation2 + $0x420] sm:$0xff]
  %v2313 = vld [vmem:[#allocation2 + $0x428] sm:$0xff]
  %v2314 = vld [vmem:[#allocation2 + $0x430] sm:$0xff]
  %v2315 = vld [vmem:[#allocation2 + $0x438] sm:$0xff]
  %v2316 = vld [vmem:[#allocation2 + $0x440] sm:$0xff]
  %v2317 = vld [vmem:[#allocation2 + $0x448] sm:$0xff]
  %v2318 = vld [vmem:[#allocation2 + $0x450] sm:$0xff]
  %v2319 = vld [vmem:[#allocation2 + $0x458] sm:$0xff]
  %v2320 = vld [vmem:[#allocation2 + $0x460] sm:$0xff]
  %v2321 = vld [vmem:[#allocation2 + $0x468] sm:$0xff]
  %v2322 = vld [vmem:[#allocation2 + $0x470] sm:$0xff]
  %v2323 = vld [vmem:[#allocation2 + $0x478] sm:$0xff]
  %v2324 = vld [vmem:[#allocation2 + $0x480] sm:$0xff]
  %v2325 = vld [vmem:[#allocation2 + $0x488] sm:$0xff]
  %v2326 = vld [vmem:[#allocation2 + $0x490] sm:$0xff]
  %v2327 = vld [vmem:[#allocation2 + $0x498] sm:$0xff]
  %v2328 = vld [vmem:[#allocation2 + $0x4a0] sm:$0xff]
  %v2329 = vld [vmem:[#allocation2 + $0x4a8] sm:$0xff]
  %v2330 = vld [vmem:[#allocation2 + $0x4b0] sm:$0xff]
  %v2331 = vld [vmem:[#allocation2 + $0x4b8] sm:$0xff]
  %v2332 = vld [vmem:[#allocation2 + $0x4c0] sm:$0xff]
  %v2333 = vld [vmem:[#allocation2 + $0x4c8] sm:$0xff]
  %v2334 = vld [vmem:[#allocation2 + $0x4d0] sm:$0xff]
  %v2335 = vld [vmem:[#allocation2 + $0x4d8] sm:$0xff]
  %v2336 = vld [vmem:[#allocation2 + $0x4e0] sm:$0xff]
  %v2337 = vld [vmem:[#allocation2 + $0x4e8] sm:$0xff]
  %v2338 = vld [vmem:[#allocation2 + $0x4f0] sm:$0xff]
  %v2339 = vld [vmem:[#allocation2 + $0x4f8] sm:$0xff]
  %v2340 = vld [vmem:[#allocation2 + $0x500] sm:$0xff]
  %v2341 = vld [vmem:[#allocation2 + $0x508] sm:$0xff]
  %v2342 = vld [vmem:[#allocation2 + $0x510] sm:$0xff]
  %v2343 = vld [vmem:[#allocation2 + $0x518] sm:$0xff]
  %v2344 = vld [vmem:[#allocation2 + $0x520] sm:$0xff]
  %v2345 = vld [vmem:[#allocation2 + $0x528] sm:$0xff]
  %v2346 = vld [vmem:[#allocation2 + $0x530] sm:$0xff]
  %v2347 = vld [vmem:[#allocation2 + $0x538] sm:$0xff]
  %v2348 = vld [vmem:[#allocation2 + $0x540] sm:$0xff]
  %v2349 = vld [vmem:[#allocation2 + $0x548] sm:$0xff]
  %v2350 = vld [vmem:[#allocation2 + $0x550] sm:$0xff]
  %v2351 = vld [vmem:[#allocation2 + $0x558] sm:$0xff]
  %v2352 = vld [vmem:[#allocation2 + $0x560] sm:$0xff]
  %v2353 = vld [vmem:[#allocation2 + $0x568] sm:$0xff]
  %v2354 = vld [vmem:[#allocation2 + $0x570] sm:$0xff]
  %v2355 = vld [vmem:[#allocation2 + $0x578] sm:$0xff]
  %v2356 = vld [vmem:[#allocation2 + $0x580] sm:$0xff]
  %v2357 = vld [vmem:[#allocation2 + $0x588] sm:$0xff]
  %v2358 = vld [vmem:[#allocation2 + $0x590] sm:$0xff]
  %v2359 = vld [vmem:[#allocation2 + $0x598] sm:$0xff]
  %v2360 = vld [vmem:[#allocation2 + $0x5a0] sm:$0xff]
  %v2361 = vld [vmem:[#allocation2 + $0x5a8] sm:$0xff]
  %v2362 = vld [vmem:[#allocation2 + $0x5b0] sm:$0xff]
  %v2363 = vld [vmem:[#allocation2 + $0x5b8] sm:$0xff]
  %v2364 = vld [vmem:[#allocation2 + $0x5c0] sm:$0xff]
  %v2365 = vld [vmem:[#allocation2 + $0x5c8] sm:$0xff]
  %v2366 = vld [vmem:[#allocation2 + $0x5d0] sm:$0xff]
  %v2367 = vld [vmem:[#allocation2 + $0x5d8] sm:$0xff]
  %v2368 = vld [vmem:[#allocation2 + $0x5e0] sm:$0xff]
  %v2369 = vld [vmem:[#allocation2 + $0x5e8] sm:$0xff]
  %v2370 = vld [vmem:[#allocation2 + $0x5f0] sm:$0xff]
  %v2371 = vld [vmem:[#allocation2 + $0x5f8] sm:$0xff]
  %v2372 = vld [vmem:[#allocation2 + $0x600] sm:$0xff]
  %v2373 = vld [vmem:[#allocation2 + $0x608] sm:$0xff]
  %v2374 = vld [vmem:[#allocation2 + $0x610] sm:$0xff]
  %v2375 = vld [vmem:[#allocation2 + $0x618] sm:$0xff]
  %v2376 = vld [vmem:[#allocation2 + $0x620] sm:$0xff]
  %v2377 = vld [vmem:[#allocation2 + $0x628] sm:$0xff]
  %v2378 = vld [vmem:[#allocation2 + $0x630] sm:$0xff]
  %v2379 = vld [vmem:[#allocation2 + $0x638] sm:$0xff]
  %v2380 = vld [vmem:[#allocation2 + $0x640] sm:$0xff]
  %v2381 = vld [vmem:[#allocation2 + $0x648] sm:$0xff]
  %v2382 = vld [vmem:[#allocation2 + $0x650] sm:$0xff]
  %v2383 = vld [vmem:[#allocation2 + $0x658] sm:$0xff]
  %v2384 = vld [vmem:[#allocation2 + $0x660] sm:$0xff]
  %v2385 = vld [vmem:[#allocation2 + $0x668] sm:$0xff]
  %v2386 = vld [vmem:[#allocation2 + $0x670] sm:$0xff]
  %v2387 = vld [vmem:[#allocation2 + $0x678] sm:$0xff]
  %v2388 = vld [vmem:[#allocation2 + $0x680] sm:$0xff]
  %v2389 = vld [vmem:[#allocation2 + $0x688] sm:$0xff]
  %v2390 = vld [vmem:[#allocation2 + $0x690] sm:$0xff]
  %v2391 = vld [vmem:[#allocation2 + $0x698] sm:$0xff]
  %v2392 = vld [vmem:[#allocation2 + $0x6a0] sm:$0xff]
  %v2393 = vld [vmem:[#allocation2 + $0x6a8] sm:$0xff]
  %v2394 = vld [vmem:[#allocation2 + $0x6b0] sm:$0xff]
  %v2395 = vld [vmem:[#allocation2 + $0x6b8] sm:$0xff]
  %v2396 = vld [vmem:[#allocation2 + $0x6c0] sm:$0xff]
  %v2397 = vld [vmem:[#allocation2 + $0x6c8] sm:$0xff]
  %v2398 = vld [vmem:[#allocation2 + $0x6d0] sm:$0xff]
  %v2399 = vld [vmem:[#allocation2 + $0x6d8] sm:$0xff]
  %v2400 = vld [vmem:[#allocation2 + $0x6e0] sm:$0xff]
  %v2401 = vld [vmem:[#allocation2 + $0x6e8] sm:$0xff]
  %v2402 = vld [vmem:[#allocation2 + $0x6f0] sm:$0xff]
  %v2403 = vld [vmem:[#allocation2 + $0x6f8] sm:$0xff]
  %v2404 = vld [vmem:[#allocation2 + $0x700] sm:$0xff]
  %v2405 = vld [vmem:[#allocation2 + $0x708] sm:$0xff]
  %v2406 = vld [vmem:[#allocation2 + $0x710] sm:$0xff]
  %v2407 = vld [vmem:[#allocation2 + $0x718] sm:$0xff]
  %v2408 = vld [vmem:[#allocation2 + $0x720] sm:$0xff]
  %v2409 = vld [vmem:[#allocation2 + $0x728] sm:$0xff]
  %v2410 = vld [vmem:[#allocation2 + $0x730] sm:$0xff]
  %v2411 = vld [vmem:[#allocation2 + $0x738] sm:$0xff]
  %v2412 = vld [vmem:[#allocation2 + $0x740] sm:$0xff]
  %v2413 = vld [vmem:[#allocation2 + $0x748] sm:$0xff]
  %v2414 = vld [vmem:[#allocation2 + $0x750] sm:$0xff]
  %v2415 = vld [vmem:[#allocation2 + $0x758] sm:$0xff]
  %v2416 = vld [vmem:[#allocation2 + $0x760] sm:$0xff]
  %v2417 = vld [vmem:[#allocation2 + $0x768] sm:$0xff]
  %v2418 = vld [vmem:[#allocation2 + $0x770] sm:$0xff]
  %v2419 = vld [vmem:[#allocation2 + $0x778] sm:$0xff]
  %v2420 = vld [vmem:[#allocation2 + $0x780] sm:$0xff]
  %v2421 = vld [vmem:[#allocation2 + $0x788] sm:$0xff]
  %v2422 = vld [vmem:[#allocation2 + $0x790] sm:$0xff]
  %v2423 = vld [vmem:[#allocation2 + $0x798] sm:$0xff]
  %v2424 = vld [vmem:[#allocation2 + $0x7a0] sm:$0xff]
  %v2425 = vld [vmem:[#allocation2 + $0x7a8] sm:$0xff]
  %v2426 = vld [vmem:[#allocation2 + $0x7b0] sm:$0xff]
  %v2427 = vld [vmem:[#allocation2 + $0x7b8] sm:$0xff]
  %v2428 = vld [vmem:[#allocation2 + $0x7c0] sm:$0xff]
  %v2429 = vld [vmem:[#allocation2 + $0x7c8] sm:$0xff]
  %v2430 = vld [vmem:[#allocation2 + $0x7d0] sm:$0xff]
  %v2431 = vld [vmem:[#allocation2 + $0x7d8] sm:$0xff]
  %v2432 = vld [vmem:[#allocation2 + $0x7e0] sm:$0xff]
  %v2433 = vld [vmem:[#allocation2 + $0x7e8] sm:$0xff]
  %v2434 = vld [vmem:[#allocation2 + $0x7f0] sm:$0xff]
  %v2435 = vld [vmem:[#allocation2 + $0x7f8] sm:$0xff]
  %v2436 = vld [vmem:[#allocation2 + $0x800] sm:$0xff]
  %v2437 = vld [vmem:[#allocation2 + $0x808] sm:$0xff]
  %v2438 = vld [vmem:[#allocation2 + $0x810] sm:$0xff]
  %v2439 = vld [vmem:[#allocation2 + $0x818] sm:$0xff]
  %v2440 = vld [vmem:[#allocation2 + $0x820] sm:$0xff]
  %v2441 = vld [vmem:[#allocation2 + $0x828] sm:$0xff]
  %v2442 = vld [vmem:[#allocation2 + $0x830] sm:$0xff]
  %v2443 = vld [vmem:[#allocation2 + $0x838] sm:$0xff]
  %v2444 = vld [vmem:[#allocation2 + $0x840] sm:$0xff]
  %v2445 = vld [vmem:[#allocation2 + $0x848] sm:$0xff]
  %v2446 = vld [vmem:[#allocation2 + $0x850] sm:$0xff]
  %v2447 = vld [vmem:[#allocation2 + $0x858] sm:$0xff]
  %v2448 = vld [vmem:[#allocation2 + $0x860] sm:$0xff]
  %v2449 = vld [vmem:[#allocation2 + $0x868] sm:$0xff]
  %v2450 = vld [vmem:[#allocation2 + $0x870] sm:$0xff]
  %v2451 = vld [vmem:[#allocation2 + $0x878] sm:$0xff]
  %v2452 = vld [vmem:[#allocation2 + $0x880] sm:$0xff]
  %v2453 = vld [vmem:[#allocation2 + $0x888] sm:$0xff]
  %v2454 = vld [vmem:[#allocation2 + $0x890] sm:$0xff]
  %v2455 = vld [vmem:[#allocation2 + $0x898] sm:$0xff]
  %v2456 = vld [vmem:[#allocation2 + $0x8a0] sm:$0xff]
  %v2457 = vld [vmem:[#allocation2 + $0x8a8] sm:$0xff]
  %v2458 = vld [vmem:[#allocation2 + $0x8b0] sm:$0xff]
  %v2459 = vld [vmem:[#allocation2 + $0x8b8] sm:$0xff]
  %v2460 = vld [vmem:[#allocation2 + $0x8c0] sm:$0xff]
  %v2461 = vld [vmem:[#allocation2 + $0x8c8] sm:$0xff]
  %v2462 = vld [vmem:[#allocation2 + $0x8d0] sm:$0xff]
  %v2463 = vld [vmem:[#allocation2 + $0x8d8] sm:$0xff]
  %v2464 = vld [vmem:[#allocation2 + $0x8e0] sm:$0xff]
  %v2465 = vld [vmem:[#allocation2 + $0x8e8] sm:$0xff]
  %v2466 = vld [vmem:[#allocation2 + $0x8f0] sm:$0xff]
  %v2467 = vld [vmem:[#allocation2 + $0x8f8] sm:$0xff]
  %v2468 = vld [vmem:[%s2] sm:$0xff]
  %v2469 = vld [vmem:[%s2 + $0x8] sm:$0xff]
  %2471 = vset.pattern.permute.xlu0 0
  %2472 = vperm.xlu0 %2471, %v2468
  %v2473 = vpop.permute.xlu0 %2472
  %2476 = vset.pattern.permute.xlu0 0
  %2477 = vperm.xlu0 %2476, %v2469
  %v2478 = vpop.permute.xlu0 %2477
  %vm2480 = vcmask 261120
  %v2482 = vsel %vm2480, %v2176, 0
  %v2485 = vsel %vm2480, %v2179, 0
  %2487 = vmatpush.msra.mxu0 %v2300
  %2488 = vmatpush.msra.mxu0 %v2292
  %2489 = vmatpush.msra.mxu0 %v2284
  %2490 = vmatpush.msra.mxu0 %v2276
  %2491 = vmatpush.msra.mxu0 %v2268
  %2492 = vmatpush.msra.mxu0 %v2260
  %2493 = vmatpush.msra.mxu0 %v2252
  %2494 = vmatpush.msra.mxu0 %v2244
  %2495 = vmatpush.msra.mxu0 %v2236
  %2496 = vmatpush.msra.mxu0 %v2228
  %2497 = vmatpush.msra.mxu0 %v2220
  %2498 = vmatpush.msra.mxu0 %v2212
  %2499 = vmatpush.msra.mxu0 %v2204
  %2500 = vmatpush.msra.mxu0 %v2196
  %2501 = vmatpush.msra.mxu0 %v2188
  %2502 = vmatpush.msra.mxu0 %v2180
  %2503 = vmatmul.f32.gmra.mxu0 %v2174
  %v2504 = vpop.f32.mrf.mxu0
  %v2505 = vadd.f32 %v2473, %v2504
  %2506 = vmatmul.f32.gmra.mxu0 %v2177
  %v2507 = vpop.f32.mrf.mxu0
  %v2508 = vadd.f32 %v2478, %v2507
  %2509 = vdwg.mxu0
  %2510 = vmatpush.msra.mxu0 %v2428
  %2511 = vmatpush.msra.mxu0 %v2420
  %2512 = vmatpush.msra.mxu0 %v2412
  %2513 = vmatpush.msra.mxu0 %v2404
  %2514 = vmatpush.msra.mxu0 %v2396
  %2515 = vmatpush.msra.mxu0 %v2388
  %2516 = vmatpush.msra.mxu0 %v2380
  %2517 = vmatpush.msra.mxu0 %v2372
  %2518 = vmatpush.msra.mxu0 %v2364
  %2519 = vmatpush.msra.mxu0 %v2356
  %2520 = vmatpush.msra.mxu0 %v2348
  %2521 = vmatpush.msra.mxu0 %v2340
  %2522 = vmatpush.msra.mxu0 %v2332
  %2523 = vmatpush.msra.mxu0 %v2324
  %2524 = vmatpush.msra.mxu0 %v2316
  %2525 = vmatpush.msra.mxu0 %v2308
  %2526 = vmatmul.f32.gmra.mxu0 %v2175
  %v2527 = vpop.f32.mrf.mxu0
  %v2528 = vadd.f32 %v2505, %v2527
  %2529 = vmatmul.f32.gmra.mxu0 %v2178
  %v2530 = vpop.f32.mrf.mxu0
  %v2531 = vadd.f32 %v2508, %v2530
  %2532 = vdwg.mxu0
  %2533 = vmatpush.msra.mxu0 0.0
  %2534 = vmatpush.msra.mxu0 0.0
  %2535 = vmatpush.msra.mxu0 0.0
  %2536 = vmatpush.msra.mxu0 0.0
  %2537 = vmatpush.msra.mxu0 0.0
  %2538 = vmatpush.msra.mxu0 0.0
  %2539 = vmatpush.msra.mxu0 0.0
  %2540 = vmatpush.msra.mxu0 0.0
  %2541 = vmatpush.msra.mxu0 0.0
  %2542 = vmatpush.msra.mxu0 0.0
  %2543 = vmatpush.msra.mxu0 0.0
  %2544 = vmatpush.msra.mxu0 0.0
  %2545 = vmatpush.msra.mxu0 %v2460
  %2546 = vmatpush.msra.mxu0 %v2452
  %2547 = vmatpush.msra.mxu0 %v2444
  %2548 = vmatpush.msra.mxu0 %v2436
  %2549 = vmatmul.f32.gmra.mxu0 %v2482
  %v2550 = vpop.f32.mrf.mxu0
  %v2551 = vadd.f32 %v2528, %v2550
  %2552 = vmatmul.f32.gmra.mxu0 %v2485
  %v2553 = vpop.f32.mrf.mxu0
  %v2554 = vadd.f32 %v2531, %v2553
  %2555 = vdwg.mxu0
  %2556 = vmatpush.msra.mxu0 %v2301
  %2557 = vmatpush.msra.mxu0 %v2293
  %2558 = vmatpush.msra.mxu0 %v2285
  %2559 = vmatpush.msra.mxu0 %v2277
  %2560 = vmatpush.msra.mxu0 %v2269
  %2561 = vmatpush.msra.mxu0 %v2261
  %2562 = vmatpush.msra.mxu0 %v2253
  %2563 = vmatpush.msra.mxu0 %v2245
  %2564 = vmatpush.msra.mxu0 %v2237
  %2565 = vmatpush.msra.mxu0 %v2229
  %2566 = vmatpush.msra.mxu0 %v2221
  %2567 = vmatpush.msra.mxu0 %v2213
  %2568 = vmatpush.msra.mxu0 %v2205
  %2569 = vmatpush.msra.mxu0 %v2197
  %2570 = vmatpush.msra.mxu0 %v2189
  %2571 = vmatpush.msra.mxu0 %v2181
  %2572 = vmatmul.f32.gmra.mxu0 %v2174
  %v2573 = vpop.f32.mrf.mxu0
  %v2574 = vadd.f32 %v2473, %v2573
  %2575 = vmatmul.f32.gmra.mxu0 %v2177
  %v2576 = vpop.f32.mrf.mxu0
  %v2577 = vadd.f32 %v2478, %v2576
  %2578 = vdwg.mxu0
  %2579 = vmatpush.msra.mxu0 %v2429
  %2580 = vmatpush.msra.mxu0 %v2421
  %2581 = vmatpush.msra.mxu0 %v2413
  %2582 = vmatpush.msra.mxu0 %v2405
  %2583 = vmatpush.msra.mxu0 %v2397
  %2584 = vmatpush.msra.mxu0 %v2389
  %2585 = vmatpush.msra.mxu0 %v2381
  %2586 = vmatpush.msra.mxu0 %v2373
  %2587 = vmatpush.msra.mxu0 %v2365
  %2588 = vmatpush.msra.mxu0 %v2357
  %2589 = vmatpush.msra.mxu0 %v2349
  %2590 = vmatpush.msra.mxu0 %v2341
  %2591 = vmatpush.msra.mxu0 %v2333
  %2592 = vmatpush.msra.mxu0 %v2325
  %2593 = vmatpush.msra.mxu0 %v2317
  %2594 = vmatpush.msra.mxu0 %v2309
  %2595 = vmatmul.f32.gmra.mxu0 %v2175
  %v2596 = vpop.f32.mrf.mxu0
  %v2597 = vadd.f32 %v2574, %v2596
  %2598 = vmatmul.f32.gmra.mxu0 %v2178
  %v2599 = vpop.f32.mrf.mxu0
  %v2600 = vadd.f32 %v2577, %v2599
  %2601 = vdwg.mxu0
  %2602 = vmatpush.msra.mxu0 0.0
  %2603 = vmatpush.msra.mxu0 0.0
  %2604 = vmatpush.msra.mxu0 0.0
  %2605 = vmatpush.msra.mxu0 0.0
  %2606 = vmatpush.msra.mxu0 0.0
  %2607 = vmatpush.msra.mxu0 0.0
  %2608 = vmatpush.msra.mxu0 0.0
  %2609 = vmatpush.msra.mxu0 0.0
  %2610 = vmatpush.msra.mxu0 0.0
  %2611 = vmatpush.msra.mxu0 0.0
  %2612 = vmatpush.msra.mxu0 0.0
  %2613 = vmatpush.msra.mxu0 0.0
  %2614 = vmatpush.msra.mxu0 %v2461
  %2615 = vmatpush.msra.mxu0 %v2453
  %2616 = vmatpush.msra.mxu0 %v2445
  %2617 = vmatpush.msra.mxu0 %v2437
  %2618 = vmatmul.f32.gmra.mxu0 %v2482
  %v2619 = vpop.f32.mrf.mxu0
  %v2620 = vadd.f32 %v2597, %v2619
  %2621 = vmatmul.f32.gmra.mxu0 %v2485
  %v2622 = vpop.f32.mrf.mxu0
  %v2623 = vadd.f32 %v2600, %v2622
  %2624 = vdwg.mxu0
  %2625 = vmatpush.msra.mxu0 %v2302
  %2626 = vmatpush.msra.mxu0 %v2294
  %2627 = vmatpush.msra.mxu0 %v2286
  %2628 = vmatpush.msra.mxu0 %v2278
  %2629 = vmatpush.msra.mxu0 %v2270
  %2630 = vmatpush.msra.mxu0 %v2262
  %2631 = vmatpush.msra.mxu0 %v2254
  %2632 = vmatpush.msra.mxu0 %v2246
  %2633 = vmatpush.msra.mxu0 %v2238
  %2634 = vmatpush.msra.mxu0 %v2230
  %2635 = vmatpush.msra.mxu0 %v2222
  %2636 = vmatpush.msra.mxu0 %v2214
  %2637 = vmatpush.msra.mxu0 %v2206
  %2638 = vmatpush.msra.mxu0 %v2198
  %2639 = vmatpush.msra.mxu0 %v2190
  %2640 = vmatpush.msra.mxu0 %v2182
  %2641 = vmatmul.f32.gmra.mxu0 %v2174
  %v2642 = vpop.f32.mrf.mxu0
  %v2643 = vadd.f32 %v2473, %v2642
  %2644 = vmatmul.f32.gmra.mxu0 %v2177
  %v2645 = vpop.f32.mrf.mxu0
  %v2646 = vadd.f32 %v2478, %v2645
  %2647 = vdwg.mxu0
  %2648 = vmatpush.msra.mxu0 %v2430
  %2649 = vmatpush.msra.mxu0 %v2422
  %2650 = vmatpush.msra.mxu0 %v2414
  %2651 = vmatpush.msra.mxu0 %v2406
  %2652 = vmatpush.msra.mxu0 %v2398
  %2653 = vmatpush.msra.mxu0 %v2390
  %2654 = vmatpush.msra.mxu0 %v2382
  %2655 = vmatpush.msra.mxu0 %v2374
  %2656 = vmatpush.msra.mxu0 %v2366
  %2657 = vmatpush.msra.mxu0 %v2358
  %2658 = vmatpush.msra.mxu0 %v2350
  %2659 = vmatpush.msra.mxu0 %v2342
  %2660 = vmatpush.msra.mxu0 %v2334
  %2661 = vmatpush.msra.mxu0 %v2326
  %2662 = vmatpush.msra.mxu0 %v2318
  %2663 = vmatpush.msra.mxu0 %v2310
  %2664 = vmatmul.f32.gmra.mxu0 %v2175
  %v2665 = vpop.f32.mrf.mxu0
  %v2666 = vadd.f32 %v2643, %v2665
  %2667 = vmatmul.f32.gmra.mxu0 %v2178
  %v2668 = vpop.f32.mrf.mxu0
  %v2669 = vadd.f32 %v2646, %v2668
  %2670 = vdwg.mxu0
  %2671 = vmatpush.msra.mxu0 0.0
  %2672 = vmatpush.msra.mxu0 0.0
  %2673 = vmatpush.msra.mxu0 0.0
  %2674 = vmatpush.msra.mxu0 0.0
  %2675 = vmatpush.msra.mxu0 0.0
  %2676 = vmatpush.msra.mxu0 0.0
  %2677 = vmatpush.msra.mxu0 0.0
  %2678 = vmatpush.msra.mxu0 0.0
  %2679 = vmatpush.msra.mxu0 0.0
  %2680 = vmatpush.msra.mxu0 0.0
  %2681 = vmatpush.msra.mxu0 0.0
  %2682 = vmatpush.msra.mxu0 0.0
  %2683 = vmatpush.msra.mxu0 %v2462
  %2684 = vmatpush.msra.mxu0 %v2454
  %2685 = vmatpush.msra.mxu0 %v2446
  %2686 = vmatpush.msra.mxu0 %v2438
  %2687 = vmatmul.f32.gmra.mxu0 %v2482
  %v2688 = vpop.f32.mrf.mxu0
  %v2689 = vadd.f32 %v2666, %v2688
  %2690 = vmatmul.f32.gmra.mxu0 %v2485
  %v2691 = vpop.f32.mrf.mxu0
  %v2692 = vadd.f32 %v2669, %v2691
  %2693 = vdwg.mxu0
  %2694 = vmatpush.msra.mxu0 %v2303
  %2695 = vmatpush.msra.mxu0 %v2295
  %2696 = vmatpush.msra.mxu0 %v2287
  %2697 = vmatpush.msra.mxu0 %v2279
  %2698 = vmatpush.msra.mxu0 %v2271
  %2699 = vmatpush.msra.mxu0 %v2263
  %2700 = vmatpush.msra.mxu0 %v2255
  %2701 = vmatpush.msra.mxu0 %v2247
  %2702 = vmatpush.msra.mxu0 %v2239
  %2703 = vmatpush.msra.mxu0 %v2231
  %2704 = vmatpush.msra.mxu0 %v2223
  %2705 = vmatpush.msra.mxu0 %v2215
  %2706 = vmatpush.msra.mxu0 %v2207
  %2707 = vmatpush.msra.mxu0 %v2199
  %2708 = vmatpush.msra.mxu0 %v2191
  %2709 = vmatpush.msra.mxu0 %v2183
  %2710 = vmatmul.f32.gmra.mxu0 %v2174
  %v2711 = vpop.f32.mrf.mxu0
  %v2712 = vadd.f32 %v2473, %v2711
  %2713 = vmatmul.f32.gmra.mxu0 %v2177
  %v2714 = vpop.f32.mrf.mxu0
  %v2715 = vadd.f32 %v2478, %v2714
  %2716 = vdwg.mxu0
  %2717 = vmatpush.msra.mxu0 %v2431
  %2718 = vmatpush.msra.mxu0 %v2423
  %2719 = vmatpush.msra.mxu0 %v2415
  %2720 = vmatpush.msra.mxu0 %v2407
  %2721 = vmatpush.msra.mxu0 %v2399
  %2722 = vmatpush.msra.mxu0 %v2391
  %2723 = vmatpush.msra.mxu0 %v2383
  %2724 = vmatpush.msra.mxu0 %v2375
  %2725 = vmatpush.msra.mxu0 %v2367
  %2726 = vmatpush.msra.mxu0 %v2359
  %2727 = vmatpush.msra.mxu0 %v2351
  %2728 = vmatpush.msra.mxu0 %v2343
  %2729 = vmatpush.msra.mxu0 %v2335
  %2730 = vmatpush.msra.mxu0 %v2327
  %2731 = vmatpush.msra.mxu0 %v2319
  %2732 = vmatpush.msra.mxu0 %v2311
  %2733 = vmatmul.f32.gmra.mxu0 %v2175
  %v2734 = vpop.f32.mrf.mxu0
  %v2735 = vadd.f32 %v2712, %v2734
  %2736 = vmatmul.f32.gmra.mxu0 %v2178
  %v2737 = vpop.f32.mrf.mxu0
  %v2738 = vadd.f32 %v2715, %v2737
  %2739 = vdwg.mxu0
  %2740 = vmatpush.msra.mxu0 0.0
  %2741 = vmatpush.msra.mxu0 0.0
  %2742 = vmatpush.msra.mxu0 0.0
  %2743 = vmatpush.msra.mxu0 0.0
  %2744 = vmatpush.msra.mxu0 0.0
  %2745 = vmatpush.msra.mxu0 0.0
  %2746 = vmatpush.msra.mxu0 0.0
  %2747 = vmatpush.msra.mxu0 0.0
  %2748 = vmatpush.msra.mxu0 0.0
  %2749 = vmatpush.msra.mxu0 0.0
  %2750 = vmatpush.msra.mxu0 0.0
  %2751 = vmatpush.msra.mxu0 0.0
  %2752 = vmatpush.msra.mxu0 %v2463
  %2753 = vmatpush.msra.mxu0 %v2455
  %2754 = vmatpush.msra.mxu0 %v2447
  %2755 = vmatpush.msra.mxu0 %v2439
  %2756 = vmatmul.f32.gmra.mxu0 %v2482
  %v2757 = vpop.f32.mrf.mxu0
  %v2758 = vadd.f32 %v2735, %v2757
  %2759 = vmatmul.f32.gmra.mxu0 %v2485
  %v2760 = vpop.f32.mrf.mxu0
  %v2761 = vadd.f32 %v2738, %v2760
  %2762 = vdwg.mxu0
  %2763 = vmatpush.msra.mxu0 %v2304
  %2764 = vmatpush.msra.mxu0 %v2296
  %2765 = vmatpush.msra.mxu0 %v2288
  %2766 = vmatpush.msra.mxu0 %v2280
  %2767 = vmatpush.msra.mxu0 %v2272
  %2768 = vmatpush.msra.mxu0 %v2264
  %2769 = vmatpush.msra.mxu0 %v2256
  %2770 = vmatpush.msra.mxu0 %v2248
  %2771 = vmatpush.msra.mxu0 %v2240
  %2772 = vmatpush.msra.mxu0 %v2232
  %2773 = vmatpush.msra.mxu0 %v2224
  %2774 = vmatpush.msra.mxu0 %v2216
  %2775 = vmatpush.msra.mxu0 %v2208
  %2776 = vmatpush.msra.mxu0 %v2200
  %2777 = vmatpush.msra.mxu0 %v2192
  %2778 = vmatpush.msra.mxu0 %v2184
  %2779 = vmatmul.f32.gmra.mxu0 %v2174
  %v2780 = vpop.f32.mrf.mxu0
  %v2781 = vadd.f32 %v2473, %v2780
  %2782 = vmatmul.f32.gmra.mxu0 %v2177
  %v2783 = vpop.f32.mrf.mxu0
  %v2784 = vadd.f32 %v2478, %v2783
  %2785 = vdwg.mxu0
  %2786 = vmatpush.msra.mxu0 %v2432
  %2787 = vmatpush.msra.mxu0 %v2424
  %2788 = vmatpush.msra.mxu0 %v2416
  %2789 = vmatpush.msra.mxu0 %v2408
  %2790 = vmatpush.msra.mxu0 %v2400
  %2791 = vmatpush.msra.mxu0 %v2392
  %2792 = vmatpush.msra.mxu0 %v2384
  %2793 = vmatpush.msra.mxu0 %v2376
  %2794 = vmatpush.msra.mxu0 %v2368
  %2795 = vmatpush.msra.mxu0 %v2360
  %2796 = vmatpush.msra.mxu0 %v2352
  %2797 = vmatpush.msra.mxu0 %v2344
  %2798 = vmatpush.msra.mxu0 %v2336
  %2799 = vmatpush.msra.mxu0 %v2328
  %2800 = vmatpush.msra.mxu0 %v2320
  %2801 = vmatpush.msra.mxu0 %v2312
  %2802 = vmatmul.f32.gmra.mxu0 %v2175
  %v2803 = vpop.f32.mrf.mxu0
  %v2804 = vadd.f32 %v2781, %v2803
  %2805 = vmatmul.f32.gmra.mxu0 %v2178
  %v2806 = vpop.f32.mrf.mxu0
  %v2807 = vadd.f32 %v2784, %v2806
  %2808 = vdwg.mxu0
  %2809 = vmatpush.msra.mxu0 0.0
  %2810 = vmatpush.msra.mxu0 0.0
  %2811 = vmatpush.msra.mxu0 0.0
  %2812 = vmatpush.msra.mxu0 0.0
  %2813 = vmatpush.msra.mxu0 0.0
  %2814 = vmatpush.msra.mxu0 0.0
  %2815 = vmatpush.msra.mxu0 0.0
  %2816 = vmatpush.msra.mxu0 0.0
  %2817 = vmatpush.msra.mxu0 0.0
  %2818 = vmatpush.msra.mxu0 0.0
  %2819 = vmatpush.msra.mxu0 0.0
  %2820 = vmatpush.msra.mxu0 0.0
  %2821 = vmatpush.msra.mxu0 %v2464
  %2822 = vmatpush.msra.mxu0 %v2456
  %2823 = vmatpush.msra.mxu0 %v2448
  %2824 = vmatpush.msra.mxu0 %v2440
  %2825 = vmatmul.f32.gmra.mxu0 %v2482
  %v2826 = vpop.f32.mrf.mxu0
  %v2827 = vadd.f32 %v2804, %v2826
  %2828 = vmatmul.f32.gmra.mxu0 %v2485
  %v2829 = vpop.f32.mrf.mxu0
  %v2830 = vadd.f32 %v2807, %v2829
  %2831 = vdwg.mxu0
  %2832 = vmatpush.msra.mxu0 %v2305
  %2833 = vmatpush.msra.mxu0 %v2297
  %2834 = vmatpush.msra.mxu0 %v2289
  %2835 = vmatpush.msra.mxu0 %v2281
  %2836 = vmatpush.msra.mxu0 %v2273
  %2837 = vmatpush.msra.mxu0 %v2265
  %2838 = vmatpush.msra.mxu0 %v2257
  %2839 = vmatpush.msra.mxu0 %v2249
  %2840 = vmatpush.msra.mxu0 %v2241
  %2841 = vmatpush.msra.mxu0 %v2233
  %2842 = vmatpush.msra.mxu0 %v2225
  %2843 = vmatpush.msra.mxu0 %v2217
  %2844 = vmatpush.msra.mxu0 %v2209
  %2845 = vmatpush.msra.mxu0 %v2201
  %2846 = vmatpush.msra.mxu0 %v2193
  %2847 = vmatpush.msra.mxu0 %v2185
  %2848 = vmatmul.f32.gmra.mxu0 %v2174
  %v2849 = vpop.f32.mrf.mxu0
  %v2850 = vadd.f32 %v2473, %v2849
  %2851 = vmatmul.f32.gmra.mxu0 %v2177
  %v2852 = vpop.f32.mrf.mxu0
  %v2853 = vadd.f32 %v2478, %v2852
  %2854 = vdwg.mxu0
  %2855 = vmatpush.msra.mxu0 %v2433
  %2856 = vmatpush.msra.mxu0 %v2425
  %2857 = vmatpush.msra.mxu0 %v2417
  %2858 = vmatpush.msra.mxu0 %v2409
  %2859 = vmatpush.msra.mxu0 %v2401
  %2860 = vmatpush.msra.mxu0 %v2393
  %2861 = vmatpush.msra.mxu0 %v2385
  %2862 = vmatpush.msra.mxu0 %v2377
  %2863 = vmatpush.msra.mxu0 %v2369
  %2864 = vmatpush.msra.mxu0 %v2361
  %2865 = vmatpush.msra.mxu0 %v2353
  %2866 = vmatpush.msra.mxu0 %v2345
  %2867 = vmatpush.msra.mxu0 %v2337
  %2868 = vmatpush.msra.mxu0 %v2329
  %2869 = vmatpush.msra.mxu0 %v2321
  %2870 = vmatpush.msra.mxu0 %v2313
  %2871 = vmatmul.f32.gmra.mxu0 %v2175
  %v2872 = vpop.f32.mrf.mxu0
  %v2873 = vadd.f32 %v2850, %v2872
  %2874 = vmatmul.f32.gmra.mxu0 %v2178
  %v2875 = vpop.f32.mrf.mxu0
  %v2876 = vadd.f32 %v2853, %v2875
  %2877 = vdwg.mxu0
  %2878 = vmatpush.msra.mxu0 0.0
  %2879 = vmatpush.msra.mxu0 0.0
  %2880 = vmatpush.msra.mxu0 0.0
  %2881 = vmatpush.msra.mxu0 0.0
  %2882 = vmatpush.msra.mxu0 0.0
  %2883 = vmatpush.msra.mxu0 0.0
  %2884 = vmatpush.msra.mxu0 0.0
  %2885 = vmatpush.msra.mxu0 0.0
  %2886 = vmatpush.msra.mxu0 0.0
  %2887 = vmatpush.msra.mxu0 0.0
  %2888 = vmatpush.msra.mxu0 0.0
  %2889 = vmatpush.msra.mxu0 0.0
  %2890 = vmatpush.msra.mxu0 %v2465
  %2891 = vmatpush.msra.mxu0 %v2457
  %2892 = vmatpush.msra.mxu0 %v2449
  %2893 = vmatpush.msra.mxu0 %v2441
  %2894 = vmatmul.f32.gmra.mxu0 %v2482
  %v2895 = vpop.f32.mrf.mxu0
  %v2896 = vadd.f32 %v2873, %v2895
  %2897 = vmatmul.f32.gmra.mxu0 %v2485
  %v2898 = vpop.f32.mrf.mxu0
  %v2899 = vadd.f32 %v2876, %v2898
  %2900 = vdwg.mxu0
  %2901 = vmatpush.msra.mxu0 %v2306
  %2902 = vmatpush.msra.mxu0 %v2298
  %2903 = vmatpush.msra.mxu0 %v2290
  %2904 = vmatpush.msra.mxu0 %v2282
  %2905 = vmatpush.msra.mxu0 %v2274
  %2906 = vmatpush.msra.mxu0 %v2266
  %2907 = vmatpush.msra.mxu0 %v2258
  %2908 = vmatpush.msra.mxu0 %v2250
  %2909 = vmatpush.msra.mxu0 %v2242
  %2910 = vmatpush.msra.mxu0 %v2234
  %2911 = vmatpush.msra.mxu0 %v2226
  %2912 = vmatpush.msra.mxu0 %v2218
  %2913 = vmatpush.msra.mxu0 %v2210
  %2914 = vmatpush.msra.mxu0 %v2202
  %2915 = vmatpush.msra.mxu0 %v2194
  %2916 = vmatpush.msra.mxu0 %v2186
  %2917 = vmatmul.f32.gmra.mxu0 %v2174
  %v2918 = vpop.f32.mrf.mxu0
  %v2919 = vadd.f32 %v2473, %v2918
  %2920 = vmatmul.f32.gmra.mxu0 %v2177
  %v2921 = vpop.f32.mrf.mxu0
  %v2922 = vadd.f32 %v2478, %v2921
  %2923 = vdwg.mxu0
  %2924 = vmatpush.msra.mxu0 %v2434
  %2925 = vmatpush.msra.mxu0 %v2426
  %2926 = vmatpush.msra.mxu0 %v2418
  %2927 = vmatpush.msra.mxu0 %v2410
  %2928 = vmatpush.msra.mxu0 %v2402
  %2929 = vmatpush.msra.mxu0 %v2394
  %2930 = vmatpush.msra.mxu0 %v2386
  %2931 = vmatpush.msra.mxu0 %v2378
  %2932 = vmatpush.msra.mxu0 %v2370
  %2933 = vmatpush.msra.mxu0 %v2362
  %2934 = vmatpush.msra.mxu0 %v2354
  %2935 = vmatpush.msra.mxu0 %v2346
  %2936 = vmatpush.msra.mxu0 %v2338
  %2937 = vmatpush.msra.mxu0 %v2330
  %2938 = vmatpush.msra.mxu0 %v2322
  %2939 = vmatpush.msra.mxu0 %v2314
  %2940 = vmatmul.f32.gmra.mxu0 %v2175
  %v2941 = vpop.f32.mrf.mxu0
  %v2942 = vadd.f32 %v2919, %v2941
  %2943 = vmatmul.f32.gmra.mxu0 %v2178
  %v2944 = vpop.f32.mrf.mxu0
  %v2945 = vadd.f32 %v2922, %v2944
  %2946 = vdwg.mxu0
  %2947 = vmatpush.msra.mxu0 0.0
  %2948 = vmatpush.msra.mxu0 0.0
  %2949 = vmatpush.msra.mxu0 0.0
  %2950 = vmatpush.msra.mxu0 0.0
  %2951 = vmatpush.msra.mxu0 0.0
  %2952 = vmatpush.msra.mxu0 0.0
  %2953 = vmatpush.msra.mxu0 0.0
  %2954 = vmatpush.msra.mxu0 0.0
  %2955 = vmatpush.msra.mxu0 0.0
  %2956 = vmatpush.msra.mxu0 0.0
  %2957 = vmatpush.msra.mxu0 0.0
  %2958 = vmatpush.msra.mxu0 0.0
  %2959 = vmatpush.msra.mxu0 %v2466
  %2960 = vmatpush.msra.mxu0 %v2458
  %2961 = vmatpush.msra.mxu0 %v2450
  %2962 = vmatpush.msra.mxu0 %v2442
  %2963 = vmatmul.f32.gmra.mxu0 %v2482
  %v2964 = vpop.f32.mrf.mxu0
  %v2965 = vadd.f32 %v2942, %v2964
  %2966 = vmatmul.f32.gmra.mxu0 %v2485
  %v2967 = vpop.f32.mrf.mxu0
  %v2968 = vadd.f32 %v2945, %v2967
  %2969 = vdwg.mxu0
  %2970 = vmatpush.msra.mxu0 %v2307
  %2971 = vmatpush.msra.mxu0 %v2299
  %2972 = vmatpush.msra.mxu0 %v2291
  %2973 = vmatpush.msra.mxu0 %v2283
  %2974 = vmatpush.msra.mxu0 %v2275
  %2975 = vmatpush.msra.mxu0 %v2267
  %2976 = vmatpush.msra.mxu0 %v2259
  %2977 = vmatpush.msra.mxu0 %v2251
  %2978 = vmatpush.msra.mxu0 %v2243
  %2979 = vmatpush.msra.mxu0 %v2235
  %2980 = vmatpush.msra.mxu0 %v2227
  %2981 = vmatpush.msra.mxu0 %v2219
  %2982 = vmatpush.msra.mxu0 %v2211
  %2983 = vmatpush.msra.mxu0 %v2203
  %2984 = vmatpush.msra.mxu0 %v2195
  %2985 = vmatpush.msra.mxu0 %v2187
  %2986 = vmatmul.f32.gmra.mxu0 %v2174
  %v2987 = vpop.f32.mrf.mxu0
  %v2988 = vadd.f32 %v2473, %v2987
  %2989 = vmatmul.f32.gmra.mxu0 %v2177
  %v2990 = vpop.f32.mrf.mxu0
  %v2991 = vadd.f32 %v2478, %v2990
  %2992 = vdwg.mxu0
  %2993 = vmatpush.msra.mxu0 %v2435
  %2994 = vmatpush.msra.mxu0 %v2427
  %2995 = vmatpush.msra.mxu0 %v2419
  %2996 = vmatpush.msra.mxu0 %v2411
  %2997 = vmatpush.msra.mxu0 %v2403
  %2998 = vmatpush.msra.mxu0 %v2395
  %2999 = vmatpush.msra.mxu0 %v2387
  %3000 = vmatpush.msra.mxu0 %v2379
  %3001 = vmatpush.msra.mxu0 %v2371
  %3002 = vmatpush.msra.mxu0 %v2363
  %3003 = vmatpush.msra.mxu0 %v2355
  %3004 = vmatpush.msra.mxu0 %v2347
  %3005 = vmatpush.msra.mxu0 %v2339
  %3006 = vmatpush.msra.mxu0 %v2331
  %3007 = vmatpush.msra.mxu0 %v2323
  %3008 = vmatpush.msra.mxu0 %v2315
  %3009 = vmatmul.f32.gmra.mxu0 %v2175
  %v3010 = vpop.f32.mrf.mxu0
  %v3011 = vadd.f32 %v2988, %v3010
  %3012 = vmatmul.f32.gmra.mxu0 %v2178
  %v3013 = vpop.f32.mrf.mxu0
  %v3014 = vadd.f32 %v2991, %v3013
  %3015 = vdwg.mxu0
  %3016 = vmatpush.msra.mxu0 0.0
  %3017 = vmatpush.msra.mxu0 0.0
  %3018 = vmatpush.msra.mxu0 0.0
  %3019 = vmatpush.msra.mxu0 0.0
  %3020 = vmatpush.msra.mxu0 0.0
  %3021 = vmatpush.msra.mxu0 0.0
  %3022 = vmatpush.msra.mxu0 0.0
  %3023 = vmatpush.msra.mxu0 0.0
  %3024 = vmatpush.msra.mxu0 0.0
  %3025 = vmatpush.msra.mxu0 0.0
  %3026 = vmatpush.msra.mxu0 0.0
  %3027 = vmatpush.msra.mxu0 0.0
  %3028 = vmatpush.msra.mxu0 %v2467
  %3029 = vmatpush.msra.mxu0 %v2459
  %3030 = vmatpush.msra.mxu0 %v2451
  %3031 = vmatpush.msra.mxu0 %v2443
  %3032 = vmatmul.f32.gmra.mxu0 %v2482
  %v3033 = vpop.f32.mrf.mxu0
  %v3034 = vadd.f32 %v3011, %v3033
  %3035 = vmatmul.f32.gmra.mxu0 %v2485
  %v3036 = vpop.f32.mrf.mxu0
  %v3037 = vadd.f32 %v3014, %v3036
  %3038 = vdwg.mxu0
  %v3039 = vmax.f32 %v2551, 0.0
  %v3040 = vmax.f32 %v2620, 0.0
  %v3041 = vmax.f32 %v2689, 0.0
  %v3042 = vmax.f32 %v2758, 0.0
  %v3043 = vmax.f32 %v2827, 0.0
  %v3044 = vmax.f32 %v2896, 0.0
  %v3045 = vmax.f32 %v2965, 0.0
  %v3046 = vmax.f32 %v3034, 0.0
  %v3047 = vmax.f32 %v2554, 0.0
  %v3048 = vmax.f32 %v2623, 0.0
  %v3049 = vmax.f32 %v2692, 0.0
  %v3050 = vmax.f32 %v2761, 0.0
  %v3051 = vmax.f32 %v2830, 0.0
  %v3052 = vmax.f32 %v2899, 0.0
  %v3053 = vmax.f32 %v2968, 0.0
  %v3054 = vmax.f32 %v3037, 0.0
  %v3055 = vld [vmem:[%s5] sm:$0xff]
  %v3057 = vperm.slane %v3055, 0
  %v3058 = vperm.slane %v3055, 1
  %v3059 = vperm.slane %v3055, 2
  %v3060 = vperm.slane %v3055, 3
  %v3061 = vperm.slane %v3055, 4
  %v3062 = vperm.slane %v3055, 5
  %v3063 = vperm.slane %v3055, 6
  %v3064 = vperm.slane %v3055, 7
  %v3073 = vmul.f32 %v3039, %v3057
  %v3074 = vmul.f32 %v3040, %v3058
  %v3075 = vmul.f32 %v3041, %v3059
  %v3076 = vmul.f32 %v3042, %v3060
  %v3077 = vmul.f32 %v3043, %v3061
  %v3078 = vmul.f32 %v3044, %v3062
  %v3079 = vmul.f32 %v3045, %v3063
  %v3080 = vmul.f32 %v3046, %v3064
  %v3081 = vmul.f32 %v3047, %v3057
  %v3082 = vmul.f32 %v3048, %v3058
  %v3083 = vmul.f32 %v3049, %v3059
  %v3084 = vmul.f32 %v3050, %v3060
  %v3085 = vmul.f32 %v3051, %v3061
  %v3086 = vmul.f32 %v3052, %v3062
  %v3087 = vmul.f32 %v3053, %v3063
  %v3088 = vmul.f32 %v3054, %v3064
  %3089 = vst [vmem:[#allocation3] sm:$0xff] 0.0
  %3090 = vst [vmem:[#allocation3 + $0x48] sm:$0xff] 0.0
  %3091 = vst [vmem:[#allocation3 + $0x40] sm:$0xff] 0.0
  %3092 = vst [vmem:[#allocation3 + $0x88] sm:$0xff] 0.0
  %3109 = vrot.lane.b32.xlu0 %v3073, 35
  %v3110 = vpop.permute.xlu0 %3109
  %3111 = vrot.lane.b32.xlu0 %v3074, 35
  %v3112 = vpop.permute.xlu0 %3111
  %3113 = vrot.lane.b32.xlu0 %v3075, 35
  %v3114 = vpop.permute.xlu0 %3113
  %3115 = vrot.lane.b32.xlu0 %v3076, 35
  %v3116 = vpop.permute.xlu0 %3115
  %3117 = vrot.lane.b32.xlu0 %v3077, 35
  %v3118 = vpop.permute.xlu0 %3117
  %3119 = vrot.lane.b32.xlu0 %v3078, 35
  %v3120 = vpop.permute.xlu0 %3119
  %3121 = vrot.lane.b32.xlu0 %v3079, 35
  %v3122 = vpop.permute.xlu0 %3121
  %3123 = vrot.lane.b32.xlu0 %v3080, 35
  %v3124 = vpop.permute.xlu0 %3123
  %3125 = vrot.lane.b32.xlu0 %v3081, 35
  %v3126 = vpop.permute.xlu0 %3125
  %3127 = vrot.lane.b32.xlu0 %v3082, 35
  %v3128 = vpop.permute.xlu0 %3127
  %3129 = vrot.lane.b32.xlu0 %v3083, 35
  %v3130 = vpop.permute.xlu0 %3129
  %3131 = vrot.lane.b32.xlu0 %v3084, 35
  %v3132 = vpop.permute.xlu0 %3131
  %3133 = vrot.lane.b32.xlu0 %v3085, 35
  %v3134 = vpop.permute.xlu0 %3133
  %3135 = vrot.lane.b32.xlu0 %v3086, 35
  %v3136 = vpop.permute.xlu0 %3135
  %3137 = vrot.lane.b32.xlu0 %v3087, 35
  %v3138 = vpop.permute.xlu0 %3137
  %3139 = vrot.lane.b32.xlu0 %v3088, 35
  %v3140 = vpop.permute.xlu0 %3139
  %vm3141 = vcmask 285696
  %v3142 = vsel %vm3141, %v3110, %v3112
  %v3143 = vsel %vm3141, %v3112, %v3114
  %v3144 = vsel %vm3141, %v3114, %v3116
  %v3145 = vsel %vm3141, %v3116, %v3118
  %v3146 = vsel %vm3141, %v3118, %v3120
  %v3147 = vsel %vm3141, %v3120, %v3122
  %v3148 = vsel %vm3141, %v3122, %v3124
  %v3149 = vsel %vm3141, %v3126, %v3128
  %v3150 = vsel %vm3141, %v3128, %v3130
  %v3151 = vsel %vm3141, %v3130, %v3132
  %v3152 = vsel %vm3141, %v3132, %v3134
  %v3153 = vsel %vm3141, %v3134, %v3136
  %v3154 = vsel %vm3141, %v3136, %v3138
  %v3155 = vsel %vm3141, %v3138, %v3140
  %vm3174 = vcmask 1047832
  %3175 = vst.msk [vmem:[#allocation3] sm:$0xff] %vm3174, %v3110
  %3176 = vst [vmem:[#allocation3 + $0x8] sm:$0xff] %v3142
  %3177 = vst [vmem:[#allocation3 + $0x10] sm:$0xff] %v3143
  %3178 = vst [vmem:[#allocation3 + $0x18] sm:$0xff] %v3144
  %3179 = vst [vmem:[#allocation3 + $0x20] sm:$0xff] %v3145
  %3180 = vst [vmem:[#allocation3 + $0x28] sm:$0xff] %v3146
  %3181 = vst [vmem:[#allocation3 + $0x30] sm:$0xff] %v3147
  %3182 = vst [vmem:[#allocation3 + $0x38] sm:$0xff] %v3148
  %3183 = vst.msk [vmem:[#allocation3 + $0x40] sm:$0xff] %vm3141, %v3124
  %3184 = vst.msk [vmem:[#allocation3 + $0x48] sm:$0xff] %vm3174, %v3126
  %3185 = vst [vmem:[#allocation3 + $0x50] sm:$0xff] %v3149
  %3186 = vst [vmem:[#allocation3 + $0x58] sm:$0xff] %v3150
  %3187 = vst [vmem:[#allocation3 + $0x60] sm:$0xff] %v3151
  %3188 = vst [vmem:[#allocation3 + $0x68] sm:$0xff] %v3152
  %3189 = vst [vmem:[#allocation3 + $0x70] sm:$0xff] %v3153
  %3190 = vst [vmem:[#allocation3 + $0x78] sm:$0xff] %v3154
  %3191 = vst [vmem:[#allocation3 + $0x80] sm:$0xff] %v3155
  %3192 = vst.msk [vmem:[#allocation3 + $0x88] sm:$0xff] %vm3141, %v3140
  %v3193 = vld [vmem:[#allocation3] sm:$0xff]
  %v3194 = vld [vmem:[#allocation3 + $0x8] sm:$0xff]
  %v3195 = vld [vmem:[#allocation3 + $0x10] sm:$0xff]
  %v3196 = vld [vmem:[#allocation3 + $0x18] sm:$0xff]
  %v3197 = vld [vmem:[#allocation3 + $0x20] sm:$0xff]
  %v3198 = vld [vmem:[#allocation3 + $0x28] sm:$0xff]
  %v3199 = vld [vmem:[#allocation3 + $0x30] sm:$0xff]
  %v3200 = vld [vmem:[#allocation3 + $0x48] sm:$0xff]
  %v3201 = vld [vmem:[#allocation3 + $0x50] sm:$0xff]
  %v3202 = vld [vmem:[#allocation3 + $0x58] sm:$0xff]
  %v3203 = vld [vmem:[#allocation3 + $0x60] sm:$0xff]
  %v3204 = vld [vmem:[#allocation3 + $0x68] sm:$0xff]
  %v3205 = vld [vmem:[#allocation3 + $0x70] sm:$0xff]
  %v3206 = vld [vmem:[#allocation3 + $0x78] sm:$0xff]
  %3207 = vst [vmem:[#allocation4] sm:$0xff] %v3193
  %3208 = vst [vmem:[#allocation4 + $0x8] sm:$0xff] %v3194
  %3209 = vst [vmem:[#allocation4 + $0x10] sm:$0xff] %v3195
  %3210 = vst [vmem:[#allocation4 + $0x18] sm:$0xff] %v3196
  %3211 = vst [vmem:[#allocation4 + $0x20] sm:$0xff] %v3197
  %3212 = vst [vmem:[#allocation4 + $0x28] sm:$0xff] %v3198
  %3213 = vst [vmem:[#allocation4 + $0x30] sm:$0xff] %v3199
  %3214 = vst [vmem:[#allocation4 + $0x38] sm:$0xff] %v3200
  %3215 = vst [vmem:[#allocation4 + $0x40] sm:$0xff] %v3201
  %3216 = vst [vmem:[#allocation4 + $0x48] sm:$0xff] %v3202
  %3217 = vst [vmem:[#allocation4 + $0x50] sm:$0xff] %v3203
  %3218 = vst [vmem:[#allocation4 + $0x58] sm:$0xff] %v3204
  %3219 = vst [vmem:[#allocation4 + $0x60] sm:$0xff] %v3205
  %3220 = vst [vmem:[#allocation4 + $0x68] sm:$0xff] %v3206
  %v3221 = vld [vmem:[#allocation3] sm:$0xff]
  %v3222 = vld [vmem:[#allocation3 + $0x8] sm:$0xff]
  %v3223 = vld [vmem:[#allocation3 + $0x10] sm:$0xff]
  %v3224 = vld [vmem:[#allocation3 + $0x18] sm:$0xff]
  %v3225 = vld [vmem:[#allocation3 + $0x20] sm:$0xff]
  %v3226 = vld [vmem:[#allocation3 + $0x28] sm:$0xff]
  %v3227 = vld [vmem:[#allocation3 + $0x30] sm:$0xff]
  %v3228 = vld [vmem:[#allocation3 + $0x38] sm:$0xff]
  %v3229 = vld [vmem:[#allocation3 + $0x48] sm:$0xff]
  %v3230 = vld [vmem:[#allocation3 + $0x50] sm:$0xff]
  %v3231 = vld [vmem:[#allocation3 + $0x58] sm:$0xff]
  %v3232 = vld [vmem:[#allocation3 + $0x60] sm:$0xff]
  %v3233 = vld [vmem:[#allocation3 + $0x68] sm:$0xff]
  %v3234 = vld [vmem:[#allocation3 + $0x70] sm:$0xff]
  %v3235 = vld [vmem:[#allocation3 + $0x78] sm:$0xff]
  %v3236 = vld [vmem:[#allocation3 + $0x80] sm:$0xff]
  %3253 = vrot.lane.b32.xlu0 %v3221, 127
  %v3254 = vpop.permute.xlu0 %3253
  %3255 = vrot.lane.b32.xlu0 %v3222, 127
  %v3256 = vpop.permute.xlu0 %3255
  %3257 = vrot.lane.b32.xlu0 %v3223, 127
  %v3258 = vpop.permute.xlu0 %3257
  %3259 = vrot.lane.b32.xlu0 %v3224, 127
  %v3260 = vpop.permute.xlu0 %3259
  %3261 = vrot.lane.b32.xlu0 %v3225, 127
  %v3262 = vpop.permute.xlu0 %3261
  %3263 = vrot.lane.b32.xlu0 %v3226, 127
  %v3264 = vpop.permute.xlu0 %3263
  %3265 = vrot.lane.b32.xlu0 %v3227, 127
  %v3266 = vpop.permute.xlu0 %3265
  %3267 = vrot.lane.b32.xlu0 %v3228, 127
  %v3268 = vpop.permute.xlu0 %3267
  %3269 = vrot.lane.b32.xlu0 %v3229, 127
  %v3270 = vpop.permute.xlu0 %3269
  %3271 = vrot.lane.b32.xlu0 %v3230, 127
  %v3272 = vpop.permute.xlu0 %3271
  %3273 = vrot.lane.b32.xlu0 %v3231, 127
  %v3274 = vpop.permute.xlu0 %3273
  %3275 = vrot.lane.b32.xlu0 %v3232, 127
  %v3276 = vpop.permute.xlu0 %3275
  %3277 = vrot.lane.b32.xlu0 %v3233, 127
  %v3278 = vpop.permute.xlu0 %3277
  %3279 = vrot.lane.b32.xlu0 %v3234, 127
  %v3280 = vpop.permute.xlu0 %3279
  %3281 = vrot.lane.b32.xlu0 %v3235, 127
  %v3282 = vpop.permute.xlu0 %3281
  %3283 = vrot.lane.b32.xlu0 %v3236, 127
  %v3284 = vpop.permute.xlu0 %3283
  %v3285 = vsel %vm75, %v3254, %v3256
  %v3286 = vsel %vm75, %v3256, %v3258
  %v3287 = vsel %vm75, %v3258, %v3260
  %v3288 = vsel %vm75, %v3260, %v3262
  %v3289 = vsel %vm75, %v3262, %v3264
  %v3290 = vsel %vm75, %v3264, %v3266
  %v3291 = vsel %vm75, %v3266, %v3268
  %v3292 = vsel %vm75, %v3270, %v3272
  %v3293 = vsel %vm75, %v3272, %v3274
  %v3294 = vsel %vm75, %v3274, %v3276
  %v3295 = vsel %vm75, %v3276, %v3278
  %v3296 = vsel %vm75, %v3278, %v3280
  %v3297 = vsel %vm75, %v3280, %v3282
  %v3298 = vsel %vm75, %v3282, %v3284
  %3313 = vst [vmem:[#allocation4 + $0x70] sm:$0xff] %v3285
  %3314 = vst [vmem:[#allocation4 + $0x78] sm:$0xff] %v3286
  %3315 = vst [vmem:[#allocation4 + $0x80] sm:$0xff] %v3287
  %3316 = vst [vmem:[#allocation4 + $0x88] sm:$0xff] %v3288
  %3317 = vst [vmem:[#allocation4 + $0x90] sm:$0xff] %v3289
  %3318 = vst [vmem:[#allocation4 + $0x98] sm:$0xff] %v3290
  %3319 = vst [vmem:[#allocation4 + $0xa0] sm:$0xff] %v3291
  %3320 = vst [vmem:[#allocation4 + $0xa8] sm:$0xff] %v3292
  %3321 = vst [vmem:[#allocation4 + $0xb0] sm:$0xff] %v3293
  %3322 = vst [vmem:[#allocation4 + $0xb8] sm:$0xff] %v3294
  %3323 = vst [vmem:[#allocation4 + $0xc0] sm:$0xff] %v3295
  %3324 = vst [vmem:[#allocation4 + $0xc8] sm:$0xff] %v3296
  %3325 = vst [vmem:[#allocation4 + $0xd0] sm:$0xff] %v3297
  %3326 = vst [vmem:[#allocation4 + $0xd8] sm:$0xff] %v3298
  %v3327 = vld [vmem:[#allocation3] sm:$0xff]
  %v3328 = vld [vmem:[#allocation3 + $0x8] sm:$0xff]
  %v3329 = vld [vmem:[#allocation3 + $0x10] sm:$0xff]
  %v3330 = vld [vmem:[#allocation3 + $0x18] sm:$0xff]
  %v3331 = vld [vmem:[#allocation3 + $0x20] sm:$0xff]
  %v3332 = vld [vmem:[#allocation3 + $0x28] sm:$0xff]
  %v3333 = vld [vmem:[#allocation3 + $0x30] sm:$0xff]
  %v3334 = vld [vmem:[#allocation3 + $0x38] sm:$0xff]
  %v3335 = vld [vmem:[#allocation3 + $0x48] sm:$0xff]
  %v3336 = vld [vmem:[#allocation3 + $0x50] sm:$0xff]
  %v3337 = vld [vmem:[#allocation3 + $0x58] sm:$0xff]
  %v3338 = vld [vmem:[#allocation3 + $0x60] sm:$0xff]
  %v3339 = vld [vmem:[#allocation3 + $0x68] sm:$0xff]
  %v3340 = vld [vmem:[#allocation3 + $0x70] sm:$0xff]
  %v3341 = vld [vmem:[#allocation3 + $0x78] sm:$0xff]
  %v3342 = vld [vmem:[#allocation3 + $0x80] sm:$0xff]
  %3359 = vrot.lane.b32.xlu0 %v3327, 126
  %v3360 = vpop.permute.xlu0 %3359
  %3361 = vrot.lane.b32.xlu0 %v3328, 126
  %v3362 = vpop.permute.xlu0 %3361
  %3363 = vrot.lane.b32.xlu0 %v3329, 126
  %v3364 = vpop.permute.xlu0 %3363
  %3365 = vrot.lane.b32.xlu0 %v3330, 126
  %v3366 = vpop.permute.xlu0 %3365
  %3367 = vrot.lane.b32.xlu0 %v3331, 126
  %v3368 = vpop.permute.xlu0 %3367
  %3369 = vrot.lane.b32.xlu0 %v3332, 126
  %v3370 = vpop.permute.xlu0 %3369
  %3371 = vrot.lane.b32.xlu0 %v3333, 126
  %v3372 = vpop.permute.xlu0 %3371
  %3373 = vrot.lane.b32.xlu0 %v3334, 126
  %v3374 = vpop.permute.xlu0 %3373
  %3375 = vrot.lane.b32.xlu0 %v3335, 126
  %v3376 = vpop.permute.xlu0 %3375
  %3377 = vrot.lane.b32.xlu0 %v3336, 126
  %v3378 = vpop.permute.xlu0 %3377
  %3379 = vrot.lane.b32.xlu0 %v3337, 126
  %v3380 = vpop.permute.xlu0 %3379
  %3381 = vrot.lane.b32.xlu0 %v3338, 126
  %v3382 = vpop.permute.xlu0 %3381
  %3383 = vrot.lane.b32.xlu0 %v3339, 126
  %v3384 = vpop.permute.xlu0 %3383
  %3385 = vrot.lane.b32.xlu0 %v3340, 126
  %v3386 = vpop.permute.xlu0 %3385
  %3387 = vrot.lane.b32.xlu0 %v3341, 126
  %v3388 = vpop.permute.xlu0 %3387
  %3389 = vrot.lane.b32.xlu0 %v3342, 126
  %v3390 = vpop.permute.xlu0 %3389
  %v3391 = vsel %vm136, %v3360, %v3362
  %v3392 = vsel %vm136, %v3362, %v3364
  %v3393 = vsel %vm136, %v3364, %v3366
  %v3394 = vsel %vm136, %v3366, %v3368
  %v3395 = vsel %vm136, %v3368, %v3370
  %v3396 = vsel %vm136, %v3370, %v3372
  %v3397 = vsel %vm136, %v3372, %v3374
  %v3398 = vsel %vm136, %v3376, %v3378
  %v3399 = vsel %vm136, %v3378, %v3380
  %v3400 = vsel %vm136, %v3380, %v3382
  %v3401 = vsel %vm136, %v3382, %v3384
  %v3402 = vsel %vm136, %v3384, %v3386
  %v3403 = vsel %vm136, %v3386, %v3388
  %v3404 = vsel %vm136, %v3388, %v3390
  %3419 = vst [vmem:[#allocation4 + $0xe0] sm:$0xff] %v3391
  %3420 = vst [vmem:[#allocation4 + $0xe8] sm:$0xff] %v3392
  %3421 = vst [vmem:[#allocation4 + $0xf0] sm:$0xff] %v3393
  %3422 = vst [vmem:[#allocation4 + $0xf8] sm:$0xff] %v3394
  %3423 = vst [vmem:[#allocation4 + $0x100] sm:$0xff] %v3395
  %3424 = vst [vmem:[#allocation4 + $0x108] sm:$0xff] %v3396
  %3425 = vst [vmem:[#allocation4 + $0x110] sm:$0xff] %v3397
  %3426 = vst [vmem:[#allocation4 + $0x118] sm:$0xff] %v3398
  %3427 = vst [vmem:[#allocation4 + $0x120] sm:$0xff] %v3399
  %3428 = vst [vmem:[#allocation4 + $0x128] sm:$0xff] %v3400
  %3429 = vst [vmem:[#allocation4 + $0x130] sm:$0xff] %v3401
  %3430 = vst [vmem:[#allocation4 + $0x138] sm:$0xff] %v3402
  %3431 = vst [vmem:[#allocation4 + $0x140] sm:$0xff] %v3403
  %3432 = vst [vmem:[#allocation4 + $0x148] sm:$0xff] %v3404
  %v3433 = vld [vmem:[#allocation3] sm:$0xff]
  %v3434 = vld [vmem:[#allocation3 + $0x8] sm:$0xff]
  %v3435 = vld [vmem:[#allocation3 + $0x10] sm:$0xff]
  %v3436 = vld [vmem:[#allocation3 + $0x18] sm:$0xff]
  %v3437 = vld [vmem:[#allocation3 + $0x20] sm:$0xff]
  %v3438 = vld [vmem:[#allocation3 + $0x28] sm:$0xff]
  %v3439 = vld [vmem:[#allocation3 + $0x30] sm:$0xff]
  %v3440 = vld [vmem:[#allocation3 + $0x38] sm:$0xff]
  %v3441 = vld [vmem:[#allocation3 + $0x48] sm:$0xff]
  %v3442 = vld [vmem:[#allocation3 + $0x50] sm:$0xff]
  %v3443 = vld [vmem:[#allocation3 + $0x58] sm:$0xff]
  %v3444 = vld [vmem:[#allocation3 + $0x60] sm:$0xff]
  %v3445 = vld [vmem:[#allocation3 + $0x68] sm:$0xff]
  %v3446 = vld [vmem:[#allocation3 + $0x70] sm:$0xff]
  %v3447 = vld [vmem:[#allocation3 + $0x78] sm:$0xff]
  %v3448 = vld [vmem:[#allocation3 + $0x80] sm:$0xff]
  %3465 = vrot.lane.b32.xlu0 %v3433, 125
  %v3466 = vpop.permute.xlu0 %3465
  %3467 = vrot.lane.b32.xlu0 %v3434, 125
  %v3468 = vpop.permute.xlu0 %3467
  %3469 = vrot.lane.b32.xlu0 %v3435, 125
  %v3470 = vpop.permute.xlu0 %3469
  %3471 = vrot.lane.b32.xlu0 %v3436, 125
  %v3472 = vpop.permute.xlu0 %3471
  %3473 = vrot.lane.b32.xlu0 %v3437, 125
  %v3474 = vpop.permute.xlu0 %3473
  %3475 = vrot.lane.b32.xlu0 %v3438, 125
  %v3476 = vpop.permute.xlu0 %3475
  %3477 = vrot.lane.b32.xlu0 %v3439, 125
  %v3478 = vpop.permute.xlu0 %3477
  %3479 = vrot.lane.b32.xlu0 %v3440, 125
  %v3480 = vpop.permute.xlu0 %3479
  %3481 = vrot.lane.b32.xlu0 %v3441, 125
  %v3482 = vpop.permute.xlu0 %3481
  %3483 = vrot.lane.b32.xlu0 %v3442, 125
  %v3484 = vpop.permute.xlu0 %3483
  %3485 = vrot.lane.b32.xlu0 %v3443, 125
  %v3486 = vpop.permute.xlu0 %3485
  %3487 = vrot.lane.b32.xlu0 %v3444, 125
  %v3488 = vpop.permute.xlu0 %3487
  %3489 = vrot.lane.b32.xlu0 %v3445, 125
  %v3490 = vpop.permute.xlu0 %3489
  %3491 = vrot.lane.b32.xlu0 %v3446, 125
  %v3492 = vpop.permute.xlu0 %3491
  %3493 = vrot.lane.b32.xlu0 %v3447, 125
  %v3494 = vpop.permute.xlu0 %3493
  %3495 = vrot.lane.b32.xlu0 %v3448, 125
  %v3496 = vpop.permute.xlu0 %3495
  %v3497 = vsel %vm197, %v3466, %v3468
  %v3498 = vsel %vm197, %v3468, %v3470
  %v3499 = vsel %vm197, %v3470, %v3472
  %v3500 = vsel %vm197, %v3472, %v3474
  %v3501 = vsel %vm197, %v3474, %v3476
  %v3502 = vsel %vm197, %v3476, %v3478
  %v3503 = vsel %vm197, %v3478, %v3480
  %v3504 = vsel %vm197, %v3482, %v3484
  %v3505 = vsel %vm197, %v3484, %v3486
  %v3506 = vsel %vm197, %v3486, %v3488
  %v3507 = vsel %vm197, %v3488, %v3490
  %v3508 = vsel %vm197, %v3490, %v3492
  %v3509 = vsel %vm197, %v3492, %v3494
  %v3510 = vsel %vm197, %v3494, %v3496
  %3525 = vst [vmem:[#allocation4 + $0x150] sm:$0xff] %v3497
  %3526 = vst [vmem:[#allocation4 + $0x158] sm:$0xff] %v3498
  %3527 = vst [vmem:[#allocation4 + $0x160] sm:$0xff] %v3499
  %3528 = vst [vmem:[#allocation4 + $0x168] sm:$0xff] %v3500
  %3529 = vst [vmem:[#allocation4 + $0x170] sm:$0xff] %v3501
  %3530 = vst [vmem:[#allocation4 + $0x178] sm:$0xff] %v3502
  %3531 = vst [vmem:[#allocation4 + $0x180] sm:$0xff] %v3503
  %3532 = vst [vmem:[#allocation4 + $0x188] sm:$0xff] %v3504
  %3533 = vst [vmem:[#allocation4 + $0x190] sm:$0xff] %v3505
  %3534 = vst [vmem:[#allocation4 + $0x198] sm:$0xff] %v3506
  %3535 = vst [vmem:[#allocation4 + $0x1a0] sm:$0xff] %v3507
  %3536 = vst [vmem:[#allocation4 + $0x1a8] sm:$0xff] %v3508
  %3537 = vst [vmem:[#allocation4 + $0x1b0] sm:$0xff] %v3509
  %3538 = vst [vmem:[#allocation4 + $0x1b8] sm:$0xff] %v3510
  %v3539 = vld [vmem:[#allocation3] sm:$0xff]
  %v3540 = vld [vmem:[#allocation3 + $0x8] sm:$0xff]
  %v3541 = vld [vmem:[#allocation3 + $0x10] sm:$0xff]
  %v3542 = vld [vmem:[#allocation3 + $0x18] sm:$0xff]
  %v3543 = vld [vmem:[#allocation3 + $0x20] sm:$0xff]
  %v3544 = vld [vmem:[#allocation3 + $0x28] sm:$0xff]
  %v3545 = vld [vmem:[#allocation3 + $0x30] sm:$0xff]
  %v3546 = vld [vmem:[#allocation3 + $0x38] sm:$0xff]
  %v3547 = vld [vmem:[#allocation3 + $0x48] sm:$0xff]
  %v3548 = vld [vmem:[#allocation3 + $0x50] sm:$0xff]
  %v3549 = vld [vmem:[#allocation3 + $0x58] sm:$0xff]
  %v3550 = vld [vmem:[#allocation3 + $0x60] sm:$0xff]
  %v3551 = vld [vmem:[#allocation3 + $0x68] sm:$0xff]
  %v3552 = vld [vmem:[#allocation3 + $0x70] sm:$0xff]
  %v3553 = vld [vmem:[#allocation3 + $0x78] sm:$0xff]
  %v3554 = vld [vmem:[#allocation3 + $0x80] sm:$0xff]
  %3571 = vrot.lane.b32.xlu0 %v3539, 124
  %v3572 = vpop.permute.xlu0 %3571
  %3573 = vrot.lane.b32.xlu0 %v3540, 124
  %v3574 = vpop.permute.xlu0 %3573
  %3575 = vrot.lane.b32.xlu0 %v3541, 124
  %v3576 = vpop.permute.xlu0 %3575
  %3577 = vrot.lane.b32.xlu0 %v3542, 124
  %v3578 = vpop.permute.xlu0 %3577
  %3579 = vrot.lane.b32.xlu0 %v3543, 124
  %v3580 = vpop.permute.xlu0 %3579
  %3581 = vrot.lane.b32.xlu0 %v3544, 124
  %v3582 = vpop.permute.xlu0 %3581
  %3583 = vrot.lane.b32.xlu0 %v3545, 124
  %v3584 = vpop.permute.xlu0 %3583
  %3585 = vrot.lane.b32.xlu0 %v3546, 124
  %v3586 = vpop.permute.xlu0 %3585
  %3587 = vrot.lane.b32.xlu0 %v3547, 124
  %v3588 = vpop.permute.xlu0 %3587
  %3589 = vrot.lane.b32.xlu0 %v3548, 124
  %v3590 = vpop.permute.xlu0 %3589
  %3591 = vrot.lane.b32.xlu0 %v3549, 124
  %v3592 = vpop.permute.xlu0 %3591
  %3593 = vrot.lane.b32.xlu0 %v3550, 124
  %v3594 = vpop.permute.xlu0 %3593
  %3595 = vrot.lane.b32.xlu0 %v3551, 124
  %v3596 = vpop.permute.xlu0 %3595
  %3597 = vrot.lane.b32.xlu0 %v3552, 124
  %v3598 = vpop.permute.xlu0 %3597
  %3599 = vrot.lane.b32.xlu0 %v3553, 124
  %v3600 = vpop.permute.xlu0 %3599
  %3601 = vrot.lane.b32.xlu0 %v3554, 124
  %v3602 = vpop.permute.xlu0 %3601
  %v3603 = vsel %vm258, %v3572, %v3574
  %v3604 = vsel %vm258, %v3574, %v3576
  %v3605 = vsel %vm258, %v3576, %v3578
  %v3606 = vsel %vm258, %v3578, %v3580
  %v3607 = vsel %vm258, %v3580, %v3582
  %v3608 = vsel %vm258, %v3582, %v3584
  %v3609 = vsel %vm258, %v3584, %v3586
  %v3610 = vsel %vm258, %v3588, %v3590
  %v3611 = vsel %vm258, %v3590, %v3592
  %v3612 = vsel %vm258, %v3592, %v3594
  %v3613 = vsel %vm258, %v3594, %v3596
  %v3614 = vsel %vm258, %v3596, %v3598
  %v3615 = vsel %vm258, %v3598, %v3600
  %v3616 = vsel %vm258, %v3600, %v3602
  %3631 = vst [vmem:[#allocation4 + $0x1c0] sm:$0xff] %v3603
  %3632 = vst [vmem:[#allocation4 + $0x1c8] sm:$0xff] %v3604
  %3633 = vst [vmem:[#allocation4 + $0x1d0] sm:$0xff] %v3605
  %3634 = vst [vmem:[#allocation4 + $0x1d8] sm:$0xff] %v3606
  %3635 = vst [vmem:[#allocation4 + $0x1e0] sm:$0xff] %v3607
  %3636 = vst [vmem:[#allocation4 + $0x1e8] sm:$0xff] %v3608
  %3637 = vst [vmem:[#allocation4 + $0x1f0] sm:$0xff] %v3609
  %3638 = vst [vmem:[#allocation4 + $0x1f8] sm:$0xff] %v3610
  %3639 = vst [vmem:[#allocation4 + $0x200] sm:$0xff] %v3611
  %3640 = vst [vmem:[#allocation4 + $0x208] sm:$0xff] %v3612
  %3641 = vst [vmem:[#allocation4 + $0x210] sm:$0xff] %v3613
  %3642 = vst [vmem:[#allocation4 + $0x218] sm:$0xff] %v3614
  %3643 = vst [vmem:[#allocation4 + $0x220] sm:$0xff] %v3615
  %3644 = vst [vmem:[#allocation4 + $0x228] sm:$0xff] %v3616
  %v3645 = vld [vmem:[#allocation3] sm:$0xff]
  %v3646 = vld [vmem:[#allocation3 + $0x8] sm:$0xff]
  %v3647 = vld [vmem:[#allocation3 + $0x10] sm:$0xff]
  %v3648 = vld [vmem:[#allocation3 + $0x18] sm:$0xff]
  %v3649 = vld [vmem:[#allocation3 + $0x20] sm:$0xff]
  %v3650 = vld [vmem:[#allocation3 + $0x28] sm:$0xff]
  %v3651 = vld [vmem:[#allocation3 + $0x30] sm:$0xff]
  %v3652 = vld [vmem:[#allocation3 + $0x38] sm:$0xff]
  %v3653 = vld [vmem:[#allocation3 + $0x48] sm:$0xff]
  %v3654 = vld [vmem:[#allocation3 + $0x50] sm:$0xff]
  %v3655 = vld [vmem:[#allocation3 + $0x58] sm:$0xff]
  %v3656 = vld [vmem:[#allocation3 + $0x60] sm:$0xff]
  %v3657 = vld [vmem:[#allocation3 + $0x68] sm:$0xff]
  %v3658 = vld [vmem:[#allocation3 + $0x70] sm:$0xff]
  %v3659 = vld [vmem:[#allocation3 + $0x78] sm:$0xff]
  %v3660 = vld [vmem:[#allocation3 + $0x80] sm:$0xff]
  %3677 = vrot.lane.b32.xlu0 %v3645, 123
  %v3678 = vpop.permute.xlu0 %3677
  %3679 = vrot.lane.b32.xlu0 %v3646, 123
  %v3680 = vpop.permute.xlu0 %3679
  %3681 = vrot.lane.b32.xlu0 %v3647, 123
  %v3682 = vpop.permute.xlu0 %3681
  %3683 = vrot.lane.b32.xlu0 %v3648, 123
  %v3684 = vpop.permute.xlu0 %3683
  %3685 = vrot.lane.b32.xlu0 %v3649, 123
  %v3686 = vpop.permute.xlu0 %3685
  %3687 = vrot.lane.b32.xlu0 %v3650, 123
  %v3688 = vpop.permute.xlu0 %3687
  %3689 = vrot.lane.b32.xlu0 %v3651, 123
  %v3690 = vpop.permute.xlu0 %3689
  %3691 = vrot.lane.b32.xlu0 %v3652, 123
  %v3692 = vpop.permute.xlu0 %3691
  %3693 = vrot.lane.b32.xlu0 %v3653, 123
  %v3694 = vpop.permute.xlu0 %3693
  %3695 = vrot.lane.b32.xlu0 %v3654, 123
  %v3696 = vpop.permute.xlu0 %3695
  %3697 = vrot.lane.b32.xlu0 %v3655, 123
  %v3698 = vpop.permute.xlu0 %3697
  %3699 = vrot.lane.b32.xlu0 %v3656, 123
  %v3700 = vpop.permute.xlu0 %3699
  %3701 = vrot.lane.b32.xlu0 %v3657, 123
  %v3702 = vpop.permute.xlu0 %3701
  %3703 = vrot.lane.b32.xlu0 %v3658, 123
  %v3704 = vpop.permute.xlu0 %3703
  %3705 = vrot.lane.b32.xlu0 %v3659, 123
  %v3706 = vpop.permute.xlu0 %3705
  %3707 = vrot.lane.b32.xlu0 %v3660, 123
  %v3708 = vpop.permute.xlu0 %3707
  %v3709 = vsel %vm319, %v3678, %v3680
  %v3710 = vsel %vm319, %v3680, %v3682
  %v3711 = vsel %vm319, %v3682, %v3684
  %v3712 = vsel %vm319, %v3684, %v3686
  %v3713 = vsel %vm319, %v3686, %v3688
  %v3714 = vsel %vm319, %v3688, %v3690
  %v3715 = vsel %vm319, %v3690, %v3692
  %v3716 = vsel %vm319, %v3694, %v3696
  %v3717 = vsel %vm319, %v3696, %v3698
  %v3718 = vsel %vm319, %v3698, %v3700
  %v3719 = vsel %vm319, %v3700, %v3702
  %v3720 = vsel %vm319, %v3702, %v3704
  %v3721 = vsel %vm319, %v3704, %v3706
  %v3722 = vsel %vm319, %v3706, %v3708
  %3737 = vst [vmem:[#allocation4 + $0x230] sm:$0xff] %v3709
  %3738 = vst [vmem:[#allocation4 + $0x238] sm:$0xff] %v3710
  %3739 = vst [vmem:[#allocation4 + $0x240] sm:$0xff] %v3711
  %3740 = vst [vmem:[#allocation4 + $0x248] sm:$0xff] %v3712
  %3741 = vst [vmem:[#allocation4 + $0x250] sm:$0xff] %v3713
  %3742 = vst [vmem:[#allocation4 + $0x258] sm:$0xff] %v3714
  %3743 = vst [vmem:[#allocation4 + $0x260] sm:$0xff] %v3715
  %3744 = vst [vmem:[#allocation4 + $0x268] sm:$0xff] %v3716
  %3745 = vst [vmem:[#allocation4 + $0x270] sm:$0xff] %v3717
  %3746 = vst [vmem:[#allocation4 + $0x278] sm:$0xff] %v3718
  %3747 = vst [vmem:[#allocation4 + $0x280] sm:$0xff] %v3719
  %3748 = vst [vmem:[#allocation4 + $0x288] sm:$0xff] %v3720
  %3749 = vst [vmem:[#allocation4 + $0x290] sm:$0xff] %v3721
  %3750 = vst [vmem:[#allocation4 + $0x298] sm:$0xff] %v3722
  %v3751 = vld [vmem:[#allocation3] sm:$0xff]
  %v3752 = vld [vmem:[#allocation3 + $0x8] sm:$0xff]
  %v3753 = vld [vmem:[#allocation3 + $0x10] sm:$0xff]
  %v3754 = vld [vmem:[#allocation3 + $0x18] sm:$0xff]
  %v3755 = vld [vmem:[#allocation3 + $0x20] sm:$0xff]
  %v3756 = vld [vmem:[#allocation3 + $0x28] sm:$0xff]
  %v3757 = vld [vmem:[#allocation3 + $0x30] sm:$0xff]
  %v3758 = vld [vmem:[#allocation3 + $0x38] sm:$0xff]
  %v3759 = vld [vmem:[#allocation3 + $0x48] sm:$0xff]
  %v3760 = vld [vmem:[#allocation3 + $0x50] sm:$0xff]
  %v3761 = vld [vmem:[#allocation3 + $0x58] sm:$0xff]
  %v3762 = vld [vmem:[#allocation3 + $0x60] sm:$0xff]
  %v3763 = vld [vmem:[#allocation3 + $0x68] sm:$0xff]
  %v3764 = vld [vmem:[#allocation3 + $0x70] sm:$0xff]
  %v3765 = vld [vmem:[#allocation3 + $0x78] sm:$0xff]
  %v3766 = vld [vmem:[#allocation3 + $0x80] sm:$0xff]
  %3783 = vrot.lane.b32.xlu0 %v3751, 94
  %v3784 = vpop.permute.xlu0 %3783
  %3785 = vrot.lane.b32.xlu0 %v3752, 94
  %v3786 = vpop.permute.xlu0 %3785
  %3787 = vrot.lane.b32.xlu0 %v3753, 94
  %v3788 = vpop.permute.xlu0 %3787
  %3789 = vrot.lane.b32.xlu0 %v3754, 94
  %v3790 = vpop.permute.xlu0 %3789
  %3791 = vrot.lane.b32.xlu0 %v3755, 94
  %v3792 = vpop.permute.xlu0 %3791
  %3793 = vrot.lane.b32.xlu0 %v3756, 94
  %v3794 = vpop.permute.xlu0 %3793
  %3795 = vrot.lane.b32.xlu0 %v3757, 94
  %v3796 = vpop.permute.xlu0 %3795
  %3797 = vrot.lane.b32.xlu0 %v3758, 94
  %v3798 = vpop.permute.xlu0 %3797
  %3799 = vrot.lane.b32.xlu0 %v3759, 94
  %v3800 = vpop.permute.xlu0 %3799
  %3801 = vrot.lane.b32.xlu0 %v3760, 94
  %v3802 = vpop.permute.xlu0 %3801
  %3803 = vrot.lane.b32.xlu0 %v3761, 94
  %v3804 = vpop.permute.xlu0 %3803
  %3805 = vrot.lane.b32.xlu0 %v3762, 94
  %v3806 = vpop.permute.xlu0 %3805
  %3807 = vrot.lane.b32.xlu0 %v3763, 94
  %v3808 = vpop.permute.xlu0 %3807
  %3809 = vrot.lane.b32.xlu0 %v3764, 94
  %v3810 = vpop.permute.xlu0 %3809
  %3811 = vrot.lane.b32.xlu0 %v3765, 94
  %v3812 = vpop.permute.xlu0 %3811
  %3813 = vrot.lane.b32.xlu0 %v3766, 94
  %v3814 = vpop.permute.xlu0 %3813
  %v3815 = vsel %vm380, %v3784, %v3786
  %v3816 = vsel %vm380, %v3786, %v3788
  %v3817 = vsel %vm380, %v3788, %v3790
  %v3818 = vsel %vm380, %v3790, %v3792
  %v3819 = vsel %vm380, %v3792, %v3794
  %v3820 = vsel %vm380, %v3794, %v3796
  %v3821 = vsel %vm380, %v3796, %v3798
  %v3822 = vsel %vm380, %v3800, %v3802
  %v3823 = vsel %vm380, %v3802, %v3804
  %v3824 = vsel %vm380, %v3804, %v3806
  %v3825 = vsel %vm380, %v3806, %v3808
  %v3826 = vsel %vm380, %v3808, %v3810
  %v3827 = vsel %vm380, %v3810, %v3812
  %v3828 = vsel %vm380, %v3812, %v3814
  %3843 = vst [vmem:[#allocation4 + $0x2a0] sm:$0xff] %v3815
  %3844 = vst [vmem:[#allocation4 + $0x2a8] sm:$0xff] %v3816
  %3845 = vst [vmem:[#allocation4 + $0x2b0] sm:$0xff] %v3817
  %3846 = vst [vmem:[#allocation4 + $0x2b8] sm:$0xff] %v3818
  %3847 = vst [vmem:[#allocation4 + $0x2c0] sm:$0xff] %v3819
  %3848 = vst [vmem:[#allocation4 + $0x2c8] sm:$0xff] %v3820
  %3849 = vst [vmem:[#allocation4 + $0x2d0] sm:$0xff] %v3821
  %3850 = vst [vmem:[#allocation4 + $0x2d8] sm:$0xff] %v3822
  %3851 = vst [vmem:[#allocation4 + $0x2e0] sm:$0xff] %v3823
  %3852 = vst [vmem:[#allocation4 + $0x2e8] sm:$0xff] %v3824
  %3853 = vst [vmem:[#allocation4 + $0x2f0] sm:$0xff] %v3825
  %3854 = vst [vmem:[#allocation4 + $0x2f8] sm:$0xff] %v3826
  %3855 = vst [vmem:[#allocation4 + $0x300] sm:$0xff] %v3827
  %3856 = vst [vmem:[#allocation4 + $0x308] sm:$0xff] %v3828
  %v3857 = vld [vmem:[#allocation3] sm:$0xff]
  %v3858 = vld [vmem:[#allocation3 + $0x8] sm:$0xff]
  %v3859 = vld [vmem:[#allocation3 + $0x10] sm:$0xff]
  %v3860 = vld [vmem:[#allocation3 + $0x18] sm:$0xff]
  %v3861 = vld [vmem:[#allocation3 + $0x20] sm:$0xff]
  %v3862 = vld [vmem:[#allocation3 + $0x28] sm:$0xff]
  %v3863 = vld [vmem:[#allocation3 + $0x30] sm:$0xff]
  %v3864 = vld [vmem:[#allocation3 + $0x38] sm:$0xff]
  %v3865 = vld [vmem:[#allocation3 + $0x48] sm:$0xff]
  %v3866 = vld [vmem:[#allocation3 + $0x50] sm:$0xff]
  %v3867 = vld [vmem:[#allocation3 + $0x58] sm:$0xff]
  %v3868 = vld [vmem:[#allocation3 + $0x60] sm:$0xff]
  %v3869 = vld [vmem:[#allocation3 + $0x68] sm:$0xff]
  %v3870 = vld [vmem:[#allocation3 + $0x70] sm:$0xff]
  %v3871 = vld [vmem:[#allocation3 + $0x78] sm:$0xff]
  %v3872 = vld [vmem:[#allocation3 + $0x80] sm:$0xff]
  %3889 = vrot.lane.b32.xlu0 %v3857, 93
  %v3890 = vpop.permute.xlu0 %3889
  %3891 = vrot.lane.b32.xlu0 %v3858, 93
  %v3892 = vpop.permute.xlu0 %3891
  %3893 = vrot.lane.b32.xlu0 %v3859, 93
  %v3894 = vpop.permute.xlu0 %3893
  %3895 = vrot.lane.b32.xlu0 %v3860, 93
  %v3896 = vpop.permute.xlu0 %3895
  %3897 = vrot.lane.b32.xlu0 %v3861, 93
  %v3898 = vpop.permute.xlu0 %3897
  %3899 = vrot.lane.b32.xlu0 %v3862, 93
  %v3900 = vpop.permute.xlu0 %3899
  %3901 = vrot.lane.b32.xlu0 %v3863, 93
  %v3902 = vpop.permute.xlu0 %3901
  %3903 = vrot.lane.b32.xlu0 %v3864, 93
  %v3904 = vpop.permute.xlu0 %3903
  %3905 = vrot.lane.b32.xlu0 %v3865, 93
  %v3906 = vpop.permute.xlu0 %3905
  %3907 = vrot.lane.b32.xlu0 %v3866, 93
  %v3908 = vpop.permute.xlu0 %3907
  %3909 = vrot.lane.b32.xlu0 %v3867, 93
  %v3910 = vpop.permute.xlu0 %3909
  %3911 = vrot.lane.b32.xlu0 %v3868, 93
  %v3912 = vpop.permute.xlu0 %3911
  %3913 = vrot.lane.b32.xlu0 %v3869, 93
  %v3914 = vpop.permute.xlu0 %3913
  %3915 = vrot.lane.b32.xlu0 %v3870, 93
  %v3916 = vpop.permute.xlu0 %3915
  %3917 = vrot.lane.b32.xlu0 %v3871, 93
  %v3918 = vpop.permute.xlu0 %3917
  %3919 = vrot.lane.b32.xlu0 %v3872, 93
  %v3920 = vpop.permute.xlu0 %3919
  %v3921 = vsel %vm441, %v3890, %v3892
  %v3922 = vsel %vm441, %v3892, %v3894
  %v3923 = vsel %vm441, %v3894, %v3896
  %v3924 = vsel %vm441, %v3896, %v3898
  %v3925 = vsel %vm441, %v3898, %v3900
  %v3926 = vsel %vm441, %v3900, %v3902
  %v3927 = vsel %vm441, %v3902, %v3904
  %v3928 = vsel %vm441, %v3906, %v3908
  %v3929 = vsel %vm441, %v3908, %v3910
  %v3930 = vsel %vm441, %v3910, %v3912
  %v3931 = vsel %vm441, %v3912, %v3914
  %v3932 = vsel %vm441, %v3914, %v3916
  %v3933 = vsel %vm441, %v3916, %v3918
  %v3934 = vsel %vm441, %v3918, %v3920
  %3949 = vst [vmem:[#allocation4 + $0x310] sm:$0xff] %v3921
  %3950 = vst [vmem:[#allocation4 + $0x318] sm:$0xff] %v3922
  %3951 = vst [vmem:[#allocation4 + $0x320] sm:$0xff] %v3923
  %3952 = vst [vmem:[#allocation4 + $0x328] sm:$0xff] %v3924
  %3953 = vst [vmem:[#allocation4 + $0x330] sm:$0xff] %v3925
  %3954 = vst [vmem:[#allocation4 + $0x338] sm:$0xff] %v3926
  %3955 = vst [vmem:[#allocation4 + $0x340] sm:$0xff] %v3927
  %3956 = vst [vmem:[#allocation4 + $0x348] sm:$0xff] %v3928
  %3957 = vst [vmem:[#allocation4 + $0x350] sm:$0xff] %v3929
  %3958 = vst [vmem:[#allocation4 + $0x358] sm:$0xff] %v3930
  %3959 = vst [vmem:[#allocation4 + $0x360] sm:$0xff] %v3931
  %3960 = vst [vmem:[#allocation4 + $0x368] sm:$0xff] %v3932
  %3961 = vst [vmem:[#allocation4 + $0x370] sm:$0xff] %v3933
  %3962 = vst [vmem:[#allocation4 + $0x378] sm:$0xff] %v3934
  %v3963 = vld [vmem:[#allocation3] sm:$0xff]
  %v3964 = vld [vmem:[#allocation3 + $0x8] sm:$0xff]
  %v3965 = vld [vmem:[#allocation3 + $0x10] sm:$0xff]
  %v3966 = vld [vmem:[#allocation3 + $0x18] sm:$0xff]
  %v3967 = vld [vmem:[#allocation3 + $0x20] sm:$0xff]
  %v3968 = vld [vmem:[#allocation3 + $0x28] sm:$0xff]
  %v3969 = vld [vmem:[#allocation3 + $0x30] sm:$0xff]
  %v3970 = vld [vmem:[#allocation3 + $0x38] sm:$0xff]
  %v3971 = vld [vmem:[#allocation3 + $0x48] sm:$0xff]
  %v3972 = vld [vmem:[#allocation3 + $0x50] sm:$0xff]
  %v3973 = vld [vmem:[#allocation3 + $0x58] sm:$0xff]
  %v3974 = vld [vmem:[#allocation3 + $0x60] sm:$0xff]
  %v3975 = vld [vmem:[#allocation3 + $0x68] sm:$0xff]
  %v3976 = vld [vmem:[#allocation3 + $0x70] sm:$0xff]
  %v3977 = vld [vmem:[#allocation3 + $0x78] sm:$0xff]
  %v3978 = vld [vmem:[#allocation3 + $0x80] sm:$0xff]
  %3995 = vrot.lane.b32.xlu0 %v3963, 92
  %v3996 = vpop.permute.xlu0 %3995
  %3997 = vrot.lane.b32.xlu0 %v3964, 92
  %v3998 = vpop.permute.xlu0 %3997
  %3999 = vrot.lane.b32.xlu0 %v3965, 92
  %v4000 = vpop.permute.xlu0 %3999
  %4001 = vrot.lane.b32.xlu0 %v3966, 92
  %v4002 = vpop.permute.xlu0 %4001
  %4003 = vrot.lane.b32.xlu0 %v3967, 92
  %v4004 = vpop.permute.xlu0 %4003
  %4005 = vrot.lane.b32.xlu0 %v3968, 92
  %v4006 = vpop.permute.xlu0 %4005
  %4007 = vrot.lane.b32.xlu0 %v3969, 92
  %v4008 = vpop.permute.xlu0 %4007
  %4009 = vrot.lane.b32.xlu0 %v3970, 92
  %v4010 = vpop.permute.xlu0 %4009
  %4011 = vrot.lane.b32.xlu0 %v3971, 92
  %v4012 = vpop.permute.xlu0 %4011
  %4013 = vrot.lane.b32.xlu0 %v3972, 92
  %v4014 = vpop.permute.xlu0 %4013
  %4015 = vrot.lane.b32.xlu0 %v3973, 92
  %v4016 = vpop.permute.xlu0 %4015
  %4017 = vrot.lane.b32.xlu0 %v3974, 92
  %v4018 = vpop.permute.xlu0 %4017
  %4019 = vrot.lane.b32.xlu0 %v3975, 92
  %v4020 = vpop.permute.xlu0 %4019
  %4021 = vrot.lane.b32.xlu0 %v3976, 92
  %v4022 = vpop.permute.xlu0 %4021
  %4023 = vrot.lane.b32.xlu0 %v3977, 92
  %v4024 = vpop.permute.xlu0 %4023
  %4025 = vrot.lane.b32.xlu0 %v3978, 92
  %v4026 = vpop.permute.xlu0 %4025
  %v4027 = vsel %vm502, %v3996, %v3998
  %v4028 = vsel %vm502, %v3998, %v4000
  %v4029 = vsel %vm502, %v4000, %v4002
  %v4030 = vsel %vm502, %v4002, %v4004
  %v4031 = vsel %vm502, %v4004, %v4006
  %v4032 = vsel %vm502, %v4006, %v4008
  %v4033 = vsel %vm502, %v4008, %v4010
  %v4034 = vsel %vm502, %v4012, %v4014
  %v4035 = vsel %vm502, %v4014, %v4016
  %v4036 = vsel %vm502, %v4016, %v4018
  %v4037 = vsel %vm502, %v4018, %v4020
  %v4038 = vsel %vm502, %v4020, %v4022
  %v4039 = vsel %vm502, %v4022, %v4024
  %v4040 = vsel %vm502, %v4024, %v4026
  %4055 = vst [vmem:[#allocation4 + $0x380] sm:$0xff] %v4027
  %4056 = vst [vmem:[#allocation4 + $0x388] sm:$0xff] %v4028
  %4057 = vst [vmem:[#allocation4 + $0x390] sm:$0xff] %v4029
  %4058 = vst [vmem:[#allocation4 + $0x398] sm:$0xff] %v4030
  %4059 = vst [vmem:[#allocation4 + $0x3a0] sm:$0xff] %v4031
  %4060 = vst [vmem:[#allocation4 + $0x3a8] sm:$0xff] %v4032
  %4061 = vst [vmem:[#allocation4 + $0x3b0] sm:$0xff] %v4033
  %4062 = vst [vmem:[#allocation4 + $0x3b8] sm:$0xff] %v4034
  %4063 = vst [vmem:[#allocation4 + $0x3c0] sm:$0xff] %v4035
  %4064 = vst [vmem:[#allocation4 + $0x3c8] sm:$0xff] %v4036
  %4065 = vst [vmem:[#allocation4 + $0x3d0] sm:$0xff] %v4037
  %4066 = vst [vmem:[#allocation4 + $0x3d8] sm:$0xff] %v4038
  %4067 = vst [vmem:[#allocation4 + $0x3e0] sm:$0xff] %v4039
  %4068 = vst [vmem:[#allocation4 + $0x3e8] sm:$0xff] %v4040
  %v4069 = vld [vmem:[#allocation3] sm:$0xff]
  %v4070 = vld [vmem:[#allocation3 + $0x8] sm:$0xff]
  %v4071 = vld [vmem:[#allocation3 + $0x10] sm:$0xff]
  %v4072 = vld [vmem:[#allocation3 + $0x18] sm:$0xff]
  %v4073 = vld [vmem:[#allocation3 + $0x20] sm:$0xff]
  %v4074 = vld [vmem:[#allocation3 + $0x28] sm:$0xff]
  %v4075 = vld [vmem:[#allocation3 + $0x30] sm:$0xff]
  %v4076 = vld [vmem:[#allocation3 + $0x38] sm:$0xff]
  %v4077 = vld [vmem:[#allocation3 + $0x48] sm:$0xff]
  %v4078 = vld [vmem:[#allocation3 + $0x50] sm:$0xff]
  %v4079 = vld [vmem:[#allocation3 + $0x58] sm:$0xff]
  %v4080 = vld [vmem:[#allocation3 + $0x60] sm:$0xff]
  %v4081 = vld [vmem:[#allocation3 + $0x68] sm:$0xff]
  %v4082 = vld [vmem:[#allocation3 + $0x70] sm:$0xff]
  %v4083 = vld [vmem:[#allocation3 + $0x78] sm:$0xff]
  %v4084 = vld [vmem:[#allocation3 + $0x80] sm:$0xff]
  %4101 = vrot.lane.b32.xlu0 %v4069, 91
  %v4102 = vpop.permute.xlu0 %4101
  %4103 = vrot.lane.b32.xlu0 %v4070, 91
  %v4104 = vpop.permute.xlu0 %4103
  %4105 = vrot.lane.b32.xlu0 %v4071, 91
  %v4106 = vpop.permute.xlu0 %4105
  %4107 = vrot.lane.b32.xlu0 %v4072, 91
  %v4108 = vpop.permute.xlu0 %4107
  %4109 = vrot.lane.b32.xlu0 %v4073, 91
  %v4110 = vpop.permute.xlu0 %4109
  %4111 = vrot.lane.b32.xlu0 %v4074, 91
  %v4112 = vpop.permute.xlu0 %4111
  %4113 = vrot.lane.b32.xlu0 %v4075, 91
  %v4114 = vpop.permute.xlu0 %4113
  %4115 = vrot.lane.b32.xlu0 %v4076, 91
  %v4116 = vpop.permute.xlu0 %4115
  %4117 = vrot.lane.b32.xlu0 %v4077, 91
  %v4118 = vpop.permute.xlu0 %4117
  %4119 = vrot.lane.b32.xlu0 %v4078, 91
  %v4120 = vpop.permute.xlu0 %4119
  %4121 = vrot.lane.b32.xlu0 %v4079, 91
  %v4122 = vpop.permute.xlu0 %4121
  %4123 = vrot.lane.b32.xlu0 %v4080, 91
  %v4124 = vpop.permute.xlu0 %4123
  %4125 = vrot.lane.b32.xlu0 %v4081, 91
  %v4126 = vpop.permute.xlu0 %4125
  %4127 = vrot.lane.b32.xlu0 %v4082, 91
  %v4128 = vpop.permute.xlu0 %4127
  %4129 = vrot.lane.b32.xlu0 %v4083, 91
  %v4130 = vpop.permute.xlu0 %4129
  %4131 = vrot.lane.b32.xlu0 %v4084, 91
  %v4132 = vpop.permute.xlu0 %4131
  %v4133 = vsel %vm563, %v4102, %v4104
  %v4134 = vsel %vm563, %v4104, %v4106
  %v4135 = vsel %vm563, %v4106, %v4108
  %v4136 = vsel %vm563, %v4108, %v4110
  %v4137 = vsel %vm563, %v4110, %v4112
  %v4138 = vsel %vm563, %v4112, %v4114
  %v4139 = vsel %vm563, %v4114, %v4116
  %v4140 = vsel %vm563, %v4118, %v4120
  %v4141 = vsel %vm563, %v4120, %v4122
  %v4142 = vsel %vm563, %v4122, %v4124
  %v4143 = vsel %vm563, %v4124, %v4126
  %v4144 = vsel %vm563, %v4126, %v4128
  %v4145 = vsel %vm563, %v4128, %v4130
  %v4146 = vsel %vm563, %v4130, %v4132
  %4161 = vst [vmem:[#allocation4 + $0x3f0] sm:$0xff] %v4133
  %4162 = vst [vmem:[#allocation4 + $0x3f8] sm:$0xff] %v4134
  %4163 = vst [vmem:[#allocation4 + $0x400] sm:$0xff] %v4135
  %4164 = vst [vmem:[#allocation4 + $0x408] sm:$0xff] %v4136
  %4165 = vst [vmem:[#allocation4 + $0x410] sm:$0xff] %v4137
  %4166 = vst [vmem:[#allocation4 + $0x418] sm:$0xff] %v4138
  %4167 = vst [vmem:[#allocation4 + $0x420] sm:$0xff] %v4139
  %4168 = vst [vmem:[#allocation4 + $0x428] sm:$0xff] %v4140
  %4169 = vst [vmem:[#allocation4 + $0x430] sm:$0xff] %v4141
  %4170 = vst [vmem:[#allocation4 + $0x438] sm:$0xff] %v4142
  %4171 = vst [vmem:[#allocation4 + $0x440] sm:$0xff] %v4143
  %4172 = vst [vmem:[#allocation4 + $0x448] sm:$0xff] %v4144
  %4173 = vst [vmem:[#allocation4 + $0x450] sm:$0xff] %v4145
  %4174 = vst [vmem:[#allocation4 + $0x458] sm:$0xff] %v4146
  %v4175 = vld [vmem:[#allocation3] sm:$0xff]
  %v4176 = vld [vmem:[#allocation3 + $0x8] sm:$0xff]
  %v4177 = vld [vmem:[#allocation3 + $0x10] sm:$0xff]
  %v4178 = vld [vmem:[#allocation3 + $0x18] sm:$0xff]
  %v4179 = vld [vmem:[#allocation3 + $0x20] sm:$0xff]
  %v4180 = vld [vmem:[#allocation3 + $0x28] sm:$0xff]
  %v4181 = vld [vmem:[#allocation3 + $0x30] sm:$0xff]
  %v4182 = vld [vmem:[#allocation3 + $0x38] sm:$0xff]
  %v4183 = vld [vmem:[#allocation3 + $0x48] sm:$0xff]
  %v4184 = vld [vmem:[#allocation3 + $0x50] sm:$0xff]
  %v4185 = vld [vmem:[#allocation3 + $0x58] sm:$0xff]
  %v4186 = vld [vmem:[#allocation3 + $0x60] sm:$0xff]
  %v4187 = vld [vmem:[#allocation3 + $0x68] sm:$0xff]
  %v4188 = vld [vmem:[#allocation3 + $0x70] sm:$0xff]
  %v4189 = vld [vmem:[#allocation3 + $0x78] sm:$0xff]
  %v4190 = vld [vmem:[#allocation3 + $0x80] sm:$0xff]
  %4207 = vrot.lane.b32.xlu0 %v4175, 90
  %v4208 = vpop.permute.xlu0 %4207
  %4209 = vrot.lane.b32.xlu0 %v4176, 90
  %v4210 = vpop.permute.xlu0 %4209
  %4211 = vrot.lane.b32.xlu0 %v4177, 90
  %v4212 = vpop.permute.xlu0 %4211
  %4213 = vrot.lane.b32.xlu0 %v4178, 90
  %v4214 = vpop.permute.xlu0 %4213
  %4215 = vrot.lane.b32.xlu0 %v4179, 90
  %v4216 = vpop.permute.xlu0 %4215
  %4217 = vrot.lane.b32.xlu0 %v4180, 90
  %v4218 = vpop.permute.xlu0 %4217
  %4219 = vrot.lane.b32.xlu0 %v4181, 90
  %v4220 = vpop.permute.xlu0 %4219
  %4221 = vrot.lane.b32.xlu0 %v4182, 90
  %v4222 = vpop.permute.xlu0 %4221
  %4223 = vrot.lane.b32.xlu0 %v4183, 90
  %v4224 = vpop.permute.xlu0 %4223
  %4225 = vrot.lane.b32.xlu0 %v4184, 90
  %v4226 = vpop.permute.xlu0 %4225
  %4227 = vrot.lane.b32.xlu0 %v4185, 90
  %v4228 = vpop.permute.xlu0 %4227
  %4229 = vrot.lane.b32.xlu0 %v4186, 90
  %v4230 = vpop.permute.xlu0 %4229
  %4231 = vrot.lane.b32.xlu0 %v4187, 90
  %v4232 = vpop.permute.xlu0 %4231
  %4233 = vrot.lane.b32.xlu0 %v4188, 90
  %v4234 = vpop.permute.xlu0 %4233
  %4235 = vrot.lane.b32.xlu0 %v4189, 90
  %v4236 = vpop.permute.xlu0 %4235
  %4237 = vrot.lane.b32.xlu0 %v4190, 90
  %v4238 = vpop.permute.xlu0 %4237
  %v4239 = vsel %vm624, %v4208, %v4210
  %v4240 = vsel %vm624, %v4210, %v4212
  %v4241 = vsel %vm624, %v4212, %v4214
  %v4242 = vsel %vm624, %v4214, %v4216
  %v4243 = vsel %vm624, %v4216, %v4218
  %v4244 = vsel %vm624, %v4218, %v4220
  %v4245 = vsel %vm624, %v4220, %v4222
  %v4246 = vsel %vm624, %v4224, %v4226
  %v4247 = vsel %vm624, %v4226, %v4228
  %v4248 = vsel %vm624, %v4228, %v4230
  %v4249 = vsel %vm624, %v4230, %v4232
  %v4250 = vsel %vm624, %v4232, %v4234
  %v4251 = vsel %vm624, %v4234, %v4236
  %v4252 = vsel %vm624, %v4236, %v4238
  %4267 = vst [vmem:[#allocation4 + $0x460] sm:$0xff] %v4239
  %4268 = vst [vmem:[#allocation4 + $0x468] sm:$0xff] %v4240
  %4269 = vst [vmem:[#allocation4 + $0x470] sm:$0xff] %v4241
  %4270 = vst [vmem:[#allocation4 + $0x478] sm:$0xff] %v4242
  %4271 = vst [vmem:[#allocation4 + $0x480] sm:$0xff] %v4243
  %4272 = vst [vmem:[#allocation4 + $0x488] sm:$0xff] %v4244
  %4273 = vst [vmem:[#allocation4 + $0x490] sm:$0xff] %v4245
  %4274 = vst [vmem:[#allocation4 + $0x498] sm:$0xff] %v4246
  %4275 = vst [vmem:[#allocation4 + $0x4a0] sm:$0xff] %v4247
  %4276 = vst [vmem:[#allocation4 + $0x4a8] sm:$0xff] %v4248
  %4277 = vst [vmem:[#allocation4 + $0x4b0] sm:$0xff] %v4249
  %4278 = vst [vmem:[#allocation4 + $0x4b8] sm:$0xff] %v4250
  %4279 = vst [vmem:[#allocation4 + $0x4c0] sm:$0xff] %v4251
  %4280 = vst [vmem:[#allocation4 + $0x4c8] sm:$0xff] %v4252
  %v4281 = vld [vmem:[#allocation3] sm:$0xff]
  %v4282 = vld [vmem:[#allocation3 + $0x8] sm:$0xff]
  %v4283 = vld [vmem:[#allocation3 + $0x10] sm:$0xff]
  %v4284 = vld [vmem:[#allocation3 + $0x18] sm:$0xff]
  %v4285 = vld [vmem:[#allocation3 + $0x20] sm:$0xff]
  %v4286 = vld [vmem:[#allocation3 + $0x28] sm:$0xff]
  %v4287 = vld [vmem:[#allocation3 + $0x30] sm:$0xff]
  %v4288 = vld [vmem:[#allocation3 + $0x38] sm:$0xff]
  %v4289 = vld [vmem:[#allocation3 + $0x48] sm:$0xff]
  %v4290 = vld [vmem:[#allocation3 + $0x50] sm:$0xff]
  %v4291 = vld [vmem:[#allocation3 + $0x58] sm:$0xff]
  %v4292 = vld [vmem:[#allocation3 + $0x60] sm:$0xff]
  %v4293 = vld [vmem:[#allocation3 + $0x68] sm:$0xff]
  %v4294 = vld [vmem:[#allocation3 + $0x70] sm:$0xff]
  %v4295 = vld [vmem:[#allocation3 + $0x78] sm:$0xff]
  %v4296 = vld [vmem:[#allocation3 + $0x80] sm:$0xff]
  %4313 = vrot.lane.b32.xlu0 %v4281, 89
  %v4314 = vpop.permute.xlu0 %4313
  %4315 = vrot.lane.b32.xlu0 %v4282, 89
  %v4316 = vpop.permute.xlu0 %4315
  %4317 = vrot.lane.b32.xlu0 %v4283, 89
  %v4318 = vpop.permute.xlu0 %4317
  %4319 = vrot.lane.b32.xlu0 %v4284, 89
  %v4320 = vpop.permute.xlu0 %4319
  %4321 = vrot.lane.b32.xlu0 %v4285, 89
  %v4322 = vpop.permute.xlu0 %4321
  %4323 = vrot.lane.b32.xlu0 %v4286, 89
  %v4324 = vpop.permute.xlu0 %4323
  %4325 = vrot.lane.b32.xlu0 %v4287, 89
  %v4326 = vpop.permute.xlu0 %4325
  %4327 = vrot.lane.b32.xlu0 %v4288, 89
  %v4328 = vpop.permute.xlu0 %4327
  %4329 = vrot.lane.b32.xlu0 %v4289, 89
  %v4330 = vpop.permute.xlu0 %4329
  %4331 = vrot.lane.b32.xlu0 %v4290, 89
  %v4332 = vpop.permute.xlu0 %4331
  %4333 = vrot.lane.b32.xlu0 %v4291, 89
  %v4334 = vpop.permute.xlu0 %4333
  %4335 = vrot.lane.b32.xlu0 %v4292, 89
  %v4336 = vpop.permute.xlu0 %4335
  %4337 = vrot.lane.b32.xlu0 %v4293, 89
  %v4338 = vpop.permute.xlu0 %4337
  %4339 = vrot.lane.b32.xlu0 %v4294, 89
  %v4340 = vpop.permute.xlu0 %4339
  %4341 = vrot.lane.b32.xlu0 %v4295, 89
  %v4342 = vpop.permute.xlu0 %4341
  %4343 = vrot.lane.b32.xlu0 %v4296, 89
  %v4344 = vpop.permute.xlu0 %4343
  %v4345 = vsel %vm685, %v4314, %v4316
  %v4346 = vsel %vm685, %v4316, %v4318
  %v4347 = vsel %vm685, %v4318, %v4320
  %v4348 = vsel %vm685, %v4320, %v4322
  %v4349 = vsel %vm685, %v4322, %v4324
  %v4350 = vsel %vm685, %v4324, %v4326
  %v4351 = vsel %vm685, %v4326, %v4328
  %v4352 = vsel %vm685, %v4330, %v4332
  %v4353 = vsel %vm685, %v4332, %v4334
  %v4354 = vsel %vm685, %v4334, %v4336
  %v4355 = vsel %vm685, %v4336, %v4338
  %v4356 = vsel %vm685, %v4338, %v4340
  %v4357 = vsel %vm685, %v4340, %v4342
  %v4358 = vsel %vm685, %v4342, %v4344
  %4373 = vst [vmem:[#allocation4 + $0x4d0] sm:$0xff] %v4345
  %4374 = vst [vmem:[#allocation4 + $0x4d8] sm:$0xff] %v4346
  %4375 = vst [vmem:[#allocation4 + $0x4e0] sm:$0xff] %v4347
  %4376 = vst [vmem:[#allocation4 + $0x4e8] sm:$0xff] %v4348
  %4377 = vst [vmem:[#allocation4 + $0x4f0] sm:$0xff] %v4349
  %4378 = vst [vmem:[#allocation4 + $0x4f8] sm:$0xff] %v4350
  %4379 = vst [vmem:[#allocation4 + $0x500] sm:$0xff] %v4351
  %4380 = vst [vmem:[#allocation4 + $0x508] sm:$0xff] %v4352
  %4381 = vst [vmem:[#allocation4 + $0x510] sm:$0xff] %v4353
  %4382 = vst [vmem:[#allocation4 + $0x518] sm:$0xff] %v4354
  %4383 = vst [vmem:[#allocation4 + $0x520] sm:$0xff] %v4355
  %4384 = vst [vmem:[#allocation4 + $0x528] sm:$0xff] %v4356
  %4385 = vst [vmem:[#allocation4 + $0x530] sm:$0xff] %v4357
  %4386 = vst [vmem:[#allocation4 + $0x538] sm:$0xff] %v4358
  %v4387 = vld [vmem:[#allocation3] sm:$0xff]
  %v4388 = vld [vmem:[#allocation3 + $0x8] sm:$0xff]
  %v4389 = vld [vmem:[#allocation3 + $0x10] sm:$0xff]
  %v4390 = vld [vmem:[#allocation3 + $0x18] sm:$0xff]
  %v4391 = vld [vmem:[#allocation3 + $0x20] sm:$0xff]
  %v4392 = vld [vmem:[#allocation3 + $0x28] sm:$0xff]
  %v4393 = vld [vmem:[#allocation3 + $0x30] sm:$0xff]
  %v4394 = vld [vmem:[#allocation3 + $0x38] sm:$0xff]
  %v4395 = vld [vmem:[#allocation3 + $0x48] sm:$0xff]
  %v4396 = vld [vmem:[#allocation3 + $0x50] sm:$0xff]
  %v4397 = vld [vmem:[#allocation3 + $0x58] sm:$0xff]
  %v4398 = vld [vmem:[#allocation3 + $0x60] sm:$0xff]
  %v4399 = vld [vmem:[#allocation3 + $0x68] sm:$0xff]
  %v4400 = vld [vmem:[#allocation3 + $0x70] sm:$0xff]
  %v4401 = vld [vmem:[#allocation3 + $0x78] sm:$0xff]
  %v4402 = vld [vmem:[#allocation3 + $0x80] sm:$0xff]
  %4419 = vrot.lane.b32.xlu0 %v4387, 60
  %v4420 = vpop.permute.xlu0 %4419
  %4421 = vrot.lane.b32.xlu0 %v4388, 60
  %v4422 = vpop.permute.xlu0 %4421
  %4423 = vrot.lane.b32.xlu0 %v4389, 60
  %v4424 = vpop.permute.xlu0 %4423
  %4425 = vrot.lane.b32.xlu0 %v4390, 60
  %v4426 = vpop.permute.xlu0 %4425
  %4427 = vrot.lane.b32.xlu0 %v4391, 60
  %v4428 = vpop.permute.xlu0 %4427
  %4429 = vrot.lane.b32.xlu0 %v4392, 60
  %v4430 = vpop.permute.xlu0 %4429
  %4431 = vrot.lane.b32.xlu0 %v4393, 60
  %v4432 = vpop.permute.xlu0 %4431
  %4433 = vrot.lane.b32.xlu0 %v4394, 60
  %v4434 = vpop.permute.xlu0 %4433
  %4435 = vrot.lane.b32.xlu0 %v4395, 60
  %v4436 = vpop.permute.xlu0 %4435
  %4437 = vrot.lane.b32.xlu0 %v4396, 60
  %v4438 = vpop.permute.xlu0 %4437
  %4439 = vrot.lane.b32.xlu0 %v4397, 60
  %v4440 = vpop.permute.xlu0 %4439
  %4441 = vrot.lane.b32.xlu0 %v4398, 60
  %v4442 = vpop.permute.xlu0 %4441
  %4443 = vrot.lane.b32.xlu0 %v4399, 60
  %v4444 = vpop.permute.xlu0 %4443
  %4445 = vrot.lane.b32.xlu0 %v4400, 60
  %v4446 = vpop.permute.xlu0 %4445
  %4447 = vrot.lane.b32.xlu0 %v4401, 60
  %v4448 = vpop.permute.xlu0 %4447
  %4449 = vrot.lane.b32.xlu0 %v4402, 60
  %v4450 = vpop.permute.xlu0 %4449
  %v4451 = vsel %vm746, %v4420, %v4422
  %v4452 = vsel %vm746, %v4422, %v4424
  %v4453 = vsel %vm746, %v4424, %v4426
  %v4454 = vsel %vm746, %v4426, %v4428
  %v4455 = vsel %vm746, %v4428, %v4430
  %v4456 = vsel %vm746, %v4430, %v4432
  %v4457 = vsel %vm746, %v4432, %v4434
  %v4458 = vsel %vm746, %v4436, %v4438
  %v4459 = vsel %vm746, %v4438, %v4440
  %v4460 = vsel %vm746, %v4440, %v4442
  %v4461 = vsel %vm746, %v4442, %v4444
  %v4462 = vsel %vm746, %v4444, %v4446
  %v4463 = vsel %vm746, %v4446, %v4448
  %v4464 = vsel %vm746, %v4448, %v4450
  %4479 = vst [vmem:[#allocation4 + $0x540] sm:$0xff] %v4451
  %4480 = vst [vmem:[#allocation4 + $0x548] sm:$0xff] %v4452
  %4481 = vst [vmem:[#allocation4 + $0x550] sm:$0xff] %v4453
  %4482 = vst [vmem:[#allocation4 + $0x558] sm:$0xff] %v4454
  %4483 = vst [vmem:[#allocation4 + $0x560] sm:$0xff] %v4455
  %4484 = vst [vmem:[#allocation4 + $0x568] sm:$0xff] %v4456
  %4485 = vst [vmem:[#allocation4 + $0x570] sm:$0xff] %v4457
  %4486 = vst [vmem:[#allocation4 + $0x578] sm:$0xff] %v4458
  %4487 = vst [vmem:[#allocation4 + $0x580] sm:$0xff] %v4459
  %4488 = vst [vmem:[#allocation4 + $0x588] sm:$0xff] %v4460
  %4489 = vst [vmem:[#allocation4 + $0x590] sm:$0xff] %v4461
  %4490 = vst [vmem:[#allocation4 + $0x598] sm:$0xff] %v4462
  %4491 = vst [vmem:[#allocation4 + $0x5a0] sm:$0xff] %v4463
  %4492 = vst [vmem:[#allocation4 + $0x5a8] sm:$0xff] %v4464
  %v4493 = vld [vmem:[#allocation3] sm:$0xff]
  %v4494 = vld [vmem:[#allocation3 + $0x8] sm:$0xff]
  %v4495 = vld [vmem:[#allocation3 + $0x10] sm:$0xff]
  %v4496 = vld [vmem:[#allocation3 + $0x18] sm:$0xff]
  %v4497 = vld [vmem:[#allocation3 + $0x20] sm:$0xff]
  %v4498 = vld [vmem:[#allocation3 + $0x28] sm:$0xff]
  %v4499 = vld [vmem:[#allocation3 + $0x30] sm:$0xff]
  %v4500 = vld [vmem:[#allocation3 + $0x38] sm:$0xff]
  %v4501 = vld [vmem:[#allocation3 + $0x48] sm:$0xff]
  %v4502 = vld [vmem:[#allocation3 + $0x50] sm:$0xff]
  %v4503 = vld [vmem:[#allocation3 + $0x58] sm:$0xff]
  %v4504 = vld [vmem:[#allocation3 + $0x60] sm:$0xff]
  %v4505 = vld [vmem:[#allocation3 + $0x68] sm:$0xff]
  %v4506 = vld [vmem:[#allocation3 + $0x70] sm:$0xff]
  %v4507 = vld [vmem:[#allocation3 + $0x78] sm:$0xff]
  %v4508 = vld [vmem:[#allocation3 + $0x80] sm:$0xff]
  %4525 = vrot.lane.b32.xlu0 %v4493, 59
  %v4526 = vpop.permute.xlu0 %4525
  %4527 = vrot.lane.b32.xlu0 %v4494, 59
  %v4528 = vpop.permute.xlu0 %4527
  %4529 = vrot.lane.b32.xlu0 %v4495, 59
  %v4530 = vpop.permute.xlu0 %4529
  %4531 = vrot.lane.b32.xlu0 %v4496, 59
  %v4532 = vpop.permute.xlu0 %4531
  %4533 = vrot.lane.b32.xlu0 %v4497, 59
  %v4534 = vpop.permute.xlu0 %4533
  %4535 = vrot.lane.b32.xlu0 %v4498, 59
  %v4536 = vpop.permute.xlu0 %4535
  %4537 = vrot.lane.b32.xlu0 %v4499, 59
  %v4538 = vpop.permute.xlu0 %4537
  %4539 = vrot.lane.b32.xlu0 %v4500, 59
  %v4540 = vpop.permute.xlu0 %4539
  %4541 = vrot.lane.b32.xlu0 %v4501, 59
  %v4542 = vpop.permute.xlu0 %4541
  %4543 = vrot.lane.b32.xlu0 %v4502, 59
  %v4544 = vpop.permute.xlu0 %4543
  %4545 = vrot.lane.b32.xlu0 %v4503, 59
  %v4546 = vpop.permute.xlu0 %4545
  %4547 = vrot.lane.b32.xlu0 %v4504, 59
  %v4548 = vpop.permute.xlu0 %4547
  %4549 = vrot.lane.b32.xlu0 %v4505, 59
  %v4550 = vpop.permute.xlu0 %4549
  %4551 = vrot.lane.b32.xlu0 %v4506, 59
  %v4552 = vpop.permute.xlu0 %4551
  %4553 = vrot.lane.b32.xlu0 %v4507, 59
  %v4554 = vpop.permute.xlu0 %4553
  %4555 = vrot.lane.b32.xlu0 %v4508, 59
  %v4556 = vpop.permute.xlu0 %4555
  %v4557 = vsel %vm807, %v4526, %v4528
  %v4558 = vsel %vm807, %v4528, %v4530
  %v4559 = vsel %vm807, %v4530, %v4532
  %v4560 = vsel %vm807, %v4532, %v4534
  %v4561 = vsel %vm807, %v4534, %v4536
  %v4562 = vsel %vm807, %v4536, %v4538
  %v4563 = vsel %vm807, %v4538, %v4540
  %v4564 = vsel %vm807, %v4542, %v4544
  %v4565 = vsel %vm807, %v4544, %v4546
  %v4566 = vsel %vm807, %v4546, %v4548
  %v4567 = vsel %vm807, %v4548, %v4550
  %v4568 = vsel %vm807, %v4550, %v4552
  %v4569 = vsel %vm807, %v4552, %v4554
  %v4570 = vsel %vm807, %v4554, %v4556
  %4585 = vst [vmem:[#allocation4 + $0x5b0] sm:$0xff] %v4557
  %4586 = vst [vmem:[#allocation4 + $0x5b8] sm:$0xff] %v4558
  %4587 = vst [vmem:[#allocation4 + $0x5c0] sm:$0xff] %v4559
  %4588 = vst [vmem:[#allocation4 + $0x5c8] sm:$0xff] %v4560
  %4589 = vst [vmem:[#allocation4 + $0x5d0] sm:$0xff] %v4561
  %4590 = vst [vmem:[#allocation4 + $0x5d8] sm:$0xff] %v4562
  %4591 = vst [vmem:[#allocation4 + $0x5e0] sm:$0xff] %v4563
  %4592 = vst [vmem:[#allocation4 + $0x5e8] sm:$0xff] %v4564
  %4593 = vst [vmem:[#allocation4 + $0x5f0] sm:$0xff] %v4565
  %4594 = vst [vmem:[#allocation4 + $0x5f8] sm:$0xff] %v4566
  %4595 = vst [vmem:[#allocation4 + $0x600] sm:$0xff] %v4567
  %4596 = vst [vmem:[#allocation4 + $0x608] sm:$0xff] %v4568
  %4597 = vst [vmem:[#allocation4 + $0x610] sm:$0xff] %v4569
  %4598 = vst [vmem:[#allocation4 + $0x618] sm:$0xff] %v4570
  %v4599 = vld [vmem:[#allocation3] sm:$0xff]
  %v4600 = vld [vmem:[#allocation3 + $0x8] sm:$0xff]
  %v4601 = vld [vmem:[#allocation3 + $0x10] sm:$0xff]
  %v4602 = vld [vmem:[#allocation3 + $0x18] sm:$0xff]
  %v4603 = vld [vmem:[#allocation3 + $0x20] sm:$0xff]
  %v4604 = vld [vmem:[#allocation3 + $0x28] sm:$0xff]
  %v4605 = vld [vmem:[#allocation3 + $0x30] sm:$0xff]
  %v4606 = vld [vmem:[#allocation3 + $0x38] sm:$0xff]
  %v4607 = vld [vmem:[#allocation3 + $0x48] sm:$0xff]
  %v4608 = vld [vmem:[#allocation3 + $0x50] sm:$0xff]
  %v4609 = vld [vmem:[#allocation3 + $0x58] sm:$0xff]
  %v4610 = vld [vmem:[#allocation3 + $0x60] sm:$0xff]
  %v4611 = vld [vmem:[#allocation3 + $0x68] sm:$0xff]
  %v4612 = vld [vmem:[#allocation3 + $0x70] sm:$0xff]
  %v4613 = vld [vmem:[#allocation3 + $0x78] sm:$0xff]
  %v4614 = vld [vmem:[#allocation3 + $0x80] sm:$0xff]
  %4631 = vrot.lane.b32.xlu0 %v4599, 58
  %v4632 = vpop.permute.xlu0 %4631
  %4633 = vrot.lane.b32.xlu0 %v4600, 58
  %v4634 = vpop.permute.xlu0 %4633
  %4635 = vrot.lane.b32.xlu0 %v4601, 58
  %v4636 = vpop.permute.xlu0 %4635
  %4637 = vrot.lane.b32.xlu0 %v4602, 58
  %v4638 = vpop.permute.xlu0 %4637
  %4639 = vrot.lane.b32.xlu0 %v4603, 58
  %v4640 = vpop.permute.xlu0 %4639
  %4641 = vrot.lane.b32.xlu0 %v4604, 58
  %v4642 = vpop.permute.xlu0 %4641
  %4643 = vrot.lane.b32.xlu0 %v4605, 58
  %v4644 = vpop.permute.xlu0 %4643
  %4645 = vrot.lane.b32.xlu0 %v4606, 58
  %v4646 = vpop.permute.xlu0 %4645
  %4647 = vrot.lane.b32.xlu0 %v4607, 58
  %v4648 = vpop.permute.xlu0 %4647
  %4649 = vrot.lane.b32.xlu0 %v4608, 58
  %v4650 = vpop.permute.xlu0 %4649
  %4651 = vrot.lane.b32.xlu0 %v4609, 58
  %v4652 = vpop.permute.xlu0 %4651
  %4653 = vrot.lane.b32.xlu0 %v4610, 58
  %v4654 = vpop.permute.xlu0 %4653
  %4655 = vrot.lane.b32.xlu0 %v4611, 58
  %v4656 = vpop.permute.xlu0 %4655
  %4657 = vrot.lane.b32.xlu0 %v4612, 58
  %v4658 = vpop.permute.xlu0 %4657
  %4659 = vrot.lane.b32.xlu0 %v4613, 58
  %v4660 = vpop.permute.xlu0 %4659
  %4661 = vrot.lane.b32.xlu0 %v4614, 58
  %v4662 = vpop.permute.xlu0 %4661
  %v4663 = vsel %vm868, %v4632, %v4634
  %v4664 = vsel %vm868, %v4634, %v4636
  %v4665 = vsel %vm868, %v4636, %v4638
  %v4666 = vsel %vm868, %v4638, %v4640
  %v4667 = vsel %vm868, %v4640, %v4642
  %v4668 = vsel %vm868, %v4642, %v4644
  %v4669 = vsel %vm868, %v4644, %v4646
  %v4670 = vsel %vm868, %v4648, %v4650
  %v4671 = vsel %vm868, %v4650, %v4652
  %v4672 = vsel %vm868, %v4652, %v4654
  %v4673 = vsel %vm868, %v4654, %v4656
  %v4674 = vsel %vm868, %v4656, %v4658
  %v4675 = vsel %vm868, %v4658, %v4660
  %v4676 = vsel %vm868, %v4660, %v4662
  %4691 = vst [vmem:[#allocation4 + $0x620] sm:$0xff] %v4663
  %4692 = vst [vmem:[#allocation4 + $0x628] sm:$0xff] %v4664
  %4693 = vst [vmem:[#allocation4 + $0x630] sm:$0xff] %v4665
  %4694 = vst [vmem:[#allocation4 + $0x638] sm:$0xff] %v4666
  %4695 = vst [vmem:[#allocation4 + $0x640] sm:$0xff] %v4667
  %4696 = vst [vmem:[#allocation4 + $0x648] sm:$0xff] %v4668
  %4697 = vst [vmem:[#allocation4 + $0x650] sm:$0xff] %v4669
  %4698 = vst [vmem:[#allocation4 + $0x658] sm:$0xff] %v4670
  %4699 = vst [vmem:[#allocation4 + $0x660] sm:$0xff] %v4671
  %4700 = vst [vmem:[#allocation4 + $0x668] sm:$0xff] %v4672
  %4701 = vst [vmem:[#allocation4 + $0x670] sm:$0xff] %v4673
  %4702 = vst [vmem:[#allocation4 + $0x678] sm:$0xff] %v4674
  %4703 = vst [vmem:[#allocation4 + $0x680] sm:$0xff] %v4675
  %4704 = vst [vmem:[#allocation4 + $0x688] sm:$0xff] %v4676
  %v4705 = vld [vmem:[#allocation3] sm:$0xff]
  %v4706 = vld [vmem:[#allocation3 + $0x8] sm:$0xff]
  %v4707 = vld [vmem:[#allocation3 + $0x10] sm:$0xff]
  %v4708 = vld [vmem:[#allocation3 + $0x18] sm:$0xff]
  %v4709 = vld [vmem:[#allocation3 + $0x20] sm:$0xff]
  %v4710 = vld [vmem:[#allocation3 + $0x28] sm:$0xff]
  %v4711 = vld [vmem:[#allocation3 + $0x30] sm:$0xff]
  %v4712 = vld [vmem:[#allocation3 + $0x38] sm:$0xff]
  %v4713 = vld [vmem:[#allocation3 + $0x48] sm:$0xff]
  %v4714 = vld [vmem:[#allocation3 + $0x50] sm:$0xff]
  %v4715 = vld [vmem:[#allocation3 + $0x58] sm:$0xff]
  %v4716 = vld [vmem:[#allocation3 + $0x60] sm:$0xff]
  %v4717 = vld [vmem:[#allocation3 + $0x68] sm:$0xff]
  %v4718 = vld [vmem:[#allocation3 + $0x70] sm:$0xff]
  %v4719 = vld [vmem:[#allocation3 + $0x78] sm:$0xff]
  %v4720 = vld [vmem:[#allocation3 + $0x80] sm:$0xff]
  %4737 = vrot.lane.b32.xlu0 %v4705, 57
  %v4738 = vpop.permute.xlu0 %4737
  %4739 = vrot.lane.b32.xlu0 %v4706, 57
  %v4740 = vpop.permute.xlu0 %4739
  %4741 = vrot.lane.b32.xlu0 %v4707, 57
  %v4742 = vpop.permute.xlu0 %4741
  %4743 = vrot.lane.b32.xlu0 %v4708, 57
  %v4744 = vpop.permute.xlu0 %4743
  %4745 = vrot.lane.b32.xlu0 %v4709, 57
  %v4746 = vpop.permute.xlu0 %4745
  %4747 = vrot.lane.b32.xlu0 %v4710, 57
  %v4748 = vpop.permute.xlu0 %4747
  %4749 = vrot.lane.b32.xlu0 %v4711, 57
  %v4750 = vpop.permute.xlu0 %4749
  %4751 = vrot.lane.b32.xlu0 %v4712, 57
  %v4752 = vpop.permute.xlu0 %4751
  %4753 = vrot.lane.b32.xlu0 %v4713, 57
  %v4754 = vpop.permute.xlu0 %4753
  %4755 = vrot.lane.b32.xlu0 %v4714, 57
  %v4756 = vpop.permute.xlu0 %4755
  %4757 = vrot.lane.b32.xlu0 %v4715, 57
  %v4758 = vpop.permute.xlu0 %4757
  %4759 = vrot.lane.b32.xlu0 %v4716, 57
  %v4760 = vpop.permute.xlu0 %4759
  %4761 = vrot.lane.b32.xlu0 %v4717, 57
  %v4762 = vpop.permute.xlu0 %4761
  %4763 = vrot.lane.b32.xlu0 %v4718, 57
  %v4764 = vpop.permute.xlu0 %4763
  %4765 = vrot.lane.b32.xlu0 %v4719, 57
  %v4766 = vpop.permute.xlu0 %4765
  %4767 = vrot.lane.b32.xlu0 %v4720, 57
  %v4768 = vpop.permute.xlu0 %4767
  %v4769 = vsel %vm929, %v4738, %v4740
  %v4770 = vsel %vm929, %v4740, %v4742
  %v4771 = vsel %vm929, %v4742, %v4744
  %v4772 = vsel %vm929, %v4744, %v4746
  %v4773 = vsel %vm929, %v4746, %v4748
  %v4774 = vsel %vm929, %v4748, %v4750
  %v4775 = vsel %vm929, %v4750, %v4752
  %v4776 = vsel %vm929, %v4754, %v4756
  %v4777 = vsel %vm929, %v4756, %v4758
  %v4778 = vsel %vm929, %v4758, %v4760
  %v4779 = vsel %vm929, %v4760, %v4762
  %v4780 = vsel %vm929, %v4762, %v4764
  %v4781 = vsel %vm929, %v4764, %v4766
  %v4782 = vsel %vm929, %v4766, %v4768
  %4797 = vst [vmem:[#allocation4 + $0x690] sm:$0xff] %v4769
  %4798 = vst [vmem:[#allocation4 + $0x698] sm:$0xff] %v4770
  %4799 = vst [vmem:[#allocation4 + $0x6a0] sm:$0xff] %v4771
  %4800 = vst [vmem:[#allocation4 + $0x6a8] sm:$0xff] %v4772
  %4801 = vst [vmem:[#allocation4 + $0x6b0] sm:$0xff] %v4773
  %4802 = vst [vmem:[#allocation4 + $0x6b8] sm:$0xff] %v4774
  %4803 = vst [vmem:[#allocation4 + $0x6c0] sm:$0xff] %v4775
  %4804 = vst [vmem:[#allocation4 + $0x6c8] sm:$0xff] %v4776
  %4805 = vst [vmem:[#allocation4 + $0x6d0] sm:$0xff] %v4777
  %4806 = vst [vmem:[#allocation4 + $0x6d8] sm:$0xff] %v4778
  %4807 = vst [vmem:[#allocation4 + $0x6e0] sm:$0xff] %v4779
  %4808 = vst [vmem:[#allocation4 + $0x6e8] sm:$0xff] %v4780
  %4809 = vst [vmem:[#allocation4 + $0x6f0] sm:$0xff] %v4781
  %4810 = vst [vmem:[#allocation4 + $0x6f8] sm:$0xff] %v4782
  %v4811 = vld [vmem:[#allocation3] sm:$0xff]
  %v4812 = vld [vmem:[#allocation3 + $0x8] sm:$0xff]
  %v4813 = vld [vmem:[#allocation3 + $0x10] sm:$0xff]
  %v4814 = vld [vmem:[#allocation3 + $0x18] sm:$0xff]
  %v4815 = vld [vmem:[#allocation3 + $0x20] sm:$0xff]
  %v4816 = vld [vmem:[#allocation3 + $0x28] sm:$0xff]
  %v4817 = vld [vmem:[#allocation3 + $0x30] sm:$0xff]
  %v4818 = vld [vmem:[#allocation3 + $0x38] sm:$0xff]
  %v4819 = vld [vmem:[#allocation3 + $0x48] sm:$0xff]
  %v4820 = vld [vmem:[#allocation3 + $0x50] sm:$0xff]
  %v4821 = vld [vmem:[#allocation3 + $0x58] sm:$0xff]
  %v4822 = vld [vmem:[#allocation3 + $0x60] sm:$0xff]
  %v4823 = vld [vmem:[#allocation3 + $0x68] sm:$0xff]
  %v4824 = vld [vmem:[#allocation3 + $0x70] sm:$0xff]
  %v4825 = vld [vmem:[#allocation3 + $0x78] sm:$0xff]
  %v4826 = vld [vmem:[#allocation3 + $0x80] sm:$0xff]
  %4843 = vrot.lane.b32.xlu0 %v4811, 56
  %v4844 = vpop.permute.xlu0 %4843
  %4845 = vrot.lane.b32.xlu0 %v4812, 56
  %v4846 = vpop.permute.xlu0 %4845
  %4847 = vrot.lane.b32.xlu0 %v4813, 56
  %v4848 = vpop.permute.xlu0 %4847
  %4849 = vrot.lane.b32.xlu0 %v4814, 56
  %v4850 = vpop.permute.xlu0 %4849
  %4851 = vrot.lane.b32.xlu0 %v4815, 56
  %v4852 = vpop.permute.xlu0 %4851
  %4853 = vrot.lane.b32.xlu0 %v4816, 56
  %v4854 = vpop.permute.xlu0 %4853
  %4855 = vrot.lane.b32.xlu0 %v4817, 56
  %v4856 = vpop.permute.xlu0 %4855
  %4857 = vrot.lane.b32.xlu0 %v4818, 56
  %v4858 = vpop.permute.xlu0 %4857
  %4859 = vrot.lane.b32.xlu0 %v4819, 56
  %v4860 = vpop.permute.xlu0 %4859
  %4861 = vrot.lane.b32.xlu0 %v4820, 56
  %v4862 = vpop.permute.xlu0 %4861
  %4863 = vrot.lane.b32.xlu0 %v4821, 56
  %v4864 = vpop.permute.xlu0 %4863
  %4865 = vrot.lane.b32.xlu0 %v4822, 56
  %v4866 = vpop.permute.xlu0 %4865
  %4867 = vrot.lane.b32.xlu0 %v4823, 56
  %v4868 = vpop.permute.xlu0 %4867
  %4869 = vrot.lane.b32.xlu0 %v4824, 56
  %v4870 = vpop.permute.xlu0 %4869
  %4871 = vrot.lane.b32.xlu0 %v4825, 56
  %v4872 = vpop.permute.xlu0 %4871
  %4873 = vrot.lane.b32.xlu0 %v4826, 56
  %v4874 = vpop.permute.xlu0 %4873
  %v4875 = vsel %vm990, %v4844, %v4846
  %v4876 = vsel %vm990, %v4846, %v4848
  %v4877 = vsel %vm990, %v4848, %v4850
  %v4878 = vsel %vm990, %v4850, %v4852
  %v4879 = vsel %vm990, %v4852, %v4854
  %v4880 = vsel %vm990, %v4854, %v4856
  %v4881 = vsel %vm990, %v4856, %v4858
  %v4882 = vsel %vm990, %v4860, %v4862
  %v4883 = vsel %vm990, %v4862, %v4864
  %v4884 = vsel %vm990, %v4864, %v4866
  %v4885 = vsel %vm990, %v4866, %v4868
  %v4886 = vsel %vm990, %v4868, %v4870
  %v4887 = vsel %vm990, %v4870, %v4872
  %v4888 = vsel %vm990, %v4872, %v4874
  %4903 = vst [vmem:[#allocation4 + $0x700] sm:$0xff] %v4875
  %4904 = vst [vmem:[#allocation4 + $0x708] sm:$0xff] %v4876
  %4905 = vst [vmem:[#allocation4 + $0x710] sm:$0xff] %v4877
  %4906 = vst [vmem:[#allocation4 + $0x718] sm:$0xff] %v4878
  %4907 = vst [vmem:[#allocation4 + $0x720] sm:$0xff] %v4879
  %4908 = vst [vmem:[#allocation4 + $0x728] sm:$0xff] %v4880
  %4909 = vst [vmem:[#allocation4 + $0x730] sm:$0xff] %v4881
  %4910 = vst [vmem:[#allocation4 + $0x738] sm:$0xff] %v4882
  %4911 = vst [vmem:[#allocation4 + $0x740] sm:$0xff] %v4883
  %4912 = vst [vmem:[#allocation4 + $0x748] sm:$0xff] %v4884
  %4913 = vst [vmem:[#allocation4 + $0x750] sm:$0xff] %v4885
  %4914 = vst [vmem:[#allocation4 + $0x758] sm:$0xff] %v4886
  %4915 = vst [vmem:[#allocation4 + $0x760] sm:$0xff] %v4887
  %4916 = vst [vmem:[#allocation4 + $0x768] sm:$0xff] %v4888
  %v4917 = vld [vmem:[#allocation3] sm:$0xff]
  %v4918 = vld [vmem:[#allocation3 + $0x8] sm:$0xff]
  %v4919 = vld [vmem:[#allocation3 + $0x10] sm:$0xff]
  %v4920 = vld [vmem:[#allocation3 + $0x18] sm:$0xff]
  %v4921 = vld [vmem:[#allocation3 + $0x20] sm:$0xff]
  %v4922 = vld [vmem:[#allocation3 + $0x28] sm:$0xff]
  %v4923 = vld [vmem:[#allocation3 + $0x30] sm:$0xff]
  %v4924 = vld [vmem:[#allocation3 + $0x38] sm:$0xff]
  %v4925 = vld [vmem:[#allocation3 + $0x48] sm:$0xff]
  %v4926 = vld [vmem:[#allocation3 + $0x50] sm:$0xff]
  %v4927 = vld [vmem:[#allocation3 + $0x58] sm:$0xff]
  %v4928 = vld [vmem:[#allocation3 + $0x60] sm:$0xff]
  %v4929 = vld [vmem:[#allocation3 + $0x68] sm:$0xff]
  %v4930 = vld [vmem:[#allocation3 + $0x70] sm:$0xff]
  %v4931 = vld [vmem:[#allocation3 + $0x78] sm:$0xff]
  %v4932 = vld [vmem:[#allocation3 + $0x80] sm:$0xff]
  %4949 = vrot.lane.b32.xlu0 %v4917, 55
  %v4950 = vpop.permute.xlu0 %4949
  %4951 = vrot.lane.b32.xlu0 %v4918, 55
  %v4952 = vpop.permute.xlu0 %4951
  %4953 = vrot.lane.b32.xlu0 %v4919, 55
  %v4954 = vpop.permute.xlu0 %4953
  %4955 = vrot.lane.b32.xlu0 %v4920, 55
  %v4956 = vpop.permute.xlu0 %4955
  %4957 = vrot.lane.b32.xlu0 %v4921, 55
  %v4958 = vpop.permute.xlu0 %4957
  %4959 = vrot.lane.b32.xlu0 %v4922, 55
  %v4960 = vpop.permute.xlu0 %4959
  %4961 = vrot.lane.b32.xlu0 %v4923, 55
  %v4962 = vpop.permute.xlu0 %4961
  %4963 = vrot.lane.b32.xlu0 %v4924, 55
  %v4964 = vpop.permute.xlu0 %4963
  %4965 = vrot.lane.b32.xlu0 %v4925, 55
  %v4966 = vpop.permute.xlu0 %4965
  %4967 = vrot.lane.b32.xlu0 %v4926, 55
  %v4968 = vpop.permute.xlu0 %4967
  %4969 = vrot.lane.b32.xlu0 %v4927, 55
  %v4970 = vpop.permute.xlu0 %4969
  %4971 = vrot.lane.b32.xlu0 %v4928, 55
  %v4972 = vpop.permute.xlu0 %4971
  %4973 = vrot.lane.b32.xlu0 %v4929, 55
  %v4974 = vpop.permute.xlu0 %4973
  %4975 = vrot.lane.b32.xlu0 %v4930, 55
  %v4976 = vpop.permute.xlu0 %4975
  %4977 = vrot.lane.b32.xlu0 %v4931, 55
  %v4978 = vpop.permute.xlu0 %4977
  %4979 = vrot.lane.b32.xlu0 %v4932, 55
  %v4980 = vpop.permute.xlu0 %4979
  %v4981 = vsel %vm1051, %v4950, %v4952
  %v4982 = vsel %vm1051, %v4952, %v4954
  %v4983 = vsel %vm1051, %v4954, %v4956
  %v4984 = vsel %vm1051, %v4956, %v4958
  %v4985 = vsel %vm1051, %v4958, %v4960
  %v4986 = vsel %vm1051, %v4960, %v4962
  %v4987 = vsel %vm1051, %v4962, %v4964
  %v4988 = vsel %vm1051, %v4966, %v4968
  %v4989 = vsel %vm1051, %v4968, %v4970
  %v4990 = vsel %vm1051, %v4970, %v4972
  %v4991 = vsel %vm1051, %v4972, %v4974
  %v4992 = vsel %vm1051, %v4974, %v4976
  %v4993 = vsel %vm1051, %v4976, %v4978
  %v4994 = vsel %vm1051, %v4978, %v4980
  %5009 = vst [vmem:[#allocation4 + $0x770] sm:$0xff] %v4981
  %5010 = vst [vmem:[#allocation4 + $0x778] sm:$0xff] %v4982
  %5011 = vst [vmem:[#allocation4 + $0x780] sm:$0xff] %v4983
  %5012 = vst [vmem:[#allocation4 + $0x788] sm:$0xff] %v4984
  %5013 = vst [vmem:[#allocation4 + $0x790] sm:$0xff] %v4985
  %5014 = vst [vmem:[#allocation4 + $0x798] sm:$0xff] %v4986
  %5015 = vst [vmem:[#allocation4 + $0x7a0] sm:$0xff] %v4987
  %5016 = vst [vmem:[#allocation4 + $0x7a8] sm:$0xff] %v4988
  %5017 = vst [vmem:[#allocation4 + $0x7b0] sm:$0xff] %v4989
  %5018 = vst [vmem:[#allocation4 + $0x7b8] sm:$0xff] %v4990
  %5019 = vst [vmem:[#allocation4 + $0x7c0] sm:$0xff] %v4991
  %5020 = vst [vmem:[#allocation4 + $0x7c8] sm:$0xff] %v4992
  %5021 = vst [vmem:[#allocation4 + $0x7d0] sm:$0xff] %v4993
  %5022 = vst [vmem:[#allocation4 + $0x7d8] sm:$0xff] %v4994
  %v5023 = vld [vmem:[#allocation3] sm:$0xff]
  %v5024 = vld [vmem:[#allocation3 + $0x8] sm:$0xff]
  %v5025 = vld [vmem:[#allocation3 + $0x10] sm:$0xff]
  %v5026 = vld [vmem:[#allocation3 + $0x18] sm:$0xff]
  %v5027 = vld [vmem:[#allocation3 + $0x20] sm:$0xff]
  %v5028 = vld [vmem:[#allocation3 + $0x28] sm:$0xff]
  %v5029 = vld [vmem:[#allocation3 + $0x30] sm:$0xff]
  %v5030 = vld [vmem:[#allocation3 + $0x38] sm:$0xff]
  %v5031 = vld [vmem:[#allocation3 + $0x48] sm:$0xff]
  %v5032 = vld [vmem:[#allocation3 + $0x50] sm:$0xff]
  %v5033 = vld [vmem:[#allocation3 + $0x58] sm:$0xff]
  %v5034 = vld [vmem:[#allocation3 + $0x60] sm:$0xff]
  %v5035 = vld [vmem:[#allocation3 + $0x68] sm:$0xff]
  %v5036 = vld [vmem:[#allocation3 + $0x70] sm:$0xff]
  %v5037 = vld [vmem:[#allocation3 + $0x78] sm:$0xff]
  %v5038 = vld [vmem:[#allocation3 + $0x80] sm:$0xff]
  %5055 = vrot.lane.b32.xlu0 %v5023, 26
  %v5056 = vpop.permute.xlu0 %5055
  %5057 = vrot.lane.b32.xlu0 %v5024, 26
  %v5058 = vpop.permute.xlu0 %5057
  %5059 = vrot.lane.b32.xlu0 %v5025, 26
  %v5060 = vpop.permute.xlu0 %5059
  %5061 = vrot.lane.b32.xlu0 %v5026, 26
  %v5062 = vpop.permute.xlu0 %5061
  %5063 = vrot.lane.b32.xlu0 %v5027, 26
  %v5064 = vpop.permute.xlu0 %5063
  %5065 = vrot.lane.b32.xlu0 %v5028, 26
  %v5066 = vpop.permute.xlu0 %5065
  %5067 = vrot.lane.b32.xlu0 %v5029, 26
  %v5068 = vpop.permute.xlu0 %5067
  %5069 = vrot.lane.b32.xlu0 %v5030, 26
  %v5070 = vpop.permute.xlu0 %5069
  %5071 = vrot.lane.b32.xlu0 %v5031, 26
  %v5072 = vpop.permute.xlu0 %5071
  %5073 = vrot.lane.b32.xlu0 %v5032, 26
  %v5074 = vpop.permute.xlu0 %5073
  %5075 = vrot.lane.b32.xlu0 %v5033, 26
  %v5076 = vpop.permute.xlu0 %5075
  %5077 = vrot.lane.b32.xlu0 %v5034, 26
  %v5078 = vpop.permute.xlu0 %5077
  %5079 = vrot.lane.b32.xlu0 %v5035, 26
  %v5080 = vpop.permute.xlu0 %5079
  %5081 = vrot.lane.b32.xlu0 %v5036, 26
  %v5082 = vpop.permute.xlu0 %5081
  %5083 = vrot.lane.b32.xlu0 %v5037, 26
  %v5084 = vpop.permute.xlu0 %5083
  %5085 = vrot.lane.b32.xlu0 %v5038, 26
  %v5086 = vpop.permute.xlu0 %5085
  %v5087 = vsel %vm1112, %v5056, %v5058
  %v5088 = vsel %vm1112, %v5058, %v5060
  %v5089 = vsel %vm1112, %v5060, %v5062
  %v5090 = vsel %vm1112, %v5062, %v5064
  %v5091 = vsel %vm1112, %v5064, %v5066
  %v5092 = vsel %vm1112, %v5066, %v5068
  %v5093 = vsel %vm1112, %v5068, %v5070
  %v5094 = vsel %vm1112, %v5072, %v5074
  %v5095 = vsel %vm1112, %v5074, %v5076
  %v5096 = vsel %vm1112, %v5076, %v5078
  %v5097 = vsel %vm1112, %v5078, %v5080
  %v5098 = vsel %vm1112, %v5080, %v5082
  %v5099 = vsel %vm1112, %v5082, %v5084
  %v5100 = vsel %vm1112, %v5084, %v5086
  %5115 = vst [vmem:[#allocation4 + $0x7e0] sm:$0xff] %v5087
  %5116 = vst [vmem:[#allocation4 + $0x7e8] sm:$0xff] %v5088
  %5117 = vst [vmem:[#allocation4 + $0x7f0] sm:$0xff] %v5089
  %5118 = vst [vmem:[#allocation4 + $0x7f8] sm:$0xff] %v5090
  %5119 = vst [vmem:[#allocation4 + $0x800] sm:$0xff] %v5091
  %5120 = vst [vmem:[#allocation4 + $0x808] sm:$0xff] %v5092
  %5121 = vst [vmem:[#allocation4 + $0x810] sm:$0xff] %v5093
  %5122 = vst [vmem:[#allocation4 + $0x818] sm:$0xff] %v5094
  %5123 = vst [vmem:[#allocation4 + $0x820] sm:$0xff] %v5095
  %5124 = vst [vmem:[#allocation4 + $0x828] sm:$0xff] %v5096
  %5125 = vst [vmem:[#allocation4 + $0x830] sm:$0xff] %v5097
  %5126 = vst [vmem:[#allocation4 + $0x838] sm:$0xff] %v5098
  %5127 = vst [vmem:[#allocation4 + $0x840] sm:$0xff] %v5099
  %5128 = vst [vmem:[#allocation4 + $0x848] sm:$0xff] %v5100
  %v5129 = vld [vmem:[#allocation3] sm:$0xff]
  %v5130 = vld [vmem:[#allocation3 + $0x8] sm:$0xff]
  %v5131 = vld [vmem:[#allocation3 + $0x10] sm:$0xff]
  %v5132 = vld [vmem:[#allocation3 + $0x18] sm:$0xff]
  %v5133 = vld [vmem:[#allocation3 + $0x20] sm:$0xff]
  %v5134 = vld [vmem:[#allocation3 + $0x28] sm:$0xff]
  %v5135 = vld [vmem:[#allocation3 + $0x30] sm:$0xff]
  %v5136 = vld [vmem:[#allocation3 + $0x38] sm:$0xff]
  %v5137 = vld [vmem:[#allocation3 + $0x48] sm:$0xff]
  %v5138 = vld [vmem:[#allocation3 + $0x50] sm:$0xff]
  %v5139 = vld [vmem:[#allocation3 + $0x58] sm:$0xff]
  %v5140 = vld [vmem:[#allocation3 + $0x60] sm:$0xff]
  %v5141 = vld [vmem:[#allocation3 + $0x68] sm:$0xff]
  %v5142 = vld [vmem:[#allocation3 + $0x70] sm:$0xff]
  %v5143 = vld [vmem:[#allocation3 + $0x78] sm:$0xff]
  %v5144 = vld [vmem:[#allocation3 + $0x80] sm:$0xff]
  %5161 = vrot.lane.b32.xlu0 %v5129, 25
  %v5162 = vpop.permute.xlu0 %5161
  %5163 = vrot.lane.b32.xlu0 %v5130, 25
  %v5164 = vpop.permute.xlu0 %5163
  %5165 = vrot.lane.b32.xlu0 %v5131, 25
  %v5166 = vpop.permute.xlu0 %5165
  %5167 = vrot.lane.b32.xlu0 %v5132, 25
  %v5168 = vpop.permute.xlu0 %5167
  %5169 = vrot.lane.b32.xlu0 %v5133, 25
  %v5170 = vpop.permute.xlu0 %5169
  %5171 = vrot.lane.b32.xlu0 %v5134, 25
  %v5172 = vpop.permute.xlu0 %5171
  %5173 = vrot.lane.b32.xlu0 %v5135, 25
  %v5174 = vpop.permute.xlu0 %5173
  %5175 = vrot.lane.b32.xlu0 %v5136, 25
  %v5176 = vpop.permute.xlu0 %5175
  %5177 = vrot.lane.b32.xlu0 %v5137, 25
  %v5178 = vpop.permute.xlu0 %5177
  %5179 = vrot.lane.b32.xlu0 %v5138, 25
  %v5180 = vpop.permute.xlu0 %5179
  %5181 = vrot.lane.b32.xlu0 %v5139, 25
  %v5182 = vpop.permute.xlu0 %5181
  %5183 = vrot.lane.b32.xlu0 %v5140, 25
  %v5184 = vpop.permute.xlu0 %5183
  %5185 = vrot.lane.b32.xlu0 %v5141, 25
  %v5186 = vpop.permute.xlu0 %5185
  %5187 = vrot.lane.b32.xlu0 %v5142, 25
  %v5188 = vpop.permute.xlu0 %5187
  %5189 = vrot.lane.b32.xlu0 %v5143, 25
  %v5190 = vpop.permute.xlu0 %5189
  %5191 = vrot.lane.b32.xlu0 %v5144, 25
  %v5192 = vpop.permute.xlu0 %5191
  %v5193 = vsel %vm1173, %v5162, %v5164
  %v5194 = vsel %vm1173, %v5164, %v5166
  %v5195 = vsel %vm1173, %v5166, %v5168
  %v5196 = vsel %vm1173, %v5168, %v5170
  %v5197 = vsel %vm1173, %v5170, %v5172
  %v5198 = vsel %vm1173, %v5172, %v5174
  %v5199 = vsel %vm1173, %v5174, %v5176
  %v5200 = vsel %vm1173, %v5178, %v5180
  %v5201 = vsel %vm1173, %v5180, %v5182
  %v5202 = vsel %vm1173, %v5182, %v5184
  %v5203 = vsel %vm1173, %v5184, %v5186
  %v5204 = vsel %vm1173, %v5186, %v5188
  %v5205 = vsel %vm1173, %v5188, %v5190
  %v5206 = vsel %vm1173, %v5190, %v5192
  %5221 = vst [vmem:[#allocation4 + $0x850] sm:$0xff] %v5193
  %5222 = vst [vmem:[#allocation4 + $0x858] sm:$0xff] %v5194
  %5223 = vst [vmem:[#allocation4 + $0x860] sm:$0xff] %v5195
  %5224 = vst [vmem:[#allocation4 + $0x868] sm:$0xff] %v5196
  %5225 = vst [vmem:[#allocation4 + $0x870] sm:$0xff] %v5197
  %5226 = vst [vmem:[#allocation4 + $0x878] sm:$0xff] %v5198
  %5227 = vst [vmem:[#allocation4 + $0x880] sm:$0xff] %v5199
  %5228 = vst [vmem:[#allocation4 + $0x888] sm:$0xff] %v5200
  %5229 = vst [vmem:[#allocation4 + $0x890] sm:$0xff] %v5201
  %5230 = vst [vmem:[#allocation4 + $0x898] sm:$0xff] %v5202
  %5231 = vst [vmem:[#allocation4 + $0x8a0] sm:$0xff] %v5203
  %5232 = vst [vmem:[#allocation4 + $0x8a8] sm:$0xff] %v5204
  %5233 = vst [vmem:[#allocation4 + $0x8b0] sm:$0xff] %v5205
  %5234 = vst [vmem:[#allocation4 + $0x8b8] sm:$0xff] %v5206
  %v5235 = vld [vmem:[#allocation3] sm:$0xff]
  %v5236 = vld [vmem:[#allocation3 + $0x8] sm:$0xff]
  %v5237 = vld [vmem:[#allocation3 + $0x10] sm:$0xff]
  %v5238 = vld [vmem:[#allocation3 + $0x18] sm:$0xff]
  %v5239 = vld [vmem:[#allocation3 + $0x20] sm:$0xff]
  %v5240 = vld [vmem:[#allocation3 + $0x28] sm:$0xff]
  %v5241 = vld [vmem:[#allocation3 + $0x30] sm:$0xff]
  %v5242 = vld [vmem:[#allocation3 + $0x38] sm:$0xff]
  %v5243 = vld [vmem:[#allocation3 + $0x48] sm:$0xff]
  %v5244 = vld [vmem:[#allocation3 + $0x50] sm:$0xff]
  %v5245 = vld [vmem:[#allocation3 + $0x58] sm:$0xff]
  %v5246 = vld [vmem:[#allocation3 + $0x60] sm:$0xff]
  %v5247 = vld [vmem:[#allocation3 + $0x68] sm:$0xff]
  %v5248 = vld [vmem:[#allocation3 + $0x70] sm:$0xff]
  %v5249 = vld [vmem:[#allocation3 + $0x78] sm:$0xff]
  %v5250 = vld [vmem:[#allocation3 + $0x80] sm:$0xff]
  %5267 = vrot.lane.b32.xlu0 %v5235, 24
  %v5268 = vpop.permute.xlu0 %5267
  %5269 = vrot.lane.b32.xlu0 %v5236, 24
  %v5270 = vpop.permute.xlu0 %5269
  %5271 = vrot.lane.b32.xlu0 %v5237, 24
  %v5272 = vpop.permute.xlu0 %5271
  %5273 = vrot.lane.b32.xlu0 %v5238, 24
  %v5274 = vpop.permute.xlu0 %5273
  %5275 = vrot.lane.b32.xlu0 %v5239, 24
  %v5276 = vpop.permute.xlu0 %5275
  %5277 = vrot.lane.b32.xlu0 %v5240, 24
  %v5278 = vpop.permute.xlu0 %5277
  %5279 = vrot.lane.b32.xlu0 %v5241, 24
  %v5280 = vpop.permute.xlu0 %5279
  %5281 = vrot.lane.b32.xlu0 %v5242, 24
  %v5282 = vpop.permute.xlu0 %5281
  %5283 = vrot.lane.b32.xlu0 %v5243, 24
  %v5284 = vpop.permute.xlu0 %5283
  %5285 = vrot.lane.b32.xlu0 %v5244, 24
  %v5286 = vpop.permute.xlu0 %5285
  %5287 = vrot.lane.b32.xlu0 %v5245, 24
  %v5288 = vpop.permute.xlu0 %5287
  %5289 = vrot.lane.b32.xlu0 %v5246, 24
  %v5290 = vpop.permute.xlu0 %5289
  %5291 = vrot.lane.b32.xlu0 %v5247, 24
  %v5292 = vpop.permute.xlu0 %5291
  %5293 = vrot.lane.b32.xlu0 %v5248, 24
  %v5294 = vpop.permute.xlu0 %5293
  %5295 = vrot.lane.b32.xlu0 %v5249, 24
  %v5296 = vpop.permute.xlu0 %5295
  %5297 = vrot.lane.b32.xlu0 %v5250, 24
  %v5298 = vpop.permute.xlu0 %5297
  %v5299 = vsel %vm1234, %v5268, %v5270
  %v5300 = vsel %vm1234, %v5270, %v5272
  %v5301 = vsel %vm1234, %v5272, %v5274
  %v5302 = vsel %vm1234, %v5274, %v5276
  %v5303 = vsel %vm1234, %v5276, %v5278
  %v5304 = vsel %vm1234, %v5278, %v5280
  %v5305 = vsel %vm1234, %v5280, %v5282
  %v5306 = vsel %vm1234, %v5284, %v5286
  %v5307 = vsel %vm1234, %v5286, %v5288
  %v5308 = vsel %vm1234, %v5288, %v5290
  %v5309 = vsel %vm1234, %v5290, %v5292
  %v5310 = vsel %vm1234, %v5292, %v5294
  %v5311 = vsel %vm1234, %v5294, %v5296
  %v5312 = vsel %vm1234, %v5296, %v5298
  %5327 = vst [vmem:[#allocation4 + $0x8c0] sm:$0xff] %v5299
  %5328 = vst [vmem:[#allocation4 + $0x8c8] sm:$0xff] %v5300
  %5329 = vst [vmem:[#allocation4 + $0x8d0] sm:$0xff] %v5301
  %5330 = vst [vmem:[#allocation4 + $0x8d8] sm:$0xff] %v5302
  %5331 = vst [vmem:[#allocation4 + $0x8e0] sm:$0xff] %v5303
  %5332 = vst [vmem:[#allocation4 + $0x8e8] sm:$0xff] %v5304
  %5333 = vst [vmem:[#allocation4 + $0x8f0] sm:$0xff] %v5305
  %5334 = vst [vmem:[#allocation4 + $0x8f8] sm:$0xff] %v5306
  %5335 = vst [vmem:[#allocation4 + $0x900] sm:$0xff] %v5307
  %5336 = vst [vmem:[#allocation4 + $0x908] sm:$0xff] %v5308
  %5337 = vst [vmem:[#allocation4 + $0x910] sm:$0xff] %v5309
  %5338 = vst [vmem:[#allocation4 + $0x918] sm:$0xff] %v5310
  %5339 = vst [vmem:[#allocation4 + $0x920] sm:$0xff] %v5311
  %5340 = vst [vmem:[#allocation4 + $0x928] sm:$0xff] %v5312
  %v5341 = vld [vmem:[#allocation3] sm:$0xff]
  %v5342 = vld [vmem:[#allocation3 + $0x8] sm:$0xff]
  %v5343 = vld [vmem:[#allocation3 + $0x10] sm:$0xff]
  %v5344 = vld [vmem:[#allocation3 + $0x18] sm:$0xff]
  %v5345 = vld [vmem:[#allocation3 + $0x20] sm:$0xff]
  %v5346 = vld [vmem:[#allocation3 + $0x28] sm:$0xff]
  %v5347 = vld [vmem:[#allocation3 + $0x30] sm:$0xff]
  %v5348 = vld [vmem:[#allocation3 + $0x38] sm:$0xff]
  %v5349 = vld [vmem:[#allocation3 + $0x48] sm:$0xff]
  %v5350 = vld [vmem:[#allocation3 + $0x50] sm:$0xff]
  %v5351 = vld [vmem:[#allocation3 + $0x58] sm:$0xff]
  %v5352 = vld [vmem:[#allocation3 + $0x60] sm:$0xff]
  %v5353 = vld [vmem:[#allocation3 + $0x68] sm:$0xff]
  %v5354 = vld [vmem:[#allocation3 + $0x70] sm:$0xff]
  %v5355 = vld [vmem:[#allocation3 + $0x78] sm:$0xff]
  %v5356 = vld [vmem:[#allocation3 + $0x80] sm:$0xff]
  %5373 = vrot.lane.b32.xlu0 %v5341, 23
  %v5374 = vpop.permute.xlu0 %5373
  %5375 = vrot.lane.b32.xlu0 %v5342, 23
  %v5376 = vpop.permute.xlu0 %5375
  %5377 = vrot.lane.b32.xlu0 %v5343, 23
  %v5378 = vpop.permute.xlu0 %5377
  %5379 = vrot.lane.b32.xlu0 %v5344, 23
  %v5380 = vpop.permute.xlu0 %5379
  %5381 = vrot.lane.b32.xlu0 %v5345, 23
  %v5382 = vpop.permute.xlu0 %5381
  %5383 = vrot.lane.b32.xlu0 %v5346, 23
  %v5384 = vpop.permute.xlu0 %5383
  %5385 = vrot.lane.b32.xlu0 %v5347, 23
  %v5386 = vpop.permute.xlu0 %5385
  %5387 = vrot.lane.b32.xlu0 %v5348, 23
  %v5388 = vpop.permute.xlu0 %5387
  %5389 = vrot.lane.b32.xlu0 %v5349, 23
  %v5390 = vpop.permute.xlu0 %5389
  %5391 = vrot.lane.b32.xlu0 %v5350, 23
  %v5392 = vpop.permute.xlu0 %5391
  %5393 = vrot.lane.b32.xlu0 %v5351, 23
  %v5394 = vpop.permute.xlu0 %5393
  %5395 = vrot.lane.b32.xlu0 %v5352, 23
  %v5396 = vpop.permute.xlu0 %5395
  %5397 = vrot.lane.b32.xlu0 %v5353, 23
  %v5398 = vpop.permute.xlu0 %5397
  %5399 = vrot.lane.b32.xlu0 %v5354, 23
  %v5400 = vpop.permute.xlu0 %5399
  %5401 = vrot.lane.b32.xlu0 %v5355, 23
  %v5402 = vpop.permute.xlu0 %5401
  %5403 = vrot.lane.b32.xlu0 %v5356, 23
  %v5404 = vpop.permute.xlu0 %5403
  %v5405 = vsel %vm1295, %v5374, %v5376
  %v5406 = vsel %vm1295, %v5376, %v5378
  %v5407 = vsel %vm1295, %v5378, %v5380
  %v5408 = vsel %vm1295, %v5380, %v5382
  %v5409 = vsel %vm1295, %v5382, %v5384
  %v5410 = vsel %vm1295, %v5384, %v5386
  %v5411 = vsel %vm1295, %v5386, %v5388
  %v5412 = vsel %vm1295, %v5390, %v5392
  %v5413 = vsel %vm1295, %v5392, %v5394
  %v5414 = vsel %vm1295, %v5394, %v5396
  %v5415 = vsel %vm1295, %v5396, %v5398
  %v5416 = vsel %vm1295, %v5398, %v5400
  %v5417 = vsel %vm1295, %v5400, %v5402
  %v5418 = vsel %vm1295, %v5402, %v5404
  %5433 = vst [vmem:[#allocation4 + $0x930] sm:$0xff] %v5405
  %5434 = vst [vmem:[#allocation4 + $0x938] sm:$0xff] %v5406
  %5435 = vst [vmem:[#allocation4 + $0x940] sm:$0xff] %v5407
  %5436 = vst [vmem:[#allocation4 + $0x948] sm:$0xff] %v5408
  %5437 = vst [vmem:[#allocation4 + $0x950] sm:$0xff] %v5409
  %5438 = vst [vmem:[#allocation4 + $0x958] sm:$0xff] %v5410
  %5439 = vst [vmem:[#allocation4 + $0x960] sm:$0xff] %v5411
  %5440 = vst [vmem:[#allocation4 + $0x968] sm:$0xff] %v5412
  %5441 = vst [vmem:[#allocation4 + $0x970] sm:$0xff] %v5413
  %5442 = vst [vmem:[#allocation4 + $0x978] sm:$0xff] %v5414
  %5443 = vst [vmem:[#allocation4 + $0x980] sm:$0xff] %v5415
  %5444 = vst [vmem:[#allocation4 + $0x988] sm:$0xff] %v5416
  %5445 = vst [vmem:[#allocation4 + $0x990] sm:$0xff] %v5417
  %5446 = vst [vmem:[#allocation4 + $0x998] sm:$0xff] %v5418
  %v5447 = vld [vmem:[#allocation3] sm:$0xff]
  %v5448 = vld [vmem:[#allocation3 + $0x8] sm:$0xff]
  %v5449 = vld [vmem:[#allocation3 + $0x10] sm:$0xff]
  %v5450 = vld [vmem:[#allocation3 + $0x18] sm:$0xff]
  %v5451 = vld [vmem:[#allocation3 + $0x20] sm:$0xff]
  %v5452 = vld [vmem:[#allocation3 + $0x28] sm:$0xff]
  %v5453 = vld [vmem:[#allocation3 + $0x30] sm:$0xff]
  %v5454 = vld [vmem:[#allocation3 + $0x38] sm:$0xff]
  %v5455 = vld [vmem:[#allocation3 + $0x48] sm:$0xff]
  %v5456 = vld [vmem:[#allocation3 + $0x50] sm:$0xff]
  %v5457 = vld [vmem:[#allocation3 + $0x58] sm:$0xff]
  %v5458 = vld [vmem:[#allocation3 + $0x60] sm:$0xff]
  %v5459 = vld [vmem:[#allocation3 + $0x68] sm:$0xff]
  %v5460 = vld [vmem:[#allocation3 + $0x70] sm:$0xff]
  %v5461 = vld [vmem:[#allocation3 + $0x78] sm:$0xff]
  %v5462 = vld [vmem:[#allocation3 + $0x80] sm:$0xff]
  %5479 = vrot.lane.b32.xlu0 %v5447, 22
  %v5480 = vpop.permute.xlu0 %5479
  %5481 = vrot.lane.b32.xlu0 %v5448, 22
  %v5482 = vpop.permute.xlu0 %5481
  %5483 = vrot.lane.b32.xlu0 %v5449, 22
  %v5484 = vpop.permute.xlu0 %5483
  %5485 = vrot.lane.b32.xlu0 %v5450, 22
  %v5486 = vpop.permute.xlu0 %5485
  %5487 = vrot.lane.b32.xlu0 %v5451, 22
  %v5488 = vpop.permute.xlu0 %5487
  %5489 = vrot.lane.b32.xlu0 %v5452, 22
  %v5490 = vpop.permute.xlu0 %5489
  %5491 = vrot.lane.b32.xlu0 %v5453, 22
  %v5492 = vpop.permute.xlu0 %5491
  %5493 = vrot.lane.b32.xlu0 %v5454, 22
  %v5494 = vpop.permute.xlu0 %5493
  %5495 = vrot.lane.b32.xlu0 %v5455, 22
  %v5496 = vpop.permute.xlu0 %5495
  %5497 = vrot.lane.b32.xlu0 %v5456, 22
  %v5498 = vpop.permute.xlu0 %5497
  %5499 = vrot.lane.b32.xlu0 %v5457, 22
  %v5500 = vpop.permute.xlu0 %5499
  %5501 = vrot.lane.b32.xlu0 %v5458, 22
  %v5502 = vpop.permute.xlu0 %5501
  %5503 = vrot.lane.b32.xlu0 %v5459, 22
  %v5504 = vpop.permute.xlu0 %5503
  %5505 = vrot.lane.b32.xlu0 %v5460, 22
  %v5506 = vpop.permute.xlu0 %5505
  %5507 = vrot.lane.b32.xlu0 %v5461, 22
  %v5508 = vpop.permute.xlu0 %5507
  %5509 = vrot.lane.b32.xlu0 %v5462, 22
  %v5510 = vpop.permute.xlu0 %5509
  %v5511 = vsel %vm1356, %v5480, %v5482
  %v5512 = vsel %vm1356, %v5482, %v5484
  %v5513 = vsel %vm1356, %v5484, %v5486
  %v5514 = vsel %vm1356, %v5486, %v5488
  %v5515 = vsel %vm1356, %v5488, %v5490
  %v5516 = vsel %vm1356, %v5490, %v5492
  %v5517 = vsel %vm1356, %v5492, %v5494
  %v5518 = vsel %vm1356, %v5496, %v5498
  %v5519 = vsel %vm1356, %v5498, %v5500
  %v5520 = vsel %vm1356, %v5500, %v5502
  %v5521 = vsel %vm1356, %v5502, %v5504
  %v5522 = vsel %vm1356, %v5504, %v5506
  %v5523 = vsel %vm1356, %v5506, %v5508
  %v5524 = vsel %vm1356, %v5508, %v5510
  %5539 = vst [vmem:[#allocation4 + $0x9a0] sm:$0xff] %v5511
  %5540 = vst [vmem:[#allocation4 + $0x9a8] sm:$0xff] %v5512
  %5541 = vst [vmem:[#allocation4 + $0x9b0] sm:$0xff] %v5513
  %5542 = vst [vmem:[#allocation4 + $0x9b8] sm:$0xff] %v5514
  %5543 = vst [vmem:[#allocation4 + $0x9c0] sm:$0xff] %v5515
  %5544 = vst [vmem:[#allocation4 + $0x9c8] sm:$0xff] %v5516
  %5545 = vst [vmem:[#allocation4 + $0x9d0] sm:$0xff] %v5517
  %5546 = vst [vmem:[#allocation4 + $0x9d8] sm:$0xff] %v5518
  %5547 = vst [vmem:[#allocation4 + $0x9e0] sm:$0xff] %v5519
  %5548 = vst [vmem:[#allocation4 + $0x9e8] sm:$0xff] %v5520
  %5549 = vst [vmem:[#allocation4 + $0x9f0] sm:$0xff] %v5521
  %5550 = vst [vmem:[#allocation4 + $0x9f8] sm:$0xff] %v5522
  %5551 = vst [vmem:[#allocation4 + $0xa00] sm:$0xff] %v5523
  %5552 = vst [vmem:[#allocation4 + $0xa08] sm:$0xff] %v5524
  %v5553 = vld [vmem:[#allocation3] sm:$0xff]
  %v5554 = vld [vmem:[#allocation3 + $0x8] sm:$0xff]
  %v5555 = vld [vmem:[#allocation3 + $0x10] sm:$0xff]
  %v5556 = vld [vmem:[#allocation3 + $0x18] sm:$0xff]
  %v5557 = vld [vmem:[#allocation3 + $0x20] sm:$0xff]
  %v5558 = vld [vmem:[#allocation3 + $0x28] sm:$0xff]
  %v5559 = vld [vmem:[#allocation3 + $0x30] sm:$0xff]
  %v5560 = vld [vmem:[#allocation3 + $0x38] sm:$0xff]
  %v5561 = vld [vmem:[#allocation3 + $0x48] sm:$0xff]
  %v5562 = vld [vmem:[#allocation3 + $0x50] sm:$0xff]
  %v5563 = vld [vmem:[#allocation3 + $0x58] sm:$0xff]
  %v5564 = vld [vmem:[#allocation3 + $0x60] sm:$0xff]
  %v5565 = vld [vmem:[#allocation3 + $0x68] sm:$0xff]
  %v5566 = vld [vmem:[#allocation3 + $0x70] sm:$0xff]
  %v5567 = vld [vmem:[#allocation3 + $0x78] sm:$0xff]
  %v5568 = vld [vmem:[#allocation3 + $0x80] sm:$0xff]
  %5585 = vrot.lane.b32.xlu0 %v5553, 21
  %v5586 = vpop.permute.xlu0 %5585
  %5587 = vrot.lane.b32.xlu0 %v5554, 21
  %v5588 = vpop.permute.xlu0 %5587
  %5589 = vrot.lane.b32.xlu0 %v5555, 21
  %v5590 = vpop.permute.xlu0 %5589
  %5591 = vrot.lane.b32.xlu0 %v5556, 21
  %v5592 = vpop.permute.xlu0 %5591
  %5593 = vrot.lane.b32.xlu0 %v5557, 21
  %v5594 = vpop.permute.xlu0 %5593
  %5595 = vrot.lane.b32.xlu0 %v5558, 21
  %v5596 = vpop.permute.xlu0 %5595
  %5597 = vrot.lane.b32.xlu0 %v5559, 21
  %v5598 = vpop.permute.xlu0 %5597
  %5599 = vrot.lane.b32.xlu0 %v5560, 21
  %v5600 = vpop.permute.xlu0 %5599
  %5601 = vrot.lane.b32.xlu0 %v5561, 21
  %v5602 = vpop.permute.xlu0 %5601
  %5603 = vrot.lane.b32.xlu0 %v5562, 21
  %v5604 = vpop.permute.xlu0 %5603
  %5605 = vrot.lane.b32.xlu0 %v5563, 21
  %v5606 = vpop.permute.xlu0 %5605
  %5607 = vrot.lane.b32.xlu0 %v5564, 21
  %v5608 = vpop.permute.xlu0 %5607
  %5609 = vrot.lane.b32.xlu0 %v5565, 21
  %v5610 = vpop.permute.xlu0 %5609
  %5611 = vrot.lane.b32.xlu0 %v5566, 21
  %v5612 = vpop.permute.xlu0 %5611
  %5613 = vrot.lane.b32.xlu0 %v5567, 21
  %v5614 = vpop.permute.xlu0 %5613
  %5615 = vrot.lane.b32.xlu0 %v5568, 21
  %v5616 = vpop.permute.xlu0 %5615
  %v5617 = vsel %vm1417, %v5586, %v5588
  %v5618 = vsel %vm1417, %v5588, %v5590
  %v5619 = vsel %vm1417, %v5590, %v5592
  %v5620 = vsel %vm1417, %v5592, %v5594
  %v5621 = vsel %vm1417, %v5594, %v5596
  %v5622 = vsel %vm1417, %v5596, %v5598
  %v5623 = vsel %vm1417, %v5598, %v5600
  %v5624 = vsel %vm1417, %v5602, %v5604
  %v5625 = vsel %vm1417, %v5604, %v5606
  %v5626 = vsel %vm1417, %v5606, %v5608
  %v5627 = vsel %vm1417, %v5608, %v5610
  %v5628 = vsel %vm1417, %v5610, %v5612
  %v5629 = vsel %vm1417, %v5612, %v5614
  %v5630 = vsel %vm1417, %v5614, %v5616
  %5645 = vst [vmem:[#allocation4 + $0xa10] sm:$0xff] %v5617
  %5646 = vst [vmem:[#allocation4 + $0xa18] sm:$0xff] %v5618
  %5647 = vst [vmem:[#allocation4 + $0xa20] sm:$0xff] %v5619
  %5648 = vst [vmem:[#allocation4 + $0xa28] sm:$0xff] %v5620
  %5649 = vst [vmem:[#allocation4 + $0xa30] sm:$0xff] %v5621
  %5650 = vst [vmem:[#allocation4 + $0xa38] sm:$0xff] %v5622
  %5651 = vst [vmem:[#allocation4 + $0xa40] sm:$0xff] %v5623
  %5652 = vst [vmem:[#allocation4 + $0xa48] sm:$0xff] %v5624
  %5653 = vst [vmem:[#allocation4 + $0xa50] sm:$0xff] %v5625
  %5654 = vst [vmem:[#allocation4 + $0xa58] sm:$0xff] %v5626
  %5655 = vst [vmem:[#allocation4 + $0xa60] sm:$0xff] %v5627
  %5656 = vst [vmem:[#allocation4 + $0xa68] sm:$0xff] %v5628
  %5657 = vst [vmem:[#allocation4 + $0xa70] sm:$0xff] %v5629
  %5658 = vst [vmem:[#allocation4 + $0xa78] sm:$0xff] %v5630
  %v5659 = vld [vmem:[#allocation3 + $0x8] sm:$0xff]
  %v5660 = vld [vmem:[#allocation3 + $0x10] sm:$0xff]
  %v5661 = vld [vmem:[#allocation3 + $0x18] sm:$0xff]
  %v5662 = vld [vmem:[#allocation3 + $0x20] sm:$0xff]
  %v5663 = vld [vmem:[#allocation3 + $0x28] sm:$0xff]
  %v5664 = vld [vmem:[#allocation3 + $0x30] sm:$0xff]
  %v5665 = vld [vmem:[#allocation3 + $0x38] sm:$0xff]
  %v5666 = vld [vmem:[#allocation3 + $0x40] sm:$0xff]
  %v5667 = vld [vmem:[#allocation3 + $0x50] sm:$0xff]
  %v5668 = vld [vmem:[#allocation3 + $0x58] sm:$0xff]
  %v5669 = vld [vmem:[#allocation3 + $0x60] sm:$0xff]
  %v5670 = vld [vmem:[#allocation3 + $0x68] sm:$0xff]
  %v5671 = vld [vmem:[#allocation3 + $0x70] sm:$0xff]
  %v5672 = vld [vmem:[#allocation3 + $0x78] sm:$0xff]
  %v5673 = vld [vmem:[#allocation3 + $0x80] sm:$0xff]
  %v5674 = vld [vmem:[#allocation3 + $0x88] sm:$0xff]
  %5691 = vrot.lane.b32.xlu0 %v5659, 120
  %v5692 = vpop.permute.xlu0 %5691
  %5693 = vrot.lane.b32.xlu0 %v5660, 120
  %v5694 = vpop.permute.xlu0 %5693
  %5695 = vrot.lane.b32.xlu0 %v5661, 120
  %v5696 = vpop.permute.xlu0 %5695
  %5697 = vrot.lane.b32.xlu0 %v5662, 120
  %v5698 = vpop.permute.xlu0 %5697
  %5699 = vrot.lane.b32.xlu0 %v5663, 120
  %v5700 = vpop.permute.xlu0 %5699
  %5701 = vrot.lane.b32.xlu0 %v5664, 120
  %v5702 = vpop.permute.xlu0 %5701
  %5703 = vrot.lane.b32.xlu0 %v5665, 120
  %v5704 = vpop.permute.xlu0 %5703
  %5705 = vrot.lane.b32.xlu0 %v5666, 120
  %v5706 = vpop.permute.xlu0 %5705
  %5707 = vrot.lane.b32.xlu0 %v5667, 120
  %v5708 = vpop.permute.xlu0 %5707
  %5709 = vrot.lane.b32.xlu0 %v5668, 120
  %v5710 = vpop.permute.xlu0 %5709
  %5711 = vrot.lane.b32.xlu0 %v5669, 120
  %v5712 = vpop.permute.xlu0 %5711
  %5713 = vrot.lane.b32.xlu0 %v5670, 120
  %v5714 = vpop.permute.xlu0 %5713
  %5715 = vrot.lane.b32.xlu0 %v5671, 120
  %v5716 = vpop.permute.xlu0 %5715
  %5717 = vrot.lane.b32.xlu0 %v5672, 120
  %v5718 = vpop.permute.xlu0 %5717
  %5719 = vrot.lane.b32.xlu0 %v5673, 120
  %v5720 = vpop.permute.xlu0 %5719
  %5721 = vrot.lane.b32.xlu0 %v5674, 120
  %v5722 = vpop.permute.xlu0 %5721
  %v5723 = vsel %vm1478, %v5692, %v5694
  %v5724 = vsel %vm1478, %v5694, %v5696
  %v5725 = vsel %vm1478, %v5696, %v5698
  %v5726 = vsel %vm1478, %v5698, %v5700
  %v5727 = vsel %vm1478, %v5700, %v5702
  %v5728 = vsel %vm1478, %v5702, %v5704
  %v5729 = vsel %vm1478, %v5704, %v5706
  %v5730 = vsel %vm1478, %v5708, %v5710
  %v5731 = vsel %vm1478, %v5710, %v5712
  %v5732 = vsel %vm1478, %v5712, %v5714
  %v5733 = vsel %vm1478, %v5714, %v5716
  %v5734 = vsel %vm1478, %v5716, %v5718
  %v5735 = vsel %vm1478, %v5718, %v5720
  %v5736 = vsel %vm1478, %v5720, %v5722
  %5751 = vst [vmem:[#allocation4 + $0xa80] sm:$0xff] %v5723
  %5752 = vst [vmem:[#allocation4 + $0xa88] sm:$0xff] %v5724
  %5753 = vst [vmem:[#allocation4 + $0xa90] sm:$0xff] %v5725
  %5754 = vst [vmem:[#allocation4 + $0xa98] sm:$0xff] %v5726
  %5755 = vst [vmem:[#allocation4 + $0xaa0] sm:$0xff] %v5727
  %5756 = vst [vmem:[#allocation4 + $0xaa8] sm:$0xff] %v5728
  %5757 = vst [vmem:[#allocation4 + $0xab0] sm:$0xff] %v5729
  %5758 = vst [vmem:[#allocation4 + $0xab8] sm:$0xff] %v5730
  %5759 = vst [vmem:[#allocation4 + $0xac0] sm:$0xff] %v5731
  %5760 = vst [vmem:[#allocation4 + $0xac8] sm:$0xff] %v5732
  %5761 = vst [vmem:[#allocation4 + $0xad0] sm:$0xff] %v5733
  %5762 = vst [vmem:[#allocation4 + $0xad8] sm:$0xff] %v5734
  %5763 = vst [vmem:[#allocation4 + $0xae0] sm:$0xff] %v5735
  %5764 = vst [vmem:[#allocation4 + $0xae8] sm:$0xff] %v5736
  %v5765 = vld [vmem:[#allocation3 + $0x8] sm:$0xff]
  %v5766 = vld [vmem:[#allocation3 + $0x10] sm:$0xff]
  %v5767 = vld [vmem:[#allocation3 + $0x18] sm:$0xff]
  %v5768 = vld [vmem:[#allocation3 + $0x20] sm:$0xff]
  %v5769 = vld [vmem:[#allocation3 + $0x28] sm:$0xff]
  %v5770 = vld [vmem:[#allocation3 + $0x30] sm:$0xff]
  %v5771 = vld [vmem:[#allocation3 + $0x38] sm:$0xff]
  %v5772 = vld [vmem:[#allocation3 + $0x40] sm:$0xff]
  %v5773 = vld [vmem:[#allocation3 + $0x50] sm:$0xff]
  %v5774 = vld [vmem:[#allocation3 + $0x58] sm:$0xff]
  %v5775 = vld [vmem:[#allocation3 + $0x60] sm:$0xff]
  %v5776 = vld [vmem:[#allocation3 + $0x68] sm:$0xff]
  %v5777 = vld [vmem:[#allocation3 + $0x70] sm:$0xff]
  %v5778 = vld [vmem:[#allocation3 + $0x78] sm:$0xff]
  %v5779 = vld [vmem:[#allocation3 + $0x80] sm:$0xff]
  %v5780 = vld [vmem:[#allocation3 + $0x88] sm:$0xff]
  %5797 = vrot.lane.b32.xlu0 %v5765, 119
  %v5798 = vpop.permute.xlu0 %5797
  %5799 = vrot.lane.b32.xlu0 %v5766, 119
  %v5800 = vpop.permute.xlu0 %5799
  %5801 = vrot.lane.b32.xlu0 %v5767, 119
  %v5802 = vpop.permute.xlu0 %5801
  %5803 = vrot.lane.b32.xlu0 %v5768, 119
  %v5804 = vpop.permute.xlu0 %5803
  %5805 = vrot.lane.b32.xlu0 %v5769, 119
  %v5806 = vpop.permute.xlu0 %5805
  %5807 = vrot.lane.b32.xlu0 %v5770, 119
  %v5808 = vpop.permute.xlu0 %5807
  %5809 = vrot.lane.b32.xlu0 %v5771, 119
  %v5810 = vpop.permute.xlu0 %5809
  %5811 = vrot.lane.b32.xlu0 %v5772, 119
  %v5812 = vpop.permute.xlu0 %5811
  %5813 = vrot.lane.b32.xlu0 %v5773, 119
  %v5814 = vpop.permute.xlu0 %5813
  %5815 = vrot.lane.b32.xlu0 %v5774, 119
  %v5816 = vpop.permute.xlu0 %5815
  %5817 = vrot.lane.b32.xlu0 %v5775, 119
  %v5818 = vpop.permute.xlu0 %5817
  %5819 = vrot.lane.b32.xlu0 %v5776, 119
  %v5820 = vpop.permute.xlu0 %5819
  %5821 = vrot.lane.b32.xlu0 %v5777, 119
  %v5822 = vpop.permute.xlu0 %5821
  %5823 = vrot.lane.b32.xlu0 %v5778, 119
  %v5824 = vpop.permute.xlu0 %5823
  %5825 = vrot.lane.b32.xlu0 %v5779, 119
  %v5826 = vpop.permute.xlu0 %5825
  %5827 = vrot.lane.b32.xlu0 %v5780, 119
  %v5828 = vpop.permute.xlu0 %5827
  %v5829 = vsel %vm1539, %v5798, %v5800
  %v5830 = vsel %vm1539, %v5800, %v5802
  %v5831 = vsel %vm1539, %v5802, %v5804
  %v5832 = vsel %vm1539, %v5804, %v5806
  %v5833 = vsel %vm1539, %v5806, %v5808
  %v5834 = vsel %vm1539, %v5808, %v5810
  %v5835 = vsel %vm1539, %v5810, %v5812
  %v5836 = vsel %vm1539, %v5814, %v5816
  %v5837 = vsel %vm1539, %v5816, %v5818
  %v5838 = vsel %vm1539, %v5818, %v5820
  %v5839 = vsel %vm1539, %v5820, %v5822
  %v5840 = vsel %vm1539, %v5822, %v5824
  %v5841 = vsel %vm1539, %v5824, %v5826
  %v5842 = vsel %vm1539, %v5826, %v5828
  %5857 = vst [vmem:[#allocation4 + $0xaf0] sm:$0xff] %v5829
  %5858 = vst [vmem:[#allocation4 + $0xaf8] sm:$0xff] %v5830
  %5859 = vst [vmem:[#allocation4 + $0xb00] sm:$0xff] %v5831
  %5860 = vst [vmem:[#allocation4 + $0xb08] sm:$0xff] %v5832
  %5861 = vst [vmem:[#allocation4 + $0xb10] sm:$0xff] %v5833
  %5862 = vst [vmem:[#allocation4 + $0xb18] sm:$0xff] %v5834
  %5863 = vst [vmem:[#allocation4 + $0xb20] sm:$0xff] %v5835
  %5864 = vst [vmem:[#allocation4 + $0xb28] sm:$0xff] %v5836
  %5865 = vst [vmem:[#allocation4 + $0xb30] sm:$0xff] %v5837
  %5866 = vst [vmem:[#allocation4 + $0xb38] sm:$0xff] %v5838
  %5867 = vst [vmem:[#allocation4 + $0xb40] sm:$0xff] %v5839
  %5868 = vst [vmem:[#allocation4 + $0xb48] sm:$0xff] %v5840
  %5869 = vst [vmem:[#allocation4 + $0xb50] sm:$0xff] %v5841
  %5870 = vst [vmem:[#allocation4 + $0xb58] sm:$0xff] %v5842
  %v5871 = vld [vmem:[#allocation3 + $0x8] sm:$0xff]
  %v5872 = vld [vmem:[#allocation3 + $0x10] sm:$0xff]
  %v5873 = vld [vmem:[#allocation3 + $0x18] sm:$0xff]
  %v5874 = vld [vmem:[#allocation3 + $0x20] sm:$0xff]
  %v5875 = vld [vmem:[#allocation3 + $0x28] sm:$0xff]
  %v5876 = vld [vmem:[#allocation3 + $0x30] sm:$0xff]
  %v5877 = vld [vmem:[#allocation3 + $0x38] sm:$0xff]
  %v5878 = vld [vmem:[#allocation3 + $0x40] sm:$0xff]
  %v5879 = vld [vmem:[#allocation3 + $0x50] sm:$0xff]
  %v5880 = vld [vmem:[#allocation3 + $0x58] sm:$0xff]
  %v5881 = vld [vmem:[#allocation3 + $0x60] sm:$0xff]
  %v5882 = vld [vmem:[#allocation3 + $0x68] sm:$0xff]
  %v5883 = vld [vmem:[#allocation3 + $0x70] sm:$0xff]
  %v5884 = vld [vmem:[#allocation3 + $0x78] sm:$0xff]
  %v5885 = vld [vmem:[#allocation3 + $0x80] sm:$0xff]
  %v5886 = vld [vmem:[#allocation3 + $0x88] sm:$0xff]
  %5903 = vrot.lane.b32.xlu0 %v5871, 118
  %v5904 = vpop.permute.xlu0 %5903
  %5905 = vrot.lane.b32.xlu0 %v5872, 118
  %v5906 = vpop.permute.xlu0 %5905
  %5907 = vrot.lane.b32.xlu0 %v5873, 118
  %v5908 = vpop.permute.xlu0 %5907
  %5909 = vrot.lane.b32.xlu0 %v5874, 118
  %v5910 = vpop.permute.xlu0 %5909
  %5911 = vrot.lane.b32.xlu0 %v5875, 118
  %v5912 = vpop.permute.xlu0 %5911
  %5913 = vrot.lane.b32.xlu0 %v5876, 118
  %v5914 = vpop.permute.xlu0 %5913
  %5915 = vrot.lane.b32.xlu0 %v5877, 118
  %v5916 = vpop.permute.xlu0 %5915
  %5917 = vrot.lane.b32.xlu0 %v5878, 118
  %v5918 = vpop.permute.xlu0 %5917
  %5919 = vrot.lane.b32.xlu0 %v5879, 118
  %v5920 = vpop.permute.xlu0 %5919
  %5921 = vrot.lane.b32.xlu0 %v5880, 118
  %v5922 = vpop.permute.xlu0 %5921
  %5923 = vrot.lane.b32.xlu0 %v5881, 118
  %v5924 = vpop.permute.xlu0 %5923
  %5925 = vrot.lane.b32.xlu0 %v5882, 118
  %v5926 = vpop.permute.xlu0 %5925
  %5927 = vrot.lane.b32.xlu0 %v5883, 118
  %v5928 = vpop.permute.xlu0 %5927
  %5929 = vrot.lane.b32.xlu0 %v5884, 118
  %v5930 = vpop.permute.xlu0 %5929
  %5931 = vrot.lane.b32.xlu0 %v5885, 118
  %v5932 = vpop.permute.xlu0 %5931
  %5933 = vrot.lane.b32.xlu0 %v5886, 118
  %v5934 = vpop.permute.xlu0 %5933
  %v5935 = vsel %vm1600, %v5904, %v5906
  %v5936 = vsel %vm1600, %v5906, %v5908
  %v5937 = vsel %vm1600, %v5908, %v5910
  %v5938 = vsel %vm1600, %v5910, %v5912
  %v5939 = vsel %vm1600, %v5912, %v5914
  %v5940 = vsel %vm1600, %v5914, %v5916
  %v5941 = vsel %vm1600, %v5916, %v5918
  %v5942 = vsel %vm1600, %v5920, %v5922
  %v5943 = vsel %vm1600, %v5922, %v5924
  %v5944 = vsel %vm1600, %v5924, %v5926
  %v5945 = vsel %vm1600, %v5926, %v5928
  %v5946 = vsel %vm1600, %v5928, %v5930
  %v5947 = vsel %vm1600, %v5930, %v5932
  %v5948 = vsel %vm1600, %v5932, %v5934
  %5963 = vst [vmem:[#allocation4 + $0xb60] sm:$0xff] %v5935
  %5964 = vst [vmem:[#allocation4 + $0xb68] sm:$0xff] %v5936
  %5965 = vst [vmem:[#allocation4 + $0xb70] sm:$0xff] %v5937
  %5966 = vst [vmem:[#allocation4 + $0xb78] sm:$0xff] %v5938
  %5967 = vst [vmem:[#allocation4 + $0xb80] sm:$0xff] %v5939
  %5968 = vst [vmem:[#allocation4 + $0xb88] sm:$0xff] %v5940
  %5969 = vst [vmem:[#allocation4 + $0xb90] sm:$0xff] %v5941
  %5970 = vst [vmem:[#allocation4 + $0xb98] sm:$0xff] %v5942
  %5971 = vst [vmem:[#allocation4 + $0xba0] sm:$0xff] %v5943
  %5972 = vst [vmem:[#allocation4 + $0xba8] sm:$0xff] %v5944
  %5973 = vst [vmem:[#allocation4 + $0xbb0] sm:$0xff] %v5945
  %5974 = vst [vmem:[#allocation4 + $0xbb8] sm:$0xff] %v5946
  %5975 = vst [vmem:[#allocation4 + $0xbc0] sm:$0xff] %v5947
  %5976 = vst [vmem:[#allocation4 + $0xbc8] sm:$0xff] %v5948
  %v5977 = vld [vmem:[#allocation3 + $0x8] sm:$0xff]
  %v5978 = vld [vmem:[#allocation3 + $0x10] sm:$0xff]
  %v5979 = vld [vmem:[#allocation3 + $0x18] sm:$0xff]
  %v5980 = vld [vmem:[#allocation3 + $0x20] sm:$0xff]
  %v5981 = vld [vmem:[#allocation3 + $0x28] sm:$0xff]
  %v5982 = vld [vmem:[#allocation3 + $0x30] sm:$0xff]
  %v5983 = vld [vmem:[#allocation3 + $0x38] sm:$0xff]
  %v5984 = vld [vmem:[#allocation3 + $0x40] sm:$0xff]
  %v5985 = vld [vmem:[#allocation3 + $0x50] sm:$0xff]
  %v5986 = vld [vmem:[#allocation3 + $0x58] sm:$0xff]
  %v5987 = vld [vmem:[#allocation3 + $0x60] sm:$0xff]
  %v5988 = vld [vmem:[#allocation3 + $0x68] sm:$0xff]
  %v5989 = vld [vmem:[#allocation3 + $0x70] sm:$0xff]
  %v5990 = vld [vmem:[#allocation3 + $0x78] sm:$0xff]
  %v5991 = vld [vmem:[#allocation3 + $0x80] sm:$0xff]
  %v5992 = vld [vmem:[#allocation3 + $0x88] sm:$0xff]
  %6009 = vrot.lane.b32.xlu0 %v5977, 117
  %v6010 = vpop.permute.xlu0 %6009
  %6011 = vrot.lane.b32.xlu0 %v5978, 117
  %v6012 = vpop.permute.xlu0 %6011
  %6013 = vrot.lane.b32.xlu0 %v5979, 117
  %v6014 = vpop.permute.xlu0 %6013
  %6015 = vrot.lane.b32.xlu0 %v5980, 117
  %v6016 = vpop.permute.xlu0 %6015
  %6017 = vrot.lane.b32.xlu0 %v5981, 117
  %v6018 = vpop.permute.xlu0 %6017
  %6019 = vrot.lane.b32.xlu0 %v5982, 117
  %v6020 = vpop.permute.xlu0 %6019
  %6021 = vrot.lane.b32.xlu0 %v5983, 117
  %v6022 = vpop.permute.xlu0 %6021
  %6023 = vrot.lane.b32.xlu0 %v5984, 117
  %v6024 = vpop.permute.xlu0 %6023
  %6025 = vrot.lane.b32.xlu0 %v5985, 117
  %v6026 = vpop.permute.xlu0 %6025
  %6027 = vrot.lane.b32.xlu0 %v5986, 117
  %v6028 = vpop.permute.xlu0 %6027
  %6029 = vrot.lane.b32.xlu0 %v5987, 117
  %v6030 = vpop.permute.xlu0 %6029
  %6031 = vrot.lane.b32.xlu0 %v5988, 117
  %v6032 = vpop.permute.xlu0 %6031
  %6033 = vrot.lane.b32.xlu0 %v5989, 117
  %v6034 = vpop.permute.xlu0 %6033
  %6035 = vrot.lane.b32.xlu0 %v5990, 117
  %v6036 = vpop.permute.xlu0 %6035
  %6037 = vrot.lane.b32.xlu0 %v5991, 117
  %v6038 = vpop.permute.xlu0 %6037
  %6039 = vrot.lane.b32.xlu0 %v5992, 117
  %v6040 = vpop.permute.xlu0 %6039
  %v6041 = vsel %vm1661, %v6010, %v6012
  %v6042 = vsel %vm1661, %v6012, %v6014
  %v6043 = vsel %vm1661, %v6014, %v6016
  %v6044 = vsel %vm1661, %v6016, %v6018
  %v6045 = vsel %vm1661, %v6018, %v6020
  %v6046 = vsel %vm1661, %v6020, %v6022
  %v6047 = vsel %vm1661, %v6022, %v6024
  %v6048 = vsel %vm1661, %v6026, %v6028
  %v6049 = vsel %vm1661, %v6028, %v6030
  %v6050 = vsel %vm1661, %v6030, %v6032
  %v6051 = vsel %vm1661, %v6032, %v6034
  %v6052 = vsel %vm1661, %v6034, %v6036
  %v6053 = vsel %vm1661, %v6036, %v6038
  %v6054 = vsel %vm1661, %v6038, %v6040
  %6069 = vst [vmem:[#allocation4 + $0xbd0] sm:$0xff] %v6041
  %6070 = vst [vmem:[#allocation4 + $0xbd8] sm:$0xff] %v6042
  %6071 = vst [vmem:[#allocation4 + $0xbe0] sm:$0xff] %v6043
  %6072 = vst [vmem:[#allocation4 + $0xbe8] sm:$0xff] %v6044
  %6073 = vst [vmem:[#allocation4 + $0xbf0] sm:$0xff] %v6045
  %6074 = vst [vmem:[#allocation4 + $0xbf8] sm:$0xff] %v6046
  %6075 = vst [vmem:[#allocation4 + $0xc00] sm:$0xff] %v6047
  %6076 = vst [vmem:[#allocation4 + $0xc08] sm:$0xff] %v6048
  %6077 = vst [vmem:[#allocation4 + $0xc10] sm:$0xff] %v6049
  %6078 = vst [vmem:[#allocation4 + $0xc18] sm:$0xff] %v6050
  %6079 = vst [vmem:[#allocation4 + $0xc20] sm:$0xff] %v6051
  %6080 = vst [vmem:[#allocation4 + $0xc28] sm:$0xff] %v6052
  %6081 = vst [vmem:[#allocation4 + $0xc30] sm:$0xff] %v6053
  %6082 = vst [vmem:[#allocation4 + $0xc38] sm:$0xff] %v6054
  %v6083 = vld [vmem:[#allocation3 + $0x8] sm:$0xff]
  %v6084 = vld [vmem:[#allocation3 + $0x10] sm:$0xff]
  %v6085 = vld [vmem:[#allocation3 + $0x18] sm:$0xff]
  %v6086 = vld [vmem:[#allocation3 + $0x20] sm:$0xff]
  %v6087 = vld [vmem:[#allocation3 + $0x28] sm:$0xff]
  %v6088 = vld [vmem:[#allocation3 + $0x30] sm:$0xff]
  %v6089 = vld [vmem:[#allocation3 + $0x38] sm:$0xff]
  %v6090 = vld [vmem:[#allocation3 + $0x40] sm:$0xff]
  %v6091 = vld [vmem:[#allocation3 + $0x50] sm:$0xff]
  %v6092 = vld [vmem:[#allocation3 + $0x58] sm:$0xff]
  %v6093 = vld [vmem:[#allocation3 + $0x60] sm:$0xff]
  %v6094 = vld [vmem:[#allocation3 + $0x68] sm:$0xff]
  %v6095 = vld [vmem:[#allocation3 + $0x70] sm:$0xff]
  %v6096 = vld [vmem:[#allocation3 + $0x78] sm:$0xff]
  %v6097 = vld [vmem:[#allocation3 + $0x80] sm:$0xff]
  %v6098 = vld [vmem:[#allocation3 + $0x88] sm:$0xff]
  %6115 = vrot.lane.b32.xlu0 %v6083, 116
  %v6116 = vpop.permute.xlu0 %6115
  %6117 = vrot.lane.b32.xlu0 %v6084, 116
  %v6118 = vpop.permute.xlu0 %6117
  %6119 = vrot.lane.b32.xlu0 %v6085, 116
  %v6120 = vpop.permute.xlu0 %6119
  %6121 = vrot.lane.b32.xlu0 %v6086, 116
  %v6122 = vpop.permute.xlu0 %6121
  %6123 = vrot.lane.b32.xlu0 %v6087, 116
  %v6124 = vpop.permute.xlu0 %6123
  %6125 = vrot.lane.b32.xlu0 %v6088, 116
  %v6126 = vpop.permute.xlu0 %6125
  %6127 = vrot.lane.b32.xlu0 %v6089, 116
  %v6128 = vpop.permute.xlu0 %6127
  %6129 = vrot.lane.b32.xlu0 %v6090, 116
  %v6130 = vpop.permute.xlu0 %6129
  %6131 = vrot.lane.b32.xlu0 %v6091, 116
  %v6132 = vpop.permute.xlu0 %6131
  %6133 = vrot.lane.b32.xlu0 %v6092, 116
  %v6134 = vpop.permute.xlu0 %6133
  %6135 = vrot.lane.b32.xlu0 %v6093, 116
  %v6136 = vpop.permute.xlu0 %6135
  %6137 = vrot.lane.b32.xlu0 %v6094, 116
  %v6138 = vpop.permute.xlu0 %6137
  %6139 = vrot.lane.b32.xlu0 %v6095, 116
  %v6140 = vpop.permute.xlu0 %6139
  %6141 = vrot.lane.b32.xlu0 %v6096, 116
  %v6142 = vpop.permute.xlu0 %6141
  %6143 = vrot.lane.b32.xlu0 %v6097, 116
  %v6144 = vpop.permute.xlu0 %6143
  %6145 = vrot.lane.b32.xlu0 %v6098, 116
  %v6146 = vpop.permute.xlu0 %6145
  %v6147 = vsel %vm1722, %v6116, %v6118
  %v6148 = vsel %vm1722, %v6118, %v6120
  %v6149 = vsel %vm1722, %v6120, %v6122
  %v6150 = vsel %vm1722, %v6122, %v6124
  %v6151 = vsel %vm1722, %v6124, %v6126
  %v6152 = vsel %vm1722, %v6126, %v6128
  %v6153 = vsel %vm1722, %v6128, %v6130
  %v6154 = vsel %vm1722, %v6132, %v6134
  %v6155 = vsel %vm1722, %v6134, %v6136
  %v6156 = vsel %vm1722, %v6136, %v6138
  %v6157 = vsel %vm1722, %v6138, %v6140
  %v6158 = vsel %vm1722, %v6140, %v6142
  %v6159 = vsel %vm1722, %v6142, %v6144
  %v6160 = vsel %vm1722, %v6144, %v6146
  %6175 = vst [vmem:[#allocation4 + $0xc40] sm:$0xff] %v6147
  %6176 = vst [vmem:[#allocation4 + $0xc48] sm:$0xff] %v6148
  %6177 = vst [vmem:[#allocation4 + $0xc50] sm:$0xff] %v6149
  %6178 = vst [vmem:[#allocation4 + $0xc58] sm:$0xff] %v6150
  %6179 = vst [vmem:[#allocation4 + $0xc60] sm:$0xff] %v6151
  %6180 = vst [vmem:[#allocation4 + $0xc68] sm:$0xff] %v6152
  %6181 = vst [vmem:[#allocation4 + $0xc70] sm:$0xff] %v6153
  %6182 = vst [vmem:[#allocation4 + $0xc78] sm:$0xff] %v6154
  %6183 = vst [vmem:[#allocation4 + $0xc80] sm:$0xff] %v6155
  %6184 = vst [vmem:[#allocation4 + $0xc88] sm:$0xff] %v6156
  %6185 = vst [vmem:[#allocation4 + $0xc90] sm:$0xff] %v6157
  %6186 = vst [vmem:[#allocation4 + $0xc98] sm:$0xff] %v6158
  %6187 = vst [vmem:[#allocation4 + $0xca0] sm:$0xff] %v6159
  %6188 = vst [vmem:[#allocation4 + $0xca8] sm:$0xff] %v6160
  %v6189 = vld [vmem:[#allocation3 + $0x8] sm:$0xff]
  %v6190 = vld [vmem:[#allocation3 + $0x10] sm:$0xff]
  %v6191 = vld [vmem:[#allocation3 + $0x18] sm:$0xff]
  %v6192 = vld [vmem:[#allocation3 + $0x20] sm:$0xff]
  %v6193 = vld [vmem:[#allocation3 + $0x28] sm:$0xff]
  %v6194 = vld [vmem:[#allocation3 + $0x30] sm:$0xff]
  %v6195 = vld [vmem:[#allocation3 + $0x38] sm:$0xff]
  %v6196 = vld [vmem:[#allocation3 + $0x40] sm:$0xff]
  %v6197 = vld [vmem:[#allocation3 + $0x50] sm:$0xff]
  %v6198 = vld [vmem:[#allocation3 + $0x58] sm:$0xff]
  %v6199 = vld [vmem:[#allocation3 + $0x60] sm:$0xff]
  %v6200 = vld [vmem:[#allocation3 + $0x68] sm:$0xff]
  %v6201 = vld [vmem:[#allocation3 + $0x70] sm:$0xff]
  %v6202 = vld [vmem:[#allocation3 + $0x78] sm:$0xff]
  %v6203 = vld [vmem:[#allocation3 + $0x80] sm:$0xff]
  %v6204 = vld [vmem:[#allocation3 + $0x88] sm:$0xff]
  %6221 = vrot.lane.b32.xlu0 %v6189, 115
  %v6222 = vpop.permute.xlu0 %6221
  %6223 = vrot.lane.b32.xlu0 %v6190, 115
  %v6224 = vpop.permute.xlu0 %6223
  %6225 = vrot.lane.b32.xlu0 %v6191, 115
  %v6226 = vpop.permute.xlu0 %6225
  %6227 = vrot.lane.b32.xlu0 %v6192, 115
  %v6228 = vpop.permute.xlu0 %6227
  %6229 = vrot.lane.b32.xlu0 %v6193, 115
  %v6230 = vpop.permute.xlu0 %6229
  %6231 = vrot.lane.b32.xlu0 %v6194, 115
  %v6232 = vpop.permute.xlu0 %6231
  %6233 = vrot.lane.b32.xlu0 %v6195, 115
  %v6234 = vpop.permute.xlu0 %6233
  %6235 = vrot.lane.b32.xlu0 %v6196, 115
  %v6236 = vpop.permute.xlu0 %6235
  %6237 = vrot.lane.b32.xlu0 %v6197, 115
  %v6238 = vpop.permute.xlu0 %6237
  %6239 = vrot.lane.b32.xlu0 %v6198, 115
  %v6240 = vpop.permute.xlu0 %6239
  %6241 = vrot.lane.b32.xlu0 %v6199, 115
  %v6242 = vpop.permute.xlu0 %6241
  %6243 = vrot.lane.b32.xlu0 %v6200, 115
  %v6244 = vpop.permute.xlu0 %6243
  %6245 = vrot.lane.b32.xlu0 %v6201, 115
  %v6246 = vpop.permute.xlu0 %6245
  %6247 = vrot.lane.b32.xlu0 %v6202, 115
  %v6248 = vpop.permute.xlu0 %6247
  %6249 = vrot.lane.b32.xlu0 %v6203, 115
  %v6250 = vpop.permute.xlu0 %6249
  %6251 = vrot.lane.b32.xlu0 %v6204, 115
  %v6252 = vpop.permute.xlu0 %6251
  %v6253 = vsel %vm1783, %v6222, %v6224
  %v6254 = vsel %vm1783, %v6224, %v6226
  %v6255 = vsel %vm1783, %v6226, %v6228
  %v6256 = vsel %vm1783, %v6228, %v6230
  %v6257 = vsel %vm1783, %v6230, %v6232
  %v6258 = vsel %vm1783, %v6232, %v6234
  %v6259 = vsel %vm1783, %v6234, %v6236
  %v6260 = vsel %vm1783, %v6238, %v6240
  %v6261 = vsel %vm1783, %v6240, %v6242
  %v6262 = vsel %vm1783, %v6242, %v6244
  %v6263 = vsel %vm1783, %v6244, %v6246
  %v6264 = vsel %vm1783, %v6246, %v6248
  %v6265 = vsel %vm1783, %v6248, %v6250
  %v6266 = vsel %vm1783, %v6250, %v6252
  %6281 = vst [vmem:[#allocation4 + $0xcb0] sm:$0xff] %v6253
  %6282 = vst [vmem:[#allocation4 + $0xcb8] sm:$0xff] %v6254
  %6283 = vst [vmem:[#allocation4 + $0xcc0] sm:$0xff] %v6255
  %6284 = vst [vmem:[#allocation4 + $0xcc8] sm:$0xff] %v6256
  %6285 = vst [vmem:[#allocation4 + $0xcd0] sm:$0xff] %v6257
  %6286 = vst [vmem:[#allocation4 + $0xcd8] sm:$0xff] %v6258
  %6287 = vst [vmem:[#allocation4 + $0xce0] sm:$0xff] %v6259
  %6288 = vst [vmem:[#allocation4 + $0xce8] sm:$0xff] %v6260
  %6289 = vst [vmem:[#allocation4 + $0xcf0] sm:$0xff] %v6261
  %6290 = vst [vmem:[#allocation4 + $0xcf8] sm:$0xff] %v6262
  %6291 = vst [vmem:[#allocation4 + $0xd00] sm:$0xff] %v6263
  %6292 = vst [vmem:[#allocation4 + $0xd08] sm:$0xff] %v6264
  %6293 = vst [vmem:[#allocation4 + $0xd10] sm:$0xff] %v6265
  %6294 = vst [vmem:[#allocation4 + $0xd18] sm:$0xff] %v6266
  %v6295 = vld [vmem:[#allocation3 + $0x8] sm:$0xff]
  %v6296 = vld [vmem:[#allocation3 + $0x10] sm:$0xff]
  %v6297 = vld [vmem:[#allocation3 + $0x18] sm:$0xff]
  %v6298 = vld [vmem:[#allocation3 + $0x20] sm:$0xff]
  %v6299 = vld [vmem:[#allocation3 + $0x28] sm:$0xff]
  %v6300 = vld [vmem:[#allocation3 + $0x30] sm:$0xff]
  %v6301 = vld [vmem:[#allocation3 + $0x38] sm:$0xff]
  %v6302 = vld [vmem:[#allocation3 + $0x40] sm:$0xff]
  %v6303 = vld [vmem:[#allocation3 + $0x50] sm:$0xff]
  %v6304 = vld [vmem:[#allocation3 + $0x58] sm:$0xff]
  %v6305 = vld [vmem:[#allocation3 + $0x60] sm:$0xff]
  %v6306 = vld [vmem:[#allocation3 + $0x68] sm:$0xff]
  %v6307 = vld [vmem:[#allocation3 + $0x70] sm:$0xff]
  %v6308 = vld [vmem:[#allocation3 + $0x78] sm:$0xff]
  %v6309 = vld [vmem:[#allocation3 + $0x80] sm:$0xff]
  %v6310 = vld [vmem:[#allocation3 + $0x88] sm:$0xff]
  %6327 = vrot.lane.b32.xlu0 %v6295, 86
  %v6328 = vpop.permute.xlu0 %6327
  %6329 = vrot.lane.b32.xlu0 %v6296, 86
  %v6330 = vpop.permute.xlu0 %6329
  %6331 = vrot.lane.b32.xlu0 %v6297, 86
  %v6332 = vpop.permute.xlu0 %6331
  %6333 = vrot.lane.b32.xlu0 %v6298, 86
  %v6334 = vpop.permute.xlu0 %6333
  %6335 = vrot.lane.b32.xlu0 %v6299, 86
  %v6336 = vpop.permute.xlu0 %6335
  %6337 = vrot.lane.b32.xlu0 %v6300, 86
  %v6338 = vpop.permute.xlu0 %6337
  %6339 = vrot.lane.b32.xlu0 %v6301, 86
  %v6340 = vpop.permute.xlu0 %6339
  %6341 = vrot.lane.b32.xlu0 %v6302, 86
  %v6342 = vpop.permute.xlu0 %6341
  %6343 = vrot.lane.b32.xlu0 %v6303, 86
  %v6344 = vpop.permute.xlu0 %6343
  %6345 = vrot.lane.b32.xlu0 %v6304, 86
  %v6346 = vpop.permute.xlu0 %6345
  %6347 = vrot.lane.b32.xlu0 %v6305, 86
  %v6348 = vpop.permute.xlu0 %6347
  %6349 = vrot.lane.b32.xlu0 %v6306, 86
  %v6350 = vpop.permute.xlu0 %6349
  %6351 = vrot.lane.b32.xlu0 %v6307, 86
  %v6352 = vpop.permute.xlu0 %6351
  %6353 = vrot.lane.b32.xlu0 %v6308, 86
  %v6354 = vpop.permute.xlu0 %6353
  %6355 = vrot.lane.b32.xlu0 %v6309, 86
  %v6356 = vpop.permute.xlu0 %6355
  %6357 = vrot.lane.b32.xlu0 %v6310, 86
  %v6358 = vpop.permute.xlu0 %6357
  %v6359 = vsel %vm1844, %v6328, %v6330
  %v6360 = vsel %vm1844, %v6330, %v6332
  %v6361 = vsel %vm1844, %v6332, %v6334
  %v6362 = vsel %vm1844, %v6334, %v6336
  %v6363 = vsel %vm1844, %v6336, %v6338
  %v6364 = vsel %vm1844, %v6338, %v6340
  %v6365 = vsel %vm1844, %v6340, %v6342
  %v6366 = vsel %vm1844, %v6344, %v6346
  %v6367 = vsel %vm1844, %v6346, %v6348
  %v6368 = vsel %vm1844, %v6348, %v6350
  %v6369 = vsel %vm1844, %v6350, %v6352
  %v6370 = vsel %vm1844, %v6352, %v6354
  %v6371 = vsel %vm1844, %v6354, %v6356
  %v6372 = vsel %vm1844, %v6356, %v6358
  %6387 = vst [vmem:[#allocation4 + $0xd20] sm:$0xff] %v6359
  %6388 = vst [vmem:[#allocation4 + $0xd28] sm:$0xff] %v6360
  %6389 = vst [vmem:[#allocation4 + $0xd30] sm:$0xff] %v6361
  %6390 = vst [vmem:[#allocation4 + $0xd38] sm:$0xff] %v6362
  %6391 = vst [vmem:[#allocation4 + $0xd40] sm:$0xff] %v6363
  %6392 = vst [vmem:[#allocation4 + $0xd48] sm:$0xff] %v6364
  %6393 = vst [vmem:[#allocation4 + $0xd50] sm:$0xff] %v6365
  %6394 = vst [vmem:[#allocation4 + $0xd58] sm:$0xff] %v6366
  %6395 = vst [vmem:[#allocation4 + $0xd60] sm:$0xff] %v6367
  %6396 = vst [vmem:[#allocation4 + $0xd68] sm:$0xff] %v6368
  %6397 = vst [vmem:[#allocation4 + $0xd70] sm:$0xff] %v6369
  %6398 = vst [vmem:[#allocation4 + $0xd78] sm:$0xff] %v6370
  %6399 = vst [vmem:[#allocation4 + $0xd80] sm:$0xff] %v6371
  %6400 = vst [vmem:[#allocation4 + $0xd88] sm:$0xff] %v6372
  %v6401 = vld [vmem:[#allocation3 + $0x8] sm:$0xff]
  %v6402 = vld [vmem:[#allocation3 + $0x10] sm:$0xff]
  %v6403 = vld [vmem:[#allocation3 + $0x18] sm:$0xff]
  %v6404 = vld [vmem:[#allocation3 + $0x20] sm:$0xff]
  %v6405 = vld [vmem:[#allocation3 + $0x28] sm:$0xff]
  %v6406 = vld [vmem:[#allocation3 + $0x30] sm:$0xff]
  %v6407 = vld [vmem:[#allocation3 + $0x38] sm:$0xff]
  %v6408 = vld [vmem:[#allocation3 + $0x40] sm:$0xff]
  %v6409 = vld [vmem:[#allocation3 + $0x50] sm:$0xff]
  %v6410 = vld [vmem:[#allocation3 + $0x58] sm:$0xff]
  %v6411 = vld [vmem:[#allocation3 + $0x60] sm:$0xff]
  %v6412 = vld [vmem:[#allocation3 + $0x68] sm:$0xff]
  %v6413 = vld [vmem:[#allocation3 + $0x70] sm:$0xff]
  %v6414 = vld [vmem:[#allocation3 + $0x78] sm:$0xff]
  %v6415 = vld [vmem:[#allocation3 + $0x80] sm:$0xff]
  %v6416 = vld [vmem:[#allocation3 + $0x88] sm:$0xff]
  %6433 = vrot.lane.b32.xlu0 %v6401, 85
  %v6434 = vpop.permute.xlu0 %6433
  %6435 = vrot.lane.b32.xlu0 %v6402, 85
  %v6436 = vpop.permute.xlu0 %6435
  %6437 = vrot.lane.b32.xlu0 %v6403, 85
  %v6438 = vpop.permute.xlu0 %6437
  %6439 = vrot.lane.b32.xlu0 %v6404, 85
  %v6440 = vpop.permute.xlu0 %6439
  %6441 = vrot.lane.b32.xlu0 %v6405, 85
  %v6442 = vpop.permute.xlu0 %6441
  %6443 = vrot.lane.b32.xlu0 %v6406, 85
  %v6444 = vpop.permute.xlu0 %6443
  %6445 = vrot.lane.b32.xlu0 %v6407, 85
  %v6446 = vpop.permute.xlu0 %6445
  %6447 = vrot.lane.b32.xlu0 %v6408, 85
  %v6448 = vpop.permute.xlu0 %6447
  %6449 = vrot.lane.b32.xlu0 %v6409, 85
  %v6450 = vpop.permute.xlu0 %6449
  %6451 = vrot.lane.b32.xlu0 %v6410, 85
  %v6452 = vpop.permute.xlu0 %6451
  %6453 = vrot.lane.b32.xlu0 %v6411, 85
  %v6454 = vpop.permute.xlu0 %6453
  %6455 = vrot.lane.b32.xlu0 %v6412, 85
  %v6456 = vpop.permute.xlu0 %6455
  %6457 = vrot.lane.b32.xlu0 %v6413, 85
  %v6458 = vpop.permute.xlu0 %6457
  %6459 = vrot.lane.b32.xlu0 %v6414, 85
  %v6460 = vpop.permute.xlu0 %6459
  %6461 = vrot.lane.b32.xlu0 %v6415, 85
  %v6462 = vpop.permute.xlu0 %6461
  %6463 = vrot.lane.b32.xlu0 %v6416, 85
  %v6464 = vpop.permute.xlu0 %6463
  %v6465 = vsel %vm1905, %v6434, %v6436
  %v6466 = vsel %vm1905, %v6436, %v6438
  %v6467 = vsel %vm1905, %v6438, %v6440
  %v6468 = vsel %vm1905, %v6440, %v6442
  %v6469 = vsel %vm1905, %v6442, %v6444
  %v6470 = vsel %vm1905, %v6444, %v6446
  %v6471 = vsel %vm1905, %v6446, %v6448
  %v6472 = vsel %vm1905, %v6450, %v6452
  %v6473 = vsel %vm1905, %v6452, %v6454
  %v6474 = vsel %vm1905, %v6454, %v6456
  %v6475 = vsel %vm1905, %v6456, %v6458
  %v6476 = vsel %vm1905, %v6458, %v6460
  %v6477 = vsel %vm1905, %v6460, %v6462
  %v6478 = vsel %vm1905, %v6462, %v6464
  %6493 = vst [vmem:[#allocation4 + $0xd90] sm:$0xff] %v6465
  %6494 = vst [vmem:[#allocation4 + $0xd98] sm:$0xff] %v6466
  %6495 = vst [vmem:[#allocation4 + $0xda0] sm:$0xff] %v6467
  %6496 = vst [vmem:[#allocation4 + $0xda8] sm:$0xff] %v6468
  %6497 = vst [vmem:[#allocation4 + $0xdb0] sm:$0xff] %v6469
  %6498 = vst [vmem:[#allocation4 + $0xdb8] sm:$0xff] %v6470
  %6499 = vst [vmem:[#allocation4 + $0xdc0] sm:$0xff] %v6471
  %6500 = vst [vmem:[#allocation4 + $0xdc8] sm:$0xff] %v6472
  %6501 = vst [vmem:[#allocation4 + $0xdd0] sm:$0xff] %v6473
  %6502 = vst [vmem:[#allocation4 + $0xdd8] sm:$0xff] %v6474
  %6503 = vst [vmem:[#allocation4 + $0xde0] sm:$0xff] %v6475
  %6504 = vst [vmem:[#allocation4 + $0xde8] sm:$0xff] %v6476
  %6505 = vst [vmem:[#allocation4 + $0xdf0] sm:$0xff] %v6477
  %6506 = vst [vmem:[#allocation4 + $0xdf8] sm:$0xff] %v6478
  %v6507 = vld [vmem:[#allocation3 + $0x8] sm:$0xff]
  %v6508 = vld [vmem:[#allocation3 + $0x10] sm:$0xff]
  %v6509 = vld [vmem:[#allocation3 + $0x18] sm:$0xff]
  %v6510 = vld [vmem:[#allocation3 + $0x20] sm:$0xff]
  %v6511 = vld [vmem:[#allocation3 + $0x28] sm:$0xff]
  %v6512 = vld [vmem:[#allocation3 + $0x30] sm:$0xff]
  %v6513 = vld [vmem:[#allocation3 + $0x38] sm:$0xff]
  %v6514 = vld [vmem:[#allocation3 + $0x40] sm:$0xff]
  %v6515 = vld [vmem:[#allocation3 + $0x50] sm:$0xff]
  %v6516 = vld [vmem:[#allocation3 + $0x58] sm:$0xff]
  %v6517 = vld [vmem:[#allocation3 + $0x60] sm:$0xff]
  %v6518 = vld [vmem:[#allocation3 + $0x68] sm:$0xff]
  %v6519 = vld [vmem:[#allocation3 + $0x70] sm:$0xff]
  %v6520 = vld [vmem:[#allocation3 + $0x78] sm:$0xff]
  %v6521 = vld [vmem:[#allocation3 + $0x80] sm:$0xff]
  %v6522 = vld [vmem:[#allocation3 + $0x88] sm:$0xff]
  %6539 = vrot.lane.b32.xlu0 %v6507, 84
  %v6540 = vpop.permute.xlu0 %6539
  %6541 = vrot.lane.b32.xlu0 %v6508, 84
  %v6542 = vpop.permute.xlu0 %6541
  %6543 = vrot.lane.b32.xlu0 %v6509, 84
  %v6544 = vpop.permute.xlu0 %6543
  %6545 = vrot.lane.b32.xlu0 %v6510, 84
  %v6546 = vpop.permute.xlu0 %6545
  %6547 = vrot.lane.b32.xlu0 %v6511, 84
  %v6548 = vpop.permute.xlu0 %6547
  %6549 = vrot.lane.b32.xlu0 %v6512, 84
  %v6550 = vpop.permute.xlu0 %6549
  %6551 = vrot.lane.b32.xlu0 %v6513, 84
  %v6552 = vpop.permute.xlu0 %6551
  %6553 = vrot.lane.b32.xlu0 %v6514, 84
  %v6554 = vpop.permute.xlu0 %6553
  %6555 = vrot.lane.b32.xlu0 %v6515, 84
  %v6556 = vpop.permute.xlu0 %6555
  %6557 = vrot.lane.b32.xlu0 %v6516, 84
  %v6558 = vpop.permute.xlu0 %6557
  %6559 = vrot.lane.b32.xlu0 %v6517, 84
  %v6560 = vpop.permute.xlu0 %6559
  %6561 = vrot.lane.b32.xlu0 %v6518, 84
  %v6562 = vpop.permute.xlu0 %6561
  %6563 = vrot.lane.b32.xlu0 %v6519, 84
  %v6564 = vpop.permute.xlu0 %6563
  %6565 = vrot.lane.b32.xlu0 %v6520, 84
  %v6566 = vpop.permute.xlu0 %6565
  %6567 = vrot.lane.b32.xlu0 %v6521, 84
  %v6568 = vpop.permute.xlu0 %6567
  %6569 = vrot.lane.b32.xlu0 %v6522, 84
  %v6570 = vpop.permute.xlu0 %6569
  %v6571 = vsel %vm1966, %v6540, %v6542
  %v6572 = vsel %vm1966, %v6542, %v6544
  %v6573 = vsel %vm1966, %v6544, %v6546
  %v6574 = vsel %vm1966, %v6546, %v6548
  %v6575 = vsel %vm1966, %v6548, %v6550
  %v6576 = vsel %vm1966, %v6550, %v6552
  %v6577 = vsel %vm1966, %v6552, %v6554
  %v6578 = vsel %vm1966, %v6556, %v6558
  %v6579 = vsel %vm1966, %v6558, %v6560
  %v6580 = vsel %vm1966, %v6560, %v6562
  %v6581 = vsel %vm1966, %v6562, %v6564
  %v6582 = vsel %vm1966, %v6564, %v6566
  %v6583 = vsel %vm1966, %v6566, %v6568
  %v6584 = vsel %vm1966, %v6568, %v6570
  %6599 = vst [vmem:[#allocation4 + $0xe00] sm:$0xff] %v6571
  %6600 = vst [vmem:[#allocation4 + $0xe08] sm:$0xff] %v6572
  %6601 = vst [vmem:[#allocation4 + $0xe10] sm:$0xff] %v6573
  %6602 = vst [vmem:[#allocation4 + $0xe18] sm:$0xff] %v6574
  %6603 = vst [vmem:[#allocation4 + $0xe20] sm:$0xff] %v6575
  %6604 = vst [vmem:[#allocation4 + $0xe28] sm:$0xff] %v6576
  %6605 = vst [vmem:[#allocation4 + $0xe30] sm:$0xff] %v6577
  %6606 = vst [vmem:[#allocation4 + $0xe38] sm:$0xff] %v6578
  %6607 = vst [vmem:[#allocation4 + $0xe40] sm:$0xff] %v6579
  %6608 = vst [vmem:[#allocation4 + $0xe48] sm:$0xff] %v6580
  %6609 = vst [vmem:[#allocation4 + $0xe50] sm:$0xff] %v6581
  %6610 = vst [vmem:[#allocation4 + $0xe58] sm:$0xff] %v6582
  %6611 = vst [vmem:[#allocation4 + $0xe60] sm:$0xff] %v6583
  %6612 = vst [vmem:[#allocation4 + $0xe68] sm:$0xff] %v6584
  %v6613 = vld [vmem:[#allocation3 + $0x8] sm:$0xff]
  %v6614 = vld [vmem:[#allocation3 + $0x10] sm:$0xff]
  %v6615 = vld [vmem:[#allocation3 + $0x18] sm:$0xff]
  %v6616 = vld [vmem:[#allocation3 + $0x20] sm:$0xff]
  %v6617 = vld [vmem:[#allocation3 + $0x28] sm:$0xff]
  %v6618 = vld [vmem:[#allocation3 + $0x30] sm:$0xff]
  %v6619 = vld [vmem:[#allocation3 + $0x38] sm:$0xff]
  %v6620 = vld [vmem:[#allocation3 + $0x40] sm:$0xff]
  %v6621 = vld [vmem:[#allocation3 + $0x50] sm:$0xff]
  %v6622 = vld [vmem:[#allocation3 + $0x58] sm:$0xff]
  %v6623 = vld [vmem:[#allocation3 + $0x60] sm:$0xff]
  %v6624 = vld [vmem:[#allocation3 + $0x68] sm:$0xff]
  %v6625 = vld [vmem:[#allocation3 + $0x70] sm:$0xff]
  %v6626 = vld [vmem:[#allocation3 + $0x78] sm:$0xff]
  %v6627 = vld [vmem:[#allocation3 + $0x80] sm:$0xff]
  %v6628 = vld [vmem:[#allocation3 + $0x88] sm:$0xff]
  %6645 = vrot.lane.b32.xlu0 %v6613, 83
  %v6646 = vpop.permute.xlu0 %6645
  %6647 = vrot.lane.b32.xlu0 %v6614, 83
  %v6648 = vpop.permute.xlu0 %6647
  %6649 = vrot.lane.b32.xlu0 %v6615, 83
  %v6650 = vpop.permute.xlu0 %6649
  %6651 = vrot.lane.b32.xlu0 %v6616, 83
  %v6652 = vpop.permute.xlu0 %6651
  %6653 = vrot.lane.b32.xlu0 %v6617, 83
  %v6654 = vpop.permute.xlu0 %6653
  %6655 = vrot.lane.b32.xlu0 %v6618, 83
  %v6656 = vpop.permute.xlu0 %6655
  %6657 = vrot.lane.b32.xlu0 %v6619, 83
  %v6658 = vpop.permute.xlu0 %6657
  %6659 = vrot.lane.b32.xlu0 %v6620, 83
  %v6660 = vpop.permute.xlu0 %6659
  %6661 = vrot.lane.b32.xlu0 %v6621, 83
  %v6662 = vpop.permute.xlu0 %6661
  %6663 = vrot.lane.b32.xlu0 %v6622, 83
  %v6664 = vpop.permute.xlu0 %6663
  %6665 = vrot.lane.b32.xlu0 %v6623, 83
  %v6666 = vpop.permute.xlu0 %6665
  %6667 = vrot.lane.b32.xlu0 %v6624, 83
  %v6668 = vpop.permute.xlu0 %6667
  %6669 = vrot.lane.b32.xlu0 %v6625, 83
  %v6670 = vpop.permute.xlu0 %6669
  %6671 = vrot.lane.b32.xlu0 %v6626, 83
  %v6672 = vpop.permute.xlu0 %6671
  %6673 = vrot.lane.b32.xlu0 %v6627, 83
  %v6674 = vpop.permute.xlu0 %6673
  %6675 = vrot.lane.b32.xlu0 %v6628, 83
  %v6676 = vpop.permute.xlu0 %6675
  %v6677 = vsel %vm2027, %v6646, %v6648
  %v6678 = vsel %vm2027, %v6648, %v6650
  %v6679 = vsel %vm2027, %v6650, %v6652
  %v6680 = vsel %vm2027, %v6652, %v6654
  %v6681 = vsel %vm2027, %v6654, %v6656
  %v6682 = vsel %vm2027, %v6656, %v6658
  %v6683 = vsel %vm2027, %v6658, %v6660
  %v6684 = vsel %vm2027, %v6662, %v6664
  %v6685 = vsel %vm2027, %v6664, %v6666
  %v6686 = vsel %vm2027, %v6666, %v6668
  %v6687 = vsel %vm2027, %v6668, %v6670
  %v6688 = vsel %vm2027, %v6670, %v6672
  %v6689 = vsel %vm2027, %v6672, %v6674
  %v6690 = vsel %vm2027, %v6674, %v6676
  %6705 = vst [vmem:[#allocation4 + $0xe70] sm:$0xff] %v6677
  %6706 = vst [vmem:[#allocation4 + $0xe78] sm:$0xff] %v6678
  %6707 = vst [vmem:[#allocation4 + $0xe80] sm:$0xff] %v6679
  %6708 = vst [vmem:[#allocation4 + $0xe88] sm:$0xff] %v6680
  %6709 = vst [vmem:[#allocation4 + $0xe90] sm:$0xff] %v6681
  %6710 = vst [vmem:[#allocation4 + $0xe98] sm:$0xff] %v6682
  %6711 = vst [vmem:[#allocation4 + $0xea0] sm:$0xff] %v6683
  %6712 = vst [vmem:[#allocation4 + $0xea8] sm:$0xff] %v6684
  %6713 = vst [vmem:[#allocation4 + $0xeb0] sm:$0xff] %v6685
  %6714 = vst [vmem:[#allocation4 + $0xeb8] sm:$0xff] %v6686
  %6715 = vst [vmem:[#allocation4 + $0xec0] sm:$0xff] %v6687
  %6716 = vst [vmem:[#allocation4 + $0xec8] sm:$0xff] %v6688
  %6717 = vst [vmem:[#allocation4 + $0xed0] sm:$0xff] %v6689
  %6718 = vst [vmem:[#allocation4 + $0xed8] sm:$0xff] %v6690
  %v6719 = vld [vmem:[#allocation3 + $0x8] sm:$0xff]
  %v6720 = vld [vmem:[#allocation3 + $0x10] sm:$0xff]
  %v6721 = vld [vmem:[#allocation3 + $0x18] sm:$0xff]
  %v6722 = vld [vmem:[#allocation3 + $0x20] sm:$0xff]
  %v6723 = vld [vmem:[#allocation3 + $0x28] sm:$0xff]
  %v6724 = vld [vmem:[#allocation3 + $0x30] sm:$0xff]
  %v6725 = vld [vmem:[#allocation3 + $0x38] sm:$0xff]
  %v6726 = vld [vmem:[#allocation3 + $0x40] sm:$0xff]
  %v6727 = vld [vmem:[#allocation3 + $0x50] sm:$0xff]
  %v6728 = vld [vmem:[#allocation3 + $0x58] sm:$0xff]
  %v6729 = vld [vmem:[#allocation3 + $0x60] sm:$0xff]
  %v6730 = vld [vmem:[#allocation3 + $0x68] sm:$0xff]
  %v6731 = vld [vmem:[#allocation3 + $0x70] sm:$0xff]
  %v6732 = vld [vmem:[#allocation3 + $0x78] sm:$0xff]
  %v6733 = vld [vmem:[#allocation3 + $0x80] sm:$0xff]
  %v6734 = vld [vmem:[#allocation3 + $0x88] sm:$0xff]
  %6751 = vrot.lane.b32.xlu0 %v6719, 82
  %v6752 = vpop.permute.xlu0 %6751
  %6753 = vrot.lane.b32.xlu0 %v6720, 82
  %v6754 = vpop.permute.xlu0 %6753
  %6755 = vrot.lane.b32.xlu0 %v6721, 82
  %v6756 = vpop.permute.xlu0 %6755
  %6757 = vrot.lane.b32.xlu0 %v6722, 82
  %v6758 = vpop.permute.xlu0 %6757
  %6759 = vrot.lane.b32.xlu0 %v6723, 82
  %v6760 = vpop.permute.xlu0 %6759
  %6761 = vrot.lane.b32.xlu0 %v6724, 82
  %v6762 = vpop.permute.xlu0 %6761
  %6763 = vrot.lane.b32.xlu0 %v6725, 82
  %v6764 = vpop.permute.xlu0 %6763
  %6765 = vrot.lane.b32.xlu0 %v6726, 82
  %v6766 = vpop.permute.xlu0 %6765
  %6767 = vrot.lane.b32.xlu0 %v6727, 82
  %v6768 = vpop.permute.xlu0 %6767
  %6769 = vrot.lane.b32.xlu0 %v6728, 82
  %v6770 = vpop.permute.xlu0 %6769
  %6771 = vrot.lane.b32.xlu0 %v6729, 82
  %v6772 = vpop.permute.xlu0 %6771
  %6773 = vrot.lane.b32.xlu0 %v6730, 82
  %v6774 = vpop.permute.xlu0 %6773
  %6775 = vrot.lane.b32.xlu0 %v6731, 82
  %v6776 = vpop.permute.xlu0 %6775
  %6777 = vrot.lane.b32.xlu0 %v6732, 82
  %v6778 = vpop.permute.xlu0 %6777
  %6779 = vrot.lane.b32.xlu0 %v6733, 82
  %v6780 = vpop.permute.xlu0 %6779
  %6781 = vrot.lane.b32.xlu0 %v6734, 82
  %v6782 = vpop.permute.xlu0 %6781
  %v6783 = vsel %vm2088, %v6752, %v6754
  %v6784 = vsel %vm2088, %v6754, %v6756
  %v6785 = vsel %vm2088, %v6756, %v6758
  %v6786 = vsel %vm2088, %v6758, %v6760
  %v6787 = vsel %vm2088, %v6760, %v6762
  %v6788 = vsel %vm2088, %v6762, %v6764
  %v6789 = vsel %vm2088, %v6764, %v6766
  %v6790 = vsel %vm2088, %v6768, %v6770
  %v6791 = vsel %vm2088, %v6770, %v6772
  %v6792 = vsel %vm2088, %v6772, %v6774
  %v6793 = vsel %vm2088, %v6774, %v6776
  %v6794 = vsel %vm2088, %v6776, %v6778
  %v6795 = vsel %vm2088, %v6778, %v6780
  %v6796 = vsel %vm2088, %v6780, %v6782
  %6811 = vst [vmem:[#allocation4 + $0xee0] sm:$0xff] %v6783
  %6812 = vst [vmem:[#allocation4 + $0xee8] sm:$0xff] %v6784
  %6813 = vst [vmem:[#allocation4 + $0xef0] sm:$0xff] %v6785
  %6814 = vst [vmem:[#allocation4 + $0xef8] sm:$0xff] %v6786
  %6815 = vst [vmem:[#allocation4 + $0xf00] sm:$0xff] %v6787
  %6816 = vst [vmem:[#allocation4 + $0xf08] sm:$0xff] %v6788
  %6817 = vst [vmem:[#allocation4 + $0xf10] sm:$0xff] %v6789
  %6818 = vst [vmem:[#allocation4 + $0xf18] sm:$0xff] %v6790
  %6819 = vst [vmem:[#allocation4 + $0xf20] sm:$0xff] %v6791
  %6820 = vst [vmem:[#allocation4 + $0xf28] sm:$0xff] %v6792
  %6821 = vst [vmem:[#allocation4 + $0xf30] sm:$0xff] %v6793
  %6822 = vst [vmem:[#allocation4 + $0xf38] sm:$0xff] %v6794
  %6823 = vst [vmem:[#allocation4 + $0xf40] sm:$0xff] %v6795
  %6824 = vst [vmem:[#allocation4 + $0xf48] sm:$0xff] %v6796
  %v6825 = vld [vmem:[#allocation3 + $0x8] sm:$0xff]
  %v6826 = vld [vmem:[#allocation3 + $0x10] sm:$0xff]
  %v6827 = vld [vmem:[#allocation3 + $0x18] sm:$0xff]
  %v6828 = vld [vmem:[#allocation3 + $0x20] sm:$0xff]
  %v6829 = vld [vmem:[#allocation3 + $0x28] sm:$0xff]
  %v6830 = vld [vmem:[#allocation3 + $0x30] sm:$0xff]
  %v6831 = vld [vmem:[#allocation3 + $0x38] sm:$0xff]
  %v6832 = vld [vmem:[#allocation3 + $0x40] sm:$0xff]
  %v6833 = vld [vmem:[#allocation3 + $0x50] sm:$0xff]
  %v6834 = vld [vmem:[#allocation3 + $0x58] sm:$0xff]
  %v6835 = vld [vmem:[#allocation3 + $0x60] sm:$0xff]
  %v6836 = vld [vmem:[#allocation3 + $0x68] sm:$0xff]
  %v6837 = vld [vmem:[#allocation3 + $0x70] sm:$0xff]
  %v6838 = vld [vmem:[#allocation3 + $0x78] sm:$0xff]
  %v6839 = vld [vmem:[#allocation3 + $0x80] sm:$0xff]
  %v6840 = vld [vmem:[#allocation3 + $0x88] sm:$0xff]
  %6857 = vrot.lane.b32.xlu0 %v6825, 81
  %v6858 = vpop.permute.xlu0 %6857
  %6859 = vrot.lane.b32.xlu0 %v6826, 81
  %v6860 = vpop.permute.xlu0 %6859
  %6861 = vrot.lane.b32.xlu0 %v6827, 81
  %v6862 = vpop.permute.xlu0 %6861
  %6863 = vrot.lane.b32.xlu0 %v6828, 81
  %v6864 = vpop.permute.xlu0 %6863
  %6865 = vrot.lane.b32.xlu0 %v6829, 81
  %v6866 = vpop.permute.xlu0 %6865
  %6867 = vrot.lane.b32.xlu0 %v6830, 81
  %v6868 = vpop.permute.xlu0 %6867
  %6869 = vrot.lane.b32.xlu0 %v6831, 81
  %v6870 = vpop.permute.xlu0 %6869
  %6871 = vrot.lane.b32.xlu0 %v6832, 81
  %v6872 = vpop.permute.xlu0 %6871
  %6873 = vrot.lane.b32.xlu0 %v6833, 81
  %v6874 = vpop.permute.xlu0 %6873
  %6875 = vrot.lane.b32.xlu0 %v6834, 81
  %v6876 = vpop.permute.xlu0 %6875
  %6877 = vrot.lane.b32.xlu0 %v6835, 81
  %v6878 = vpop.permute.xlu0 %6877
  %6879 = vrot.lane.b32.xlu0 %v6836, 81
  %v6880 = vpop.permute.xlu0 %6879
  %6881 = vrot.lane.b32.xlu0 %v6837, 81
  %v6882 = vpop.permute.xlu0 %6881
  %6883 = vrot.lane.b32.xlu0 %v6838, 81
  %v6884 = vpop.permute.xlu0 %6883
  %6885 = vrot.lane.b32.xlu0 %v6839, 81
  %v6886 = vpop.permute.xlu0 %6885
  %6887 = vrot.lane.b32.xlu0 %v6840, 81
  %v6888 = vpop.permute.xlu0 %6887
  %v6889 = vsel %vm2149, %v6858, %v6860
  %v6890 = vsel %vm2149, %v6860, %v6862
  %v6891 = vsel %vm2149, %v6862, %v6864
  %v6892 = vsel %vm2149, %v6864, %v6866
  %v6893 = vsel %vm2149, %v6866, %v6868
  %v6894 = vsel %vm2149, %v6868, %v6870
  %v6895 = vsel %vm2149, %v6870, %v6872
  %v6896 = vsel %vm2149, %v6874, %v6876
  %v6897 = vsel %vm2149, %v6876, %v6878
  %v6898 = vsel %vm2149, %v6878, %v6880
  %v6899 = vsel %vm2149, %v6880, %v6882
  %v6900 = vsel %vm2149, %v6882, %v6884
  %v6901 = vsel %vm2149, %v6884, %v6886
  %v6902 = vsel %vm2149, %v6886, %v6888
  %6917 = vst [vmem:[#allocation4 + $0xf50] sm:$0xff] %v6889
  %6918 = vst [vmem:[#allocation4 + $0xf58] sm:$0xff] %v6890
  %6919 = vst [vmem:[#allocation4 + $0xf60] sm:$0xff] %v6891
  %6920 = vst [vmem:[#allocation4 + $0xf68] sm:$0xff] %v6892
  %6921 = vst [vmem:[#allocation4 + $0xf70] sm:$0xff] %v6893
  %6922 = vst [vmem:[#allocation4 + $0xf78] sm:$0xff] %v6894
  %6923 = vst [vmem:[#allocation4 + $0xf80] sm:$0xff] %v6895
  %6924 = vst [vmem:[#allocation4 + $0xf88] sm:$0xff] %v6896
  %6925 = vst [vmem:[#allocation4 + $0xf90] sm:$0xff] %v6897
  %6926 = vst [vmem:[#allocation4 + $0xf98] sm:$0xff] %v6898
  %6927 = vst [vmem:[#allocation4 + $0xfa0] sm:$0xff] %v6899
  %6928 = vst [vmem:[#allocation4 + $0xfa8] sm:$0xff] %v6900
  %6929 = vst [vmem:[#allocation4 + $0xfb0] sm:$0xff] %v6901
  %6930 = vst [vmem:[#allocation4 + $0xfb8] sm:$0xff] %v6902
  %v6931 = vld [vmem:[%s3] sm:$0xff]
  %v6932 = vld [vmem:[%s3 + $0x8] sm:$0xff]
  %v6933 = vld [vmem:[%s3 + $0x10] sm:$0xff]
  %v6934 = vld [vmem:[%s3 + $0x18] sm:$0xff]
  %v6935 = vld [vmem:[%s3 + $0x20] sm:$0xff]
  %v6936 = vld [vmem:[%s3 + $0x28] sm:$0xff]
  %v6937 = vld [vmem:[%s3 + $0x30] sm:$0xff]
  %v6938 = vld [vmem:[%s3 + $0x38] sm:$0xff]
  %v6939 = vld [vmem:[%s3 + $0x40] sm:$0xff]
  %v6940 = vld [vmem:[%s3 + $0x48] sm:$0xff]
  %v6941 = vld [vmem:[#allocation4] sm:$0xff]
  %v6942 = vld [vmem:[#allocation4 + $0x8] sm:$0xff]
  %v6943 = vld [vmem:[#allocation4 + $0x10] sm:$0xff]
  %v6944 = vld [vmem:[#allocation4 + $0x18] sm:$0xff]
  %v6945 = vld [vmem:[#allocation4 + $0x20] sm:$0xff]
  %v6946 = vld [vmem:[#allocation4 + $0x28] sm:$0xff]
  %v6947 = vld [vmem:[#allocation4 + $0x30] sm:$0xff]
  %v6948 = vld [vmem:[#allocation4 + $0x38] sm:$0xff]
  %v6949 = vld [vmem:[#allocation4 + $0x40] sm:$0xff]
  %v6950 = vld [vmem:[#allocation4 + $0x48] sm:$0xff]
  %v6951 = vld [vmem:[#allocation4 + $0x50] sm:$0xff]
  %v6952 = vld [vmem:[#allocation4 + $0x58] sm:$0xff]
  %v6953 = vld [vmem:[#allocation4 + $0x60] sm:$0xff]
  %v6954 = vld [vmem:[#allocation4 + $0x68] sm:$0xff]
  %v6955 = vld [vmem:[#allocation4 + $0x70] sm:$0xff]
  %v6956 = vld [vmem:[#allocation4 + $0x78] sm:$0xff]
  %v6957 = vld [vmem:[#allocation4 + $0x80] sm:$0xff]
  %v6958 = vld [vmem:[#allocation4 + $0x88] sm:$0xff]
  %v6959 = vld [vmem:[#allocation4 + $0x90] sm:$0xff]
  %v6960 = vld [vmem:[#allocation4 + $0x98] sm:$0xff]
  %v6961 = vld [vmem:[#allocation4 + $0xa0] sm:$0xff]
  %v6962 = vld [vmem:[#allocation4 + $0xa8] sm:$0xff]
  %v6963 = vld [vmem:[#allocation4 + $0xb0] sm:$0xff]
  %v6964 = vld [vmem:[#allocation4 + $0xb8] sm:$0xff]
  %v6965 = vld [vmem:[#allocation4 + $0xc0] sm:$0xff]
  %v6966 = vld [vmem:[#allocation4 + $0xc8] sm:$0xff]
  %v6967 = vld [vmem:[#allocation4 + $0xd0] sm:$0xff]
  %v6968 = vld [vmem:[#allocation4 + $0xd8] sm:$0xff]
  %v6969 = vld [vmem:[#allocation4 + $0xe0] sm:$0xff]
  %v6970 = vld [vmem:[#allocation4 + $0xe8] sm:$0xff]
  %v6971 = vld [vmem:[#allocation4 + $0xf0] sm:$0xff]
  %v6972 = vld [vmem:[#allocation4 + $0xf8] sm:$0xff]
  %v6973 = vld [vmem:[#allocation4 + $0x100] sm:$0xff]
  %v6974 = vld [vmem:[#allocation4 + $0x108] sm:$0xff]
  %v6975 = vld [vmem:[#allocation4 + $0x110] sm:$0xff]
  %v6976 = vld [vmem:[#allocation4 + $0x118] sm:$0xff]
  %v6977 = vld [vmem:[#allocation4 + $0x120] sm:$0xff]
  %v6978 = vld [vmem:[#allocation4 + $0x128] sm:$0xff]
  %v6979 = vld [vmem:[#allocation4 + $0x130] sm:$0xff]
  %v6980 = vld [vmem:[#allocation4 + $0x138] sm:$0xff]
  %v6981 = vld [vmem:[#allocation4 + $0x140] sm:$0xff]
  %v6982 = vld [vmem:[#allocation4 + $0x148] sm:$0xff]
  %v6983 = vld [vmem:[#allocation4 + $0x150] sm:$0xff]
  %v6984 = vld [vmem:[#allocation4 + $0x158] sm:$0xff]
  %v6985 = vld [vmem:[#allocation4 + $0x160] sm:$0xff]
  %v6986 = vld [vmem:[#allocation4 + $0x168] sm:$0xff]
  %v6987 = vld [vmem:[#allocation4 + $0x170] sm:$0xff]
  %v6988 = vld [vmem:[#allocation4 + $0x178] sm:$0xff]
  %v6989 = vld [vmem:[#allocation4 + $0x180] sm:$0xff]
  %v6990 = vld [vmem:[#allocation4 + $0x188] sm:$0xff]
  %v6991 = vld [vmem:[#allocation4 + $0x190] sm:$0xff]
  %v6992 = vld [vmem:[#allocation4 + $0x198] sm:$0xff]
  %v6993 = vld [vmem:[#allocation4 + $0x1a0] sm:$0xff]
  %v6994 = vld [vmem:[#allocation4 + $0x1a8] sm:$0xff]
  %v6995 = vld [vmem:[#allocation4 + $0x1b0] sm:$0xff]
  %v6996 = vld [vmem:[#allocation4 + $0x1b8] sm:$0xff]
  %v6997 = vld [vmem:[#allocation4 + $0x1c0] sm:$0xff]
  %v6998 = vld [vmem:[#allocation4 + $0x1c8] sm:$0xff]
  %v6999 = vld [vmem:[#allocation4 + $0x1d0] sm:$0xff]
  %v7000 = vld [vmem:[#allocation4 + $0x1d8] sm:$0xff]
  %v7001 = vld [vmem:[#allocation4 + $0x1e0] sm:$0xff]
  %v7002 = vld [vmem:[#allocation4 + $0x1e8] sm:$0xff]
  %v7003 = vld [vmem:[#allocation4 + $0x1f0] sm:$0xff]
  %v7004 = vld [vmem:[#allocation4 + $0x1f8] sm:$0xff]
  %v7005 = vld [vmem:[#allocation4 + $0x200] sm:$0xff]
  %v7006 = vld [vmem:[#allocation4 + $0x208] sm:$0xff]
  %v7007 = vld [vmem:[#allocation4 + $0x210] sm:$0xff]
  %v7008 = vld [vmem:[#allocation4 + $0x218] sm:$0xff]
  %v7009 = vld [vmem:[#allocation4 + $0x220] sm:$0xff]
  %v7010 = vld [vmem:[#allocation4 + $0x228] sm:$0xff]
  %v7011 = vld [vmem:[#allocation4 + $0x230] sm:$0xff]
  %v7012 = vld [vmem:[#allocation4 + $0x238] sm:$0xff]
  %v7013 = vld [vmem:[#allocation4 + $0x240] sm:$0xff]
  %v7014 = vld [vmem:[#allocation4 + $0x248] sm:$0xff]
  %v7015 = vld [vmem:[#allocation4 + $0x250] sm:$0xff]
  %v7016 = vld [vmem:[#allocation4 + $0x258] sm:$0xff]
  %v7017 = vld [vmem:[#allocation4 + $0x260] sm:$0xff]
  %v7018 = vld [vmem:[#allocation4 + $0x268] sm:$0xff]
  %v7019 = vld [vmem:[#allocation4 + $0x270] sm:$0xff]
  %v7020 = vld [vmem:[#allocation4 + $0x278] sm:$0xff]
  %v7021 = vld [vmem:[#allocation4 + $0x280] sm:$0xff]
  %v7022 = vld [vmem:[#allocation4 + $0x288] sm:$0xff]
  %v7023 = vld [vmem:[#allocation4 + $0x290] sm:$0xff]
  %v7024 = vld [vmem:[#allocation4 + $0x298] sm:$0xff]
  %v7025 = vld [vmem:[#allocation4 + $0x2a0] sm:$0xff]
  %v7026 = vld [vmem:[#allocation4 + $0x2a8] sm:$0xff]
  %v7027 = vld [vmem:[#allocation4 + $0x2b0] sm:$0xff]
  %v7028 = vld [vmem:[#allocation4 + $0x2b8] sm:$0xff]
  %v7029 = vld [vmem:[#allocation4 + $0x2c0] sm:$0xff]
  %v7030 = vld [vmem:[#allocation4 + $0x2c8] sm:$0xff]
  %v7031 = vld [vmem:[#allocation4 + $0x2d0] sm:$0xff]
  %v7032 = vld [vmem:[#allocation4 + $0x2d8] sm:$0xff]
  %v7033 = vld [vmem:[#allocation4 + $0x2e0] sm:$0xff]
  %v7034 = vld [vmem:[#allocation4 + $0x2e8] sm:$0xff]
  %v7035 = vld [vmem:[#allocation4 + $0x2f0] sm:$0xff]
  %v7036 = vld [vmem:[#allocation4 + $0x2f8] sm:$0xff]
  %v7037 = vld [vmem:[#allocation4 + $0x300] sm:$0xff]
  %v7038 = vld [vmem:[#allocation4 + $0x308] sm:$0xff]
  %v7039 = vld [vmem:[#allocation4 + $0x310] sm:$0xff]
  %v7040 = vld [vmem:[#allocation4 + $0x318] sm:$0xff]
  %v7041 = vld [vmem:[#allocation4 + $0x320] sm:$0xff]
  %v7042 = vld [vmem:[#allocation4 + $0x328] sm:$0xff]
  %v7043 = vld [vmem:[#allocation4 + $0x330] sm:$0xff]
  %v7044 = vld [vmem:[#allocation4 + $0x338] sm:$0xff]
  %v7045 = vld [vmem:[#allocation4 + $0x340] sm:$0xff]
  %v7046 = vld [vmem:[#allocation4 + $0x348] sm:$0xff]
  %v7047 = vld [vmem:[#allocation4 + $0x350] sm:$0xff]
  %v7048 = vld [vmem:[#allocation4 + $0x358] sm:$0xff]
  %v7049 = vld [vmem:[#allocation4 + $0x360] sm:$0xff]
  %v7050 = vld [vmem:[#allocation4 + $0x368] sm:$0xff]
  %v7051 = vld [vmem:[#allocation4 + $0x370] sm:$0xff]
  %v7052 = vld [vmem:[#allocation4 + $0x378] sm:$0xff]
  %v7053 = vld [vmem:[#allocation4 + $0x380] sm:$0xff]
  %v7054 = vld [vmem:[#allocation4 + $0x388] sm:$0xff]
  %v7055 = vld [vmem:[#allocation4 + $0x390] sm:$0xff]
  %v7056 = vld [vmem:[#allocation4 + $0x398] sm:$0xff]
  %v7057 = vld [vmem:[#allocation4 + $0x3a0] sm:$0xff]
  %v7058 = vld [vmem:[#allocation4 + $0x3a8] sm:$0xff]
  %v7059 = vld [vmem:[#allocation4 + $0x3b0] sm:$0xff]
  %v7060 = vld [vmem:[#allocation4 + $0x3b8] sm:$0xff]
  %v7061 = vld [vmem:[#allocation4 + $0x3c0] sm:$0xff]
  %v7062 = vld [vmem:[#allocation4 + $0x3c8] sm:$0xff]
  %v7063 = vld [vmem:[#allocation4 + $0x3d0] sm:$0xff]
  %v7064 = vld [vmem:[#allocation4 + $0x3d8] sm:$0xff]
  %v7065 = vld [vmem:[#allocation4 + $0x3e0] sm:$0xff]
  %v7066 = vld [vmem:[#allocation4 + $0x3e8] sm:$0xff]
  %v7067 = vld [vmem:[#allocation4 + $0x3f0] sm:$0xff]
  %v7068 = vld [vmem:[#allocation4 + $0x3f8] sm:$0xff]
  %v7069 = vld [vmem:[#allocation4 + $0x400] sm:$0xff]
  %v7070 = vld [vmem:[#allocation4 + $0x408] sm:$0xff]
  %v7071 = vld [vmem:[#allocation4 + $0x410] sm:$0xff]
  %v7072 = vld [vmem:[#allocation4 + $0x418] sm:$0xff]
  %v7073 = vld [vmem:[#allocation4 + $0x420] sm:$0xff]
  %v7074 = vld [vmem:[#allocation4 + $0x428] sm:$0xff]
  %v7075 = vld [vmem:[#allocation4 + $0x430] sm:$0xff]
  %v7076 = vld [vmem:[#allocation4 + $0x438] sm:$0xff]
  %v7077 = vld [vmem:[#allocation4 + $0x440] sm:$0xff]
  %v7078 = vld [vmem:[#allocation4 + $0x448] sm:$0xff]
  %v7079 = vld [vmem:[#allocation4 + $0x450] sm:$0xff]
  %v7080 = vld [vmem:[#allocation4 + $0x458] sm:$0xff]
  %v7081 = vld [vmem:[#allocation4 + $0x460] sm:$0xff]
  %v7082 = vld [vmem:[#allocation4 + $0x468] sm:$0xff]
  %v7083 = vld [vmem:[#allocation4 + $0x470] sm:$0xff]
  %v7084 = vld [vmem:[#allocation4 + $0x478] sm:$0xff]
  %v7085 = vld [vmem:[#allocation4 + $0x480] sm:$0xff]
  %v7086 = vld [vmem:[#allocation4 + $0x488] sm:$0xff]
  %v7087 = vld [vmem:[#allocation4 + $0x490] sm:$0xff]
  %v7088 = vld [vmem:[#allocation4 + $0x498] sm:$0xff]
  %v7089 = vld [vmem:[#allocation4 + $0x4a0] sm:$0xff]
  %v7090 = vld [vmem:[#allocation4 + $0x4a8] sm:$0xff]
  %v7091 = vld [vmem:[#allocation4 + $0x4b0] sm:$0xff]
  %v7092 = vld [vmem:[#allocation4 + $0x4b8] sm:$0xff]
  %v7093 = vld [vmem:[#allocation4 + $0x4c0] sm:$0xff]
  %v7094 = vld [vmem:[#allocation4 + $0x4c8] sm:$0xff]
  %v7095 = vld [vmem:[#allocation4 + $0x4d0] sm:$0xff]
  %v7096 = vld [vmem:[#allocation4 + $0x4d8] sm:$0xff]
  %v7097 = vld [vmem:[#allocation4 + $0x4e0] sm:$0xff]
  %v7098 = vld [vmem:[#allocation4 + $0x4e8] sm:$0xff]
  %v7099 = vld [vmem:[#allocation4 + $0x4f0] sm:$0xff]
  %v7100 = vld [vmem:[#allocation4 + $0x4f8] sm:$0xff]
  %v7101 = vld [vmem:[#allocation4 + $0x500] sm:$0xff]
  %v7102 = vld [vmem:[#allocation4 + $0x508] sm:$0xff]
  %v7103 = vld [vmem:[#allocation4 + $0x510] sm:$0xff]
  %v7104 = vld [vmem:[#allocation4 + $0x518] sm:$0xff]
  %v7105 = vld [vmem:[#allocation4 + $0x520] sm:$0xff]
  %v7106 = vld [vmem:[#allocation4 + $0x528] sm:$0xff]
  %v7107 = vld [vmem:[#allocation4 + $0x530] sm:$0xff]
  %v7108 = vld [vmem:[#allocation4 + $0x538] sm:$0xff]
  %v7109 = vld [vmem:[#allocation4 + $0x540] sm:$0xff]
  %v7110 = vld [vmem:[#allocation4 + $0x548] sm:$0xff]
  %v7111 = vld [vmem:[#allocation4 + $0x550] sm:$0xff]
  %v7112 = vld [vmem:[#allocation4 + $0x558] sm:$0xff]
  %v7113 = vld [vmem:[#allocation4 + $0x560] sm:$0xff]
  %v7114 = vld [vmem:[#allocation4 + $0x568] sm:$0xff]
  %v7115 = vld [vmem:[#allocation4 + $0x570] sm:$0xff]
  %v7116 = vld [vmem:[#allocation4 + $0x578] sm:$0xff]
  %v7117 = vld [vmem:[#allocation4 + $0x580] sm:$0xff]
  %v7118 = vld [vmem:[#allocation4 + $0x588] sm:$0xff]
  %v7119 = vld [vmem:[#allocation4 + $0x590] sm:$0xff]
  %v7120 = vld [vmem:[#allocation4 + $0x598] sm:$0xff]
  %v7121 = vld [vmem:[#allocation4 + $0x5a0] sm:$0xff]
  %v7122 = vld [vmem:[#allocation4 + $0x5a8] sm:$0xff]
  %v7123 = vld [vmem:[#allocation4 + $0x5b0] sm:$0xff]
  %v7124 = vld [vmem:[#allocation4 + $0x5b8] sm:$0xff]
  %v7125 = vld [vmem:[#allocation4 + $0x5c0] sm:$0xff]
  %v7126 = vld [vmem:[#allocation4 + $0x5c8] sm:$0xff]
  %v7127 = vld [vmem:[#allocation4 + $0x5d0] sm:$0xff]
  %v7128 = vld [vmem:[#allocation4 + $0x5d8] sm:$0xff]
  %v7129 = vld [vmem:[#allocation4 + $0x5e0] sm:$0xff]
  %v7130 = vld [vmem:[#allocation4 + $0x5e8] sm:$0xff]
  %v7131 = vld [vmem:[#allocation4 + $0x5f0] sm:$0xff]
  %v7132 = vld [vmem:[#allocation4 + $0x5f8] sm:$0xff]
  %v7133 = vld [vmem:[#allocation4 + $0x600] sm:$0xff]
  %v7134 = vld [vmem:[#allocation4 + $0x608] sm:$0xff]
  %v7135 = vld [vmem:[#allocation4 + $0x610] sm:$0xff]
  %v7136 = vld [vmem:[#allocation4 + $0x618] sm:$0xff]
  %v7137 = vld [vmem:[#allocation4 + $0x620] sm:$0xff]
  %v7138 = vld [vmem:[#allocation4 + $0x628] sm:$0xff]
  %v7139 = vld [vmem:[#allocation4 + $0x630] sm:$0xff]
  %v7140 = vld [vmem:[#allocation4 + $0x638] sm:$0xff]
  %v7141 = vld [vmem:[#allocation4 + $0x640] sm:$0xff]
  %v7142 = vld [vmem:[#allocation4 + $0x648] sm:$0xff]
  %v7143 = vld [vmem:[#allocation4 + $0x650] sm:$0xff]
  %v7144 = vld [vmem:[#allocation4 + $0x658] sm:$0xff]
  %v7145 = vld [vmem:[#allocation4 + $0x660] sm:$0xff]
  %v7146 = vld [vmem:[#allocation4 + $0x668] sm:$0xff]
  %v7147 = vld [vmem:[#allocation4 + $0x670] sm:$0xff]
  %v7148 = vld [vmem:[#allocation4 + $0x678] sm:$0xff]
  %v7149 = vld [vmem:[#allocation4 + $0x680] sm:$0xff]
  %v7150 = vld [vmem:[#allocation4 + $0x688] sm:$0xff]
  %v7151 = vld [vmem:[#allocation4 + $0x690] sm:$0xff]
  %v7152 = vld [vmem:[#allocation4 + $0x698] sm:$0xff]
  %v7153 = vld [vmem:[#allocation4 + $0x6a0] sm:$0xff]
  %v7154 = vld [vmem:[#allocation4 + $0x6a8] sm:$0xff]
  %v7155 = vld [vmem:[#allocation4 + $0x6b0] sm:$0xff]
  %v7156 = vld [vmem:[#allocation4 + $0x6b8] sm:$0xff]
  %v7157 = vld [vmem:[#allocation4 + $0x6c0] sm:$0xff]
  %v7158 = vld [vmem:[#allocation4 + $0x6c8] sm:$0xff]
  %v7159 = vld [vmem:[#allocation4 + $0x6d0] sm:$0xff]
  %v7160 = vld [vmem:[#allocation4 + $0x6d8] sm:$0xff]
  %v7161 = vld [vmem:[#allocation4 + $0x6e0] sm:$0xff]
  %v7162 = vld [vmem:[#allocation4 + $0x6e8] sm:$0xff]
  %v7163 = vld [vmem:[#allocation4 + $0x6f0] sm:$0xff]
  %v7164 = vld [vmem:[#allocation4 + $0x6f8] sm:$0xff]
  %v7165 = vld [vmem:[#allocation4 + $0x700] sm:$0xff]
  %v7166 = vld [vmem:[#allocation4 + $0x708] sm:$0xff]
  %v7167 = vld [vmem:[#allocation4 + $0x710] sm:$0xff]
  %v7168 = vld [vmem:[#allocation4 + $0x718] sm:$0xff]
  %v7169 = vld [vmem:[#allocation4 + $0x720] sm:$0xff]
  %v7170 = vld [vmem:[#allocation4 + $0x728] sm:$0xff]
  %v7171 = vld [vmem:[#allocation4 + $0x730] sm:$0xff]
  %v7172 = vld [vmem:[#allocation4 + $0x738] sm:$0xff]
  %v7173 = vld [vmem:[#allocation4 + $0x740] sm:$0xff]
  %v7174 = vld [vmem:[#allocation4 + $0x748] sm:$0xff]
  %v7175 = vld [vmem:[#allocation4 + $0x750] sm:$0xff]
  %v7176 = vld [vmem:[#allocation4 + $0x758] sm:$0xff]
  %v7177 = vld [vmem:[#allocation4 + $0x760] sm:$0xff]
  %v7178 = vld [vmem:[#allocation4 + $0x768] sm:$0xff]
  %v7179 = vld [vmem:[#allocation4 + $0x770] sm:$0xff]
  %v7180 = vld [vmem:[#allocation4 + $0x778] sm:$0xff]
  %v7181 = vld [vmem:[#allocation4 + $0x780] sm:$0xff]
  %v7182 = vld [vmem:[#allocation4 + $0x788] sm:$0xff]
  %v7183 = vld [vmem:[#allocation4 + $0x790] sm:$0xff]
  %v7184 = vld [vmem:[#allocation4 + $0x798] sm:$0xff]
  %v7185 = vld [vmem:[#allocation4 + $0x7a0] sm:$0xff]
  %v7186 = vld [vmem:[#allocation4 + $0x7a8] sm:$0xff]
  %v7187 = vld [vmem:[#allocation4 + $0x7b0] sm:$0xff]
  %v7188 = vld [vmem:[#allocation4 + $0x7b8] sm:$0xff]
  %v7189 = vld [vmem:[#allocation4 + $0x7c0] sm:$0xff]
  %v7190 = vld [vmem:[#allocation4 + $0x7c8] sm:$0xff]
  %v7191 = vld [vmem:[#allocation4 + $0x7d0] sm:$0xff]
  %v7192 = vld [vmem:[#allocation4 + $0x7d8] sm:$0xff]
  %v7193 = vld [vmem:[#allocation4 + $0x7e0] sm:$0xff]
  %v7194 = vld [vmem:[#allocation4 + $0x7e8] sm:$0xff]
  %v7195 = vld [vmem:[#allocation4 + $0x7f0] sm:$0xff]
  %v7196 = vld [vmem:[#allocation4 + $0x7f8] sm:$0xff]
  %v7197 = vld [vmem:[#allocation4 + $0x800] sm:$0xff]
  %v7198 = vld [vmem:[#allocation4 + $0x808] sm:$0xff]
  %v7199 = vld [vmem:[#allocation4 + $0x810] sm:$0xff]
  %v7200 = vld [vmem:[#allocation4 + $0x818] sm:$0xff]
  %v7201 = vld [vmem:[#allocation4 + $0x820] sm:$0xff]
  %v7202 = vld [vmem:[#allocation4 + $0x828] sm:$0xff]
  %v7203 = vld [vmem:[#allocation4 + $0x830] sm:$0xff]
  %v7204 = vld [vmem:[#allocation4 + $0x838] sm:$0xff]
  %v7205 = vld [vmem:[#allocation4 + $0x840] sm:$0xff]
  %v7206 = vld [vmem:[#allocation4 + $0x848] sm:$0xff]
  %v7207 = vld [vmem:[#allocation4 + $0x850] sm:$0xff]
  %v7208 = vld [vmem:[#allocation4 + $0x858] sm:$0xff]
  %v7209 = vld [vmem:[#allocation4 + $0x860] sm:$0xff]
  %v7210 = vld [vmem:[#allocation4 + $0x868] sm:$0xff]
  %v7211 = vld [vmem:[#allocation4 + $0x870] sm:$0xff]
  %v7212 = vld [vmem:[#allocation4 + $0x878] sm:$0xff]
  %v7213 = vld [vmem:[#allocation4 + $0x880] sm:$0xff]
  %v7214 = vld [vmem:[#allocation4 + $0x888] sm:$0xff]
  %v7215 = vld [vmem:[#allocation4 + $0x890] sm:$0xff]
  %v7216 = vld [vmem:[#allocation4 + $0x898] sm:$0xff]
  %v7217 = vld [vmem:[#allocation4 + $0x8a0] sm:$0xff]
  %v7218 = vld [vmem:[#allocation4 + $0x8a8] sm:$0xff]
  %v7219 = vld [vmem:[#allocation4 + $0x8b0] sm:$0xff]
  %v7220 = vld [vmem:[#allocation4 + $0x8b8] sm:$0xff]
  %v7221 = vld [vmem:[#allocation4 + $0x8c0] sm:$0xff]
  %v7222 = vld [vmem:[#allocation4 + $0x8c8] sm:$0xff]
  %v7223 = vld [vmem:[#allocation4 + $0x8d0] sm:$0xff]
  %v7224 = vld [vmem:[#allocation4 + $0x8d8] sm:$0xff]
  %v7225 = vld [vmem:[#allocation4 + $0x8e0] sm:$0xff]
  %v7226 = vld [vmem:[#allocation4 + $0x8e8] sm:$0xff]
  %v7227 = vld [vmem:[#allocation4 + $0x8f0] sm:$0xff]
  %v7228 = vld [vmem:[#allocation4 + $0x8f8] sm:$0xff]
  %v7229 = vld [vmem:[#allocation4 + $0x900] sm:$0xff]
  %v7230 = vld [vmem:[#allocation4 + $0x908] sm:$0xff]
  %v7231 = vld [vmem:[#allocation4 + $0x910] sm:$0xff]
  %v7232 = vld [vmem:[#allocation4 + $0x918] sm:$0xff]
  %v7233 = vld [vmem:[#allocation4 + $0x920] sm:$0xff]
  %v7234 = vld [vmem:[#allocation4 + $0x928] sm:$0xff]
  %v7235 = vld [vmem:[#allocation4 + $0x930] sm:$0xff]
  %v7236 = vld [vmem:[#allocation4 + $0x938] sm:$0xff]
  %v7237 = vld [vmem:[#allocation4 + $0x940] sm:$0xff]
  %v7238 = vld [vmem:[#allocation4 + $0x948] sm:$0xff]
  %v7239 = vld [vmem:[#allocation4 + $0x950] sm:$0xff]
  %v7240 = vld [vmem:[#allocation4 + $0x958] sm:$0xff]
  %v7241 = vld [vmem:[#allocation4 + $0x960] sm:$0xff]
  %v7242 = vld [vmem:[#allocation4 + $0x968] sm:$0xff]
  %v7243 = vld [vmem:[#allocation4 + $0x970] sm:$0xff]
  %v7244 = vld [vmem:[#allocation4 + $0x978] sm:$0xff]
  %v7245 = vld [vmem:[#allocation4 + $0x980] sm:$0xff]
  %v7246 = vld [vmem:[#allocation4 + $0x988] sm:$0xff]
  %v7247 = vld [vmem:[#allocation4 + $0x990] sm:$0xff]
  %v7248 = vld [vmem:[#allocation4 + $0x998] sm:$0xff]
  %v7249 = vld [vmem:[#allocation4 + $0x9a0] sm:$0xff]
  %v7250 = vld [vmem:[#allocation4 + $0x9a8] sm:$0xff]
  %v7251 = vld [vmem:[#allocation4 + $0x9b0] sm:$0xff]
  %v7252 = vld [vmem:[#allocation4 + $0x9b8] sm:$0xff]
  %v7253 = vld [vmem:[#allocation4 + $0x9c0] sm:$0xff]
  %v7254 = vld [vmem:[#allocation4 + $0x9c8] sm:$0xff]
  %v7255 = vld [vmem:[#allocation4 + $0x9d0] sm:$0xff]
  %v7256 = vld [vmem:[#allocation4 + $0x9d8] sm:$0xff]
  %v7257 = vld [vmem:[#allocation4 + $0x9e0] sm:$0xff]
  %v7258 = vld [vmem:[#allocation4 + $0x9e8] sm:$0xff]
  %v7259 = vld [vmem:[#allocation4 + $0x9f0] sm:$0xff]
  %v7260 = vld [vmem:[#allocation4 + $0x9f8] sm:$0xff]
  %v7261 = vld [vmem:[#allocation4 + $0xa00] sm:$0xff]
  %v7262 = vld [vmem:[#allocation4 + $0xa08] sm:$0xff]
  %v7263 = vld [vmem:[#allocation4 + $0xa10] sm:$0xff]
  %v7264 = vld [vmem:[#allocation4 + $0xa18] sm:$0xff]
  %v7265 = vld [vmem:[#allocation4 + $0xa20] sm:$0xff]
  %v7266 = vld [vmem:[#allocation4 + $0xa28] sm:$0xff]
  %v7267 = vld [vmem:[#allocation4 + $0xa30] sm:$0xff]
  %v7268 = vld [vmem:[#allocation4 + $0xa38] sm:$0xff]
  %v7269 = vld [vmem:[#allocation4 + $0xa40] sm:$0xff]
  %v7270 = vld [vmem:[#allocation4 + $0xa48] sm:$0xff]
  %v7271 = vld [vmem:[#allocation4 + $0xa50] sm:$0xff]
  %v7272 = vld [vmem:[#allocation4 + $0xa58] sm:$0xff]
  %v7273 = vld [vmem:[#allocation4 + $0xa60] sm:$0xff]
  %v7274 = vld [vmem:[#allocation4 + $0xa68] sm:$0xff]
  %v7275 = vld [vmem:[#allocation4 + $0xa70] sm:$0xff]
  %v7276 = vld [vmem:[#allocation4 + $0xa78] sm:$0xff]
  %v7277 = vld [vmem:[#allocation4 + $0xa80] sm:$0xff]
  %v7278 = vld [vmem:[#allocation4 + $0xa88] sm:$0xff]
  %v7279 = vld [vmem:[#allocation4 + $0xa90] sm:$0xff]
  %v7280 = vld [vmem:[#allocation4 + $0xa98] sm:$0xff]
  %v7281 = vld [vmem:[#allocation4 + $0xaa0] sm:$0xff]
  %v7282 = vld [vmem:[#allocation4 + $0xaa8] sm:$0xff]
  %v7283 = vld [vmem:[#allocation4 + $0xab0] sm:$0xff]
  %v7284 = vld [vmem:[#allocation4 + $0xab8] sm:$0xff]
  %v7285 = vld [vmem:[#allocation4 + $0xac0] sm:$0xff]
  %v7286 = vld [vmem:[#allocation4 + $0xac8] sm:$0xff]
  %v7287 = vld [vmem:[#allocation4 + $0xad0] sm:$0xff]
  %v7288 = vld [vmem:[#allocation4 + $0xad8] sm:$0xff]
  %v7289 = vld [vmem:[#allocation4 + $0xae0] sm:$0xff]
  %v7290 = vld [vmem:[#allocation4 + $0xae8] sm:$0xff]
  %v7291 = vld [vmem:[#allocation4 + $0xaf0] sm:$0xff]
  %v7292 = vld [vmem:[#allocation4 + $0xaf8] sm:$0xff]
  %v7293 = vld [vmem:[#allocation4 + $0xb00] sm:$0xff]
  %v7294 = vld [vmem:[#allocation4 + $0xb08] sm:$0xff]
  %v7295 = vld [vmem:[#allocation4 + $0xb10] sm:$0xff]
  %v7296 = vld [vmem:[#allocation4 + $0xb18] sm:$0xff]
  %v7297 = vld [vmem:[#allocation4 + $0xb20] sm:$0xff]
  %v7298 = vld [vmem:[#allocation4 + $0xb28] sm:$0xff]
  %v7299 = vld [vmem:[#allocation4 + $0xb30] sm:$0xff]
  %v7300 = vld [vmem:[#allocation4 + $0xb38] sm:$0xff]
  %v7301 = vld [vmem:[#allocation4 + $0xb40] sm:$0xff]
  %v7302 = vld [vmem:[#allocation4 + $0xb48] sm:$0xff]
  %v7303 = vld [vmem:[#allocation4 + $0xb50] sm:$0xff]
  %v7304 = vld [vmem:[#allocation4 + $0xb58] sm:$0xff]
  %v7305 = vld [vmem:[#allocation4 + $0xb60] sm:$0xff]
  %v7306 = vld [vmem:[#allocation4 + $0xb68] sm:$0xff]
  %v7307 = vld [vmem:[#allocation4 + $0xb70] sm:$0xff]
  %v7308 = vld [vmem:[#allocation4 + $0xb78] sm:$0xff]
  %v7309 = vld [vmem:[#allocation4 + $0xb80] sm:$0xff]
  %v7310 = vld [vmem:[#allocation4 + $0xb88] sm:$0xff]
  %v7311 = vld [vmem:[#allocation4 + $0xb90] sm:$0xff]
  %v7312 = vld [vmem:[#allocation4 + $0xb98] sm:$0xff]
  %v7313 = vld [vmem:[#allocation4 + $0xba0] sm:$0xff]
  %v7314 = vld [vmem:[#allocation4 + $0xba8] sm:$0xff]
  %v7315 = vld [vmem:[#allocation4 + $0xbb0] sm:$0xff]
  %v7316 = vld [vmem:[#allocation4 + $0xbb8] sm:$0xff]
  %v7317 = vld [vmem:[#allocation4 + $0xbc0] sm:$0xff]
  %v7318 = vld [vmem:[#allocation4 + $0xbc8] sm:$0xff]
  %v7319 = vld [vmem:[#allocation4 + $0xbd0] sm:$0xff]
  %v7320 = vld [vmem:[#allocation4 + $0xbd8] sm:$0xff]
  %v7321 = vld [vmem:[#allocation4 + $0xbe0] sm:$0xff]
  %v7322 = vld [vmem:[#allocation4 + $0xbe8] sm:$0xff]
  %v7323 = vld [vmem:[#allocation4 + $0xbf0] sm:$0xff]
  %v7324 = vld [vmem:[#allocation4 + $0xbf8] sm:$0xff]
  %v7325 = vld [vmem:[#allocation4 + $0xc00] sm:$0xff]
  %v7326 = vld [vmem:[#allocation4 + $0xc08] sm:$0xff]
  %v7327 = vld [vmem:[#allocation4 + $0xc10] sm:$0xff]
  %v7328 = vld [vmem:[#allocation4 + $0xc18] sm:$0xff]
  %v7329 = vld [vmem:[#allocation4 + $0xc20] sm:$0xff]
  %v7330 = vld [vmem:[#allocation4 + $0xc28] sm:$0xff]
  %v7331 = vld [vmem:[#allocation4 + $0xc30] sm:$0xff]
  %v7332 = vld [vmem:[#allocation4 + $0xc38] sm:$0xff]
  %v7333 = vld [vmem:[#allocation4 + $0xc40] sm:$0xff]
  %v7334 = vld [vmem:[#allocation4 + $0xc48] sm:$0xff]
  %v7335 = vld [vmem:[#allocation4 + $0xc50] sm:$0xff]
  %v7336 = vld [vmem:[#allocation4 + $0xc58] sm:$0xff]
  %v7337 = vld [vmem:[#allocation4 + $0xc60] sm:$0xff]
  %v7338 = vld [vmem:[#allocation4 + $0xc68] sm:$0xff]
  %v7339 = vld [vmem:[#allocation4 + $0xc70] sm:$0xff]
  %v7340 = vld [vmem:[#allocation4 + $0xc78] sm:$0xff]
  %v7341 = vld [vmem:[#allocation4 + $0xc80] sm:$0xff]
  %v7342 = vld [vmem:[#allocation4 + $0xc88] sm:$0xff]
  %v7343 = vld [vmem:[#allocation4 + $0xc90] sm:$0xff]
  %v7344 = vld [vmem:[#allocation4 + $0xc98] sm:$0xff]
  %v7345 = vld [vmem:[#allocation4 + $0xca0] sm:$0xff]
  %v7346 = vld [vmem:[#allocation4 + $0xca8] sm:$0xff]
  %v7347 = vld [vmem:[#allocation4 + $0xcb0] sm:$0xff]
  %v7348 = vld [vmem:[#allocation4 + $0xcb8] sm:$0xff]
  %v7349 = vld [vmem:[#allocation4 + $0xcc0] sm:$0xff]
  %v7350 = vld [vmem:[#allocation4 + $0xcc8] sm:$0xff]
  %v7351 = vld [vmem:[#allocation4 + $0xcd0] sm:$0xff]
  %v7352 = vld [vmem:[#allocation4 + $0xcd8] sm:$0xff]
  %v7353 = vld [vmem:[#allocation4 + $0xce0] sm:$0xff]
  %v7354 = vld [vmem:[#allocation4 + $0xce8] sm:$0xff]
  %v7355 = vld [vmem:[#allocation4 + $0xcf0] sm:$0xff]
  %v7356 = vld [vmem:[#allocation4 + $0xcf8] sm:$0xff]
  %v7357 = vld [vmem:[#allocation4 + $0xd00] sm:$0xff]
  %v7358 = vld [vmem:[#allocation4 + $0xd08] sm:$0xff]
  %v7359 = vld [vmem:[#allocation4 + $0xd10] sm:$0xff]
  %v7360 = vld [vmem:[#allocation4 + $0xd18] sm:$0xff]
  %v7361 = vld [vmem:[#allocation4 + $0xd20] sm:$0xff]
  %v7362 = vld [vmem:[#allocation4 + $0xd28] sm:$0xff]
  %v7363 = vld [vmem:[#allocation4 + $0xd30] sm:$0xff]
  %v7364 = vld [vmem:[#allocation4 + $0xd38] sm:$0xff]
  %v7365 = vld [vmem:[#allocation4 + $0xd40] sm:$0xff]
  %v7366 = vld [vmem:[#allocation4 + $0xd48] sm:$0xff]
  %v7367 = vld [vmem:[#allocation4 + $0xd50] sm:$0xff]
  %v7368 = vld [vmem:[#allocation4 + $0xd58] sm:$0xff]
  %v7369 = vld [vmem:[#allocation4 + $0xd60] sm:$0xff]
  %v7370 = vld [vmem:[#allocation4 + $0xd68] sm:$0xff]
  %v7371 = vld [vmem:[#allocation4 + $0xd70] sm:$0xff]
  %v7372 = vld [vmem:[#allocation4 + $0xd78] sm:$0xff]
  %v7373 = vld [vmem:[#allocation4 + $0xd80] sm:$0xff]
  %v7374 = vld [vmem:[#allocation4 + $0xd88] sm:$0xff]
  %v7375 = vld [vmem:[#allocation4 + $0xd90] sm:$0xff]
  %v7376 = vld [vmem:[#allocation4 + $0xd98] sm:$0xff]
  %v7377 = vld [vmem:[#allocation4 + $0xda0] sm:$0xff]
  %v7378 = vld [vmem:[#allocation4 + $0xda8] sm:$0xff]
  %v7379 = vld [vmem:[#allocation4 + $0xdb0] sm:$0xff]
  %v7380 = vld [vmem:[#allocation4 + $0xdb8] sm:$0xff]
  %v7381 = vld [vmem:[#allocation4 + $0xdc0] sm:$0xff]
  %v7382 = vld [vmem:[#allocation4 + $0xdc8] sm:$0xff]
  %v7383 = vld [vmem:[#allocation4 + $0xdd0] sm:$0xff]
  %v7384 = vld [vmem:[#allocation4 + $0xdd8] sm:$0xff]
  %v7385 = vld [vmem:[#allocation4 + $0xde0] sm:$0xff]
  %v7386 = vld [vmem:[#allocation4 + $0xde8] sm:$0xff]
  %v7387 = vld [vmem:[#allocation4 + $0xdf0] sm:$0xff]
  %v7388 = vld [vmem:[#allocation4 + $0xdf8] sm:$0xff]
  %v7389 = vld [vmem:[#allocation4 + $0xe00] sm:$0xff]
  %v7390 = vld [vmem:[#allocation4 + $0xe08] sm:$0xff]
  %v7391 = vld [vmem:[#allocation4 + $0xe10] sm:$0xff]
  %v7392 = vld [vmem:[#allocation4 + $0xe18] sm:$0xff]
  %v7393 = vld [vmem:[#allocation4 + $0xe20] sm:$0xff]
  %v7394 = vld [vmem:[#allocation4 + $0xe28] sm:$0xff]
  %v7395 = vld [vmem:[#allocation4 + $0xe30] sm:$0xff]
  %v7396 = vld [vmem:[#allocation4 + $0xe38] sm:$0xff]
  %v7397 = vld [vmem:[#allocation4 + $0xe40] sm:$0xff]
  %v7398 = vld [vmem:[#allocation4 + $0xe48] sm:$0xff]
  %v7399 = vld [vmem:[#allocation4 + $0xe50] sm:$0xff]
  %v7400 = vld [vmem:[#allocation4 + $0xe58] sm:$0xff]
  %v7401 = vld [vmem:[#allocation4 + $0xe60] sm:$0xff]
  %v7402 = vld [vmem:[#allocation4 + $0xe68] sm:$0xff]
  %v7403 = vld [vmem:[#allocation4 + $0xe70] sm:$0xff]
  %v7404 = vld [vmem:[#allocation4 + $0xe78] sm:$0xff]
  %v7405 = vld [vmem:[#allocation4 + $0xe80] sm:$0xff]
  %v7406 = vld [vmem:[#allocation4 + $0xe88] sm:$0xff]
  %v7407 = vld [vmem:[#allocation4 + $0xe90] sm:$0xff]
  %v7408 = vld [vmem:[#allocation4 + $0xe98] sm:$0xff]
  %v7409 = vld [vmem:[#allocation4 + $0xea0] sm:$0xff]
  %v7410 = vld [vmem:[#allocation4 + $0xea8] sm:$0xff]
  %v7411 = vld [vmem:[#allocation4 + $0xeb0] sm:$0xff]
  %v7412 = vld [vmem:[#allocation4 + $0xeb8] sm:$0xff]
  %v7413 = vld [vmem:[#allocation4 + $0xec0] sm:$0xff]
  %v7414 = vld [vmem:[#allocation4 + $0xec8] sm:$0xff]
  %v7415 = vld [vmem:[#allocation4 + $0xed0] sm:$0xff]
  %v7416 = vld [vmem:[#allocation4 + $0xed8] sm:$0xff]
  %v7417 = vld [vmem:[#allocation4 + $0xee0] sm:$0xff]
  %v7418 = vld [vmem:[#allocation4 + $0xee8] sm:$0xff]
  %v7419 = vld [vmem:[#allocation4 + $0xef0] sm:$0xff]
  %v7420 = vld [vmem:[#allocation4 + $0xef8] sm:$0xff]
  %v7421 = vld [vmem:[#allocation4 + $0xf00] sm:$0xff]
  %v7422 = vld [vmem:[#allocation4 + $0xf08] sm:$0xff]
  %v7423 = vld [vmem:[#allocation4 + $0xf10] sm:$0xff]
  %v7424 = vld [vmem:[#allocation4 + $0xf18] sm:$0xff]
  %v7425 = vld [vmem:[#allocation4 + $0xf20] sm:$0xff]
  %v7426 = vld [vmem:[#allocation4 + $0xf28] sm:$0xff]
  %v7427 = vld [vmem:[#allocation4 + $0xf30] sm:$0xff]
  %v7428 = vld [vmem:[#allocation4 + $0xf38] sm:$0xff]
  %v7429 = vld [vmem:[#allocation4 + $0xf40] sm:$0xff]
  %v7430 = vld [vmem:[#allocation4 + $0xf48] sm:$0xff]
  %v7431 = vld [vmem:[#allocation4 + $0xf50] sm:$0xff]
  %v7432 = vld [vmem:[#allocation4 + $0xf58] sm:$0xff]
  %v7433 = vld [vmem:[#allocation4 + $0xf60] sm:$0xff]
  %v7434 = vld [vmem:[#allocation4 + $0xf68] sm:$0xff]
  %v7435 = vld [vmem:[#allocation4 + $0xf70] sm:$0xff]
  %v7436 = vld [vmem:[#allocation4 + $0xf78] sm:$0xff]
  %v7437 = vld [vmem:[#allocation4 + $0xf80] sm:$0xff]
  %v7438 = vld [vmem:[#allocation4 + $0xf88] sm:$0xff]
  %v7439 = vld [vmem:[#allocation4 + $0xf90] sm:$0xff]
  %v7440 = vld [vmem:[#allocation4 + $0xf98] sm:$0xff]
  %v7441 = vld [vmem:[#allocation4 + $0xfa0] sm:$0xff]
  %v7442 = vld [vmem:[#allocation4 + $0xfa8] sm:$0xff]
  %v7443 = vld [vmem:[#allocation4 + $0xfb0] sm:$0xff]
  %v7444 = vld [vmem:[#allocation4 + $0xfb8] sm:$0xff]
  %v7445 = vld [vmem:[%s4] sm:$0xff]
  %v7446 = vld [vmem:[%s4 + $0x8] sm:$0xff]
  %7448 = vset.pattern.permute.xlu0 0
  %7449 = vperm.xlu0 %7448, %v7445
  %v7450 = vpop.permute.xlu0 %7449
  %7453 = vset.pattern.permute.xlu0 0
  %7454 = vperm.xlu0 %7453, %v7446
  %v7455 = vpop.permute.xlu0 %7454
  %vm7457 = vcmask 523264
  %v7459 = vsel %vm7457, %v6935, 0
  %v7462 = vsel %vm7457, %v6940, 0
  %7464 = vmatpush.msra.mxu0 %v7046
  %7465 = vmatpush.msra.mxu0 %v7039
  %7466 = vmatpush.msra.mxu0 %v7032
  %7467 = vmatpush.msra.mxu0 %v7025
  %7468 = vmatpush.msra.mxu0 %v7018
  %7469 = vmatpush.msra.mxu0 %v7011
  %7470 = vmatpush.msra.mxu0 %v7004
  %7471 = vmatpush.msra.mxu0 %v6997
  %7472 = vmatpush.msra.mxu0 %v6990
  %7473 = vmatpush.msra.mxu0 %v6983
  %7474 = vmatpush.msra.mxu0 %v6976
  %7475 = vmatpush.msra.mxu0 %v6969
  %7476 = vmatpush.msra.mxu0 %v6962
  %7477 = vmatpush.msra.mxu0 %v6955
  %7478 = vmatpush.msra.mxu0 %v6948
  %7479 = vmatpush.msra.mxu0 %v6941
  %7480 = vmatmul.f32.gmra.mxu0 %v6931
  %v7481 = vpop.f32.mrf.mxu0
  %v7482 = vadd.f32 %v7450, %v7481
  %7483 = vmatmul.f32.gmra.mxu0 %v6936
  %v7484 = vpop.f32.mrf.mxu0
  %v7485 = vadd.f32 %v7455, %v7484
  %7486 = vdwg.mxu0
  %7487 = vmatpush.msra.mxu0 %v7158
  %7488 = vmatpush.msra.mxu0 %v7151
  %7489 = vmatpush.msra.mxu0 %v7144
  %7490 = vmatpush.msra.mxu0 %v7137
  %7491 = vmatpush.msra.mxu0 %v7130
  %7492 = vmatpush.msra.mxu0 %v7123
  %7493 = vmatpush.msra.mxu0 %v7116
  %7494 = vmatpush.msra.mxu0 %v7109
  %7495 = vmatpush.msra.mxu0 %v7102
  %7496 = vmatpush.msra.mxu0 %v7095
  %7497 = vmatpush.msra.mxu0 %v7088
  %7498 = vmatpush.msra.mxu0 %v7081
  %7499 = vmatpush.msra.mxu0 %v7074
  %7500 = vmatpush.msra.mxu0 %v7067
  %7501 = vmatpush.msra.mxu0 %v7060
  %7502 = vmatpush.msra.mxu0 %v7053
  %7503 = vmatmul.f32.gmra.mxu0 %v6932
  %v7504 = vpop.f32.mrf.mxu0
  %v7505 = vadd.f32 %v7482, %v7504
  %7506 = vmatmul.f32.gmra.mxu0 %v6937
  %v7507 = vpop.f32.mrf.mxu0
  %v7508 = vadd.f32 %v7485, %v7507
  %7509 = vdwg.mxu0
  %7510 = vmatpush.msra.mxu0 %v7270
  %7511 = vmatpush.msra.mxu0 %v7263
  %7512 = vmatpush.msra.mxu0 %v7256
  %7513 = vmatpush.msra.mxu0 %v7249
  %7514 = vmatpush.msra.mxu0 %v7242
  %7515 = vmatpush.msra.mxu0 %v7235
  %7516 = vmatpush.msra.mxu0 %v7228
  %7517 = vmatpush.msra.mxu0 %v7221
  %7518 = vmatpush.msra.mxu0 %v7214
  %7519 = vmatpush.msra.mxu0 %v7207
  %7520 = vmatpush.msra.mxu0 %v7200
  %7521 = vmatpush.msra.mxu0 %v7193
  %7522 = vmatpush.msra.mxu0 %v7186
  %7523 = vmatpush.msra.mxu0 %v7179
  %7524 = vmatpush.msra.mxu0 %v7172
  %7525 = vmatpush.msra.mxu0 %v7165
  %7526 = vmatmul.f32.gmra.mxu0 %v6933
  %v7527 = vpop.f32.mrf.mxu0
  %v7528 = vadd.f32 %v7505, %v7527
  %7529 = vmatmul.f32.gmra.mxu0 %v6938
  %v7530 = vpop.f32.mrf.mxu0
  %v7531 = vadd.f32 %v7508, %v7530
  %7532 = vdwg.mxu0
  %7533 = vmatpush.msra.mxu0 %v7382
  %7534 = vmatpush.msra.mxu0 %v7375
  %7535 = vmatpush.msra.mxu0 %v7368
  %7536 = vmatpush.msra.mxu0 %v7361
  %7537 = vmatpush.msra.mxu0 %v7354
  %7538 = vmatpush.msra.mxu0 %v7347
  %7539 = vmatpush.msra.mxu0 %v7340
  %7540 = vmatpush.msra.mxu0 %v7333
  %7541 = vmatpush.msra.mxu0 %v7326
  %7542 = vmatpush.msra.mxu0 %v7319
  %7543 = vmatpush.msra.mxu0 %v7312
  %7544 = vmatpush.msra.mxu0 %v7305
  %7545 = vmatpush.msra.mxu0 %v7298
  %7546 = vmatpush.msra.mxu0 %v7291
  %7547 = vmatpush.msra.mxu0 %v7284
  %7548 = vmatpush.msra.mxu0 %v7277
  %7549 = vmatmul.f32.gmra.mxu0 %v6934
  %v7550 = vpop.f32.mrf.mxu0
  %v7551 = vadd.f32 %v7528, %v7550
  %7552 = vmatmul.f32.gmra.mxu0 %v6939
  %v7553 = vpop.f32.mrf.mxu0
  %v7554 = vadd.f32 %v7531, %v7553
  %7555 = vdwg.mxu0
  %7556 = vmatpush.msra.mxu0 0.0
  %7557 = vmatpush.msra.mxu0 0.0
  %7558 = vmatpush.msra.mxu0 0.0
  %7559 = vmatpush.msra.mxu0 0.0
  %7560 = vmatpush.msra.mxu0 0.0
  %7561 = vmatpush.msra.mxu0 0.0
  %7562 = vmatpush.msra.mxu0 0.0
  %7563 = vmatpush.msra.mxu0 0.0
  %7564 = vmatpush.msra.mxu0 %v7438
  %7565 = vmatpush.msra.mxu0 %v7431
  %7566 = vmatpush.msra.mxu0 %v7424
  %7567 = vmatpush.msra.mxu0 %v7417
  %7568 = vmatpush.msra.mxu0 %v7410
  %7569 = vmatpush.msra.mxu0 %v7403
  %7570 = vmatpush.msra.mxu0 %v7396
  %7571 = vmatpush.msra.mxu0 %v7389
  %7572 = vmatmul.f32.gmra.mxu0 %v7459
  %v7573 = vpop.f32.mrf.mxu0
  %v7574 = vadd.f32 %v7551, %v7573
  %7575 = vmatmul.f32.gmra.mxu0 %v7462
  %v7576 = vpop.f32.mrf.mxu0
  %v7577 = vadd.f32 %v7554, %v7576
  %7578 = vdwg.mxu0
  %7579 = vmatpush.msra.mxu0 %v7047
  %7580 = vmatpush.msra.mxu0 %v7040
  %7581 = vmatpush.msra.mxu0 %v7033
  %7582 = vmatpush.msra.mxu0 %v7026
  %7583 = vmatpush.msra.mxu0 %v7019
  %7584 = vmatpush.msra.mxu0 %v7012
  %7585 = vmatpush.msra.mxu0 %v7005
  %7586 = vmatpush.msra.mxu0 %v6998
  %7587 = vmatpush.msra.mxu0 %v6991
  %7588 = vmatpush.msra.mxu0 %v6984
  %7589 = vmatpush.msra.mxu0 %v6977
  %7590 = vmatpush.msra.mxu0 %v6970
  %7591 = vmatpush.msra.mxu0 %v6963
  %7592 = vmatpush.msra.mxu0 %v6956
  %7593 = vmatpush.msra.mxu0 %v6949
  %7594 = vmatpush.msra.mxu0 %v6942
  %7595 = vmatmul.f32.gmra.mxu0 %v6931
  %v7596 = vpop.f32.mrf.mxu0
  %v7597 = vadd.f32 %v7450, %v7596
  %7598 = vmatmul.f32.gmra.mxu0 %v6936
  %v7599 = vpop.f32.mrf.mxu0
  %v7600 = vadd.f32 %v7455, %v7599
  %7601 = vdwg.mxu0
  %7602 = vmatpush.msra.mxu0 %v7159
  %7603 = vmatpush.msra.mxu0 %v7152
  %7604 = vmatpush.msra.mxu0 %v7145
  %7605 = vmatpush.msra.mxu0 %v7138
  %7606 = vmatpush.msra.mxu0 %v7131
  %7607 = vmatpush.msra.mxu0 %v7124
  %7608 = vmatpush.msra.mxu0 %v7117
  %7609 = vmatpush.msra.mxu0 %v7110
  %7610 = vmatpush.msra.mxu0 %v7103
  %7611 = vmatpush.msra.mxu0 %v7096
  %7612 = vmatpush.msra.mxu0 %v7089
  %7613 = vmatpush.msra.mxu0 %v7082
  %7614 = vmatpush.msra.mxu0 %v7075
  %7615 = vmatpush.msra.mxu0 %v7068
  %7616 = vmatpush.msra.mxu0 %v7061
  %7617 = vmatpush.msra.mxu0 %v7054
  %7618 = vmatmul.f32.gmra.mxu0 %v6932
  %v7619 = vpop.f32.mrf.mxu0
  %v7620 = vadd.f32 %v7597, %v7619
  %7621 = vmatmul.f32.gmra.mxu0 %v6937
  %v7622 = vpop.f32.mrf.mxu0
  %v7623 = vadd.f32 %v7600, %v7622
  %7624 = vdwg.mxu0
  %7625 = vmatpush.msra.mxu0 %v7271
  %7626 = vmatpush.msra.mxu0 %v7264
  %7627 = vmatpush.msra.mxu0 %v7257
  %7628 = vmatpush.msra.mxu0 %v7250
  %7629 = vmatpush.msra.mxu0 %v7243
  %7630 = vmatpush.msra.mxu0 %v7236
  %7631 = vmatpush.msra.mxu0 %v7229
  %7632 = vmatpush.msra.mxu0 %v7222
  %7633 = vmatpush.msra.mxu0 %v7215
  %7634 = vmatpush.msra.mxu0 %v7208
  %7635 = vmatpush.msra.mxu0 %v7201
  %7636 = vmatpush.msra.mxu0 %v7194
  %7637 = vmatpush.msra.mxu0 %v7187
  %7638 = vmatpush.msra.mxu0 %v7180
  %7639 = vmatpush.msra.mxu0 %v7173
  %7640 = vmatpush.msra.mxu0 %v7166
  %7641 = vmatmul.f32.gmra.mxu0 %v6933
  %v7642 = vpop.f32.mrf.mxu0
  %v7643 = vadd.f32 %v7620, %v7642
  %7644 = vmatmul.f32.gmra.mxu0 %v6938
  %v7645 = vpop.f32.mrf.mxu0
  %v7646 = vadd.f32 %v7623, %v7645
  %7647 = vdwg.mxu0
  %7648 = vmatpush.msra.mxu0 %v7383
  %7649 = vmatpush.msra.mxu0 %v7376
  %7650 = vmatpush.msra.mxu0 %v7369
  %7651 = vmatpush.msra.mxu0 %v7362
  %7652 = vmatpush.msra.mxu0 %v7355
  %7653 = vmatpush.msra.mxu0 %v7348
  %7654 = vmatpush.msra.mxu0 %v7341
  %7655 = vmatpush.msra.mxu0 %v7334
  %7656 = vmatpush.msra.mxu0 %v7327
  %7657 = vmatpush.msra.mxu0 %v7320
  %7658 = vmatpush.msra.mxu0 %v7313
  %7659 = vmatpush.msra.mxu0 %v7306
  %7660 = vmatpush.msra.mxu0 %v7299
  %7661 = vmatpush.msra.mxu0 %v7292
  %7662 = vmatpush.msra.mxu0 %v7285
  %7663 = vmatpush.msra.mxu0 %v7278
  %7664 = vmatmul.f32.gmra.mxu0 %v6934
  %v7665 = vpop.f32.mrf.mxu0
  %v7666 = vadd.f32 %v7643, %v7665
  %7667 = vmatmul.f32.gmra.mxu0 %v6939
  %v7668 = vpop.f32.mrf.mxu0
  %v7669 = vadd.f32 %v7646, %v7668
  %7670 = vdwg.mxu0
  %7671 = vmatpush.msra.mxu0 0.0
  %7672 = vmatpush.msra.mxu0 0.0
  %7673 = vmatpush.msra.mxu0 0.0
  %7674 = vmatpush.msra.mxu0 0.0
  %7675 = vmatpush.msra.mxu0 0.0
  %7676 = vmatpush.msra.mxu0 0.0
  %7677 = vmatpush.msra.mxu0 0.0
  %7678 = vmatpush.msra.mxu0 0.0
  %7679 = vmatpush.msra.mxu0 %v7439
  %7680 = vmatpush.msra.mxu0 %v7432
  %7681 = vmatpush.msra.mxu0 %v7425
  %7682 = vmatpush.msra.mxu0 %v7418
  %7683 = vmatpush.msra.mxu0 %v7411
  %7684 = vmatpush.msra.mxu0 %v7404
  %7685 = vmatpush.msra.mxu0 %v7397
  %7686 = vmatpush.msra.mxu0 %v7390
  %7687 = vmatmul.f32.gmra.mxu0 %v7459
  %v7688 = vpop.f32.mrf.mxu0
  %v7689 = vadd.f32 %v7666, %v7688
  %7690 = vmatmul.f32.gmra.mxu0 %v7462
  %v7691 = vpop.f32.mrf.mxu0
  %v7692 = vadd.f32 %v7669, %v7691
  %7693 = vdwg.mxu0
  %7694 = vmatpush.msra.mxu0 %v7048
  %7695 = vmatpush.msra.mxu0 %v7041
  %7696 = vmatpush.msra.mxu0 %v7034
  %7697 = vmatpush.msra.mxu0 %v7027
  %7698 = vmatpush.msra.mxu0 %v7020
  %7699 = vmatpush.msra.mxu0 %v7013
  %7700 = vmatpush.msra.mxu0 %v7006
  %7701 = vmatpush.msra.mxu0 %v6999
  %7702 = vmatpush.msra.mxu0 %v6992
  %7703 = vmatpush.msra.mxu0 %v6985
  %7704 = vmatpush.msra.mxu0 %v6978
  %7705 = vmatpush.msra.mxu0 %v6971
  %7706 = vmatpush.msra.mxu0 %v6964
  %7707 = vmatpush.msra.mxu0 %v6957
  %7708 = vmatpush.msra.mxu0 %v6950
  %7709 = vmatpush.msra.mxu0 %v6943
  %7710 = vmatmul.f32.gmra.mxu0 %v6931
  %v7711 = vpop.f32.mrf.mxu0
  %v7712 = vadd.f32 %v7450, %v7711
  %7713 = vmatmul.f32.gmra.mxu0 %v6936
  %v7714 = vpop.f32.mrf.mxu0
  %v7715 = vadd.f32 %v7455, %v7714
  %7716 = vdwg.mxu0
  %7717 = vmatpush.msra.mxu0 %v7160
  %7718 = vmatpush.msra.mxu0 %v7153
  %7719 = vmatpush.msra.mxu0 %v7146
  %7720 = vmatpush.msra.mxu0 %v7139
  %7721 = vmatpush.msra.mxu0 %v7132
  %7722 = vmatpush.msra.mxu0 %v7125
  %7723 = vmatpush.msra.mxu0 %v7118
  %7724 = vmatpush.msra.mxu0 %v7111
  %7725 = vmatpush.msra.mxu0 %v7104
  %7726 = vmatpush.msra.mxu0 %v7097
  %7727 = vmatpush.msra.mxu0 %v7090
  %7728 = vmatpush.msra.mxu0 %v7083
  %7729 = vmatpush.msra.mxu0 %v7076
  %7730 = vmatpush.msra.mxu0 %v7069
  %7731 = vmatpush.msra.mxu0 %v7062
  %7732 = vmatpush.msra.mxu0 %v7055
  %7733 = vmatmul.f32.gmra.mxu0 %v6932
  %v7734 = vpop.f32.mrf.mxu0
  %v7735 = vadd.f32 %v7712, %v7734
  %7736 = vmatmul.f32.gmra.mxu0 %v6937
  %v7737 = vpop.f32.mrf.mxu0
  %v7738 = vadd.f32 %v7715, %v7737
  %7739 = vdwg.mxu0
  %7740 = vmatpush.msra.mxu0 %v7272
  %7741 = vmatpush.msra.mxu0 %v7265
  %7742 = vmatpush.msra.mxu0 %v7258
  %7743 = vmatpush.msra.mxu0 %v7251
  %7744 = vmatpush.msra.mxu0 %v7244
  %7745 = vmatpush.msra.mxu0 %v7237
  %7746 = vmatpush.msra.mxu0 %v7230
  %7747 = vmatpush.msra.mxu0 %v7223
  %7748 = vmatpush.msra.mxu0 %v7216
  %7749 = vmatpush.msra.mxu0 %v7209
  %7750 = vmatpush.msra.mxu0 %v7202
  %7751 = vmatpush.msra.mxu0 %v7195
  %7752 = vmatpush.msra.mxu0 %v7188
  %7753 = vmatpush.msra.mxu0 %v7181
  %7754 = vmatpush.msra.mxu0 %v7174
  %7755 = vmatpush.msra.mxu0 %v7167
  %7756 = vmatmul.f32.gmra.mxu0 %v6933
  %v7757 = vpop.f32.mrf.mxu0
  %v7758 = vadd.f32 %v7735, %v7757
  %7759 = vmatmul.f32.gmra.mxu0 %v6938
  %v7760 = vpop.f32.mrf.mxu0
  %v7761 = vadd.f32 %v7738, %v7760
  %7762 = vdwg.mxu0
  %7763 = vmatpush.msra.mxu0 %v7384
  %7764 = vmatpush.msra.mxu0 %v7377
  %7765 = vmatpush.msra.mxu0 %v7370
  %7766 = vmatpush.msra.mxu0 %v7363
  %7767 = vmatpush.msra.mxu0 %v7356
  %7768 = vmatpush.msra.mxu0 %v7349
  %7769 = vmatpush.msra.mxu0 %v7342
  %7770 = vmatpush.msra.mxu0 %v7335
  %7771 = vmatpush.msra.mxu0 %v7328
  %7772 = vmatpush.msra.mxu0 %v7321
  %7773 = vmatpush.msra.mxu0 %v7314
  %7774 = vmatpush.msra.mxu0 %v7307
  %7775 = vmatpush.msra.mxu0 %v7300
  %7776 = vmatpush.msra.mxu0 %v7293
  %7777 = vmatpush.msra.mxu0 %v7286
  %7778 = vmatpush.msra.mxu0 %v7279
  %7779 = vmatmul.f32.gmra.mxu0 %v6934
  %v7780 = vpop.f32.mrf.mxu0
  %v7781 = vadd.f32 %v7758, %v7780
  %7782 = vmatmul.f32.gmra.mxu0 %v6939
  %v7783 = vpop.f32.mrf.mxu0
  %v7784 = vadd.f32 %v7761, %v7783
  %7785 = vdwg.mxu0
  %7786 = vmatpush.msra.mxu0 0.0
  %7787 = vmatpush.msra.mxu0 0.0
  %7788 = vmatpush.msra.mxu0 0.0
  %7789 = vmatpush.msra.mxu0 0.0
  %7790 = vmatpush.msra.mxu0 0.0
  %7791 = vmatpush.msra.mxu0 0.0
  %7792 = vmatpush.msra.mxu0 0.0
  %7793 = vmatpush.msra.mxu0 0.0
  %7794 = vmatpush.msra.mxu0 %v7440
  %7795 = vmatpush.msra.mxu0 %v7433
  %7796 = vmatpush.msra.mxu0 %v7426
  %7797 = vmatpush.msra.mxu0 %v7419
  %7798 = vmatpush.msra.mxu0 %v7412
  %7799 = vmatpush.msra.mxu0 %v7405
  %7800 = vmatpush.msra.mxu0 %v7398
  %7801 = vmatpush.msra.mxu0 %v7391
  %7802 = vmatmul.f32.gmra.mxu0 %v7459
  %v7803 = vpop.f32.mrf.mxu0
  %v7804 = vadd.f32 %v7781, %v7803
  %7805 = vmatmul.f32.gmra.mxu0 %v7462
  %v7806 = vpop.f32.mrf.mxu0
  %v7807 = vadd.f32 %v7784, %v7806
  %7808 = vdwg.mxu0
  %7809 = vmatpush.msra.mxu0 %v7049
  %7810 = vmatpush.msra.mxu0 %v7042
  %7811 = vmatpush.msra.mxu0 %v7035
  %7812 = vmatpush.msra.mxu0 %v7028
  %7813 = vmatpush.msra.mxu0 %v7021
  %7814 = vmatpush.msra.mxu0 %v7014
  %7815 = vmatpush.msra.mxu0 %v7007
  %7816 = vmatpush.msra.mxu0 %v7000
  %7817 = vmatpush.msra.mxu0 %v6993
  %7818 = vmatpush.msra.mxu0 %v6986
  %7819 = vmatpush.msra.mxu0 %v6979
  %7820 = vmatpush.msra.mxu0 %v6972
  %7821 = vmatpush.msra.mxu0 %v6965
  %7822 = vmatpush.msra.mxu0 %v6958
  %7823 = vmatpush.msra.mxu0 %v6951
  %7824 = vmatpush.msra.mxu0 %v6944
  %7825 = vmatmul.f32.gmra.mxu0 %v6931
  %v7826 = vpop.f32.mrf.mxu0
  %v7827 = vadd.f32 %v7450, %v7826
  %7828 = vmatmul.f32.gmra.mxu0 %v6936
  %v7829 = vpop.f32.mrf.mxu0
  %v7830 = vadd.f32 %v7455, %v7829
  %7831 = vdwg.mxu0
  %7832 = vmatpush.msra.mxu0 %v7161
  %7833 = vmatpush.msra.mxu0 %v7154
  %7834 = vmatpush.msra.mxu0 %v7147
  %7835 = vmatpush.msra.mxu0 %v7140
  %7836 = vmatpush.msra.mxu0 %v7133
  %7837 = vmatpush.msra.mxu0 %v7126
  %7838 = vmatpush.msra.mxu0 %v7119
  %7839 = vmatpush.msra.mxu0 %v7112
  %7840 = vmatpush.msra.mxu0 %v7105
  %7841 = vmatpush.msra.mxu0 %v7098
  %7842 = vmatpush.msra.mxu0 %v7091
  %7843 = vmatpush.msra.mxu0 %v7084
  %7844 = vmatpush.msra.mxu0 %v7077
  %7845 = vmatpush.msra.mxu0 %v7070
  %7846 = vmatpush.msra.mxu0 %v7063
  %7847 = vmatpush.msra.mxu0 %v7056
  %7848 = vmatmul.f32.gmra.mxu0 %v6932
  %v7849 = vpop.f32.mrf.mxu0
  %v7850 = vadd.f32 %v7827, %v7849
  %7851 = vmatmul.f32.gmra.mxu0 %v6937
  %v7852 = vpop.f32.mrf.mxu0
  %v7853 = vadd.f32 %v7830, %v7852
  %7854 = vdwg.mxu0
  %7855 = vmatpush.msra.mxu0 %v7273
  %7856 = vmatpush.msra.mxu0 %v7266
  %7857 = vmatpush.msra.mxu0 %v7259
  %7858 = vmatpush.msra.mxu0 %v7252
  %7859 = vmatpush.msra.mxu0 %v7245
  %7860 = vmatpush.msra.mxu0 %v7238
  %7861 = vmatpush.msra.mxu0 %v7231
  %7862 = vmatpush.msra.mxu0 %v7224
  %7863 = vmatpush.msra.mxu0 %v7217
  %7864 = vmatpush.msra.mxu0 %v7210
  %7865 = vmatpush.msra.mxu0 %v7203
  %7866 = vmatpush.msra.mxu0 %v7196
  %7867 = vmatpush.msra.mxu0 %v7189
  %7868 = vmatpush.msra.mxu0 %v7182
  %7869 = vmatpush.msra.mxu0 %v7175
  %7870 = vmatpush.msra.mxu0 %v7168
  %7871 = vmatmul.f32.gmra.mxu0 %v6933
  %v7872 = vpop.f32.mrf.mxu0
  %v7873 = vadd.f32 %v7850, %v7872
  %7874 = vmatmul.f32.gmra.mxu0 %v6938
  %v7875 = vpop.f32.mrf.mxu0
  %v7876 = vadd.f32 %v7853, %v7875
  %7877 = vdwg.mxu0
  %7878 = vmatpush.msra.mxu0 %v7385
  %7879 = vmatpush.msra.mxu0 %v7378
  %7880 = vmatpush.msra.mxu0 %v7371
  %7881 = vmatpush.msra.mxu0 %v7364
  %7882 = vmatpush.msra.mxu0 %v7357
  %7883 = vmatpush.msra.mxu0 %v7350
  %7884 = vmatpush.msra.mxu0 %v7343
  %7885 = vmatpush.msra.mxu0 %v7336
  %7886 = vmatpush.msra.mxu0 %v7329
  %7887 = vmatpush.msra.mxu0 %v7322
  %7888 = vmatpush.msra.mxu0 %v7315
  %7889 = vmatpush.msra.mxu0 %v7308
  %7890 = vmatpush.msra.mxu0 %v7301
  %7891 = vmatpush.msra.mxu0 %v7294
  %7892 = vmatpush.msra.mxu0 %v7287
  %7893 = vmatpush.msra.mxu0 %v7280
  %7894 = vmatmul.f32.gmra.mxu0 %v6934
  %v7895 = vpop.f32.mrf.mxu0
  %v7896 = vadd.f32 %v7873, %v7895
  %7897 = vmatmul.f32.gmra.mxu0 %v6939
  %v7898 = vpop.f32.mrf.mxu0
  %v7899 = vadd.f32 %v7876, %v7898
  %7900 = vdwg.mxu0
  %7901 = vmatpush.msra.mxu0 0.0
  %7902 = vmatpush.msra.mxu0 0.0
  %7903 = vmatpush.msra.mxu0 0.0
  %7904 = vmatpush.msra.mxu0 0.0
  %7905 = vmatpush.msra.mxu0 0.0
  %7906 = vmatpush.msra.mxu0 0.0
  %7907 = vmatpush.msra.mxu0 0.0
  %7908 = vmatpush.msra.mxu0 0.0
  %7909 = vmatpush.msra.mxu0 %v7441
  %7910 = vmatpush.msra.mxu0 %v7434
  %7911 = vmatpush.msra.mxu0 %v7427
  %7912 = vmatpush.msra.mxu0 %v7420
  %7913 = vmatpush.msra.mxu0 %v7413
  %7914 = vmatpush.msra.mxu0 %v7406
  %7915 = vmatpush.msra.mxu0 %v7399
  %7916 = vmatpush.msra.mxu0 %v7392
  %7917 = vmatmul.f32.gmra.mxu0 %v7459
  %v7918 = vpop.f32.mrf.mxu0
  %v7919 = vadd.f32 %v7896, %v7918
  %7920 = vmatmul.f32.gmra.mxu0 %v7462
  %v7921 = vpop.f32.mrf.mxu0
  %v7922 = vadd.f32 %v7899, %v7921
  %7923 = vdwg.mxu0
  %7924 = vmatpush.msra.mxu0 %v7050
  %7925 = vmatpush.msra.mxu0 %v7043
  %7926 = vmatpush.msra.mxu0 %v7036
  %7927 = vmatpush.msra.mxu0 %v7029
  %7928 = vmatpush.msra.mxu0 %v7022
  %7929 = vmatpush.msra.mxu0 %v7015
  %7930 = vmatpush.msra.mxu0 %v7008
  %7931 = vmatpush.msra.mxu0 %v7001
  %7932 = vmatpush.msra.mxu0 %v6994
  %7933 = vmatpush.msra.mxu0 %v6987
  %7934 = vmatpush.msra.mxu0 %v6980
  %7935 = vmatpush.msra.mxu0 %v6973
  %7936 = vmatpush.msra.mxu0 %v6966
  %7937 = vmatpush.msra.mxu0 %v6959
  %7938 = vmatpush.msra.mxu0 %v6952
  %7939 = vmatpush.msra.mxu0 %v6945
  %7940 = vmatmul.f32.gmra.mxu0 %v6931
  %v7941 = vpop.f32.mrf.mxu0
  %v7942 = vadd.f32 %v7450, %v7941
  %7943 = vmatmul.f32.gmra.mxu0 %v6936
  %v7944 = vpop.f32.mrf.mxu0
  %v7945 = vadd.f32 %v7455, %v7944
  %7946 = vdwg.mxu0
  %7947 = vmatpush.msra.mxu0 %v7162
  %7948 = vmatpush.msra.mxu0 %v7155
  %7949 = vmatpush.msra.mxu0 %v7148
  %7950 = vmatpush.msra.mxu0 %v7141
  %7951 = vmatpush.msra.mxu0 %v7134
  %7952 = vmatpush.msra.mxu0 %v7127
  %7953 = vmatpush.msra.mxu0 %v7120
  %7954 = vmatpush.msra.mxu0 %v7113
  %7955 = vmatpush.msra.mxu0 %v7106
  %7956 = vmatpush.msra.mxu0 %v7099
  %7957 = vmatpush.msra.mxu0 %v7092
  %7958 = vmatpush.msra.mxu0 %v7085
  %7959 = vmatpush.msra.mxu0 %v7078
  %7960 = vmatpush.msra.mxu0 %v7071
  %7961 = vmatpush.msra.mxu0 %v7064
  %7962 = vmatpush.msra.mxu0 %v7057
  %7963 = vmatmul.f32.gmra.mxu0 %v6932
  %v7964 = vpop.f32.mrf.mxu0
  %v7965 = vadd.f32 %v7942, %v7964
  %7966 = vmatmul.f32.gmra.mxu0 %v6937
  %v7967 = vpop.f32.mrf.mxu0
  %v7968 = vadd.f32 %v7945, %v7967
  %7969 = vdwg.mxu0
  %7970 = vmatpush.msra.mxu0 %v7274
  %7971 = vmatpush.msra.mxu0 %v7267
  %7972 = vmatpush.msra.mxu0 %v7260
  %7973 = vmatpush.msra.mxu0 %v7253
  %7974 = vmatpush.msra.mxu0 %v7246
  %7975 = vmatpush.msra.mxu0 %v7239
  %7976 = vmatpush.msra.mxu0 %v7232
  %7977 = vmatpush.msra.mxu0 %v7225
  %7978 = vmatpush.msra.mxu0 %v7218
  %7979 = vmatpush.msra.mxu0 %v7211
  %7980 = vmatpush.msra.mxu0 %v7204
  %7981 = vmatpush.msra.mxu0 %v7197
  %7982 = vmatpush.msra.mxu0 %v7190
  %7983 = vmatpush.msra.mxu0 %v7183
  %7984 = vmatpush.msra.mxu0 %v7176
  %7985 = vmatpush.msra.mxu0 %v7169
  %7986 = vmatmul.f32.gmra.mxu0 %v6933
  %v7987 = vpop.f32.mrf.mxu0
  %v7988 = vadd.f32 %v7965, %v7987
  %7989 = vmatmul.f32.gmra.mxu0 %v6938
  %v7990 = vpop.f32.mrf.mxu0
  %v7991 = vadd.f32 %v7968, %v7990
  %7992 = vdwg.mxu0
  %7993 = vmatpush.msra.mxu0 %v7386
  %7994 = vmatpush.msra.mxu0 %v7379
  %7995 = vmatpush.msra.mxu0 %v7372
  %7996 = vmatpush.msra.mxu0 %v7365
  %7997 = vmatpush.msra.mxu0 %v7358
  %7998 = vmatpush.msra.mxu0 %v7351
  %7999 = vmatpush.msra.mxu0 %v7344
  %8000 = vmatpush.msra.mxu0 %v7337
  %8001 = vmatpush.msra.mxu0 %v7330
  %8002 = vmatpush.msra.mxu0 %v7323
  %8003 = vmatpush.msra.mxu0 %v7316
  %8004 = vmatpush.msra.mxu0 %v7309
  %8005 = vmatpush.msra.mxu0 %v7302
  %8006 = vmatpush.msra.mxu0 %v7295
  %8007 = vmatpush.msra.mxu0 %v7288
  %8008 = vmatpush.msra.mxu0 %v7281
  %8009 = vmatmul.f32.gmra.mxu0 %v6934
  %v8010 = vpop.f32.mrf.mxu0
  %v8011 = vadd.f32 %v7988, %v8010
  %8012 = vmatmul.f32.gmra.mxu0 %v6939
  %v8013 = vpop.f32.mrf.mxu0
  %v8014 = vadd.f32 %v7991, %v8013
  %8015 = vdwg.mxu0
  %8016 = vmatpush.msra.mxu0 0.0
  %8017 = vmatpush.msra.mxu0 0.0
  %8018 = vmatpush.msra.mxu0 0.0
  %8019 = vmatpush.msra.mxu0 0.0
  %8020 = vmatpush.msra.mxu0 0.0
  %8021 = vmatpush.msra.mxu0 0.0
  %8022 = vmatpush.msra.mxu0 0.0
  %8023 = vmatpush.msra.mxu0 0.0
  %8024 = vmatpush.msra.mxu0 %v7442
  %8025 = vmatpush.msra.mxu0 %v7435
  %8026 = vmatpush.msra.mxu0 %v7428
  %8027 = vmatpush.msra.mxu0 %v7421
  %8028 = vmatpush.msra.mxu0 %v7414
  %8029 = vmatpush.msra.mxu0 %v7407
  %8030 = vmatpush.msra.mxu0 %v7400
  %8031 = vmatpush.msra.mxu0 %v7393
  %8032 = vmatmul.f32.gmra.mxu0 %v7459
  %v8033 = vpop.f32.mrf.mxu0
  %v8034 = vadd.f32 %v8011, %v8033
  %8035 = vmatmul.f32.gmra.mxu0 %v7462
  %v8036 = vpop.f32.mrf.mxu0
  %v8037 = vadd.f32 %v8014, %v8036
  %8038 = vdwg.mxu0
  %8039 = vmatpush.msra.mxu0 %v7051
  %8040 = vmatpush.msra.mxu0 %v7044
  %8041 = vmatpush.msra.mxu0 %v7037
  %8042 = vmatpush.msra.mxu0 %v7030
  %8043 = vmatpush.msra.mxu0 %v7023
  %8044 = vmatpush.msra.mxu0 %v7016
  %8045 = vmatpush.msra.mxu0 %v7009
  %8046 = vmatpush.msra.mxu0 %v7002
  %8047 = vmatpush.msra.mxu0 %v6995
  %8048 = vmatpush.msra.mxu0 %v6988
  %8049 = vmatpush.msra.mxu0 %v6981
  %8050 = vmatpush.msra.mxu0 %v6974
  %8051 = vmatpush.msra.mxu0 %v6967
  %8052 = vmatpush.msra.mxu0 %v6960
  %8053 = vmatpush.msra.mxu0 %v6953
  %8054 = vmatpush.msra.mxu0 %v6946
  %8055 = vmatmul.f32.gmra.mxu0 %v6931
  %v8056 = vpop.f32.mrf.mxu0
  %v8057 = vadd.f32 %v7450, %v8056
  %8058 = vmatmul.f32.gmra.mxu0 %v6936
  %v8059 = vpop.f32.mrf.mxu0
  %v8060 = vadd.f32 %v7455, %v8059
  %8061 = vdwg.mxu0
  %8062 = vmatpush.msra.mxu0 %v7163
  %8063 = vmatpush.msra.mxu0 %v7156
  %8064 = vmatpush.msra.mxu0 %v7149
  %8065 = vmatpush.msra.mxu0 %v7142
  %8066 = vmatpush.msra.mxu0 %v7135
  %8067 = vmatpush.msra.mxu0 %v7128
  %8068 = vmatpush.msra.mxu0 %v7121
  %8069 = vmatpush.msra.mxu0 %v7114
  %8070 = vmatpush.msra.mxu0 %v7107
  %8071 = vmatpush.msra.mxu0 %v7100
  %8072 = vmatpush.msra.mxu0 %v7093
  %8073 = vmatpush.msra.mxu0 %v7086
  %8074 = vmatpush.msra.mxu0 %v7079
  %8075 = vmatpush.msra.mxu0 %v7072
  %8076 = vmatpush.msra.mxu0 %v7065
  %8077 = vmatpush.msra.mxu0 %v7058
  %8078 = vmatmul.f32.gmra.mxu0 %v6932
  %v8079 = vpop.f32.mrf.mxu0
  %v8080 = vadd.f32 %v8057, %v8079
  %8081 = vmatmul.f32.gmra.mxu0 %v6937
  %v8082 = vpop.f32.mrf.mxu0
  %v8083 = vadd.f32 %v8060, %v8082
  %8084 = vdwg.mxu0
  %8085 = vmatpush.msra.mxu0 %v7275
  %8086 = vmatpush.msra.mxu0 %v7268
  %8087 = vmatpush.msra.mxu0 %v7261
  %8088 = vmatpush.msra.mxu0 %v7254
  %8089 = vmatpush.msra.mxu0 %v7247
  %8090 = vmatpush.msra.mxu0 %v7240
  %8091 = vmatpush.msra.mxu0 %v7233
  %8092 = vmatpush.msra.mxu0 %v7226
  %8093 = vmatpush.msra.mxu0 %v7219
  %8094 = vmatpush.msra.mxu0 %v7212
  %8095 = vmatpush.msra.mxu0 %v7205
  %8096 = vmatpush.msra.mxu0 %v7198
  %8097 = vmatpush.msra.mxu0 %v7191
  %8098 = vmatpush.msra.mxu0 %v7184
  %8099 = vmatpush.msra.mxu0 %v7177
  %8100 = vmatpush.msra.mxu0 %v7170
  %8101 = vmatmul.f32.gmra.mxu0 %v6933
  %v8102 = vpop.f32.mrf.mxu0
  %v8103 = vadd.f32 %v8080, %v8102
  %8104 = vmatmul.f32.gmra.mxu0 %v6938
  %v8105 = vpop.f32.mrf.mxu0
  %v8106 = vadd.f32 %v8083, %v8105
  %8107 = vdwg.mxu0
  %8108 = vmatpush.msra.mxu0 %v7387
  %8109 = vmatpush.msra.mxu0 %v7380
  %8110 = vmatpush.msra.mxu0 %v7373
  %8111 = vmatpush.msra.mxu0 %v7366
  %8112 = vmatpush.msra.mxu0 %v7359
  %8113 = vmatpush.msra.mxu0 %v7352
  %8114 = vmatpush.msra.mxu0 %v7345
  %8115 = vmatpush.msra.mxu0 %v7338
  %8116 = vmatpush.msra.mxu0 %v7331
  %8117 = vmatpush.msra.mxu0 %v7324
  %8118 = vmatpush.msra.mxu0 %v7317
  %8119 = vmatpush.msra.mxu0 %v7310
  %8120 = vmatpush.msra.mxu0 %v7303
  %8121 = vmatpush.msra.mxu0 %v7296
  %8122 = vmatpush.msra.mxu0 %v7289
  %8123 = vmatpush.msra.mxu0 %v7282
  %8124 = vmatmul.f32.gmra.mxu0 %v6934
  %v8125 = vpop.f32.mrf.mxu0
  %v8126 = vadd.f32 %v8103, %v8125
  %8127 = vmatmul.f32.gmra.mxu0 %v6939
  %v8128 = vpop.f32.mrf.mxu0
  %v8129 = vadd.f32 %v8106, %v8128
  %8130 = vdwg.mxu0
  %8131 = vmatpush.msra.mxu0 0.0
  %8132 = vmatpush.msra.mxu0 0.0
  %8133 = vmatpush.msra.mxu0 0.0
  %8134 = vmatpush.msra.mxu0 0.0
  %8135 = vmatpush.msra.mxu0 0.0
  %8136 = vmatpush.msra.mxu0 0.0
  %8137 = vmatpush.msra.mxu0 0.0
  %8138 = vmatpush.msra.mxu0 0.0
  %8139 = vmatpush.msra.mxu0 %v7443
  %8140 = vmatpush.msra.mxu0 %v7436
  %8141 = vmatpush.msra.mxu0 %v7429
  %8142 = vmatpush.msra.mxu0 %v7422
  %8143 = vmatpush.msra.mxu0 %v7415
  %8144 = vmatpush.msra.mxu0 %v7408
  %8145 = vmatpush.msra.mxu0 %v7401
  %8146 = vmatpush.msra.mxu0 %v7394
  %8147 = vmatmul.f32.gmra.mxu0 %v7459
  %v8148 = vpop.f32.mrf.mxu0
  %v8149 = vadd.f32 %v8126, %v8148
  %8150 = vmatmul.f32.gmra.mxu0 %v7462
  %v8151 = vpop.f32.mrf.mxu0
  %v8152 = vadd.f32 %v8129, %v8151
  %8153 = vdwg.mxu0
  %8154 = vmatpush.msra.mxu0 %v7052
  %8155 = vmatpush.msra.mxu0 %v7045
  %8156 = vmatpush.msra.mxu0 %v7038
  %8157 = vmatpush.msra.mxu0 %v7031
  %8158 = vmatpush.msra.mxu0 %v7024
  %8159 = vmatpush.msra.mxu0 %v7017
  %8160 = vmatpush.msra.mxu0 %v7010
  %8161 = vmatpush.msra.mxu0 %v7003
  %8162 = vmatpush.msra.mxu0 %v6996
  %8163 = vmatpush.msra.mxu0 %v6989
  %8164 = vmatpush.msra.mxu0 %v6982
  %8165 = vmatpush.msra.mxu0 %v6975
  %8166 = vmatpush.msra.mxu0 %v6968
  %8167 = vmatpush.msra.mxu0 %v6961
  %8168 = vmatpush.msra.mxu0 %v6954
  %8169 = vmatpush.msra.mxu0 %v6947
  %8170 = vmatmul.f32.gmra.mxu0 %v6931
  %v8171 = vpop.f32.mrf.mxu0
  %v8172 = vadd.f32 %v7450, %v8171
  %8173 = vmatmul.f32.gmra.mxu0 %v6936
  %v8174 = vpop.f32.mrf.mxu0
  %v8175 = vadd.f32 %v7455, %v8174
  %8176 = vdwg.mxu0
  %8177 = vmatpush.msra.mxu0 %v7164
  %8178 = vmatpush.msra.mxu0 %v7157
  %8179 = vmatpush.msra.mxu0 %v7150
  %8180 = vmatpush.msra.mxu0 %v7143
  %8181 = vmatpush.msra.mxu0 %v7136
  %8182 = vmatpush.msra.mxu0 %v7129
  %8183 = vmatpush.msra.mxu0 %v7122
  %8184 = vmatpush.msra.mxu0 %v7115
  %8185 = vmatpush.msra.mxu0 %v7108
  %8186 = vmatpush.msra.mxu0 %v7101
  %8187 = vmatpush.msra.mxu0 %v7094
  %8188 = vmatpush.msra.mxu0 %v7087
  %8189 = vmatpush.msra.mxu0 %v7080
  %8190 = vmatpush.msra.mxu0 %v7073
  %8191 = vmatpush.msra.mxu0 %v7066
  %8192 = vmatpush.msra.mxu0 %v7059
  %8193 = vmatmul.f32.gmra.mxu0 %v6932
  %v8194 = vpop.f32.mrf.mxu0
  %v8195 = vadd.f32 %v8172, %v8194
  %8196 = vmatmul.f32.gmra.mxu0 %v6937
  %v8197 = vpop.f32.mrf.mxu0
  %v8198 = vadd.f32 %v8175, %v8197
  %8199 = vdwg.mxu0
  %8200 = vmatpush.msra.mxu0 %v7276
  %8201 = vmatpush.msra.mxu0 %v7269
  %8202 = vmatpush.msra.mxu0 %v7262
  %8203 = vmatpush.msra.mxu0 %v7255
  %8204 = vmatpush.msra.mxu0 %v7248
  %8205 = vmatpush.msra.mxu0 %v7241
  %8206 = vmatpush.msra.mxu0 %v7234
  %8207 = vmatpush.msra.mxu0 %v7227
  %8208 = vmatpush.msra.mxu0 %v7220
  %8209 = vmatpush.msra.mxu0 %v7213
  %8210 = vmatpush.msra.mxu0 %v7206
  %8211 = vmatpush.msra.mxu0 %v7199
  %8212 = vmatpush.msra.mxu0 %v7192
  %8213 = vmatpush.msra.mxu0 %v7185
  %8214 = vmatpush.msra.mxu0 %v7178
  %8215 = vmatpush.msra.mxu0 %v7171
  %8216 = vmatmul.f32.gmra.mxu0 %v6933
  %v8217 = vpop.f32.mrf.mxu0
  %v8218 = vadd.f32 %v8195, %v8217
  %8219 = vmatmul.f32.gmra.mxu0 %v6938
  %v8220 = vpop.f32.mrf.mxu0
  %v8221 = vadd.f32 %v8198, %v8220
  %8222 = vdwg.mxu0
  %8223 = vmatpush.msra.mxu0 %v7388
  %8224 = vmatpush.msra.mxu0 %v7381
  %8225 = vmatpush.msra.mxu0 %v7374
  %8226 = vmatpush.msra.mxu0 %v7367
  %8227 = vmatpush.msra.mxu0 %v7360
  %8228 = vmatpush.msra.mxu0 %v7353
  %8229 = vmatpush.msra.mxu0 %v7346
  %8230 = vmatpush.msra.mxu0 %v7339
  %8231 = vmatpush.msra.mxu0 %v7332
  %8232 = vmatpush.msra.mxu0 %v7325
  %8233 = vmatpush.msra.mxu0 %v7318
  %8234 = vmatpush.msra.mxu0 %v7311
  %8235 = vmatpush.msra.mxu0 %v7304
  %8236 = vmatpush.msra.mxu0 %v7297
  %8237 = vmatpush.msra.mxu0 %v7290
  %8238 = vmatpush.msra.mxu0 %v7283
  %8239 = vmatmul.f32.gmra.mxu0 %v6934
  %v8240 = vpop.f32.mrf.mxu0
  %v8241 = vadd.f32 %v8218, %v8240
  %8242 = vmatmul.f32.gmra.mxu0 %v6939
  %v8243 = vpop.f32.mrf.mxu0
  %v8244 = vadd.f32 %v8221, %v8243
  %8245 = vdwg.mxu0
  %8246 = vmatpush.msra.mxu0 0.0
  %8247 = vmatpush.msra.mxu0 0.0
  %8248 = vmatpush.msra.mxu0 0.0
  %8249 = vmatpush.msra.mxu0 0.0
  %8250 = vmatpush.msra.mxu0 0.0
  %8251 = vmatpush.msra.mxu0 0.0
  %8252 = vmatpush.msra.mxu0 0.0
  %8253 = vmatpush.msra.mxu0 0.0
  %8254 = vmatpush.msra.mxu0 %v7444
  %8255 = vmatpush.msra.mxu0 %v7437
  %8256 = vmatpush.msra.mxu0 %v7430
  %8257 = vmatpush.msra.mxu0 %v7423
  %8258 = vmatpush.msra.mxu0 %v7416
  %8259 = vmatpush.msra.mxu0 %v7409
  %8260 = vmatpush.msra.mxu0 %v7402
  %8261 = vmatpush.msra.mxu0 %v7395
  %8262 = vmatmul.f32.gmra.mxu0 %v7459
  %v8263 = vpop.f32.mrf.mxu0
  %v8264 = vadd.f32 %v8241, %v8263
  %8265 = vmatmul.f32.gmra.mxu0 %v7462
  %v8266 = vpop.f32.mrf.mxu0
  %v8267 = vadd.f32 %v8244, %v8266
  %8268 = vdwg.mxu0
  %v8269 = vmax.f32 %v7574, 0.0
  %v8270 = vmax.f32 %v7689, 0.0
  %v8271 = vmax.f32 %v7804, 0.0
  %v8272 = vmax.f32 %v7919, 0.0
  %v8273 = vmax.f32 %v8034, 0.0
  %v8274 = vmax.f32 %v8149, 0.0
  %v8275 = vmax.f32 %v8264, 0.0
  %v8276 = vmax.f32 %v7577, 0.0
  %v8277 = vmax.f32 %v7692, 0.0
  %v8278 = vmax.f32 %v7807, 0.0
  %v8279 = vmax.f32 %v7922, 0.0
  %v8280 = vmax.f32 %v8037, 0.0
  %v8281 = vmax.f32 %v8152, 0.0
  %v8282 = vmax.f32 %v8267, 0.0
  %8283 = vst [vmem:[%s6] sm:$0xff] %v8269
  %8284 = vst [vmem:[%s6 + $0x8] sm:$0xff] %v8270
  %8285 = vst [vmem:[%s6 + $0x10] sm:$0xff] %v8271
  %8286 = vst [vmem:[%s6 + $0x18] sm:$0xff] %v8272
  %8287 = vst [vmem:[%s6 + $0x20] sm:$0xff] %v8273
  %8288 = vst [vmem:[%s6 + $0x28] sm:$0xff] %v8274
  %8289 = vst [vmem:[%s6 + $0x30] sm:$0xff] %v8275
  %8290 = vst [vmem:[%s6 + $0x38] sm:$0xff] %v8276
  %8291 = vst [vmem:[%s6 + $0x40] sm:$0xff] %v8277
  %8292 = vst [vmem:[%s6 + $0x48] sm:$0xff] %v8278
  %8293 = vst [vmem:[%s6 + $0x50] sm:$0xff] %v8279
  %8294 = vst [vmem:[%s6 + $0x58] sm:$0xff] %v8280
  %8295 = vst [vmem:[%s6 + $0x60] sm:$0xff] %v8281
  %8296 = vst [vmem:[%s6 + $0x68] sm:$0xff] %v8282
  // Predicated region
  $region26: #{model_forward.1} parent=0 // pred_check
    _
  $region27: #{model_forward.1} parent=0 // pred_check_branch
    %8298 = sbr.rel (0) target = $region29
  $region28: #{model_forward.1} parent=0 // pred_region
    _
  $region29: #{model_forward.1} parent=0 // pred_fallthru
    _
  // Predicated region
  $region30: #{model_forward.1} parent=0 // pred_check
    _
  $region31: #{model_forward.1} parent=0 // pred_check_branch
    %8300 = sbr.rel (0) target = $region33
  $region32: #{model_forward.1} parent=0 // pred_region
    _
  $region33: #{model_forward.1} parent=0 // pred_fallthru
    _

</llo_original>
